<compile_context>
chip_gen: v7x
topology: tpu7x:2x2x1
jax: 0.10.0
libtpu: 0.0.40
codegen_flags: <defaults>
</compile_context>

<pallas_src>
import functools

import jax
import jax.numpy as jnp
from jax import lax
from jax.experimental import pallas as pl
from jax.experimental.pallas import tpu as pltpu


def _bottleneck_kernel(xc_ref, xp_ref, xn_ref,
                       w1_ref, s1_ref, b1_ref,
                       w2_ref, s2_ref, b2_ref,
                       w3_ref, s3_ref, b3_ref,
                       o_ref, h1p_ref, *, atrous):
    a = atrous
    i = pl.program_id(1)
    nt = pl.num_programs(1)

    _, TH, W, Cp = xc_ref.shape
    Pp = w1_ref.shape[1]
    Op = w3_ref.shape[1]
    R = TH + 2 * a                               # rows incl. top / bottom halo

    xc = xc_ref[0]                               # (TH, W, Cp) bf16 (also the residual)
    w1 = w1_ref[...]
    s1 = s1_ref[...]
    b1 = b1_ref[...]

    def conv1_bn_relu(x_bf):                     # (rows, W, Cp) bf16 -> (rows, W, Pp) bf16
        rows = x_bf.shape[0]
        h = jnp.dot(x_bf.reshape(rows * W, Cp), w1,
                    preferred_element_type=jnp.float32)
        h = jnp.maximum(h * s1 + b1, 0.0)
        return h.astype(jnp.bfloat16).reshape(rows, W, Pp)

    # h1p scratch layout: (R, W + 2a, Pp); width pad columns are zeros (conv2 padding).
    zpad = jnp.zeros((R, a, Pp), jnp.bfloat16)
    h1p_ref[:, :a, :] = zpad
    h1p_ref[:, W + a:, :] = zpad

    # center rows: conv1 + BN1 + ReLU of the current tile
    h1p_ref[a:a + TH, a:a + W, :] = conv1_bn_relu(xc)

    # top halo rows (zeros at the image top -> zero-padding conv semantics)
    @pl.when(i > 0)
    def _():
        h1p_ref[:a, a:a + W, :] = conv1_bn_relu(xp_ref[0])

    @pl.when(i == 0)
    def _():
        h1p_ref[:a, a:a + W, :] = jnp.zeros((a, W, Pp), jnp.bfloat16)

    # bottom halo rows
    @pl.when(i < nt - 1)
    def _():
        h1p_ref[a + TH:, a:a + W, :] = conv1_bn_relu(xn_ref[0])

    @pl.when(i == nt - 1)
    def _():
        h1p_ref[a + TH:, a:a + W, :] = jnp.zeros((a, W, Pp), jnp.bfloat16)

    # ---- conv2 (3x3, dilation=a, padding=a, stride=1) as 9 accumulating MXU dots.
    #      The 3 kx width-shifts are hoisted and reused across ky; ky shifts are free
    #      leading-dim slices.  No im2col slab is materialized.
    kx_slabs = [h1p_ref[:, kx * a:kx * a + W, :] for kx in range(3)]   # (R, W, Pp) bf16
    acc = None
    for ky in range(3):
        for kx in range(3):
            tap = kx_slabs[kx][ky * a:ky * a + TH].reshape(TH * W, Pp)
            part = jnp.dot(tap, w2_ref[ky * 3 + kx],
                           preferred_element_type=jnp.float32)
            acc = part if acc is None else acc + part
    h2 = jnp.maximum(acc * s2_ref[...] + b2_ref[...], 0.0)             # (TH*W, Pp) f32

    # ---- conv3 (1x1) + BN3
    h3 = jnp.dot(h2.astype(jnp.bfloat16), w3_ref[...],
                 preferred_element_type=jnp.float32)
    h3 = h3 * s3_ref[...] + b3_ref[...]                                # (TH*W, Op) f32

    # ---- identity shortcut (f32 add) + ReLU (Cp == Op)
    out = jnp.maximum(h3 + xc.reshape(TH * W, Cp).astype(jnp.float32), 0.0)
    o_ref[0] = out.reshape(TH, W, Op).astype(o_ref.dtype)


def _round_up(x, m):
    return (x + m - 1) // m * m


def _vmem_limit_bytes():
    """Generation-aware scoped-VMEM limit: 75% of physical VMEM."""
    try:
        cap = pltpu.get_tpu_info().vmem_capacity_bytes
    except Exception:
        cap = 64 << 20
    return int(cap) * 3 // 4


def _estimate_step_vmem(TH, W, a, Cp, Pp, Op, out_bytes):
    """Rough per-grid-step VMEM footprint (double-buffered I/O, single-buffered weights)."""
    R = TH + 2 * a
    Wp = W + 2 * a
    bf, f32 = 2, 4
    v = 0
    v += 2 * TH * W * Cp * bf               # current tile (x2 buffers)
    v += 2 * 2 * a * W * Cp * bf            # two halo tiles (x2 buffers)
    v += 2 * TH * W * Op * out_bytes        # output tile (x2 buffers)
    v += (Cp * Pp + 9 * Pp * Pp + Pp * Op) * bf + 6 * max(Pp, Op) * f32  # weights/BN
    v += R * Wp * Pp * bf                   # h1p scratch
    v += 3 * R * W * Pp * bf                # hoisted kx shift slabs
    v += TH * W * Pp * f32 * 2              # conv2 accumulator + h2
    v += TH * W * Op * f32 * 2              # h3 + out staging
    return v


def _pick_tile_rows(N, H, W, a, Cp, Pp, Op, out_bytes, budget_bytes):
    """Largest TH with H % TH == 0, TH % a == 0 whose estimated footprint fits the budget."""
    if H % a:
        # TODO(synk): ragged halo blocks when atrous does not divide H.
        raise ValueError("atrous must divide H for the row-tiled kernel")
    cands = [th for th in range(a, H + 1, a) if H % th == 0]
    fits = [th for th in cands
            if _estimate_step_vmem(th, W, a, Cp, Pp, Op, out_bytes) <= budget_bytes]
    pool = fits if fits else cands[:1]          # fall back to the smallest tile, never overshoot
    if N % 2 == 1:                              # v7x: keep the parallel grid even
        even = [th for th in pool if ((H // th) * N) % 2 == 0]
        if even:
            pool = even
    return max(pool)


def bottleneck_forward(x_nhwc, w1, bn1, w2, bn2, w3, bn3, *,
                       atrous=1, eps=1e-5, tile_rows=None, out_dtype=jnp.float32):
    """x_nhwc: (N,H,W,Cin); w1:(Cin,P); w2:(9,P,P) (tap=ky*3+kx, in, out); w3:(P,4P);
    bn*: (gamma, beta, running_mean, running_var) each (C,)."""
    N, H, W, Cin = x_nhwc.shape
    P = w1.shape[1]
    Cout = w3.shape[1]
    if Cin != Cout:
        raise NotImplementedError("identity shortcut requires inplanes == planes*4")
    a = atrous

    LANE = 128
    Cp = _round_up(Cin, LANE)
    Pp = _round_up(P, LANE)
    Op = _round_up(Cout, LANE)                  # == Cp for the identity shortcut
    # TODO(synk): pad W to a multiple of 8 (and zero the extra h1 columns) for
    # feature maps whose width is not sublane-aligned (e.g. 65/129-wide DeepLab maps).

    out_bytes = jnp.dtype(out_dtype).itemsize
    vmem_limit = _vmem_limit_bytes()
    if tile_rows is None:
        tile_rows = _pick_tile_rows(N, H, W, a, Cp, Pp, Op, out_bytes,
                                    budget_bytes=int(vmem_limit * 0.6))
    TH = tile_rows
    if H % TH or TH % a:
        raise ValueError("tile_rows must divide H and be a multiple of atrous")
    nt = H // TH
    khalo = TH // a                             # halo blocks (height a) per row tile
    nhb = H // a                                # halo blocks per image

    f32 = jnp.float32

    def fold(bn, cpad):                         # fold BN to per-channel scale/bias, pad with 0
        g, b, m, v = (t.astype(f32) for t in bn)
        s = g / jnp.sqrt(v + eps)
        sb = b - m * s
        return (jnp.zeros((1, cpad), f32).at[0, :s.shape[0]].set(s),
                jnp.zeros((1, cpad), f32).at[0, :sb.shape[0]].set(sb))

    s1, b1 = fold(bn1, Pp)
    s2, b2 = fold(bn2, Pp)
    s3, b3 = fold(bn3, Op)

    # bf16 activations for DMA / MXU; padded channels stay zero end-to-end.
    x_p = x_nhwc.astype(jnp.bfloat16)
    if Cp != Cin:
        x_p = jnp.zeros((N, H, W, Cp), jnp.bfloat16).at[..., :Cin].set(x_p)
    w1_p = jnp.zeros((Cp, Pp), f32).at[:Cin, :P].set(w1).astype(jnp.bfloat16)
    w2_p = jnp.zeros((9, Pp, Pp), f32).at[:, :P, :P].set(w2).astype(jnp.bfloat16)
    w3_p = jnp.zeros((Pp, Op), f32).at[:P, :Cout].set(w3).astype(jnp.bfloat16)

    flops_step = 2 * ((TH + 2 * a) * W * Cp * Pp
                      + TH * W * 9 * Pp * Pp
                      + TH * W * Pp * Op)
    bytes_accessed = (N * nt * (TH + 2 * a) * W * Cp * 2        # bf16 inputs (incl. halos)
                      + N * H * W * Op * out_bytes              # output
                      + (Cp * Pp + 9 * Pp * Pp + Pp * Op) * 2)  # weights
    cost = pl.CostEstimate(flops=flops_step * N * nt, transcendentals=0,
                           bytes_accessed=int(bytes_accessed))

    kernel = functools.partial(_bottleneck_kernel, atrous=a)

    def call(single_buffer_weights):
        extra = {"pipeline_mode": pl.Buffered(1)} if single_buffer_weights else {}

        def const(shape):
            return pl.BlockSpec(shape, lambda n, i: (0,) * len(shape), **extra)

        in_specs = [
            pl.BlockSpec((1, TH, W, Cp), lambda n, i: (n, i, 0, 0)),          # current rows
            pl.BlockSpec((1, a, W, Cp),                                       # top halo (clamped)
                         lambda n, i: (n, jnp.maximum(i * khalo - 1, 0), 0, 0)),
            pl.BlockSpec((1, a, W, Cp),                                       # bottom halo (clamped)
                         lambda n, i: (n, jnp.minimum((i + 1) * khalo, nhb - 1), 0, 0)),
            const((Cp, Pp)), const((1, Pp)), const((1, Pp)),
            const((9, Pp, Pp)), const((1, Pp)), const((1, Pp)),
            const((Pp, Op)), const((1, Op)), const((1, Op)),
        ]
        return pl.pallas_call(
            kernel,
            out_shape=jax.ShapeDtypeStruct((N, H, W, Op), out_dtype),
            grid=(N, nt),
            in_specs=in_specs,
            out_specs=pl.BlockSpec((1, TH, W, Op), lambda n, i: (n, i, 0, 0)),
            scratch_shapes=[pltpu.VMEM((TH + 2 * a, W + 2 * a, Pp), jnp.bfloat16)],
            compiler_params=pltpu.CompilerParams(
                dimension_semantics=("parallel", "parallel"),
                vmem_limit_bytes=vmem_limit),
            cost_estimate=cost,
        )(x_p, x_p, x_p, w1_p, s1, b1, w2_p, s2, b2, w3_p, s3, b3)

    try:
        out = jax.block_until_ready(call(True))
    except Exception:
        # pipeline_mode / Buffered(1) not supported by this jax build: rebuild with
        # default double-buffered constant operands (functionally identical).
        out = jax.block_until_ready(call(False))

    return out[..., :Cout] if Op != Cout else out


def reference_forward(x_nhwc, w1, bn1, w2, bn2, w3, bn3, *, atrous=1, eps=1e-5):
    """Pure-JAX reference using lax.conv_general_dilated (NHWC/HWIO), f32."""
    def bn(x, p):
        g, b, m, v = p
        return (x - m) / jnp.sqrt(v + eps) * g + b

    def conv(x, w_hwio, dil, pad):
        return lax.conv_general_dilated(
            x, w_hwio, window_strides=(1, 1),
            padding=((pad, pad), (pad, pad)), rhs_dilation=(dil, dil),
            dimension_numbers=("NHWC", "HWIO", "NHWC"))

    Cin, P = w1.shape
    Cout = w3.shape[1]
    h = jax.nn.relu(bn(conv(x_nhwc, w1.reshape(1, 1, Cin, P), 1, 0), bn1))
    h = jax.nn.relu(bn(conv(h, w2.reshape(3, 3, P, P), atrous, atrous), bn2))
    h = bn(conv(h, w3.reshape(1, 1, P, Cout), 1, 0), bn3)
    return jax.nn.relu(h + x_nhwc)


if __name__ == "__main__":
    key = jax.random.PRNGKey(0)
    N, H, W = 2, 16, 16
    planes = 8
    inplanes = planes * 4           # identity shortcut (downsample=None)

    ks = jax.random.split(key, 8)
    x_nchw = jax.random.normal(ks[0], (N, inplanes, H, W), jnp.float32)
    x_nhwc = jnp.transpose(x_nchw, (0, 2, 3, 1))     # NCHW -> NHWC

    w1 = jax.random.normal(ks[1], (inplanes, planes), jnp.float32) * (2.0 / inplanes) ** 0.5
    w2 = jax.random.normal(ks[2], (9, planes, planes), jnp.float32) * (2.0 / (9 * planes)) ** 0.5
    w3 = jax.random.normal(ks[3], (planes, inplanes), jnp.float32) * (2.0 / planes) ** 0.5

    def bn_params(k, c):
        k1, k2, k3, k4 = jax.random.split(k, 4)
        return (jax.random.uniform(k1, (c,), jnp.float32, 0.5, 1.5),
                0.1 * jax.random.normal(k2, (c,), jnp.float32),
                0.1 * jax.random.normal(k3, (c,), jnp.float32),
                jax.random.uniform(k4, (c,), jnp.float32, 0.5, 1.5))

    bn1 = bn_params(ks[4], planes)
    bn2 = bn_params(ks[5], planes)
    bn3 = bn_params(ks[6], inplanes)

    # Exercise: (a) row tiling with live halo exchange, (b) auto VMEM-budgeted tile,
    # (c) dilation = 2 with 2-row halos.
    for atrous, tile_rows in [(1, 8), (1, None), (2, 8)]:
        out = bottleneck_forward(x_nhwc, w1, bn1, w2, bn2, w3, bn3,
                                 atrous=atrous, tile_rows=tile_rows)
        out = jax.block_until_ready(out)
        ref = reference_forward(x_nhwc, w1, bn1, w2, bn2, w3, bn3, atrous=atrous)
        ref = jax.block_until_ready(ref)
        assert out.shape == (N, H, W, inplanes)
        err = float(jnp.max(jnp.abs(out - ref)))
        assert jnp.allclose(out, ref, atol=5e-2, rtol=5e-2), (
            f"atrous={atrous} tile_rows={tile_rows}: max abs err {err}")

    print("KERNEL_OK")
</pallas_src>

<mosaic_0001>
module attributes {stable_mosaic.version = 11 : i64} {
  func.func @_bottleneck_kernel(%arg0: i32, %arg1: i32, %arg2: memref<1x8x16x128xbf16, #tpu.memory_space<vmem>>, %arg3: memref<1x1x16x128xbf16, #tpu.memory_space<vmem>>, %arg4: memref<1x1x16x128xbf16, #tpu.memory_space<vmem>>, %arg5: memref<128x128xbf16, #tpu.memory_space<vmem>>, %arg6: memref<1x128xf32, #tpu.memory_space<vmem>>, %arg7: memref<1x128xf32, #tpu.memory_space<vmem>>, %arg8: memref<9x128x128xbf16, #tpu.memory_space<vmem>>, %arg9: memref<1x128xf32, #tpu.memory_space<vmem>>, %arg10: memref<1x128xf32, #tpu.memory_space<vmem>>, %arg11: memref<128x128xbf16, #tpu.memory_space<vmem>>, %arg12: memref<1x128xf32, #tpu.memory_space<vmem>>, %arg13: memref<1x128xf32, #tpu.memory_space<vmem>>, %arg14: memref<1x8x16x128xf32, #tpu.memory_space<vmem>>, %arg15: memref<10x18x128xbf16, #tpu.memory_space<vmem>>) attributes {dimension_semantics = [#tpu.dimension_semantics<parallel>, #tpu.dimension_semantics<parallel>], iteration_bounds = array<i64: 2, 2>, scalar_prefetch = 0 : i64, scratch_operands = 1 : i64, tpu.core_type = #tpu.core_type<tc>, window_params = [{transform_indices = @transform_0, window_bounds = array<i64: 1, 8, 16, 128>}, {transform_indices = @transform_1, window_bounds = array<i64: 1, 1, 16, 128>}, {transform_indices = @transform_2, window_bounds = array<i64: 1, 1, 16, 128>}, {pipeline_mode = #tpu.pipeline_mode<synchronous>, transform_indices = @transform_3, window_bounds = array<i64: 128, 128>}, {pipeline_mode = #tpu.pipeline_mode<synchronous>, transform_indices = @transform_4, window_bounds = array<i64: 1, 128>}, {pipeline_mode = #tpu.pipeline_mode<synchronous>, transform_indices = @transform_5, window_bounds = array<i64: 1, 128>}, {pipeline_mode = #tpu.pipeline_mode<synchronous>, transform_indices = @transform_6, window_bounds = array<i64: 9, 128, 128>}, {pipeline_mode = #tpu.pipeline_mode<synchronous>, transform_indices = @transform_7, window_bounds = array<i64: 1, 128>}, {pipeline_mode = #tpu.pipeline_mode<synchronous>, transform_indices = @transform_8, window_bounds = array<i64: 1, 128>}, {pipeline_mode = #tpu.pipeline_mode<synchronous>, transform_indices = @transform_9, window_bounds = array<i64: 128, 128>}, {pipeline_mode = #tpu.pipeline_mode<synchronous>, transform_indices = @transform_10, window_bounds = array<i64: 1, 128>}, {pipeline_mode = #tpu.pipeline_mode<synchronous>, transform_indices = @transform_11, window_bounds = array<i64: 1, 128>}, {transform_indices = @transform_12, window_bounds = array<i64: 1, 8, 16, 128>}]} {
    %c0 = arith.constant 0 : index
    %c0_0 = arith.constant 0 : index
    %c0_1 = arith.constant 0 : index
    %c0_2 = arith.constant 0 : index
    %0 = vector.load %arg2[%c0, %c0_0, %c0_1, %c0_2] : memref<1x8x16x128xbf16, #tpu.memory_space<vmem>>, vector<1x8x16x128xbf16>
    %1 = vector.shape_cast %0 : vector<1x8x16x128xbf16> to vector<8x16x128xbf16>
    %c0_3 = arith.constant 0 : index
    %c0_4 = arith.constant 0 : index
    %2 = vector.load %arg5[%c0_3, %c0_4] : memref<128x128xbf16, #tpu.memory_space<vmem>>, vector<128x128xbf16>
    %c0_5 = arith.constant 0 : index
    %c0_6 = arith.constant 0 : index
    %3 = vector.load %arg6[%c0_5, %c0_6] : memref<1x128xf32, #tpu.memory_space<vmem>>, vector<1x128xf32>
    %c0_7 = arith.constant 0 : index
    %c0_8 = arith.constant 0 : index
    %4 = vector.load %arg7[%c0_7, %c0_8] : memref<1x128xf32, #tpu.memory_space<vmem>>, vector<1x128xf32>
    %cst = arith.constant 0.000000e+00 : bf16
    %5 = vector.broadcast %cst : bf16 to vector<10x1x128xbf16>
    %c0_9 = arith.constant 0 : index
    %c0_10 = arith.constant 0 : index
    %c0_11 = arith.constant 0 : index
    %6 = vector.load %arg15[%c0_9, %c0_10, %c0_11] : memref<10x18x128xbf16, #tpu.memory_space<vmem>>, vector<10x1x128xbf16>
    tpu.vector_store %arg15[%c0_9, %c0_10, %c0_11], %5 {strides = array<i32>} : memref<10x18x128xbf16, #tpu.memory_space<vmem>>, vector<10x1x128xbf16>,
    %c0_12 = arith.constant 0 : index
    %c17 = arith.constant 17 : index
    %c0_13 = arith.constant 0 : index
    %7 = vector.load %arg15[%c0_12, %c17, %c0_13] : memref<10x18x128xbf16, #tpu.memory_space<vmem>>, vector<10x1x128xbf16>
    tpu.vector_store %arg15[%c0_12, %c17, %c0_13], %5 {strides = array<i32>} : memref<10x18x128xbf16, #tpu.memory_space<vmem>>, vector<10x1x128xbf16>,
    %8 = vector.shape_cast %1 : vector<8x16x128xbf16> to vector<128x128xbf16>
    %cst_14 = arith.constant dense<0.000000e+00> : vector<128x128xf32>
    %9 = tpu.matmul %8, %2, %cst_14 {dimension_numbers = #tpu.dot_dimension_numbers<[1], [0], [0], [1], [0, 0, 1, 1], [], []>} : vector<128x128xbf16>, vector<128x128xbf16>, vector<128x128xf32> -> vector<128x128xf32>
    %10 = vector.broadcast %3 : vector<1x128xf32> to vector<128x128xf32>
    %11 = arith.mulf %9, %10 : vector<128x128xf32>
    %12 = vector.broadcast %4 : vector<1x128xf32> to vector<128x128xf32>
    %13 = arith.addf %11, %12 : vector<128x128xf32>
    %cst_15 = arith.constant 0.000000e+00 : f32
    %14 = vector.broadcast %cst_15 : f32 to vector<128x128xf32>
    %15 = arith.maximumf %13, %14 : vector<128x128xf32>
    %16 = arith.truncf %15 : vector<128x128xf32> to vector<128x128xbf16>
    %17 = vector.shape_cast %16 : vector<128x128xbf16> to vector<8x16x128xbf16>
    %c1 = arith.constant 1 : index
    %c1_16 = arith.constant 1 : index
    %c0_17 = arith.constant 0 : index
    %18 = vector.load %arg15[%c1, %c1_16, %c0_17] : memref<10x18x128xbf16, #tpu.memory_space<vmem>>, vector<8x16x128xbf16>
    tpu.vector_store %arg15[%c1, %c1_16, %c0_17], %17 {strides = array<i32>} : memref<10x18x128xbf16, #tpu.memory_space<vmem>>, vector<8x16x128xbf16>,
    %c0_i32 = arith.constant 0 : i32
    %19 = arith.cmpi sgt, %arg1, %c0_i32 : i32
    %20 = arith.extui %19 : i1 to i32
    %c0_i32_18 = arith.constant 0 : i32
    %21 = arith.cmpi ne, %20, %c0_i32_18 : i32
    scf.if %21 {
      %c0_79 = arith.constant 0 : index
      %c0_80 = arith.constant 0 : index
      %c0_81 = arith.constant 0 : index
      %c0_82 = arith.constant 0 : index
      %113 = vector.load %arg3[%c0_79, %c0_80, %c0_81, %c0_82] : memref<1x1x16x128xbf16, #tpu.memory_space<vmem>>, vector<1x1x16x128xbf16>
      %114 = vector.shape_cast %113 : vector<1x1x16x128xbf16> to vector<1x16x128xbf16>
      %115 = vector.shape_cast %114 : vector<1x16x128xbf16> to vector<16x128xbf16>
      %cst_83 = arith.constant dense<0.000000e+00> : vector<16x128xf32>
      %116 = tpu.matmul %115, %2, %cst_83 {dimension_numbers = #tpu.dot_dimension_numbers<[1], [0], [0], [1], [0, 0, 1, 1], [], []>} : vector<16x128xbf16>, vector<128x128xbf16>, vector<16x128xf32> -> vector<16x128xf32>
      %117 = vector.broadcast %3 : vector<1x128xf32> to vector<16x128xf32>
      %118 = arith.mulf %116, %117 : vector<16x128xf32>
      %119 = vector.broadcast %4 : vector<1x128xf32> to vector<16x128xf32>
      %120 = arith.addf %118, %119 : vector<16x128xf32>
      %cst_84 = arith.constant 0.000000e+00 : f32
      %121 = vector.broadcast %cst_84 : f32 to vector<16x128xf32>
      %122 = arith.maximumf %120, %121 : vector<16x128xf32>
      %123 = arith.truncf %122 : vector<16x128xf32> to vector<16x128xbf16>
      %124 = vector.shape_cast %123 : vector<16x128xbf16> to vector<1x16x128xbf16>
      %c0_85 = arith.constant 0 : index
      %c1_86 = arith.constant 1 : index
      %c0_87 = arith.constant 0 : index
      %125 = vector.load %arg15[%c0_85, %c1_86, %c0_87] : memref<10x18x128xbf16, #tpu.memory_space<vmem>>, vector<1x16x128xbf16>
      tpu.vector_store %arg15[%c0_85, %c1_86, %c0_87], %124 {strides = array<i32>} : memref<10x18x128xbf16, #tpu.memory_space<vmem>>, vector<1x16x128xbf16>,
    } else {
    }
    %c0_i32_19 = arith.constant 0 : i32
    %22 = arith.cmpi eq, %arg1, %c0_i32_19 : i32
    %23 = arith.extui %22 : i1 to i32
    %c0_i32_20 = arith.constant 0 : i32
    %24 = arith.cmpi ne, %23, %c0_i32_20 : i32
    scf.if %24 {
      %cst_79 = arith.constant 0.000000e+00 : bf16
      %113 = vector.broadcast %cst_79 : bf16 to vector<1x16x128xbf16>
      %c0_80 = arith.constant 0 : index
      %c1_81 = arith.constant 1 : index
      %c0_82 = arith.constant 0 : index
      %114 = vector.load %arg15[%c0_80, %c1_81, %c0_82] : memref<10x18x128xbf16, #tpu.memory_space<vmem>>, vector<1x16x128xbf16>
      tpu.vector_store %arg15[%c0_80, %c1_81, %c0_82], %113 {strides = array<i32>} : memref<10x18x128xbf16, #tpu.memory_space<vmem>>, vector<1x16x128xbf16>,
    } else {
    }
    %c1_i32 = arith.constant 1 : i32
    %25 = arith.cmpi slt, %arg1, %c1_i32 : i32
    %26 = arith.extui %25 : i1 to i32
    %c0_i32_21 = arith.constant 0 : i32
    %27 = arith.cmpi ne, %26, %c0_i32_21 : i32
    scf.if %27 {
      %c0_79 = arith.constant 0 : index
      %c0_80 = arith.constant 0 : index
      %c0_81 = arith.constant 0 : index
      %c0_82 = arith.constant 0 : index
      %113 = vector.load %arg4[%c0_79, %c0_80, %c0_81, %c0_82] : memref<1x1x16x128xbf16, #tpu.memory_space<vmem>>, vector<1x1x16x128xbf16>
      %114 = vector.shape_cast %113 : vector<1x1x16x128xbf16> to vector<1x16x128xbf16>
      %115 = vector.shape_cast %114 : vector<1x16x128xbf16> to vector<16x128xbf16>
      %cst_83 = arith.constant dense<0.000000e+00> : vector<16x128xf32>
      %116 = tpu.matmul %115, %2, %cst_83 {dimension_numbers = #tpu.dot_dimension_numbers<[1], [0], [0], [1], [0, 0, 1, 1], [], []>} : vector<16x128xbf16>, vector<128x128xbf16>, vector<16x128xf32> -> vector<16x128xf32>
      %117 = vector.broadcast %3 : vector<1x128xf32> to vector<16x128xf32>
      %118 = arith.mulf %116, %117 : vector<16x128xf32>
      %119 = vector.broadcast %4 : vector<1x128xf32> to vector<16x128xf32>
      %120 = arith.addf %118, %119 : vector<16x128xf32>
      %cst_84 = arith.constant 0.000000e+00 : f32
      %121 = vector.broadcast %cst_84 : f32 to vector<16x128xf32>
      %122 = arith.maximumf %120, %121 : vector<16x128xf32>
      %123 = arith.truncf %122 : vector<16x128xf32> to vector<16x128xbf16>
      %124 = vector.shape_cast %123 : vector<16x128xbf16> to vector<1x16x128xbf16>
      %c9 = arith.constant 9 : index
      %c1_85 = arith.constant 1 : index
      %c0_86 = arith.constant 0 : index
      %125 = vector.load %arg15[%c9, %c1_85, %c0_86] : memref<10x18x128xbf16, #tpu.memory_space<vmem>>, vector<1x16x128xbf16>
      tpu.vector_store %arg15[%c9, %c1_85, %c0_86], %124 {strides = array<i32>} : memref<10x18x128xbf16, #tpu.memory_space<vmem>>, vector<1x16x128xbf16>,
    } else {
    }
    %c1_i32_22 = arith.constant 1 : i32
    %28 = arith.cmpi eq, %arg1, %c1_i32_22 : i32
    %29 = arith.extui %28 : i1 to i32
    %c0_i32_23 = arith.constant 0 : i32
    %30 = arith.cmpi ne, %29, %c0_i32_23 : i32
    scf.if %30 {
      %cst_79 = arith.constant 0.000000e+00 : bf16
      %113 = vector.broadcast %cst_79 : bf16 to vector<1x16x128xbf16>
      %c9 = arith.constant 9 : index
      %c1_80 = arith.constant 1 : index
      %c0_81 = arith.constant 0 : index
      %114 = vector.load %arg15[%c9, %c1_80, %c0_81] : memref<10x18x128xbf16, #tpu.memory_space<vmem>>, vector<1x16x128xbf16>
      tpu.vector_store %arg15[%c9, %c1_80, %c0_81], %113 {strides = array<i32>} : memref<10x18x128xbf16, #tpu.memory_space<vmem>>, vector<1x16x128xbf16>,
    } else {
    }
    %c0_24 = arith.constant 0 : index
    %c0_25 = arith.constant 0 : index
    %c0_26 = arith.constant 0 : index
    %31 = vector.load %arg15[%c0_24, %c0_25, %c0_26] : memref<10x18x128xbf16, #tpu.memory_space<vmem>>, vector<10x16x128xbf16>
    %c0_27 = arith.constant 0 : index
    %c1_28 = arith.constant 1 : index
    %c0_29 = arith.constant 0 : index
    %32 = vector.load %arg15[%c0_27, %c1_28, %c0_29] : memref<10x18x128xbf16, #tpu.memory_space<vmem>>, vector<10x16x128xbf16>
    %c0_30 = arith.constant 0 : index
    %c2 = arith.constant 2 : index
    %c0_31 = arith.constant 0 : index
    %33 = vector.load %arg15[%c0_30, %c2, %c0_31] : memref<10x18x128xbf16, #tpu.memory_space<vmem>>, vector<10x16x128xbf16>
    %34 = vector.extract_strided_slice %31 {offsets = [0, 0, 0], sizes = [8, 16, 128], strides = [1, 1, 1]} : vector<10x16x128xbf16> to vector<8x16x128xbf16>
    %35 = vector.shape_cast %34 : vector<8x16x128xbf16> to vector<128x128xbf16>
    %c0_32 = arith.constant 0 : index
    %c0_33 = arith.constant 0 : index
    %c0_34 = arith.constant 0 : index
    %36 = vector.load %arg8[%c0_32, %c0_33, %c0_34] : memref<9x128x128xbf16, #tpu.memory_space<vmem>>, vector<1x128x128xbf16>
    %37 = vector.shape_cast %36 : vector<1x128x128xbf16> to vector<128x128xbf16>
    %cst_35 = arith.constant dense<0.000000e+00> : vector<128x128xf32>
    %38 = tpu.matmul %35, %37, %cst_35 {dimension_numbers = #tpu.dot_dimension_numbers<[1], [0], [0], [1], [0, 0, 1, 1], [], []>} : vector<128x128xbf16>, vector<128x128xbf16>, vector<128x128xf32> -> vector<128x128xf32>
    %39 = vector.extract_strided_slice %32 {offsets = [0, 0, 0], sizes = [8, 16, 128], strides = [1, 1, 1]} : vector<10x16x128xbf16> to vector<8x16x128xbf16>
    %40 = vector.shape_cast %39 : vector<8x16x128xbf16> to vector<128x128xbf16>
    %c1_36 = arith.constant 1 : index
    %c0_37 = arith.constant 0 : index
    %c0_38 = arith.constant 0 : index
    %41 = vector.load %arg8[%c1_36, %c0_37, %c0_38] : memref<9x128x128xbf16, #tpu.memory_space<vmem>>, vector<1x128x128xbf16>
    %42 = vector.shape_cast %41 : vector<1x128x128xbf16> to vector<128x128xbf16>
    %cst_39 = arith.constant dense<0.000000e+00> : vector<128x128xf32>
    %43 = tpu.matmul %40, %42, %cst_39 {dimension_numbers = #tpu.dot_dimension_numbers<[1], [0], [0], [1], [0, 0, 1, 1], [], []>} : vector<128x128xbf16>, vector<128x128xbf16>, vector<128x128xf32> -> vector<128x128xf32>
    %44 = arith.addf %38, %43 : vector<128x128xf32>
    %45 = vector.extract_strided_slice %33 {offsets = [0, 0, 0], sizes = [8, 16, 128], strides = [1, 1, 1]} : vector<10x16x128xbf16> to vector<8x16x128xbf16>
    %46 = vector.shape_cast %45 : vector<8x16x128xbf16> to vector<128x128xbf16>
    %c2_40 = arith.constant 2 : index
    %c0_41 = arith.constant 0 : index
    %c0_42 = arith.constant 0 : index
    %47 = vector.load %arg8[%c2_40, %c0_41, %c0_42] : memref<9x128x128xbf16, #tpu.memory_space<vmem>>, vector<1x128x128xbf16>
    %48 = vector.shape_cast %47 : vector<1x128x128xbf16> to vector<128x128xbf16>
    %cst_43 = arith.constant dense<0.000000e+00> : vector<128x128xf32>
    %49 = tpu.matmul %46, %48, %cst_43 {dimension_numbers = #tpu.dot_dimension_numbers<[1], [0], [0], [1], [0, 0, 1, 1], [], []>} : vector<128x128xbf16>, vector<128x128xbf16>, vector<128x128xf32> -> vector<128x128xf32>
    %50 = arith.addf %44, %49 : vector<128x128xf32>
    %51 = vector.extract_strided_slice %31 {offsets = [1, 0, 0], sizes = [8, 16, 128], strides = [1, 1, 1]} : vector<10x16x128xbf16> to vector<8x16x128xbf16>
    %52 = vector.shape_cast %51 : vector<8x16x128xbf16> to vector<128x128xbf16>
    %c3 = arith.constant 3 : index
    %c0_44 = arith.constant 0 : index
    %c0_45 = arith.constant 0 : index
    %53 = vector.load %arg8[%c3, %c0_44, %c0_45] : memref<9x128x128xbf16, #tpu.memory_space<vmem>>, vector<1x128x128xbf16>
    %54 = vector.shape_cast %53 : vector<1x128x128xbf16> to vector<128x128xbf16>
    %cst_46 = arith.constant dense<0.000000e+00> : vector<128x128xf32>
    %55 = tpu.matmul %52, %54, %cst_46 {dimension_numbers = #tpu.dot_dimension_numbers<[1], [0], [0], [1], [0, 0, 1, 1], [], []>} : vector<128x128xbf16>, vector<128x128xbf16>, vector<128x128xf32> -> vector<128x128xf32>
    %56 = arith.addf %50, %55 : vector<128x128xf32>
    %57 = vector.extract_strided_slice %32 {offsets = [1, 0, 0], sizes = [8, 16, 128], strides = [1, 1, 1]} : vector<10x16x128xbf16> to vector<8x16x128xbf16>
    %58 = vector.shape_cast %57 : vector<8x16x128xbf16> to vector<128x128xbf16>
    %c4 = arith.constant 4 : index
    %c0_47 = arith.constant 0 : index
    %c0_48 = arith.constant 0 : index
    %59 = vector.load %arg8[%c4, %c0_47, %c0_48] : memref<9x128x128xbf16, #tpu.memory_space<vmem>>, vector<1x128x128xbf16>
    %60 = vector.shape_cast %59 : vector<1x128x128xbf16> to vector<128x128xbf16>
    %cst_49 = arith.constant dense<0.000000e+00> : vector<128x128xf32>
    %61 = tpu.matmul %58, %60, %cst_49 {dimension_numbers = #tpu.dot_dimension_numbers<[1], [0], [0], [1], [0, 0, 1, 1], [], []>} : vector<128x128xbf16>, vector<128x128xbf16>, vector<128x128xf32> -> vector<128x128xf32>
    %62 = arith.addf %56, %61 : vector<128x128xf32>
    %63 = vector.extract_strided_slice %33 {offsets = [1, 0, 0], sizes = [8, 16, 128], strides = [1, 1, 1]} : vector<10x16x128xbf16> to vector<8x16x128xbf16>
    %64 = vector.shape_cast %63 : vector<8x16x128xbf16> to vector<128x128xbf16>
    %c5 = arith.constant 5 : index
    %c0_50 = arith.constant 0 : index
    %c0_51 = arith.constant 0 : index
    %65 = vector.load %arg8[%c5, %c0_50, %c0_51] : memref<9x128x128xbf16, #tpu.memory_space<vmem>>, vector<1x128x128xbf16>
    %66 = vector.shape_cast %65 : vector<1x128x128xbf16> to vector<128x128xbf16>
    %cst_52 = arith.constant dense<0.000000e+00> : vector<128x128xf32>
    %67 = tpu.matmul %64, %66, %cst_52 {dimension_numbers = #tpu.dot_dimension_numbers<[1], [0], [0], [1], [0, 0, 1, 1], [], []>} : vector<128x128xbf16>, vector<128x128xbf16>, vector<128x128xf32> -> vector<128x128xf32>
    %68 = arith.addf %62, %67 : vector<128x128xf32>
    %69 = vector.extract_strided_slice %31 {offsets = [2, 0, 0], sizes = [8, 16, 128], strides = [1, 1, 1]} : vector<10x16x128xbf16> to vector<8x16x128xbf16>
    %70 = vector.shape_cast %69 : vector<8x16x128xbf16> to vector<128x128xbf16>
    %c6 = arith.constant 6 : index
    %c0_53 = arith.constant 0 : index
    %c0_54 = arith.constant 0 : index
    %71 = vector.load %arg8[%c6, %c0_53, %c0_54] : memref<9x128x128xbf16, #tpu.memory_space<vmem>>, vector<1x128x128xbf16>
    %72 = vector.shape_cast %71 : vector<1x128x128xbf16> to vector<128x128xbf16>
    %cst_55 = arith.constant dense<0.000000e+00> : vector<128x128xf32>
    %73 = tpu.matmul %70, %72, %cst_55 {dimension_numbers = #tpu.dot_dimension_numbers<[1], [0], [0], [1], [0, 0, 1, 1], [], []>} : vector<128x128xbf16>, vector<128x128xbf16>, vector<128x128xf32> -> vector<128x128xf32>
    %74 = arith.addf %68, %73 : vector<128x128xf32>
    %75 = vector.extract_strided_slice %32 {offsets = [2, 0, 0], sizes = [8, 16, 128], strides = [1, 1, 1]} : vector<10x16x128xbf16> to vector<8x16x128xbf16>
    %76 = vector.shape_cast %75 : vector<8x16x128xbf16> to vector<128x128xbf16>
    %c7 = arith.constant 7 : index
    %c0_56 = arith.constant 0 : index
    %c0_57 = arith.constant 0 : index
    %77 = vector.load %arg8[%c7, %c0_56, %c0_57] : memref<9x128x128xbf16, #tpu.memory_space<vmem>>, vector<1x128x128xbf16>
    %78 = vector.shape_cast %77 : vector<1x128x128xbf16> to vector<128x128xbf16>
    %cst_58 = arith.constant dense<0.000000e+00> : vector<128x128xf32>
    %79 = tpu.matmul %76, %78, %cst_58 {dimension_numbers = #tpu.dot_dimension_numbers<[1], [0], [0], [1], [0, 0, 1, 1], [], []>} : vector<128x128xbf16>, vector<128x128xbf16>, vector<128x128xf32> -> vector<128x128xf32>
    %80 = arith.addf %74, %79 : vector<128x128xf32>
    %81 = vector.extract_strided_slice %33 {offsets = [2, 0, 0], sizes = [8, 16, 128], strides = [1, 1, 1]} : vector<10x16x128xbf16> to vector<8x16x128xbf16>
    %82 = vector.shape_cast %81 : vector<8x16x128xbf16> to vector<128x128xbf16>
    %c8 = arith.constant 8 : index
    %c0_59 = arith.constant 0 : index
    %c0_60 = arith.constant 0 : index
    %83 = vector.load %arg8[%c8, %c0_59, %c0_60] : memref<9x128x128xbf16, #tpu.memory_space<vmem>>, vector<1x128x128xbf16>
    %84 = vector.shape_cast %83 : vector<1x128x128xbf16> to vector<128x128xbf16>
    %cst_61 = arith.constant dense<0.000000e+00> : vector<128x128xf32>
    %85 = tpu.matmul %82, %84, %cst_61 {dimension_numbers = #tpu.dot_dimension_numbers<[1], [0], [0], [1], [0, 0, 1, 1], [], []>} : vector<128x128xbf16>, vector<128x128xbf16>, vector<128x128xf32> -> vector<128x128xf32>
    %86 = arith.addf %80, %85 : vector<128x128xf32>
    %c0_62 = arith.constant 0 : index
    %c0_63 = arith.constant 0 : index
    %87 = vector.load %arg9[%c0_62, %c0_63] : memref<1x128xf32, #tpu.memory_space<vmem>>, vector<1x128xf32>
    %88 = vector.broadcast %87 : vector<1x128xf32> to vector<128x128xf32>
    %89 = arith.mulf %86, %88 : vector<128x128xf32>
    %c0_64 = arith.constant 0 : index
    %c0_65 = arith.constant 0 : index
    %90 = vector.load %arg10[%c0_64, %c0_65] : memref<1x128xf32, #tpu.memory_space<vmem>>, vector<1x128xf32>
    %91 = vector.broadcast %90 : vector<1x128xf32> to vector<128x128xf32>
    %92 = arith.addf %89, %91 : vector<128x128xf32>
    %cst_66 = arith.constant 0.000000e+00 : f32
    %93 = vector.broadcast %cst_66 : f32 to vector<128x128xf32>
    %94 = arith.maximumf %92, %93 : vector<128x128xf32>
    %95 = arith.truncf %94 : vector<128x128xf32> to vector<128x128xbf16>
    %c0_67 = arith.constant 0 : index
    %c0_68 = arith.constant 0 : index
    %96 = vector.load %arg11[%c0_67, %c0_68] : memref<128x128xbf16, #tpu.memory_space<vmem>>, vector<128x128xbf16>
    %cst_69 = arith.constant dense<0.000000e+00> : vector<128x128xf32>
    %97 = tpu.matmul %95, %96, %cst_69 {dimension_numbers = #tpu.dot_dimension_numbers<[1], [0], [0], [1], [0, 0, 1, 1], [], []>} : vector<128x128xbf16>, vector<128x128xbf16>, vector<128x128xf32> -> vector<128x128xf32>
    %c0_70 = arith.constant 0 : index
    %c0_71 = arith.constant 0 : index
    %98 = vector.load %arg12[%c0_70, %c0_71] : memref<1x128xf32, #tpu.memory_space<vmem>>, vector<1x128xf32>
    %99 = vector.broadcast %98 : vector<1x128xf32> to vector<128x128xf32>
    %100 = arith.mulf %97, %99 : vector<128x128xf32>
    %c0_72 = arith.constant 0 : index
    %c0_73 = arith.constant 0 : index
    %101 = vector.load %arg13[%c0_72, %c0_73] : memref<1x128xf32, #tpu.memory_space<vmem>>, vector<1x128xf32>
    %102 = vector.broadcast %101 : vector<1x128xf32> to vector<128x128xf32>
    %103 = arith.addf %100, %102 : vector<128x128xf32>
    %104 = vector.shape_cast %1 : vector<8x16x128xbf16> to vector<128x128xbf16>
    %105 = arith.extf %104 : vector<128x128xbf16> to vector<128x128xf32>
    %106 = arith.addf %103, %105 : vector<128x128xf32>
    %cst_74 = arith.constant 0.000000e+00 : f32
    %107 = vector.broadcast %cst_74 : f32 to vector<128x128xf32>
    %108 = arith.maximumf %106, %107 : vector<128x128xf32>
    %109 = vector.shape_cast %108 : vector<128x128xf32> to vector<8x16x128xf32>
    %c0_75 = arith.constant 0 : index
    %c0_76 = arith.constant 0 : index
    %c0_77 = arith.constant 0 : index
    %c0_78 = arith.constant 0 : index
    %110 = vector.load %arg14[%c0_75, %c0_76, %c0_77, %c0_78] : memref<1x8x16x128xf32, #tpu.memory_space<vmem>>, vector<1x8x16x128xf32>
    %111 = vector.shape_cast %110 : vector<1x8x16x128xf32> to vector<8x16x128xf32>
    %112 = vector.shape_cast %109 : vector<8x16x128xf32> to vector<1x8x16x128xf32>
    tpu.vector_store %arg14[%c0_75, %c0_76, %c0_77, %c0_78], %112 {strides = array<i32>} : memref<1x8x16x128xf32, #tpu.memory_space<vmem>>, vector<1x8x16x128xf32>,
    return
  }
  func.func @transform_0(%arg0: i32, %arg1: i32) -> (i32, i32, i32, i32) {
    %c0_i32 = arith.constant 0 : i32
    %c0_i32_0 = arith.constant 0 : i32
    %c0_i32_1 = arith.constant 0 : i32
    return %arg0, %arg1, %c0_i32, %c0_i32_0 : i32, i32, i32, i32
  }
  func.func @transform_1(%arg0: i32, %arg1: i32) -> (i32, i32, i32, i32) {
    %c8_i32 = arith.constant 8 : i32
    %0 = arith.muli %arg1, %c8_i32 : i32
    %c1_i32 = arith.constant 1 : i32
    %1 = arith.subi %0, %c1_i32 : i32
    %c0_i32 = arith.constant 0 : i32
    %2 = arith.maxsi %1, %c0_i32 : i32
    %c0_i32_0 = arith.constant 0 : i32
    %c0_i32_1 = arith.constant 0 : i32
    %c0_i32_2 = arith.constant 0 : i32
    return %arg0, %2, %c0_i32_0, %c0_i32_1 : i32, i32, i32, i32
  }
  func.func @transform_2(%arg0: i32, %arg1: i32) -> (i32, i32, i32, i32) {
    %c1_i32 = arith.constant 1 : i32
    %0 = arith.addi %arg1, %c1_i32 : i32
    %c8_i32 = arith.constant 8 : i32
    %1 = arith.muli %0, %c8_i32 : i32
    %c15_i32 = arith.constant 15 : i32
    %2 = arith.minsi %1, %c15_i32 : i32
    %c0_i32 = arith.constant 0 : i32
    %c0_i32_0 = arith.constant 0 : i32
    %c0_i32_1 = arith.constant 0 : i32
    return %arg0, %2, %c0_i32, %c0_i32_0 : i32, i32, i32, i32
  }
  func.func @transform_3(%arg0: i32, %arg1: i32) -> (i32, i32) {
    %c0_i32 = arith.constant 0 : i32
    %c0_i32_0 = arith.constant 0 : i32
    %c0_i32_1 = arith.constant 0 : i32
    return %c0_i32, %c0_i32_0 : i32, i32
  }
  func.func @transform_4(%arg0: i32, %arg1: i32) -> (i32, i32) {
    %c0_i32 = arith.constant 0 : i32
    %c0_i32_0 = arith.constant 0 : i32
    %c0_i32_1 = arith.constant 0 : i32
    return %c0_i32, %c0_i32_0 : i32, i32
  }
  func.func @transform_5(%arg0: i32, %arg1: i32) -> (i32, i32) {
    %c0_i32 = arith.constant 0 : i32
    %c0_i32_0 = arith.constant 0 : i32
    %c0_i32_1 = arith.constant 0 : i32
    return %c0_i32, %c0_i32_0 : i32, i32
  }
  func.func @transform_6(%arg0: i32, %arg1: i32) -> (i32, i32, i32) {
    %c0_i32 = arith.constant 0 : i32
    %c0_i32_0 = arith.constant 0 : i32
    %c0_i32_1 = arith.constant 0 : i32
    %c0_i32_2 = arith.constant 0 : i32
    return %c0_i32, %c0_i32_0, %c0_i32_1 : i32, i32, i32
  }
  func.func @transform_7(%arg0: i32, %arg1: i32) -> (i32, i32) {
    %c0_i32 = arith.constant 0 : i32
    %c0_i32_0 = arith.constant 0 : i32
    %c0_i32_1 = arith.constant 0 : i32
    return %c0_i32, %c0_i32_0 : i32, i32
  }
  func.func @transform_8(%arg0: i32, %arg1: i32) -> (i32, i32) {
    %c0_i32 = arith.constant 0 : i32
    %c0_i32_0 = arith.constant 0 : i32
    %c0_i32_1 = arith.constant 0 : i32
    return %c0_i32, %c0_i32_0 : i32, i32
  }
  func.func @transform_9(%arg0: i32, %arg1: i32) -> (i32, i32) {
    %c0_i32 = arith.constant 0 : i32
    %c0_i32_0 = arith.constant 0 : i32
    %c0_i32_1 = arith.constant 0 : i32
    return %c0_i32, %c0_i32_0 : i32, i32
  }
  func.func @transform_10(%arg0: i32, %arg1: i32) -> (i32, i32) {
    %c0_i32 = arith.constant 0 : i32
    %c0_i32_0 = arith.constant 0 : i32
    %c0_i32_1 = arith.constant 0 : i32
    return %c0_i32, %c0_i32_0 : i32, i32
  }
  func.func @transform_11(%arg0: i32, %arg1: i32) -> (i32, i32) {
    %c0_i32 = arith.constant 0 : i32
    %c0_i32_0 = arith.constant 0 : i32
    %c0_i32_1 = arith.constant 0 : i32
    return %c0_i32, %c0_i32_0 : i32, i32
  }
  func.func @transform_12(%arg0: i32, %arg1: i32) -> (i32, i32, i32, i32) {
    %c0_i32 = arith.constant 0 : i32
    %c0_i32_0 = arith.constant 0 : i32
    %c0_i32_1 = arith.constant 0 : i32
    return %arg0, %arg1, %c0_i32, %c0_i32_0 : i32, i32, i32, i32
  }
}

module attributes {stable_mosaic.version = 11 : i64} {
  func.func @_bottleneck_kernel(%arg0: i32, %arg1: i32, %arg2: memref<1x8x16x128xbf16, #tpu.memory_space<vmem>>, %arg3: memref<1x1x16x128xbf16, #tpu.memory_space<vmem>>, %arg4: memref<1x1x16x128xbf16, #tpu.memory_space<vmem>>, %arg5: memref<128x128xbf16, #tpu.memory_space<vmem>>, %arg6: memref<1x128xf32, #tpu.memory_space<vmem>>, %arg7: memref<1x128xf32, #tpu.memory_space<vmem>>, %arg8: memref<9x128x128xbf16, #tpu.memory_space<vmem>>, %arg9: memref<1x128xf32, #tpu.memory_space<vmem>>, %arg10: memref<1x128xf32, #tpu.memory_space<vmem>>, %arg11: memref<128x128xbf16, #tpu.memory_space<vmem>>, %arg12: memref<1x128xf32, #tpu.memory_space<vmem>>, %arg13: memref<1x128xf32, #tpu.memory_space<vmem>>, %arg14: memref<1x8x16x128xf32, #tpu.memory_space<vmem>>, %arg15: memref<10x18x128xbf16, #tpu.memory_space<vmem>>) attributes {dimension_semantics = [#tpu.dimension_semantics<parallel>, #tpu.dimension_semantics<parallel>], iteration_bounds = array<i64: 2, 2>, scalar_prefetch = 0 : i64, scratch_operands = 1 : i64, tpu.core_type = #tpu.core_type<tc>, window_params = [{transform_indices = @transform_0, window_bounds = array<i64: 1, 8, 16, 128>}, {transform_indices = @transform_1, window_bounds = array<i64: 1, 1, 16, 128>}, {transform_indices = @transform_2, window_bounds = array<i64: 1, 1, 16, 128>}, {pipeline_mode = #tpu.pipeline_mode<synchronous>, transform_indices = @transform_3, window_bounds = array<i64: 128, 128>}, {pipeline_mode = #tpu.pipeline_mode<synchronous>, transform_indices = @transform_4, window_bounds = array<i64: 1, 128>}, {pipeline_mode = #tpu.pipeline_mode<synchronous>, transform_indices = @transform_5, window_bounds = array<i64: 1, 128>}, {pipeline_mode = #tpu.pipeline_mode<synchronous>, transform_indices = @transform_6, window_bounds = array<i64: 9, 128, 128>}, {pipeline_mode = #tpu.pipeline_mode<synchronous>, transform_indices = @transform_7, window_bounds = array<i64: 1, 128>}, {pipeline_mode = #tpu.pipeline_mode<synchronous>, transform_indices = @transform_8, window_bounds = array<i64: 1, 128>}, {pipeline_mode = #tpu.pipeline_mode<synchronous>, transform_indices = @transform_9, window_bounds = array<i64: 128, 128>}, {pipeline_mode = #tpu.pipeline_mode<synchronous>, transform_indices = @transform_10, window_bounds = array<i64: 1, 128>}, {pipeline_mode = #tpu.pipeline_mode<synchronous>, transform_indices = @transform_11, window_bounds = array<i64: 1, 128>}, {transform_indices = @transform_12, window_bounds = array<i64: 1, 8, 16, 128>}]} {
    %c0 = arith.constant 0 : index
    %c0_0 = arith.constant 0 : index
    %c0_1 = arith.constant 0 : index
    %c0_2 = arith.constant 0 : index
    %0 = vector.load %arg2[%c0, %c0_0, %c0_1, %c0_2] : memref<1x8x16x128xbf16, #tpu.memory_space<vmem>>, vector<1x8x16x128xbf16>
    %1 = vector.shape_cast %0 : vector<1x8x16x128xbf16> to vector<8x16x128xbf16>
    %c0_3 = arith.constant 0 : index
    %c0_4 = arith.constant 0 : index
    %2 = vector.load %arg5[%c0_3, %c0_4] : memref<128x128xbf16, #tpu.memory_space<vmem>>, vector<128x128xbf16>
    %c0_5 = arith.constant 0 : index
    %c0_6 = arith.constant 0 : index
    %3 = vector.load %arg6[%c0_5, %c0_6] : memref<1x128xf32, #tpu.memory_space<vmem>>, vector<1x128xf32>
    %c0_7 = arith.constant 0 : index
    %c0_8 = arith.constant 0 : index
    %4 = vector.load %arg7[%c0_7, %c0_8] : memref<1x128xf32, #tpu.memory_space<vmem>>, vector<1x128xf32>
    %cst = arith.constant 0.000000e+00 : bf16
    %5 = vector.broadcast %cst : bf16 to vector<10x1x128xbf16>
    %c0_9 = arith.constant 0 : index
    %c0_10 = arith.constant 0 : index
    %c0_11 = arith.constant 0 : index
    %6 = vector.load %arg15[%c0_9, %c0_10, %c0_11] : memref<10x18x128xbf16, #tpu.memory_space<vmem>>, vector<10x1x128xbf16>
    tpu.vector_store %arg15[%c0_9, %c0_10, %c0_11], %5 {strides = array<i32>} : memref<10x18x128xbf16, #tpu.memory_space<vmem>>, vector<10x1x128xbf16>,
    %c0_12 = arith.constant 0 : index
    %c17 = arith.constant 17 : index
    %c0_13 = arith.constant 0 : index
    %7 = vector.load %arg15[%c0_12, %c17, %c0_13] : memref<10x18x128xbf16, #tpu.memory_space<vmem>>, vector<10x1x128xbf16>
    tpu.vector_store %arg15[%c0_12, %c17, %c0_13], %5 {strides = array<i32>} : memref<10x18x128xbf16, #tpu.memory_space<vmem>>, vector<10x1x128xbf16>,
    %8 = vector.shape_cast %1 : vector<8x16x128xbf16> to vector<128x128xbf16>
    %cst_14 = arith.constant dense<0.000000e+00> : vector<128x128xf32>
    %9 = tpu.matmul %8, %2, %cst_14 {dimension_numbers = #tpu.dot_dimension_numbers<[1], [0], [0], [1], [0, 0, 1, 1], [], []>} : vector<128x128xbf16>, vector<128x128xbf16>, vector<128x128xf32> -> vector<128x128xf32>
    %10 = vector.broadcast %3 : vector<1x128xf32> to vector<128x128xf32>
    %11 = arith.mulf %9, %10 : vector<128x128xf32>
    %12 = vector.broadcast %4 : vector<1x128xf32> to vector<128x128xf32>
    %13 = arith.addf %11, %12 : vector<128x128xf32>
    %cst_15 = arith.constant 0.000000e+00 : f32
    %14 = vector.broadcast %cst_15 : f32 to vector<128x128xf32>
    %15 = arith.maximumf %13, %14 : vector<128x128xf32>
    %16 = arith.truncf %15 : vector<128x128xf32> to vector<128x128xbf16>
    %17 = vector.shape_cast %16 : vector<128x128xbf16> to vector<8x16x128xbf16>
    %c1 = arith.constant 1 : index
    %c1_16 = arith.constant 1 : index
    %c0_17 = arith.constant 0 : index
    %18 = vector.load %arg15[%c1, %c1_16, %c0_17] : memref<10x18x128xbf16, #tpu.memory_space<vmem>>, vector<8x16x128xbf16>
    tpu.vector_store %arg15[%c1, %c1_16, %c0_17], %17 {strides = array<i32>} : memref<10x18x128xbf16, #tpu.memory_space<vmem>>, vector<8x16x128xbf16>,
    %c0_i32 = arith.constant 0 : i32
    %19 = arith.cmpi sgt, %arg1, %c0_i32 : i32
    %20 = arith.extui %19 : i1 to i32
    %c0_i32_18 = arith.constant 0 : i32
    %21 = arith.cmpi ne, %20, %c0_i32_18 : i32
    scf.if %21 {
      %c0_79 = arith.constant 0 : index
      %c0_80 = arith.constant 0 : index
      %c0_81 = arith.constant 0 : index
      %c0_82 = arith.constant 0 : index
      %113 = vector.load %arg3[%c0_79, %c0_80, %c0_81, %c0_82] : memref<1x1x16x128xbf16, #tpu.memory_space<vmem>>, vector<1x1x16x128xbf16>
      %114 = vector.shape_cast %113 : vector<1x1x16x128xbf16> to vector<1x16x128xbf16>
      %115 = vector.shape_cast %114 : vector<1x16x128xbf16> to vector<16x128xbf16>
      %cst_83 = arith.constant dense<0.000000e+00> : vector<16x128xf32>
      %116 = tpu.matmul %115, %2, %cst_83 {dimension_numbers = #tpu.dot_dimension_numbers<[1], [0], [0], [1], [0, 0, 1, 1], [], []>} : vector<16x128xbf16>, vector<128x128xbf16>, vector<16x128xf32> -> vector<16x128xf32>
      %117 = vector.broadcast %3 : vector<1x128xf32> to vector<16x128xf32>
      %118 = arith.mulf %116, %117 : vector<16x128xf32>
      %119 = vector.broadcast %4 : vector<1x128xf32> to vector<16x128xf32>
      %120 = arith.addf %118, %119 : vector<16x128xf32>
      %cst_84 = arith.constant 0.000000e+00 : f32
      %121 = vector.broadcast %cst_84 : f32 to vector<16x128xf32>
      %122 = arith.maximumf %120, %121 : vector<16x128xf32>
      %123 = arith.truncf %122 : vector<16x128xf32> to vector<16x128xbf16>
      %124 = vector.shape_cast %123 : vector<16x128xbf16> to vector<1x16x128xbf16>
      %c0_85 = arith.constant 0 : index
      %c1_86 = arith.constant 1 : index
      %c0_87 = arith.constant 0 : index
      %125 = vector.load %arg15[%c0_85, %c1_86, %c0_87] : memref<10x18x128xbf16, #tpu.memory_space<vmem>>, vector<1x16x128xbf16>
      tpu.vector_store %arg15[%c0_85, %c1_86, %c0_87], %124 {strides = array<i32>} : memref<10x18x128xbf16, #tpu.memory_space<vmem>>, vector<1x16x128xbf16>,
    } else {
    }
    %c0_i32_19 = arith.constant 0 : i32
    %22 = arith.cmpi eq, %arg1, %c0_i32_19 : i32
    %23 = arith.extui %22 : i1 to i32
    %c0_i32_20 = arith.constant 0 : i32
    %24 = arith.cmpi ne, %23, %c0_i32_20 : i32
    scf.if %24 {
      %cst_79 = arith.constant 0.000000e+00 : bf16
      %113 = vector.broadcast %cst_79 : bf16 to vector<1x16x128xbf16>
      %c0_80 = arith.constant 0 : index
      %c1_81 = arith.constant 1 : index
      %c0_82 = arith.constant 0 : index
      %114 = vector.load %arg15[%c0_80, %c1_81, %c0_82] : memref<10x18x128xbf16, #tpu.memory_space<vmem>>, vector<1x16x128xbf16>
      tpu.vector_store %arg15[%c0_80, %c1_81, %c0_82], %113 {strides = array<i32>} : memref<10x18x128xbf16, #tpu.memory_space<vmem>>, vector<1x16x128xbf16>,
    } else {
    }
    %c1_i32 = arith.constant 1 : i32
    %25 = arith.cmpi slt, %arg1, %c1_i32 : i32
    %26 = arith.extui %25 : i1 to i32
    %c0_i32_21 = arith.constant 0 : i32
    %27 = arith.cmpi ne, %26, %c0_i32_21 : i32
    scf.if %27 {
      %c0_79 = arith.constant 0 : index
      %c0_80 = arith.constant 0 : index
      %c0_81 = arith.constant 0 : index
      %c0_82 = arith.constant 0 : index
      %113 = vector.load %arg4[%c0_79, %c0_80, %c0_81, %c0_82] : memref<1x1x16x128xbf16, #tpu.memory_space<vmem>>, vector<1x1x16x128xbf16>
      %114 = vector.shape_cast %113 : vector<1x1x16x128xbf16> to vector<1x16x128xbf16>
      %115 = vector.shape_cast %114 : vector<1x16x128xbf16> to vector<16x128xbf16>
      %cst_83 = arith.constant dense<0.000000e+00> : vector<16x128xf32>
      %116 = tpu.matmul %115, %2, %cst_83 {dimension_numbers = #tpu.dot_dimension_numbers<[1], [0], [0], [1], [0, 0, 1, 1], [], []>} : vector<16x128xbf16>, vector<128x128xbf16>, vector<16x128xf32> -> vector<16x128xf32>
      %117 = vector.broadcast %3 : vector<1x128xf32> to vector<16x128xf32>
      %118 = arith.mulf %116, %117 : vector<16x128xf32>
      %119 = vector.broadcast %4 : vector<1x128xf32> to vector<16x128xf32>
      %120 = arith.addf %118, %119 : vector<16x128xf32>
      %cst_84 = arith.constant 0.000000e+00 : f32
      %121 = vector.broadcast %cst_84 : f32 to vector<16x128xf32>
      %122 = arith.maximumf %120, %121 : vector<16x128xf32>
      %123 = arith.truncf %122 : vector<16x128xf32> to vector<16x128xbf16>
      %124 = vector.shape_cast %123 : vector<16x128xbf16> to vector<1x16x128xbf16>
      %c9 = arith.constant 9 : index
      %c1_85 = arith.constant 1 : index
      %c0_86 = arith.constant 0 : index
      %125 = vector.load %arg15[%c9, %c1_85, %c0_86] : memref<10x18x128xbf16, #tpu.memory_space<vmem>>, vector<1x16x128xbf16>
      tpu.vector_store %arg15[%c9, %c1_85, %c0_86], %124 {strides = array<i32>} : memref<10x18x128xbf16, #tpu.memory_space<vmem>>, vector<1x16x128xbf16>,
    } else {
    }
    %c1_i32_22 = arith.constant 1 : i32
    %28 = arith.cmpi eq, %arg1, %c1_i32_22 : i32
    %29 = arith.extui %28 : i1 to i32
    %c0_i32_23 = arith.constant 0 : i32
    %30 = arith.cmpi ne, %29, %c0_i32_23 : i32
    scf.if %30 {
      %cst_79 = arith.constant 0.000000e+00 : bf16
      %113 = vector.broadcast %cst_79 : bf16 to vector<1x16x128xbf16>
      %c9 = arith.constant 9 : index
      %c1_80 = arith.constant 1 : index
      %c0_81 = arith.constant 0 : index
      %114 = vector.load %arg15[%c9, %c1_80, %c0_81] : memref<10x18x128xbf16, #tpu.memory_space<vmem>>, vector<1x16x128xbf16>
      tpu.vector_store %arg15[%c9, %c1_80, %c0_81], %113 {strides = array<i32>} : memref<10x18x128xbf16, #tpu.memory_space<vmem>>, vector<1x16x128xbf16>,
    } else {
    }
    %c0_24 = arith.constant 0 : index
    %c0_25 = arith.constant 0 : index
    %c0_26 = arith.constant 0 : index
    %31 = vector.load %arg15[%c0_24, %c0_25, %c0_26] : memref<10x18x128xbf16, #tpu.memory_space<vmem>>, vector<10x16x128xbf16>
    %c0_27 = arith.constant 0 : index
    %c1_28 = arith.constant 1 : index
    %c0_29 = arith.constant 0 : index
    %32 = vector.load %arg15[%c0_27, %c1_28, %c0_29] : memref<10x18x128xbf16, #tpu.memory_space<vmem>>, vector<10x16x128xbf16>
    %c0_30 = arith.constant 0 : index
    %c2 = arith.constant 2 : index
    %c0_31 = arith.constant 0 : index
    %33 = vector.load %arg15[%c0_30, %c2, %c0_31] : memref<10x18x128xbf16, #tpu.memory_space<vmem>>, vector<10x16x128xbf16>
    %34 = vector.extract_strided_slice %31 {offsets = [0, 0, 0], sizes = [8, 16, 128], strides = [1, 1, 1]} : vector<10x16x128xbf16> to vector<8x16x128xbf16>
    %35 = vector.shape_cast %34 : vector<8x16x128xbf16> to vector<128x128xbf16>
    %c0_32 = arith.constant 0 : index
    %c0_33 = arith.constant 0 : index
    %c0_34 = arith.constant 0 : index
    %36 = vector.load %arg8[%c0_32, %c0_33, %c0_34] : memref<9x128x128xbf16, #tpu.memory_space<vmem>>, vector<1x128x128xbf16>
    %37 = vector.shape_cast %36 : vector<1x128x128xbf16> to vector<128x128xbf16>
    %cst_35 = arith.constant dense<0.000000e+00> : vector<128x128xf32>
    %38 = tpu.matmul %35, %37, %cst_35 {dimension_numbers = #tpu.dot_dimension_numbers<[1], [0], [0], [1], [0, 0, 1, 1], [], []>} : vector<128x128xbf16>, vector<128x128xbf16>, vector<128x128xf32> -> vector<128x128xf32>
    %39 = vector.extract_strided_slice %32 {offsets = [0, 0, 0], sizes = [8, 16, 128], strides = [1, 1, 1]} : vector<10x16x128xbf16> to vector<8x16x128xbf16>
    %40 = vector.shape_cast %39 : vector<8x16x128xbf16> to vector<128x128xbf16>
    %c1_36 = arith.constant 1 : index
    %c0_37 = arith.constant 0 : index
    %c0_38 = arith.constant 0 : index
    %41 = vector.load %arg8[%c1_36, %c0_37, %c0_38] : memref<9x128x128xbf16, #tpu.memory_space<vmem>>, vector<1x128x128xbf16>
    %42 = vector.shape_cast %41 : vector<1x128x128xbf16> to vector<128x128xbf16>
    %cst_39 = arith.constant dense<0.000000e+00> : vector<128x128xf32>
    %43 = tpu.matmul %40, %42, %cst_39 {dimension_numbers = #tpu.dot_dimension_numbers<[1], [0], [0], [1], [0, 0, 1, 1], [], []>} : vector<128x128xbf16>, vector<128x128xbf16>, vector<128x128xf32> -> vector<128x128xf32>
    %44 = arith.addf %38, %43 : vector<128x128xf32>
    %45 = vector.extract_strided_slice %33 {offsets = [0, 0, 0], sizes = [8, 16, 128], strides = [1, 1, 1]} : vector<10x16x128xbf16> to vector<8x16x128xbf16>
    %46 = vector.shape_cast %45 : vector<8x16x128xbf16> to vector<128x128xbf16>
    %c2_40 = arith.constant 2 : index
    %c0_41 = arith.constant 0 : index
    %c0_42 = arith.constant 0 : index
    %47 = vector.load %arg8[%c2_40, %c0_41, %c0_42] : memref<9x128x128xbf16, #tpu.memory_space<vmem>>, vector<1x128x128xbf16>
    %48 = vector.shape_cast %47 : vector<1x128x128xbf16> to vector<128x128xbf16>
    %cst_43 = arith.constant dense<0.000000e+00> : vector<128x128xf32>
    %49 = tpu.matmul %46, %48, %cst_43 {dimension_numbers = #tpu.dot_dimension_numbers<[1], [0], [0], [1], [0, 0, 1, 1], [], []>} : vector<128x128xbf16>, vector<128x128xbf16>, vector<128x128xf32> -> vector<128x128xf32>
    %50 = arith.addf %44, %49 : vector<128x128xf32>
    %51 = vector.extract_strided_slice %31 {offsets = [1, 0, 0], sizes = [8, 16, 128], strides = [1, 1, 1]} : vector<10x16x128xbf16> to vector<8x16x128xbf16>
    %52 = vector.shape_cast %51 : vector<8x16x128xbf16> to vector<128x128xbf16>
    %c3 = arith.constant 3 : index
    %c0_44 = arith.constant 0 : index
    %c0_45 = arith.constant 0 : index
    %53 = vector.load %arg8[%c3, %c0_44, %c0_45] : memref<9x128x128xbf16, #tpu.memory_space<vmem>>, vector<1x128x128xbf16>
    %54 = vector.shape_cast %53 : vector<1x128x128xbf16> to vector<128x128xbf16>
    %cst_46 = arith.constant dense<0.000000e+00> : vector<128x128xf32>
    %55 = tpu.matmul %52, %54, %cst_46 {dimension_numbers = #tpu.dot_dimension_numbers<[1], [0], [0], [1], [0, 0, 1, 1], [], []>} : vector<128x128xbf16>, vector<128x128xbf16>, vector<128x128xf32> -> vector<128x128xf32>
    %56 = arith.addf %50, %55 : vector<128x128xf32>
    %57 = vector.extract_strided_slice %32 {offsets = [1, 0, 0], sizes = [8, 16, 128], strides = [1, 1, 1]} : vector<10x16x128xbf16> to vector<8x16x128xbf16>
    %58 = vector.shape_cast %57 : vector<8x16x128xbf16> to vector<128x128xbf16>
    %c4 = arith.constant 4 : index
    %c0_47 = arith.constant 0 : index
    %c0_48 = arith.constant 0 : index
    %59 = vector.load %arg8[%c4, %c0_47, %c0_48] : memref<9x128x128xbf16, #tpu.memory_space<vmem>>, vector<1x128x128xbf16>
    %60 = vector.shape_cast %59 : vector<1x128x128xbf16> to vector<128x128xbf16>
    %cst_49 = arith.constant dense<0.000000e+00> : vector<128x128xf32>
    %61 = tpu.matmul %58, %60, %cst_49 {dimension_numbers = #tpu.dot_dimension_numbers<[1], [0], [0], [1], [0, 0, 1, 1], [], []>} : vector<128x128xbf16>, vector<128x128xbf16>, vector<128x128xf32> -> vector<128x128xf32>
    %62 = arith.addf %56, %61 : vector<128x128xf32>
    %63 = vector.extract_strided_slice %33 {offsets = [1, 0, 0], sizes = [8, 16, 128], strides = [1, 1, 1]} : vector<10x16x128xbf16> to vector<8x16x128xbf16>
    %64 = vector.shape_cast %63 : vector<8x16x128xbf16> to vector<128x128xbf16>
    %c5 = arith.constant 5 : index
    %c0_50 = arith.constant 0 : index
    %c0_51 = arith.constant 0 : index
    %65 = vector.load %arg8[%c5, %c0_50, %c0_51] : memref<9x128x128xbf16, #tpu.memory_space<vmem>>, vector<1x128x128xbf16>
    %66 = vector.shape_cast %65 : vector<1x128x128xbf16> to vector<128x128xbf16>
    %cst_52 = arith.constant dense<0.000000e+00> : vector<128x128xf32>
    %67 = tpu.matmul %64, %66, %cst_52 {dimension_numbers = #tpu.dot_dimension_numbers<[1], [0], [0], [1], [0, 0, 1, 1], [], []>} : vector<128x128xbf16>, vector<128x128xbf16>, vector<128x128xf32> -> vector<128x128xf32>
    %68 = arith.addf %62, %67 : vector<128x128xf32>
    %69 = vector.extract_strided_slice %31 {offsets = [2, 0, 0], sizes = [8, 16, 128], strides = [1, 1, 1]} : vector<10x16x128xbf16> to vector<8x16x128xbf16>
    %70 = vector.shape_cast %69 : vector<8x16x128xbf16> to vector<128x128xbf16>
    %c6 = arith.constant 6 : index
    %c0_53 = arith.constant 0 : index
    %c0_54 = arith.constant 0 : index
    %71 = vector.load %arg8[%c6, %c0_53, %c0_54] : memref<9x128x128xbf16, #tpu.memory_space<vmem>>, vector<1x128x128xbf16>
    %72 = vector.shape_cast %71 : vector<1x128x128xbf16> to vector<128x128xbf16>
    %cst_55 = arith.constant dense<0.000000e+00> : vector<128x128xf32>
    %73 = tpu.matmul %70, %72, %cst_55 {dimension_numbers = #tpu.dot_dimension_numbers<[1], [0], [0], [1], [0, 0, 1, 1], [], []>} : vector<128x128xbf16>, vector<128x128xbf16>, vector<128x128xf32> -> vector<128x128xf32>
    %74 = arith.addf %68, %73 : vector<128x128xf32>
    %75 = vector.extract_strided_slice %32 {offsets = [2, 0, 0], sizes = [8, 16, 128], strides = [1, 1, 1]} : vector<10x16x128xbf16> to vector<8x16x128xbf16>
    %76 = vector.shape_cast %75 : vector<8x16x128xbf16> to vector<128x128xbf16>
    %c7 = arith.constant 7 : index
    %c0_56 = arith.constant 0 : index
    %c0_57 = arith.constant 0 : index
    %77 = vector.load %arg8[%c7, %c0_56, %c0_57] : memref<9x128x128xbf16, #tpu.memory_space<vmem>>, vector<1x128x128xbf16>
    %78 = vector.shape_cast %77 : vector<1x128x128xbf16> to vector<128x128xbf16>
    %cst_58 = arith.constant dense<0.000000e+00> : vector<128x128xf32>
    %79 = tpu.matmul %76, %78, %cst_58 {dimension_numbers = #tpu.dot_dimension_numbers<[1], [0], [0], [1], [0, 0, 1, 1], [], []>} : vector<128x128xbf16>, vector<128x128xbf16>, vector<128x128xf32> -> vector<128x128xf32>
    %80 = arith.addf %74, %79 : vector<128x128xf32>
    %81 = vector.extract_strided_slice %33 {offsets = [2, 0, 0], sizes = [8, 16, 128], strides = [1, 1, 1]} : vector<10x16x128xbf16> to vector<8x16x128xbf16>
    %82 = vector.shape_cast %81 : vector<8x16x128xbf16> to vector<128x128xbf16>
    %c8 = arith.constant 8 : index
    %c0_59 = arith.constant 0 : index
    %c0_60 = arith.constant 0 : index
    %83 = vector.load %arg8[%c8, %c0_59, %c0_60] : memref<9x128x128xbf16, #tpu.memory_space<vmem>>, vector<1x128x128xbf16>
    %84 = vector.shape_cast %83 : vector<1x128x128xbf16> to vector<128x128xbf16>
    %cst_61 = arith.constant dense<0.000000e+00> : vector<128x128xf32>
    %85 = tpu.matmul %82, %84, %cst_61 {dimension_numbers = #tpu.dot_dimension_numbers<[1], [0], [0], [1], [0, 0, 1, 1], [], []>} : vector<128x128xbf16>, vector<128x128xbf16>, vector<128x128xf32> -> vector<128x128xf32>
    %86 = arith.addf %80, %85 : vector<128x128xf32>
    %c0_62 = arith.constant 0 : index
    %c0_63 = arith.constant 0 : index
    %87 = vector.load %arg9[%c0_62, %c0_63] : memref<1x128xf32, #tpu.memory_space<vmem>>, vector<1x128xf32>
    %88 = vector.broadcast %87 : vector<1x128xf32> to vector<128x128xf32>
    %89 = arith.mulf %86, %88 : vector<128x128xf32>
    %c0_64 = arith.constant 0 : index
    %c0_65 = arith.constant 0 : index
    %90 = vector.load %arg10[%c0_64, %c0_65] : memref<1x128xf32, #tpu.memory_space<vmem>>, vector<1x128xf32>
    %91 = vector.broadcast %90 : vector<1x128xf32> to vector<128x128xf32>
    %92 = arith.addf %89, %91 : vector<128x128xf32>
    %cst_66 = arith.constant 0.000000e+00 : f32
    %93 = vector.broadcast %cst_66 : f32 to vector<128x128xf32>
    %94 = arith.maximumf %92, %93 : vector<128x128xf32>
    %95 = arith.truncf %94 : vector<128x128xf32> to vector<128x128xbf16>
    %c0_67 = arith.constant 0 : index
    %c0_68 = arith.constant 0 : index
    %96 = vector.load %arg11[%c0_67, %c0_68] : memref<128x128xbf16, #tpu.memory_space<vmem>>, vector<128x128xbf16>
    %cst_69 = arith.constant dense<0.000000e+00> : vector<128x128xf32>
    %97 = tpu.matmul %95, %96, %cst_69 {dimension_numbers = #tpu.dot_dimension_numbers<[1], [0], [0], [1], [0, 0, 1, 1], [], []>} : vector<128x128xbf16>, vector<128x128xbf16>, vector<128x128xf32> -> vector<128x128xf32>
    %c0_70 = arith.constant 0 : index
    %c0_71 = arith.constant 0 : index
    %98 = vector.load %arg12[%c0_70, %c0_71] : memref<1x128xf32, #tpu.memory_space<vmem>>, vector<1x128xf32>
    %99 = vector.broadcast %98 : vector<1x128xf32> to vector<128x128xf32>
    %100 = arith.mulf %97, %99 : vector<128x128xf32>
    %c0_72 = arith.constant 0 : index
    %c0_73 = arith.constant 0 : index
    %101 = vector.load %arg13[%c0_72, %c0_73] : memref<1x128xf32, #tpu.memory_space<vmem>>, vector<1x128xf32>
    %102 = vector.broadcast %101 : vector<1x128xf32> to vector<128x128xf32>
    %103 = arith.addf %100, %102 : vector<128x128xf32>
    %104 = vector.shape_cast %1 : vector<8x16x128xbf16> to vector<128x128xbf16>
    %105 = arith.extf %104 : vector<128x128xbf16> to vector<128x128xf32>
    %106 = arith.addf %103, %105 : vector<128x128xf32>
    %cst_74 = arith.constant 0.000000e+00 : f32
    %107 = vector.broadcast %cst_74 : f32 to vector<128x128xf32>
    %108 = arith.maximumf %106, %107 : vector<128x128xf32>
    %109 = vector.shape_cast %108 : vector<128x128xf32> to vector<8x16x128xf32>
    %c0_75 = arith.constant 0 : index
    %c0_76 = arith.constant 0 : index
    %c0_77 = arith.constant 0 : index
    %c0_78 = arith.constant 0 : index
    %110 = vector.load %arg14[%c0_75, %c0_76, %c0_77, %c0_78] : memref<1x8x16x128xf32, #tpu.memory_space<vmem>>, vector<1x8x16x128xf32>
    %111 = vector.shape_cast %110 : vector<1x8x16x128xf32> to vector<8x16x128xf32>
    %112 = vector.shape_cast %109 : vector<8x16x128xf32> to vector<1x8x16x128xf32>
    tpu.vector_store %arg14[%c0_75, %c0_76, %c0_77, %c0_78], %112 {strides = array<i32>} : memref<1x8x16x128xf32, #tpu.memory_space<vmem>>, vector<1x8x16x128xf32>,
    return
  }
  func.func @transform_0(%arg0: i32, %arg1: i32) -> (i32, i32, i32, i32) {
    %c0_i32 = arith.constant 0 : i32
    %c0_i32_0 = arith.constant 0 : i32
    %c0_i32_1 = arith.constant 0 : i32
    return %arg0, %arg1, %c0_i32, %c0_i32_0 : i32, i32, i32, i32
  }
  func.func @transform_1(%arg0: i32, %arg1: i32) -> (i32, i32, i32, i32) {
    %c8_i32 = arith.constant 8 : i32
    %0 = arith.muli %arg1, %c8_i32 : i32
    %c1_i32 = arith.constant 1 : i32
    %1 = arith.subi %0, %c1_i32 : i32
    %c0_i32 = arith.constant 0 : i32
    %2 = arith.maxsi %1, %c0_i32 : i32
    %c0_i32_0 = arith.constant 0 : i32
    %c0_i32_1 = arith.constant 0 : i32
    %c0_i32_2 = arith.constant 0 : i32
    return %arg0, %2, %c0_i32_0, %c0_i32_1 : i32, i32, i32, i32
  }
  func.func @transform_2(%arg0: i32, %arg1: i32) -> (i32, i32, i32, i32) {
    %c1_i32 = arith.constant 1 : i32
    %0 = arith.addi %arg1, %c1_i32 : i32
    %c8_i32 = arith.constant 8 : i32
    %1 = arith.muli %0, %c8_i32 : i32
    %c15_i32 = arith.constant 15 : i32
    %2 = arith.minsi %1, %c15_i32 : i32
    %c0_i32 = arith.constant 0 : i32
    %c0_i32_0 = arith.constant 0 : i32
    %c0_i32_1 = arith.constant 0 : i32
    return %arg0, %2, %c0_i32, %c0_i32_0 : i32, i32, i32, i32
  }
  func.func @transform_3(%arg0: i32, %arg1: i32) -> (i32, i32) {
    %c0_i32 = arith.constant 0 : i32
    %c0_i32_0 = arith.constant 0 : i32
    %c0_i32_1 = arith.constant 0 : i32
    return %c0_i32, %c0_i32_0 : i32, i32
  }
  func.func @transform_4(%arg0: i32, %arg1: i32) -> (i32, i32) {
    %c0_i32 = arith.constant 0 : i32
    %c0_i32_0 = arith.constant 0 : i32
    %c0_i32_1 = arith.constant 0 : i32
    return %c0_i32, %c0_i32_0 : i32, i32
  }
  func.func @transform_5(%arg0: i32, %arg1: i32) -> (i32, i32) {
    %c0_i32 = arith.constant 0 : i32
    %c0_i32_0 = arith.constant 0 : i32
    %c0_i32_1 = arith.constant 0 : i32
    return %c0_i32, %c0_i32_0 : i32, i32
  }
  func.func @transform_6(%arg0: i32, %arg1: i32) -> (i32, i32, i32) {
    %c0_i32 = arith.constant 0 : i32
    %c0_i32_0 = arith.constant 0 : i32
    %c0_i32_1 = arith.constant 0 : i32
    %c0_i32_2 = arith.constant 0 : i32
    return %c0_i32, %c0_i32_0, %c0_i32_1 : i32, i32, i32
  }
  func.func @transform_7(%arg0: i32, %arg1: i32) -> (i32, i32) {
    %c0_i32 = arith.constant 0 : i32
    %c0_i32_0 = arith.constant 0 : i32
    %c0_i32_1 = arith.constant 0 : i32
    return %c0_i32, %c0_i32_0 : i32, i32
  }
  func.func @transform_8(%arg0: i32, %arg1: i32) -> (i32, i32) {
    %c0_i32 = arith.constant 0 : i32
    %c0_i32_0 = arith.constant 0 : i32
    %c0_i32_1 = arith.constant 0 : i32
    return %c0_i32, %c0_i32_0 : i32, i32
  }
  func.func @transform_9(%arg0: i32, %arg1: i32) -> (i32, i32) {
    %c0_i32 = arith.constant 0 : i32
    %c0_i32_0 = arith.constant 0 : i32
    %c0_i32_1 = arith.constant 0 : i32
    return %c0_i32, %c0_i32_0 : i32, i32
  }
  func.func @transform_10(%arg0: i32, %arg1: i32) -> (i32, i32) {
    %c0_i32 = arith.constant 0 : i32
    %c0_i32_0 = arith.constant 0 : i32
    %c0_i32_1 = arith.constant 0 : i32
    return %c0_i32, %c0_i32_0 : i32, i32
  }
  func.func @transform_11(%arg0: i32, %arg1: i32) -> (i32, i32) {
    %c0_i32 = arith.constant 0 : i32
    %c0_i32_0 = arith.constant 0 : i32
    %c0_i32_1 = arith.constant 0 : i32
    return %c0_i32, %c0_i32_0 : i32, i32
  }
  func.func @transform_12(%arg0: i32, %arg1: i32) -> (i32, i32, i32, i32) {
    %c0_i32 = arith.constant 0 : i32
    %c0_i32_0 = arith.constant 0 : i32
    %c0_i32_1 = arith.constant 0 : i32
    return %arg0, %arg1, %c0_i32, %c0_i32_0 : i32, i32, i32, i32
  }
}

</mosaic_0001>

<llo_original>
// kernel: tpu_custom_call.1
$region0: #{tpu_custom_call.1}
  #allocation0 [shape = 'u32[]', space=smem, size = 0x4, offset = 0x4, fixed_abs, tag = 'smem constant byte address 0x4 - core index']
  #allocation1 [shape = 'u32[144,128]{1,0:T(1,128)}', space=vmem, size = 0x12000, scoped, tag = 'internal scratch']
  #allocation2 [shape = 'bf16[10,18,128]{2,1,0:T(8,128)(2,1)}', space=vmem, size = 0xf000, scoped, tag = 'scratch operand']
  %s0 = inlined_call_operand.hbm [shape: bf16[2,16,16,128], index: 0, kind: input, shape index: {}]
  %s1 = inlined_call_operand.hbm [shape: bf16[2,16,16,128], index: 1, kind: input, shape index: {}]
  %s2 = inlined_call_operand.hbm [shape: bf16[2,16,16,128], index: 2, kind: input, shape index: {}]
  %s3 = inlined_call_operand.hbm [shape: bf16[128,128], index: 3, kind: input, shape index: {}]
  %s4 = inlined_call_operand.vmem [shape: f32[1,128], index: 4, kind: input, shape index: {}]
  %s5 = inlined_call_operand.vmem [shape: f32[1,128], index: 5, kind: input, shape index: {}]
  %s6 = inlined_call_operand.hbm [shape: bf16[9,128,128], index: 6, kind: input, shape index: {}]
  %s7 = inlined_call_operand.vmem [shape: f32[1,128], index: 7, kind: input, shape index: {}]
  %s8 = inlined_call_operand.vmem [shape: f32[1,128], index: 8, kind: input, shape index: {}]
  %s9 = inlined_call_operand.hbm [shape: bf16[128,128], index: 9, kind: input, shape index: {}]
  %s10 = inlined_call_operand.vmem [shape: f32[1,128], index: 10, kind: input, shape index: {}]
  %s11 = inlined_call_operand.vmem [shape: f32[1,128], index: 11, kind: input, shape index: {}]
  %s12 = inlined_call_operand.hbm [shape: f32[2,16,16,128], index: 12, kind: output, shape index: {}]
  %s13 = sld [smem:[#allocation0]]
  $region121: #{tpu_custom_call.1} parent=0
    _
  %s15 = ssub.s32 1, %s13
  %s16 = scalar_select 0, %s15, %s13
  $region1: #{tpu_custom_call.1} parent=0
    #allocation3 [shape = 'u8[65536]{0}', space=vmem, size = 0x10000, scoped, tag = 'input window, operand 0']
    #allocation4 [shape = 's32[2]{0}', space=sflag, size = 0x8, scoped, tag = 'scoped memory for tpu_custom_call.1']
    #allocation5 [shape = 's32[2]{0}', space=sflag, size = 0x8, scoped, tag = 'scoped memory for tpu_custom_call.1']
    #allocation6 [shape = 'u8[8192]{0}', space=vmem, size = 0x2000, scoped, tag = 'input window, operand 1']
    #allocation7 [shape = 's32[2]{0}', space=sflag, size = 0x8, scoped, tag = 'scoped memory for tpu_custom_call.1']
    #allocation8 [shape = 'u8[8192]{0}', space=vmem, size = 0x2000, scoped, tag = 'input window, operand 2']
    #allocation9 [shape = 'u8[32768]{0}', space=vmem, size = 0x8000, scoped, tag = 'input window, operand 3, single buffered']
    #allocation10 [shape = 's32[1]{0}', space=sflag, size = 0x4, scoped, tag = 'scoped memory for tpu_custom_call.1']
    #allocation11 [shape = 'u8[294912]{0}', space=vmem, size = 0x48000, scoped, tag = 'input window, operand 6, single buffered']
    #allocation12 [shape = 'u8[32768]{0}', space=vmem, size = 0x8000, scoped, tag = 'input window, operand 9, single buffered']
    #allocation13 [shape = 's32[1]{0}', space=sflag, size = 0x4, scoped, tag = 'scoped memory for tpu_custom_call.1']
    #allocation14 [shape = 'u8[131072]{0}', space=vmem, size = 0x20000, scoped, tag = 'output window, operand 0']
    %17 = vsyncpa [#allocation4], 0
    %s18 = scalar_lea.sflag [#allocation4], 1
    %19 = vsyncpa %s18, 0
    %20 = vsyncpa [#allocation7], 0
    %s21 = scalar_lea.sflag [#allocation7], 1
    %22 = vsyncpa %s21, 0
    %23 = vsyncpa [#allocation10], 0
    %24 = vsyncpa [#allocation13], 0
    %25 = vsyncpa [#allocation5], 0
    %s26 = scalar_lea.sflag [#allocation5], 1
    %27 = vsyncpa %s26, 0
    loop: start=0, step=1, limit=6
    $region2: #{tpu_custom_call.1} parent=1 // loop_pre_header
      _
    $region3: #{tpu_custom_call.1} parent=1 // loop_header
      %s29 = sphi 0, %s33
      %p30 = scmp.ge.s32.totalorder %s29, 6
      %s36 = sphi 0, %s48
      %s37 = sphi 0, %s44
      %s38 = sphi 0, %s36
      %s39 = sphi 0, %s37
      %s40 = sphi 0, %s38
      %s41 = sphi 0, %s39
      %s53 = sphi 0, %s55
      %s56 = sphi 0, %s53
      %s57 = sphi 0, %s56
      %s73 = sphi 0, %s57
      %s89 = sphi 0, %s91
      %s92 = sphi 0, %s89
      %s93 = sphi 0, %s92
      %s109 = sphi 0, %s93
      %s125 = sphi 0, %s127
      %s128 = sphi 0, %s125
      %s129 = sphi 0, %s128
      %s145 = sphi 0, %s129
      %s149 = sphi 0, %s149
      %s151 = sphi 0, %s149
      %s152 = sphi 0, %s151
      %s166 = sphi 0, %s152
      %s170 = sphi 0, %s170
      %s172 = sphi 0, %s170
      %s173 = sphi 0, %s172
      %s187 = sphi 0, %s173
      %s191 = sphi 0, %s191
      %s193 = sphi 0, %s191
      %s194 = sphi 0, %s193
      %s208 = sphi 0, %s194
      %s212 = sphi 0, %s212
      %s214 = sphi 0, %s212
      %s215 = sphi 0, %s214
      %s229 = sphi 0, %s215
      %s233 = sphi 0, %s233
      %s235 = sphi 0, %s233
      %s236 = sphi 0, %s235
      %s250 = sphi 0, %s236
      %s254 = sphi 0, %s254
      %s256 = sphi 0, %s254
      %s257 = sphi 0, %s256
      %s271 = sphi 0, %s257
      %s275 = sphi 0, %s275
      %s277 = sphi 0, %s275
      %s278 = sphi 0, %s277
      %s292 = sphi 0, %s278
      %s296 = sphi 0, %s296
      %s298 = sphi 0, %s296
      %s299 = sphi 0, %s298
      %s313 = sphi 0, %s299
      %s317 = sphi 0, %s317
      %s319 = sphi 0, %s317
      %s320 = sphi 0, %s319
      %s334 = sphi 0, %s320
      %s342 = sphi 0, %s344
      %s345 = sphi 0, %s342
      %s346 = sphi 0, %s345
      %s362 = sphi 0, %s346
    $region4: #{tpu_custom_call.1} parent=1 // loop_header_branch
      %32 = sbr.rel (%p30) target = $region8
    $region5: #{tpu_custom_call.1} parent=1 // loop_body
      %s34 = ssub.s32 %s29, 1
      %s35 = ssub.s32 %s29, 2
      %s42 = sadd.s32 1, %s37
      %p43 = scmp.ge.s32.totalorder %s42, 2
      %s44 = scalar_select %p43, 0, %s42
      %s45 = sadd.s32 1, %s36
      %s46 = scalar_select %p43, %s45, %s36
      %p47 = scmp.ge.s32.totalorder %s46, 2
      %s48 = scalar_select %p47, 0, %s46
      %s49 = ssub.s32 %s36, %s48
      %s50 = ssub.s32 %s37, %s44
      %s51 = sor.u32 %s49, %s50
      %p52 = scmp.eq.s32.totalorder %s51, 0
      %s54 = sadd.s32 %s53, 1
      %s55 = scalar_select %p52, %s53, %s54
      %p58 = pneg %p52
      %p59 = scmp.eq.s32.totalorder %s29, 3
      %p60 = por %p58, %p59
      %p61 = scmp.ne.s32.totalorder %s53, %s56
      %p62 = scmp.eq.s32.totalorder %s29, 0
      %p63 = por %p61, %p62
      %p64 = scmp.ne.s32.totalorder %s53, %s56
      %p65 = scmp.eq.s32.totalorder %s34, 3
      %p66 = por %p64, %p65
      %p67 = scmp.ne.s32.totalorder %s56, %s57
      %p68 = scmp.eq.s32.totalorder %s34, 0
      %p69 = por %p67, %p68
      %p70 = scmp.ne.s32.totalorder %s56, %s57
      %p71 = scmp.eq.s32.totalorder %s35, 3
      %p72 = por %p70, %p71
      %p74 = scmp.ne.s32.totalorder %s57, %s73
      %p75 = scmp.eq.s32.totalorder %s35, 0
      %p76 = por %p74, %p75
      %s77 = smul.u32 %s37, 8
      %s78 = ssub.s32 %s77, 1
      %p79 = scmp.gt.s32.totalorder %s78, 0
      %s80 = scalar_select %p79, %s78, 0
      %s81 = smul.u32 %s44, 8
      %s82 = ssub.s32 %s81, 1
      %p83 = scmp.gt.s32.totalorder %s82, 0
      %s84 = scalar_select %p83, %s82, 0
      %s85 = ssub.s32 %s36, %s48
      %s86 = ssub.s32 %s80, %s84
      %s87 = sor.u32 %s85, %s86
      %p88 = scmp.eq.s32.totalorder %s87, 0
      %s90 = sadd.s32 %s89, 1
      %s91 = scalar_select %p88, %s89, %s90
      %p94 = pneg %p88
      %p95 = scmp.eq.s32.totalorder %s29, 3
      %p96 = por %p94, %p95
      %p97 = scmp.ne.s32.totalorder %s89, %s92
      %p98 = scmp.eq.s32.totalorder %s29, 0
      %p99 = por %p97, %p98
      %p100 = scmp.ne.s32.totalorder %s89, %s92
      %p101 = scmp.eq.s32.totalorder %s34, 3
      %p102 = por %p100, %p101
      %p103 = scmp.ne.s32.totalorder %s92, %s93
      %p104 = scmp.eq.s32.totalorder %s34, 0
      %p105 = por %p103, %p104
      %p106 = scmp.ne.s32.totalorder %s92, %s93
      %p107 = scmp.eq.s32.totalorder %s35, 3
      %p108 = por %p106, %p107
      %p110 = scmp.ne.s32.totalorder %s93, %s109
      %p111 = scmp.eq.s32.totalorder %s35, 0
      %p112 = por %p110, %p111
      %s113 = sadd.s32 %s37, 1
      %s114 = smul.u32 %s113, 8
      %p115 = scmp.lt.s32.totalorder %s114, 15
      %s116 = scalar_select %p115, %s114, 15
      %s117 = sadd.s32 %s44, 1
      %s118 = smul.u32 %s117, 8
      %p119 = scmp.lt.s32.totalorder %s118, 15
      %s120 = scalar_select %p119, %s118, 15
      %s121 = ssub.s32 %s36, %s48
      %s122 = ssub.s32 %s116, %s120
      %s123 = sor.u32 %s121, %s122
      %p124 = scmp.eq.s32.totalorder %s123, 0
      %s126 = sadd.s32 %s125, 1
      %s127 = scalar_select %p124, %s125, %s126
      %p130 = pneg %p124
      %p131 = scmp.eq.s32.totalorder %s29, 3
      %p132 = por %p130, %p131
      %p133 = scmp.ne.s32.totalorder %s125, %s128
      %p134 = scmp.eq.s32.totalorder %s29, 0
      %p135 = por %p133, %p134
      %p136 = scmp.ne.s32.totalorder %s125, %s128
      %p137 = scmp.eq.s32.totalorder %s34, 3
      %p138 = por %p136, %p137
      %p139 = scmp.ne.s32.totalorder %s128, %s129
      %p140 = scmp.eq.s32.totalorder %s34, 0
      %p141 = por %p139, %p140
      %p142 = scmp.ne.s32.totalorder %s128, %s129
      %p143 = scmp.eq.s32.totalorder %s35, 3
      %p144 = por %p142, %p143
      %p146 = scmp.ne.s32.totalorder %s129, %s145
      %p147 = scmp.eq.s32.totalorder %s35, 0
      %p148 = por %p146, %p147
      %s150 = sadd.s32 %s149, 1
      %p153 = scmp.eq.s32.totalorder %s29, 3
      %p154 = scmp.ne.s32.totalorder %s149, %s151
      %p155 = scmp.eq.s32.totalorder %s29, 0
      %p156 = por %p154, %p155
      %p157 = scmp.ne.s32.totalorder %s149, %s151
      %p158 = scmp.eq.s32.totalorder %s34, 3
      %p159 = por %p157, %p158
      %p160 = scmp.ne.s32.totalorder %s151, %s152
      %p161 = scmp.eq.s32.totalorder %s34, 0
      %p162 = por %p160, %p161
      %p163 = scmp.ne.s32.totalorder %s151, %s152
      %p164 = scmp.eq.s32.totalorder %s35, 3
      %p165 = por %p163, %p164
      %p167 = scmp.ne.s32.totalorder %s152, %s166
      %p168 = scmp.eq.s32.totalorder %s35, 0
      %p169 = por %p167, %p168
      %s171 = sadd.s32 %s170, 1
      %p174 = scmp.eq.s32.totalorder %s29, 3
      %p175 = scmp.ne.s32.totalorder %s170, %s172
      %p176 = scmp.eq.s32.totalorder %s29, 0
      %p177 = por %p175, %p176
      %p178 = scmp.ne.s32.totalorder %s170, %s172
      %p179 = scmp.eq.s32.totalorder %s34, 3
      %p180 = por %p178, %p179
      %p181 = scmp.ne.s32.totalorder %s172, %s173
      %p182 = scmp.eq.s32.totalorder %s34, 0
      %p183 = por %p181, %p182
      %p184 = scmp.ne.s32.totalorder %s172, %s173
      %p185 = scmp.eq.s32.totalorder %s35, 3
      %p186 = por %p184, %p185
      %p188 = scmp.ne.s32.totalorder %s173, %s187
      %p189 = scmp.eq.s32.totalorder %s35, 0
      %p190 = por %p188, %p189
      %s192 = sadd.s32 %s191, 1
      %p195 = scmp.eq.s32.totalorder %s29, 3
      %p196 = scmp.ne.s32.totalorder %s191, %s193
      %p197 = scmp.eq.s32.totalorder %s29, 0
      %p198 = por %p196, %p197
      %p199 = scmp.ne.s32.totalorder %s191, %s193
      %p200 = scmp.eq.s32.totalorder %s34, 3
      %p201 = por %p199, %p200
      %p202 = scmp.ne.s32.totalorder %s193, %s194
      %p203 = scmp.eq.s32.totalorder %s34, 0
      %p204 = por %p202, %p203
      %p205 = scmp.ne.s32.totalorder %s193, %s194
      %p206 = scmp.eq.s32.totalorder %s35, 3
      %p207 = por %p205, %p206
      %p209 = scmp.ne.s32.totalorder %s194, %s208
      %p210 = scmp.eq.s32.totalorder %s35, 0
      %p211 = por %p209, %p210
      %s213 = sadd.s32 %s212, 1
      %p216 = scmp.eq.s32.totalorder %s29, 3
      %p217 = scmp.ne.s32.totalorder %s212, %s214
      %p218 = scmp.eq.s32.totalorder %s29, 0
      %p219 = por %p217, %p218
      %p220 = scmp.ne.s32.totalorder %s212, %s214
      %p221 = scmp.eq.s32.totalorder %s34, 3
      %p222 = por %p220, %p221
      %p223 = scmp.ne.s32.totalorder %s214, %s215
      %p224 = scmp.eq.s32.totalorder %s34, 0
      %p225 = por %p223, %p224
      %p226 = scmp.ne.s32.totalorder %s214, %s215
      %p227 = scmp.eq.s32.totalorder %s35, 3
      %p228 = por %p226, %p227
      %p230 = scmp.ne.s32.totalorder %s215, %s229
      %p231 = scmp.eq.s32.totalorder %s35, 0
      %p232 = por %p230, %p231
      %s234 = sadd.s32 %s233, 1
      %p237 = scmp.eq.s32.totalorder %s29, 3
      %p238 = scmp.ne.s32.totalorder %s233, %s235
      %p239 = scmp.eq.s32.totalorder %s29, 0
      %p240 = por %p238, %p239
      %p241 = scmp.ne.s32.totalorder %s233, %s235
      %p242 = scmp.eq.s32.totalorder %s34, 3
      %p243 = por %p241, %p242
      %p244 = scmp.ne.s32.totalorder %s235, %s236
      %p245 = scmp.eq.s32.totalorder %s34, 0
      %p246 = por %p244, %p245
      %p247 = scmp.ne.s32.totalorder %s235, %s236
      %p248 = scmp.eq.s32.totalorder %s35, 3
      %p249 = por %p247, %p248
      %p251 = scmp.ne.s32.totalorder %s236, %s250
      %p252 = scmp.eq.s32.totalorder %s35, 0
      %p253 = por %p251, %p252
      %s255 = sadd.s32 %s254, 1
      %p258 = scmp.eq.s32.totalorder %s29, 3
      %p259 = scmp.ne.s32.totalorder %s254, %s256
      %p260 = scmp.eq.s32.totalorder %s29, 0
      %p261 = por %p259, %p260
      %p262 = scmp.ne.s32.totalorder %s254, %s256
      %p263 = scmp.eq.s32.totalorder %s34, 3
      %p264 = por %p262, %p263
      %p265 = scmp.ne.s32.totalorder %s256, %s257
      %p266 = scmp.eq.s32.totalorder %s34, 0
      %p267 = por %p265, %p266
      %p268 = scmp.ne.s32.totalorder %s256, %s257
      %p269 = scmp.eq.s32.totalorder %s35, 3
      %p270 = por %p268, %p269
      %p272 = scmp.ne.s32.totalorder %s257, %s271
      %p273 = scmp.eq.s32.totalorder %s35, 0
      %p274 = por %p272, %p273
      %s276 = sadd.s32 %s275, 1
      %p279 = scmp.eq.s32.totalorder %s29, 3
      %p280 = scmp.ne.s32.totalorder %s275, %s277
      %p281 = scmp.eq.s32.totalorder %s29, 0
      %p282 = por %p280, %p281
      %p283 = scmp.ne.s32.totalorder %s275, %s277
      %p284 = scmp.eq.s32.totalorder %s34, 3
      %p285 = por %p283, %p284
      %p286 = scmp.ne.s32.totalorder %s277, %s278
      %p287 = scmp.eq.s32.totalorder %s34, 0
      %p288 = por %p286, %p287
      %p289 = scmp.ne.s32.totalorder %s277, %s278
      %p290 = scmp.eq.s32.totalorder %s35, 3
      %p291 = por %p289, %p290
      %p293 = scmp.ne.s32.totalorder %s278, %s292
      %p294 = scmp.eq.s32.totalorder %s35, 0
      %p295 = por %p293, %p294
      %s297 = sadd.s32 %s296, 1
      %p300 = scmp.eq.s32.totalorder %s29, 3
      %p301 = scmp.ne.s32.totalorder %s296, %s298
      %p302 = scmp.eq.s32.totalorder %s29, 0
      %p303 = por %p301, %p302
      %p304 = scmp.ne.s32.totalorder %s296, %s298
      %p305 = scmp.eq.s32.totalorder %s34, 3
      %p306 = por %p304, %p305
      %p307 = scmp.ne.s32.totalorder %s298, %s299
      %p308 = scmp.eq.s32.totalorder %s34, 0
      %p309 = por %p307, %p308
      %p310 = scmp.ne.s32.totalorder %s298, %s299
      %p311 = scmp.eq.s32.totalorder %s35, 3
      %p312 = por %p310, %p311
      %p314 = scmp.ne.s32.totalorder %s299, %s313
      %p315 = scmp.eq.s32.totalorder %s35, 0
      %p316 = por %p314, %p315
      %s318 = sadd.s32 %s317, 1
      %p321 = scmp.eq.s32.totalorder %s29, 3
      %p322 = scmp.ne.s32.totalorder %s317, %s319
      %p323 = scmp.eq.s32.totalorder %s29, 0
      %p324 = por %p322, %p323
      %p325 = scmp.ne.s32.totalorder %s317, %s319
      %p326 = scmp.eq.s32.totalorder %s34, 3
      %p327 = por %p325, %p326
      %p328 = scmp.ne.s32.totalorder %s319, %s320
      %p329 = scmp.eq.s32.totalorder %s34, 0
      %p330 = por %p328, %p329
      %p331 = scmp.ne.s32.totalorder %s319, %s320
      %p332 = scmp.eq.s32.totalorder %s35, 3
      %p333 = por %p331, %p332
      %p335 = scmp.ne.s32.totalorder %s320, %s334
      %p336 = scmp.eq.s32.totalorder %s35, 0
      %p337 = por %p335, %p336
      %s338 = ssub.s32 %s36, %s48
      %s339 = ssub.s32 %s37, %s44
      %s340 = sor.u32 %s338, %s339
      %p341 = scmp.eq.s32.totalorder %s340, 0
      %s343 = sadd.s32 %s342, 1
      %s344 = scalar_select %p341, %s342, %s343
      %p347 = pneg %p341
      %p348 = scmp.eq.s32.totalorder %s29, 3
      %p349 = por %p347, %p348
      %p350 = scmp.ne.s32.totalorder %s342, %s345
      %p351 = scmp.eq.s32.totalorder %s29, 0
      %p352 = por %p350, %p351
      %p353 = scmp.ne.s32.totalorder %s342, %s345
      %p354 = scmp.eq.s32.totalorder %s34, 3
      %p355 = por %p353, %p354
      %p356 = scmp.ne.s32.totalorder %s345, %s346
      %p357 = scmp.eq.s32.totalorder %s34, 0
      %p358 = por %p356, %p357
      %p359 = scmp.ne.s32.totalorder %s345, %s346
      %p360 = scmp.eq.s32.totalorder %s35, 3
      %p361 = por %p359, %p360
      %p363 = scmp.ne.s32.totalorder %s346, %s362
      %p364 = scmp.eq.s32.totalorder %s35, 0
      %p365 = por %p363, %p364
      %p366 = scmp.le.s32.totalorder 1, %s29
      %p367 = scmp.lt.s32.totalorder %s29, 5
      %p368 = pnand %p366, %p367
      %p369 = pneg %p368
      // Predicated region
      $region9: #{tpu_custom_call.1} parent=5 // pred_check
        _
      $region10: #{tpu_custom_call.1} parent=5 // pred_check_branch
        %371 = sbr.rel (%p368) target = $region12
      $region11: #{tpu_custom_call.1} parent=5 // pred_region
        %s372 = ssub.s32 %s29, 1
        // Predicated region
        $region13: #{tpu_custom_call.1} parent=11 // pred_check
          %p373 = pneg %p162
        $region14: #{tpu_custom_call.1} parent=11 // pred_check_branch
          %375 = sbr.rel (%p373) target = $region16
        $region15: #{tpu_custom_call.1} parent=11 // pred_region
          %s377 = ssub.s32 1024, 1024
          %378 = vsyncadd [#allocation10], %s377
          %s379 = sshll.u32 [#allocation9], 4
          %s380 = int_to_ptr.vmem [resolvable:$true] %s379
          %385 = dma.hbm_to_vmem [thread:$0]  %s3, 1024, %s380, [#allocation10], 64, 64, 4
        $region16: #{tpu_custom_call.1} parent=11 // pred_fallthru
          _
        // Predicated region
        $region17: #{tpu_custom_call.1} parent=11 // pred_check
          %p386 = pneg %p183
        $region18: #{tpu_custom_call.1} parent=11 // pred_check_branch
          %388 = sbr.rel (%p386) target = $region20
        $region19: #{tpu_custom_call.1} parent=11 // pred_region
          _
        $region20: #{tpu_custom_call.1} parent=11 // pred_fallthru
          _
        // Predicated region
        $region21: #{tpu_custom_call.1} parent=11 // pred_check
          %p389 = pneg %p204
        $region22: #{tpu_custom_call.1} parent=11 // pred_check_branch
          %391 = sbr.rel (%p389) target = $region24
        $region23: #{tpu_custom_call.1} parent=11 // pred_region
          _
        $region24: #{tpu_custom_call.1} parent=11 // pred_fallthru
          _
        // Predicated region
        $region25: #{tpu_custom_call.1} parent=11 // pred_check
          %p392 = pneg %p225
        $region26: #{tpu_custom_call.1} parent=11 // pred_check_branch
          %394 = sbr.rel (%p392) target = $region28
        $region27: #{tpu_custom_call.1} parent=11 // pred_region
          %s396 = ssub.s32 9216, 9216
          %397 = vsyncadd [#allocation10], %s396
          %s398 = sshll.u32 [#allocation11], 4
          %s399 = int_to_ptr.vmem [resolvable:$true] %s398
          %404 = dma.hbm_to_vmem [thread:$0]  %s6, 9216, %s399, [#allocation10], 64, 64, 4
        $region28: #{tpu_custom_call.1} parent=11 // pred_fallthru
          _
        // Predicated region
        $region29: #{tpu_custom_call.1} parent=11 // pred_check
          %p405 = pneg %p246
        $region30: #{tpu_custom_call.1} parent=11 // pred_check_branch
          %407 = sbr.rel (%p405) target = $region32
        $region31: #{tpu_custom_call.1} parent=11 // pred_region
          _
        $region32: #{tpu_custom_call.1} parent=11 // pred_fallthru
          _
        // Predicated region
        $region33: #{tpu_custom_call.1} parent=11 // pred_check
          %p408 = pneg %p267
        $region34: #{tpu_custom_call.1} parent=11 // pred_check_branch
          %410 = sbr.rel (%p408) target = $region36
        $region35: #{tpu_custom_call.1} parent=11 // pred_region
          _
        $region36: #{tpu_custom_call.1} parent=11 // pred_fallthru
          _
        // Predicated region
        $region37: #{tpu_custom_call.1} parent=11 // pred_check
          %p411 = pneg %p288
        $region38: #{tpu_custom_call.1} parent=11 // pred_check_branch
          %413 = sbr.rel (%p411) target = $region40
        $region39: #{tpu_custom_call.1} parent=11 // pred_region
          %s415 = ssub.s32 1024, 1024
          %416 = vsyncadd [#allocation13], %s415
          %s417 = sshll.u32 [#allocation12], 4
          %s418 = int_to_ptr.vmem [resolvable:$true] %s417
          %423 = dma.hbm_to_vmem [thread:$0]  %s9, 1024, %s418, [#allocation13], 64, 64, 4
        $region40: #{tpu_custom_call.1} parent=11 // pred_fallthru
          _
        // Predicated region
        $region41: #{tpu_custom_call.1} parent=11 // pred_check
          %p424 = pneg %p309
        $region42: #{tpu_custom_call.1} parent=11 // pred_check_branch
          %426 = sbr.rel (%p424) target = $region44
        $region43: #{tpu_custom_call.1} parent=11 // pred_region
          _
        $region44: #{tpu_custom_call.1} parent=11 // pred_fallthru
          _
        // Predicated region
        $region45: #{tpu_custom_call.1} parent=11 // pred_check
          %p427 = pneg %p330
        $region46: #{tpu_custom_call.1} parent=11 // pred_check_branch
          %429 = sbr.rel (%p427) target = $region48
        $region47: #{tpu_custom_call.1} parent=11 // pred_region
          _
        $region48: #{tpu_custom_call.1} parent=11 // pred_fallthru
          _
      $region12: #{tpu_custom_call.1} parent=5 // pred_fallthru
        _
      %p430 = scmp.lt.s32.totalorder %s29, 4
      // Predicated region
      $region49: #{tpu_custom_call.1} parent=5 // pred_check
        %p431 = pneg %p430
      $region50: #{tpu_custom_call.1} parent=5 // pred_check_branch
        %433 = sbr.rel (%p431) target = $region52
      $region51: #{tpu_custom_call.1} parent=5 // pred_region
        // Predicated region
        $region53: #{tpu_custom_call.1} parent=51 // pred_check
          %p434 = pneg %p63
        $region54: #{tpu_custom_call.1} parent=51 // pred_check_branch
          %436 = sbr.rel (%p434) target = $region56
        $region55: #{tpu_custom_call.1} parent=51 // pred_region
          %s437 = sand.u32 %s53, 1
          %s438 = scalar_lea.sflag [#allocation4], %s437
          %s439 = sand.u32 %s53, 1
          %s440 = smul.addr %s439, 64
          %s441 = scalar_lea.vmem [#allocation3], %s440
          %s442 = smul.u32 8, %s37
          %s444 = ssub.s32 1024, 1024
          %445 = vsyncadd %s438, %s444
          %s446 = smul.addr %s442, 2
          %s447 = smul.addr %s36, 32
          %s448 = sadd.s32 %s446, %s447
          %s449 = smul.addr %s448, 64
          %s450 = scalar_lea.hbm %s0, %s449
          %s451 = sshll.u32 %s441, 4
          %s452 = int_to_ptr.vmem [resolvable:$true] %s451
          %457 = dma.hbm_to_vmem [thread:$0]  %s450, 1024, %s452, %s438, 64, 64, 4
        $region56: #{tpu_custom_call.1} parent=51 // pred_fallthru
          _
        // Predicated region
        $region57: #{tpu_custom_call.1} parent=51 // pred_check
          %p458 = pneg %p99
        $region58: #{tpu_custom_call.1} parent=51 // pred_check_branch
          %460 = sbr.rel (%p458) target = $region60
        $region59: #{tpu_custom_call.1} parent=51 // pred_region
          %s461 = sand.u32 %s29, 1
          %s462 = scalar_lea.sflag [#allocation7], %s461
          %s463 = sand.u32 %s89, 1
          %s464 = smul.addr %s463, 8
          %s465 = scalar_lea.vmem [#allocation6], %s464
          %s466 = smul.u32 %s37, 8
          %s467 = ssub.s32 %s466, 1
          %p468 = scmp.gt.s32.totalorder %s467, 0
          %s469 = scalar_select %p468, %s467, 0
          %s471 = ssub.s32 128, 128
          %472 = vsyncadd %s462, %s471
          %s473 = smul.addr %s469, 2
          %s474 = smul.addr %s36, 32
          %s475 = sadd.s32 %s473, %s474
          %s476 = smul.addr %s475, 64
          %s477 = scalar_lea.hbm %s1, %s476
          %s478 = sshll.u32 %s465, 4
          %s479 = int_to_ptr.vmem [resolvable:$true] %s478
          %484 = dma.hbm_to_vmem [thread:$0]  %s477, 128, %s479, %s462, 64, 64, 4
        $region60: #{tpu_custom_call.1} parent=51 // pred_fallthru
          _
        // Predicated region
        $region61: #{tpu_custom_call.1} parent=51 // pred_check
          %p485 = pneg %p135
        $region62: #{tpu_custom_call.1} parent=51 // pred_check_branch
          %487 = sbr.rel (%p485) target = $region64
        $region63: #{tpu_custom_call.1} parent=51 // pred_region
          %s488 = sand.u32 %s29, 1
          %s489 = scalar_lea.sflag [#allocation7], %s488
          %s490 = sand.u32 %s125, 1
          %s491 = smul.addr %s490, 8
          %s492 = scalar_lea.vmem [#allocation8], %s491
          %s493 = sadd.s32 %s37, 1
          %s494 = smul.u32 %s493, 8
          %p495 = scmp.lt.s32.totalorder %s494, 15
          %s496 = scalar_select %p495, %s494, 15
          %s498 = ssub.s32 128, 128
          %499 = vsyncadd %s489, %s498
          %s500 = smul.addr %s496, 2
          %s501 = smul.addr %s36, 32
          %s502 = sadd.s32 %s500, %s501
          %s503 = smul.addr %s502, 64
          %s504 = scalar_lea.hbm %s2, %s503
          %s505 = sshll.u32 %s492, 4
          %s506 = int_to_ptr.vmem [resolvable:$true] %s505
          %511 = dma.hbm_to_vmem [thread:$0]  %s504, 128, %s506, %s489, 64, 64, 4
        $region64: #{tpu_custom_call.1} parent=51 // pred_fallthru
          _
      $region52: #{tpu_custom_call.1} parent=5 // pred_fallthru
        _
      %p512 = scmp.le.s32.totalorder 1, %s29
      %p513 = scmp.lt.s32.totalorder %s29, 5
      %p514 = pnand %p512, %p513
      %p515 = pneg %p514
      // Predicated region
      $region65: #{tpu_custom_call.1} parent=5 // pred_check
        _
      $region66: #{tpu_custom_call.1} parent=5 // pred_check_branch
        %517 = sbr.rel (%p514) target = $region68
      $region67: #{tpu_custom_call.1} parent=5 // pred_region
        %s518 = ssub.s32 %s29, 1
        %s519 = sand.u32 %s56, 1
        %s520 = scalar_lea.sflag [#allocation4], %s519
        %s521 = sand.u32 %s56, 1
        %s522 = smul.addr %s521, 64
        %s523 = scalar_lea.vmem [#allocation3], %s522
        // Predicated region
        $region69: #{tpu_custom_call.1} parent=67 // pred_check
          %p524 = pneg %p69
        $region70: #{tpu_custom_call.1} parent=67 // pred_check_branch
          %526 = sbr.rel (%p524) target = $region72
        $region71: #{tpu_custom_call.1} parent=67 // pred_region
          %527 = dma.done %s520, 1024
        $region72: #{tpu_custom_call.1} parent=67 // pred_fallthru
          _
        %s528 = sand.u32 %s34, 1
        %s529 = scalar_lea.sflag [#allocation7], %s528
        %s530 = sand.u32 %s92, 1
        %s531 = smul.addr %s530, 8
        %s532 = scalar_lea.vmem [#allocation6], %s531
        // Predicated region
        $region73: #{tpu_custom_call.1} parent=67 // pred_check
          %p533 = pneg %p105
        $region74: #{tpu_custom_call.1} parent=67 // pred_check_branch
          %535 = sbr.rel (%p533) target = $region76
        $region75: #{tpu_custom_call.1} parent=67 // pred_region
          %536 = dma.done %s529, 128
        $region76: #{tpu_custom_call.1} parent=67 // pred_fallthru
          _
        %s537 = sand.u32 %s34, 1
        %s538 = scalar_lea.sflag [#allocation7], %s537
        %s539 = sand.u32 %s128, 1
        %s540 = smul.addr %s539, 8
        %s541 = scalar_lea.vmem [#allocation8], %s540
        // Predicated region
        $region77: #{tpu_custom_call.1} parent=67 // pred_check
          %p542 = pneg %p141
        $region78: #{tpu_custom_call.1} parent=67 // pred_check_branch
          %544 = sbr.rel (%p542) target = $region80
        $region79: #{tpu_custom_call.1} parent=67 // pred_region
          %545 = dma.done %s538, 128
        $region80: #{tpu_custom_call.1} parent=67 // pred_fallthru
          _
        // Predicated region
        $region81: #{tpu_custom_call.1} parent=67 // pred_check
          %p546 = pneg %p162
        $region82: #{tpu_custom_call.1} parent=67 // pred_check_branch
          %548 = sbr.rel (%p546) target = $region84
        $region83: #{tpu_custom_call.1} parent=67 // pred_region
          %549 = dma.done [#allocation10], 1024
        $region84: #{tpu_custom_call.1} parent=67 // pred_fallthru
          _
        // Predicated region
        $region85: #{tpu_custom_call.1} parent=67 // pred_check
          %p550 = pneg %p225
        $region86: #{tpu_custom_call.1} parent=67 // pred_check_branch
          %552 = sbr.rel (%p550) target = $region88
        $region87: #{tpu_custom_call.1} parent=67 // pred_region
          %553 = dma.done [#allocation10], 9216
        $region88: #{tpu_custom_call.1} parent=67 // pred_fallthru
          _
        // Predicated region
        $region89: #{tpu_custom_call.1} parent=67 // pred_check
          %p554 = pneg %p288
        $region90: #{tpu_custom_call.1} parent=67 // pred_check_branch
          %556 = sbr.rel (%p554) target = $region92
        $region91: #{tpu_custom_call.1} parent=67 // pred_region
          %557 = dma.done [#allocation13], 1024
        $region92: #{tpu_custom_call.1} parent=67 // pred_fallthru
          _
        %s558 = sand.u32 %s56, 1
        %s559 = scalar_lea.sflag [#allocation4], %s558
        %s560 = sand.u32 %s56, 1
        %s561 = smul.addr %s560, 64
        %s562 = scalar_lea.vmem [#allocation3], %s561
        %p563 = pneg %p69
        %p564 = pneg %p66
        %s565 = sand.u32 %s34, 1
        %s566 = scalar_lea.sflag [#allocation7], %s565
        %s567 = sand.u32 %s92, 1
        %s568 = smul.addr %s567, 8
        %s569 = scalar_lea.vmem [#allocation6], %s568
        %p570 = pneg %p105
        %p571 = pneg %p102
        %s572 = sand.u32 %s34, 1
        %s573 = scalar_lea.sflag [#allocation7], %s572
        %s574 = sand.u32 %s128, 1
        %s575 = smul.addr %s574, 8
        %s576 = scalar_lea.vmem [#allocation8], %s575
        %p577 = pneg %p141
        %p578 = pneg %p138
        %p579 = pneg %p162
        %p580 = pneg %p159
        %p581 = pneg %p183
        %p582 = pneg %p180
        %p583 = pneg %p204
        %p584 = pneg %p201
        %p585 = pneg %p225
        %p586 = pneg %p222
        %p587 = pneg %p246
        %p588 = pneg %p243
        %p589 = pneg %p267
        %p590 = pneg %p264
        %p591 = pneg %p288
        %p592 = pneg %p285
        %p593 = pneg %p309
        %p594 = pneg %p306
        %p595 = pneg %p330
        %p596 = pneg %p327
        %p597 = pneg %p358
        %p598 = pneg %p355
        %s599 = sand.u32 %s345, 1
        %s600 = scalar_lea.sflag [#allocation5], %s599
        %s601 = sand.u32 %s345, 1
        %s602 = smul.addr %s601, 128
        %s603 = scalar_lea.vmem [#allocation14], %s602
        %s604 = smul.u32 8, %s39
        %s605 = smul.u32 %s39, 8
        %s606 = ssub.s32 %s605, 1
        %p607 = scmp.gt.s32.totalorder %s606, 0
        %s608 = scalar_select %p607, %s606, 0
        %s609 = sadd.s32 %s39, 1
        %s610 = smul.u32 %s609, 8
        %p611 = scmp.lt.s32.totalorder %s610, 15
        %s612 = scalar_select %p611, %s610, 15
        %s613 = smul.u32 8, %s39
        %v615 = vld [vmem:[%s523] sm:$0xf]
        %v616 = vld [vmem:[%s523 + $0x4] sm:$0xf]
        %v617 = vld [vmem:[%s523 + $0x8] sm:$0xf]
        %v618 = vld [vmem:[%s523 + $0xc] sm:$0xf]
        %v619 = vld [vmem:[%s523 + $0x10] sm:$0xf]
        %v620 = vld [vmem:[%s523 + $0x14] sm:$0xf]
        %v621 = vld [vmem:[%s523 + $0x18] sm:$0xf]
        %v622 = vld [vmem:[%s523 + $0x1c] sm:$0xf]
        %v623 = vld [vmem:[%s523 + $0x20] sm:$0xf]
        %v624 = vld [vmem:[%s523 + $0x24] sm:$0xf]
        %v625 = vld [vmem:[%s523 + $0x28] sm:$0xf]
        %v626 = vld [vmem:[%s523 + $0x2c] sm:$0xf]
        %v627 = vld [vmem:[%s523 + $0x30] sm:$0xf]
        %v628 = vld [vmem:[%s523 + $0x34] sm:$0xf]
        %v629 = vld [vmem:[%s523 + $0x38] sm:$0xf]
        %v630 = vld [vmem:[%s523 + $0x3c] sm:$0xf]
        %v631 = vld [vmem:[#allocation9] sm:$0xf]
        %v632 = vld [vmem:[#allocation9 + $0x4] sm:$0xf]
        %v633 = vld [vmem:[#allocation9 + $0x8] sm:$0xf]
        %v634 = vld [vmem:[#allocation9 + $0xc] sm:$0xf]
        %v635 = vld [vmem:[#allocation9 + $0x10] sm:$0xf]
        %v636 = vld [vmem:[#allocation9 + $0x14] sm:$0xf]
        %v637 = vld [vmem:[#allocation9 + $0x18] sm:$0xf]
        %v638 = vld [vmem:[#allocation9 + $0x1c] sm:$0xf]
        %v639 = vld [vmem:[#allocation9 + $0x20] sm:$0xf]
        %v640 = vld [vmem:[#allocation9 + $0x24] sm:$0xf]
        %v641 = vld [vmem:[#allocation9 + $0x28] sm:$0xf]
        %v642 = vld [vmem:[#allocation9 + $0x2c] sm:$0xf]
        %v643 = vld [vmem:[#allocation9 + $0x30] sm:$0xf]
        %v644 = vld [vmem:[#allocation9 + $0x34] sm:$0xf]
        %v645 = vld [vmem:[#allocation9 + $0x38] sm:$0xf]
        %v646 = vld [vmem:[#allocation9 + $0x3c] sm:$0xf]
        %v647 = vld [vmem:[%s4] sm:$0x1]
        %v648 = vld [vmem:[%s5] sm:$0x1]
        %vm649 = vcmask 1040384
        %vm650 = vsmask.f32 256
        %vm651 = vmand %vm649, %vm650
        %v652 = vld [vmem:[#allocation2] sm:$0x1]
        %v653 = vsel %vm651, 0, %v652
        %654 = vst [vmem:[#allocation2] sm:$0x1] %v653
        %v655 = vld [vmem:[#allocation2 + $0xc] sm:$0x1]
        %v656 = vsel %vm651, 0, %v655
        %657 = vst [vmem:[#allocation2 + $0xc] sm:$0x1] %v656
        %v658 = vld [vmem:[#allocation2 + $0x18] sm:$0x1]
        %v659 = vsel %vm651, 0, %v658
        %660 = vst [vmem:[#allocation2 + $0x18] sm:$0x1] %v659
        %v661 = vld [vmem:[#allocation2 + $0x24] sm:$0x1]
        %v662 = vsel %vm651, 0, %v661
        %663 = vst [vmem:[#allocation2 + $0x24] sm:$0x1] %v662
        %v664 = vld [vmem:[#allocation2 + $0x30] sm:$0x1]
        %v665 = vsel %vm651, 0, %v664
        %666 = vst [vmem:[#allocation2 + $0x30] sm:$0x1] %v665
        %v667 = vld [vmem:[#allocation2 + $0x3c] sm:$0x1]
        %v668 = vsel %vm651, 0, %v667
        %669 = vst [vmem:[#allocation2 + $0x3c] sm:$0x1] %v668
        %v670 = vld [vmem:[#allocation2 + $0x48] sm:$0x1]
        %v671 = vsel %vm651, 0, %v670
        %672 = vst [vmem:[#allocation2 + $0x48] sm:$0x1] %v671
        %v673 = vld [vmem:[#allocation2 + $0x54] sm:$0x1]
        %v674 = vsel %vm651, 0, %v673
        %675 = vst [vmem:[#allocation2 + $0x54] sm:$0x1] %v674
        %v676 = vld [vmem:[#allocation2 + $0x60] sm:$0x1]
        %v677 = vsel %vm651, 0, %v676
        %678 = vst [vmem:[#allocation2 + $0x60] sm:$0x1] %v677
        %v679 = vld [vmem:[#allocation2 + $0x6c] sm:$0x1]
        %v680 = vsel %vm651, 0, %v679
        %681 = vst [vmem:[#allocation2 + $0x6c] sm:$0x1] %v680
        %vm682 = vsmask.f32 7938
        %vm683 = vmand %vm649, %vm682
        %v684 = vld [vmem:[#allocation2 + $0x8] sm:$0x1]
        %v685 = vsel %vm683, 0, %v684
        %686 = vst [vmem:[#allocation2 + $0x8] sm:$0x1] %v685
        %v687 = vld [vmem:[#allocation2 + $0x14] sm:$0x1]
        %v688 = vsel %vm683, 0, %v687
        %689 = vst [vmem:[#allocation2 + $0x14] sm:$0x1] %v688
        %v690 = vld [vmem:[#allocation2 + $0x20] sm:$0x1]
        %v691 = vsel %vm683, 0, %v690
        %692 = vst [vmem:[#allocation2 + $0x20] sm:$0x1] %v691
        %v693 = vld [vmem:[#allocation2 + $0x2c] sm:$0x1]
        %v694 = vsel %vm683, 0, %v693
        %695 = vst [vmem:[#allocation2 + $0x2c] sm:$0x1] %v694
        %v696 = vld [vmem:[#allocation2 + $0x38] sm:$0x1]
        %v697 = vsel %vm683, 0, %v696
        %698 = vst [vmem:[#allocation2 + $0x38] sm:$0x1] %v697
        %v699 = vld [vmem:[#allocation2 + $0x44] sm:$0x1]
        %v700 = vsel %vm683, 0, %v699
        %701 = vst [vmem:[#allocation2 + $0x44] sm:$0x1] %v700
        %v702 = vld [vmem:[#allocation2 + $0x50] sm:$0x1]
        %v703 = vsel %vm683, 0, %v702
        %704 = vst [vmem:[#allocation2 + $0x50] sm:$0x1] %v703
        %v705 = vld [vmem:[#allocation2 + $0x5c] sm:$0x1]
        %v706 = vsel %vm683, 0, %v705
        %707 = vst [vmem:[#allocation2 + $0x5c] sm:$0x1] %v706
        %v708 = vld [vmem:[#allocation2 + $0x68] sm:$0x1]
        %v709 = vsel %vm683, 0, %v708
        %710 = vst [vmem:[#allocation2 + $0x68] sm:$0x1] %v709
        %v711 = vld [vmem:[#allocation2 + $0x74] sm:$0x1]
        %v712 = vsel %vm683, 0, %v711
        %713 = vst [vmem:[#allocation2 + $0x74] sm:$0x1] %v712
        %v730 = vunpack.c.l.b16 %v615
        %v731 = vunpack.c.l.b16 %v616
        %v732 = vunpack.c.l.b16 %v617
        %v733 = vunpack.c.l.b16 %v618
        %v734 = vunpack.c.l.b16 %v619
        %v735 = vunpack.c.l.b16 %v620
        %v736 = vunpack.c.l.b16 %v621
        %v737 = vunpack.c.l.b16 %v622
        %v738 = vunpack.c.l.b16 %v623
        %v739 = vunpack.c.l.b16 %v624
        %v740 = vunpack.c.l.b16 %v625
        %v741 = vunpack.c.l.b16 %v626
        %v742 = vunpack.c.l.b16 %v627
        %v743 = vunpack.c.l.b16 %v628
        %v744 = vunpack.c.l.b16 %v629
        %v745 = vunpack.c.l.b16 %v630
        %v746 = vpack.c.b16 %v731, %v730
        %v747 = vpack.c.b16 %v733, %v732
        %v748 = vpack.c.b16 %v735, %v734
        %v749 = vpack.c.b16 %v737, %v736
        %v750 = vpack.c.b16 %v739, %v738
        %v751 = vpack.c.b16 %v741, %v740
        %v752 = vpack.c.b16 %v743, %v742
        %v753 = vpack.c.b16 %v745, %v744
        %v778 = vunpack.c.l.b16 %v631
        %v779 = vunpack.c.l.b16 %v632
        %v780 = vunpack.c.l.b16 %v633
        %v781 = vunpack.c.l.b16 %v634
        %v782 = vunpack.c.l.b16 %v635
        %v783 = vunpack.c.l.b16 %v636
        %v784 = vunpack.c.l.b16 %v637
        %v785 = vunpack.c.l.b16 %v638
        %v786 = vunpack.c.l.b16 %v639
        %v787 = vunpack.c.l.b16 %v640
        %v788 = vunpack.c.l.b16 %v641
        %v789 = vunpack.c.l.b16 %v642
        %v790 = vunpack.c.l.b16 %v643
        %v791 = vunpack.c.l.b16 %v644
        %v792 = vunpack.c.l.b16 %v645
        %v793 = vunpack.c.l.b16 %v646
        %v794 = vpack.c.b16 %v779, %v778
        %v795 = vpack.c.b16 %v781, %v780
        %v796 = vpack.c.b16 %v783, %v782
        %v797 = vpack.c.b16 %v785, %v784
        %v798 = vpack.c.b16 %v787, %v786
        %v799 = vpack.c.b16 %v789, %v788
        %v800 = vpack.c.b16 %v791, %v790
        %v801 = vpack.c.b16 %v793, %v792
        %810 = vmatprep.subr.bf16.mxu0 0
        %811 = vmatpush1.bf16.msra.mxu0 %v794
        %812 = vmatprep.subr.bf16.mxu0 0
        %813 = vmatpush1.bf16.msra.mxu0 %v795
        %814 = vmatprep.subr.bf16.mxu0 0
        %815 = vmatpush1.bf16.msra.mxu0 %v796
        %816 = vmatprep.subr.bf16.mxu0 0
        %817 = vmatpush1.bf16.msra.mxu0 %v797
        %818 = vmatprep.subr.bf16.mxu0 0
        %819 = vmatpush1.bf16.msra.mxu0 %v798
        %820 = vmatprep.subr.bf16.mxu0 0
        %821 = vmatpush1.bf16.msra.mxu0 %v799
        %822 = vmatprep.subr.bf16.mxu0 0
        %823 = vmatpush1.bf16.msra.mxu0 %v800
        %824 = vmatprep.subr.bf16.mxu0 0
        %825 = vmatpush1.bf16.msra.mxu0 %v801
        %826 = vmatprep.subr.bf16.mxu0 0
        %827 = vmatpush1.bf16.msra.mxu0 0
        %828 = vmatprep.subr.bf16.mxu0 0
        %829 = vmatpush1.bf16.msra.mxu0 0
        %830 = vmatprep.subr.bf16.mxu0 0
        %831 = vmatpush1.bf16.msra.mxu0 0
        %832 = vmatprep.subr.bf16.mxu0 0
        %833 = vmatpush1.bf16.msra.mxu0 0
        %834 = vmatprep.subr.bf16.mxu0 0
        %835 = vmatpush1.bf16.msra.mxu0 0
        %836 = vmatprep.subr.bf16.mxu0 0
        %837 = vmatpush1.bf16.msra.mxu0 0
        %838 = vmatprep.subr.bf16.mxu0 0
        %839 = vmatpush1.bf16.msra.mxu0 0
        %840 = vmatprep.subr.bf16.mxu0 0
        %841 = vmatpush1.bf16.msra.mxu0 0
        %842 = vmatprep.mubr.bf16.mxu0 0
        %843 = vmatmul.mubr.bf16.gmra.mrb[0].mxu0 %v746
        %v844 = vpop.f32.mrb[0].mxu0
        %v845 = vadd.f32 0.0, %v844
        %v846 = vpop.f32.mrb[0].mxu0
        %v847 = vpop.f32.mrb[0].mxu0
        %v848 = vadd.f32 0.0, %v847
        %v849 = vpop.f32.mrb[0].mxu0
        %850 = vmatprep.mubr.bf16.mxu0 0
        %851 = vmatmul.mubr.bf16.gmra.mrb[0].mxu0 %v747
        %v852 = vpop.f32.mrb[0].mxu0
        %v853 = vadd.f32 0.0, %v852
        %v854 = vpop.f32.mrb[0].mxu0
        %v855 = vpop.f32.mrb[0].mxu0
        %v856 = vadd.f32 0.0, %v855
        %v857 = vpop.f32.mrb[0].mxu0
        %858 = vmatprep.mubr.bf16.mxu0 0
        %859 = vmatmul.mubr.bf16.gmra.mrb[0].mxu0 %v748
        %v860 = vpop.f32.mrb[0].mxu0
        %v861 = vadd.f32 0.0, %v860
        %v862 = vpop.f32.mrb[0].mxu0
        %v863 = vpop.f32.mrb[0].mxu0
        %v864 = vadd.f32 0.0, %v863
        %v865 = vpop.f32.mrb[0].mxu0
        %866 = vmatprep.mubr.bf16.mxu0 0
        %867 = vmatmul.mubr.bf16.gmra.mrb[0].mxu0 %v749
        %v868 = vpop.f32.mrb[0].mxu0
        %v869 = vadd.f32 0.0, %v868
        %v870 = vpop.f32.mrb[0].mxu0
        %v871 = vpop.f32.mrb[0].mxu0
        %v872 = vadd.f32 0.0, %v871
        %v873 = vpop.f32.mrb[0].mxu0
        %874 = vmatprep.mubr.bf16.mxu0 0
        %875 = vmatmul.mubr.bf16.gmra.mrb[0].mxu0 %v750
        %v876 = vpop.f32.mrb[0].mxu0
        %v877 = vadd.f32 0.0, %v876
        %v878 = vpop.f32.mrb[0].mxu0
        %v879 = vpop.f32.mrb[0].mxu0
        %v880 = vadd.f32 0.0, %v879
        %v881 = vpop.f32.mrb[0].mxu0
        %882 = vmatprep.mubr.bf16.mxu0 0
        %883 = vmatmul.mubr.bf16.gmra.mrb[0].mxu0 %v751
        %v884 = vpop.f32.mrb[0].mxu0
        %v885 = vadd.f32 0.0, %v884
        %v886 = vpop.f32.mrb[0].mxu0
        %v887 = vpop.f32.mrb[0].mxu0
        %v888 = vadd.f32 0.0, %v887
        %v889 = vpop.f32.mrb[0].mxu0
        %890 = vmatprep.mubr.bf16.mxu0 0
        %891 = vmatmul.mubr.bf16.gmra.mrb[0].mxu0 %v752
        %v892 = vpop.f32.mrb[0].mxu0
        %v893 = vadd.f32 0.0, %v892
        %v894 = vpop.f32.mrb[0].mxu0
        %v895 = vpop.f32.mrb[0].mxu0
        %v896 = vadd.f32 0.0, %v895
        %v897 = vpop.f32.mrb[0].mxu0
        %898 = vmatprep.mubr.bf16.mxu0 0
        %899 = vmatmul.mubr.bf16.gmra.mrb[0].mxu0 %v753
        %v900 = vpop.f32.mrb[0].mxu0
        %v901 = vadd.f32 0.0, %v900
        %v902 = vpop.f32.mrb[0].mxu0
        %v903 = vpop.f32.mrb[0].mxu0
        %v904 = vadd.f32 0.0, %v903
        %v905 = vpop.f32.mrb[0].mxu0
        %906 = vdwg.mxu0
        %v908 = vlaneseq
        %v909 = vshrl.u32 %v908, 7
        %v910 = vsub.s32 0, %v909
        %v911 = vrot.slane %v647, %v910
        %v913 = vmul.f32 %v845, %v911
        %v914 = vmul.f32 %v848, %v911
        %v915 = vmul.f32 %v853, %v911
        %v916 = vmul.f32 %v856, %v911
        %v917 = vmul.f32 %v861, %v911
        %v918 = vmul.f32 %v864, %v911
        %v919 = vmul.f32 %v869, %v911
        %v920 = vmul.f32 %v872, %v911
        %v921 = vmul.f32 %v877, %v911
        %v922 = vmul.f32 %v880, %v911
        %v923 = vmul.f32 %v885, %v911
        %v924 = vmul.f32 %v888, %v911
        %v925 = vmul.f32 %v893, %v911
        %v926 = vmul.f32 %v896, %v911
        %v927 = vmul.f32 %v901, %v911
        %v928 = vmul.f32 %v904, %v911
        %v930 = vlaneseq
        %v931 = vshrl.u32 %v930, 7
        %v932 = vsub.s32 0, %v931
        %v933 = vrot.slane %v648, %v932
        %v935 = vadd.f32 %v913, %v933
        %v936 = vadd.f32 %v914, %v933
        %v937 = vadd.f32 %v915, %v933
        %v938 = vadd.f32 %v916, %v933
        %v939 = vadd.f32 %v917, %v933
        %v940 = vadd.f32 %v918, %v933
        %v941 = vadd.f32 %v919, %v933
        %v942 = vadd.f32 %v920, %v933
        %v943 = vadd.f32 %v921, %v933
        %v944 = vadd.f32 %v922, %v933
        %v945 = vadd.f32 %v923, %v933
        %v946 = vadd.f32 %v924, %v933
        %v947 = vadd.f32 %v925, %v933
        %v948 = vadd.f32 %v926, %v933
        %v949 = vadd.f32 %v927, %v933
        %v950 = vadd.f32 %v928, %v933
        %v951 = vmax.f32 %v935, 0.0
        %v952 = vmax.f32 %v936, 0.0
        %v953 = vmax.f32 %v937, 0.0
        %v954 = vmax.f32 %v938, 0.0
        %v955 = vmax.f32 %v939, 0.0
        %v956 = vmax.f32 %v940, 0.0
        %v957 = vmax.f32 %v941, 0.0
        %v958 = vmax.f32 %v942, 0.0
        %v959 = vmax.f32 %v943, 0.0
        %v960 = vmax.f32 %v944, 0.0
        %v961 = vmax.f32 %v945, 0.0
        %v962 = vmax.f32 %v946, 0.0
        %v963 = vmax.f32 %v947, 0.0
        %v964 = vmax.f32 %v948, 0.0
        %v965 = vmax.f32 %v949, 0.0
        %v966 = vmax.f32 %v950, 0.0
        %v967 = vpack.c.bf16 %v952, %v951
        %v968 = vpack.c.bf16 %v954, %v953
        %v969 = vpack.c.bf16 %v956, %v955
        %v970 = vpack.c.bf16 %v958, %v957
        %v971 = vpack.c.bf16 %v960, %v959
        %v972 = vpack.c.bf16 %v962, %v961
        %v973 = vpack.c.bf16 %v964, %v963
        %v974 = vpack.c.bf16 %v966, %v965
        %v983 = vunpack.c.l.b16 %v967
        %v984 = vunpack.c.h.b16 %v967
        %v985 = vunpack.c.l.b16 %v968
        %v986 = vunpack.c.h.b16 %v968
        %v987 = vunpack.c.l.b16 %v969
        %v988 = vunpack.c.h.b16 %v969
        %v989 = vunpack.c.l.b16 %v970
        %v990 = vunpack.c.h.b16 %v970
        %v991 = vunpack.c.l.b16 %v971
        %v992 = vunpack.c.h.b16 %v971
        %v993 = vunpack.c.l.b16 %v972
        %v994 = vunpack.c.h.b16 %v972
        %v995 = vunpack.c.l.b16 %v973
        %v996 = vunpack.c.h.b16 %v973
        %v997 = vunpack.c.l.b16 %v974
        %v998 = vunpack.c.h.b16 %v974
        %v999 = vpack.c.b16 %v983, %v983
        %v1000 = vpack.c.b16 %v984, %v984
        %v1001 = vpack.c.b16 %v985, %v985
        %v1002 = vpack.c.b16 %v986, %v986
        %v1003 = vpack.c.b16 %v987, %v987
        %v1004 = vpack.c.b16 %v988, %v988
        %v1005 = vpack.c.b16 %v989, %v989
        %v1006 = vpack.c.b16 %v990, %v990
        %v1007 = vpack.c.b16 %v991, %v991
        %v1008 = vpack.c.b16 %v992, %v992
        %v1009 = vpack.c.b16 %v993, %v993
        %v1010 = vpack.c.b16 %v994, %v994
        %v1011 = vpack.c.b16 %v995, %v995
        %v1012 = vpack.c.b16 %v996, %v996
        %v1013 = vpack.c.b16 %v997, %v997
        %v1014 = vpack.c.b16 %v998, %v998
        %vm1015 = vsmask.f32 4368
        %vm1016 = vmor %vm650, %vm1015
        %v1018 = vshrl.u32 %v999, 16
        %v1020 = vrot.slane %v1018, 7
        %v1021 = vshll.u32 %v999, 16
        %v1023 = vor.u32 %v1020, %v1021
        %v1024 = vrot.slane %v1020, 4
        %v1026 = vshrl.u32 %v1000, 16
        %v1028 = vrot.slane %v1026, 7
        %v1029 = vshll.u32 %v1000, 16
        %v1031 = vor.u32 %v1028, %v1029
        %v1032 = vsel %vm1016, %v1024, %v1031
        %v1033 = vrot.slane %v1028, 4
        %v1035 = vshrl.u32 %v1001, 16
        %v1037 = vrot.slane %v1035, 7
        %v1038 = vshll.u32 %v1001, 16
        %v1040 = vor.u32 %v1037, %v1038
        %v1041 = vrot.slane %v1037, 4
        %v1043 = vshrl.u32 %v1002, 16
        %v1045 = vrot.slane %v1043, 7
        %v1046 = vshll.u32 %v1002, 16
        %v1048 = vor.u32 %v1045, %v1046
        %v1049 = vsel %vm1016, %v1041, %v1048
        %v1050 = vrot.slane %v1045, 4
        %v1052 = vshrl.u32 %v1003, 16
        %v1054 = vrot.slane %v1052, 7
        %v1055 = vshll.u32 %v1003, 16
        %v1057 = vor.u32 %v1054, %v1055
        %v1058 = vrot.slane %v1054, 4
        %v1060 = vshrl.u32 %v1004, 16
        %v1062 = vrot.slane %v1060, 7
        %v1063 = vshll.u32 %v1004, 16
        %v1065 = vor.u32 %v1062, %v1063
        %v1066 = vsel %vm1016, %v1058, %v1065
        %v1067 = vrot.slane %v1062, 4
        %v1069 = vshrl.u32 %v1005, 16
        %v1071 = vrot.slane %v1069, 7
        %v1072 = vshll.u32 %v1005, 16
        %v1074 = vor.u32 %v1071, %v1072
        %v1075 = vrot.slane %v1071, 4
        %v1077 = vshrl.u32 %v1006, 16
        %v1079 = vrot.slane %v1077, 7
        %v1080 = vshll.u32 %v1006, 16
        %v1082 = vor.u32 %v1079, %v1080
        %v1083 = vsel %vm1016, %v1075, %v1082
        %v1084 = vrot.slane %v1079, 4
        %v1086 = vshrl.u32 %v1007, 16
        %v1088 = vrot.slane %v1086, 7
        %v1089 = vshll.u32 %v1007, 16
        %v1091 = vor.u32 %v1088, %v1089
        %v1092 = vrot.slane %v1088, 4
        %v1094 = vshrl.u32 %v1008, 16
        %v1096 = vrot.slane %v1094, 7
        %v1097 = vshll.u32 %v1008, 16
        %v1099 = vor.u32 %v1096, %v1097
        %v1100 = vsel %vm1016, %v1092, %v1099
        %v1101 = vrot.slane %v1096, 4
        %v1103 = vshrl.u32 %v1009, 16
        %v1105 = vrot.slane %v1103, 7
        %v1106 = vshll.u32 %v1009, 16
        %v1108 = vor.u32 %v1105, %v1106
        %v1109 = vrot.slane %v1105, 4
        %v1111 = vshrl.u32 %v1010, 16
        %v1113 = vrot.slane %v1111, 7
        %v1114 = vshll.u32 %v1010, 16
        %v1116 = vor.u32 %v1113, %v1114
        %v1117 = vsel %vm1016, %v1109, %v1116
        %v1118 = vrot.slane %v1113, 4
        %v1120 = vshrl.u32 %v1011, 16
        %v1122 = vrot.slane %v1120, 7
        %v1123 = vshll.u32 %v1011, 16
        %v1125 = vor.u32 %v1122, %v1123
        %v1126 = vrot.slane %v1122, 4
        %v1128 = vshrl.u32 %v1012, 16
        %v1130 = vrot.slane %v1128, 7
        %v1131 = vshll.u32 %v1012, 16
        %v1133 = vor.u32 %v1130, %v1131
        %v1134 = vsel %vm1016, %v1126, %v1133
        %v1135 = vrot.slane %v1130, 4
        %v1137 = vshrl.u32 %v1013, 16
        %v1139 = vrot.slane %v1137, 7
        %v1140 = vshll.u32 %v1013, 16
        %v1142 = vor.u32 %v1139, %v1140
        %v1143 = vrot.slane %v1139, 4
        %v1145 = vshrl.u32 %v1014, 16
        %v1147 = vrot.slane %v1145, 7
        %v1148 = vshll.u32 %v1014, 16
        %v1150 = vor.u32 %v1147, %v1148
        %v1151 = vsel %vm1016, %v1143, %v1150
        %v1152 = vrot.slane %v1147, 4
        %s1177 = scalar_lea.vmem [#allocation2], 12
        %vm1178 = vcmask 1043456
        %vm1179 = vmand %vm1178, %vm682
        %v1180 = vld [vmem:[%s1177] sm:$0xf]
        %v1181 = vsel %vm1179, %v1023, %v1180
        %1182 = vst [vmem:[%s1177] sm:$0xf] %v1181
        %1183 = vst [vmem:[%s1177 + $0x4] sm:$0xf] %v1032
        %v1184 = vld [vmem:[%s1177 + $0x8] sm:$0x1]
        %v1185 = vsel %vm651, %v1033, %v1184
        %1186 = vst [vmem:[%s1177 + $0x8] sm:$0x1] %v1185
        %v1187 = vld [vmem:[%s1177 + $0xc] sm:$0xf]
        %v1188 = vsel %vm1179, %v1040, %v1187
        %1189 = vst [vmem:[%s1177 + $0xc] sm:$0xf] %v1188
        %1190 = vst [vmem:[%s1177 + $0x10] sm:$0xf] %v1049
        %v1191 = vld [vmem:[%s1177 + $0x14] sm:$0x1]
        %v1192 = vsel %vm651, %v1050, %v1191
        %1193 = vst [vmem:[%s1177 + $0x14] sm:$0x1] %v1192
        %v1194 = vld [vmem:[%s1177 + $0x18] sm:$0xf]
        %v1195 = vsel %vm1179, %v1057, %v1194
        %1196 = vst [vmem:[%s1177 + $0x18] sm:$0xf] %v1195
        %1197 = vst [vmem:[%s1177 + $0x1c] sm:$0xf] %v1066
        %v1198 = vld [vmem:[%s1177 + $0x20] sm:$0x1]
        %v1199 = vsel %vm651, %v1067, %v1198
        %1200 = vst [vmem:[%s1177 + $0x20] sm:$0x1] %v1199
        %v1201 = vld [vmem:[%s1177 + $0x24] sm:$0xf]
        %v1202 = vsel %vm1179, %v1074, %v1201
        %1203 = vst [vmem:[%s1177 + $0x24] sm:$0xf] %v1202
        %1204 = vst [vmem:[%s1177 + $0x28] sm:$0xf] %v1083
        %v1205 = vld [vmem:[%s1177 + $0x2c] sm:$0x1]
        %v1206 = vsel %vm651, %v1084, %v1205
        %1207 = vst [vmem:[%s1177 + $0x2c] sm:$0x1] %v1206
        %v1208 = vld [vmem:[%s1177 + $0x30] sm:$0xf]
        %v1209 = vsel %vm1179, %v1091, %v1208
        %1210 = vst [vmem:[%s1177 + $0x30] sm:$0xf] %v1209
        %1211 = vst [vmem:[%s1177 + $0x34] sm:$0xf] %v1100
        %v1212 = vld [vmem:[%s1177 + $0x38] sm:$0x1]
        %v1213 = vsel %vm651, %v1101, %v1212
        %1214 = vst [vmem:[%s1177 + $0x38] sm:$0x1] %v1213
        %v1215 = vld [vmem:[%s1177 + $0x3c] sm:$0xf]
        %v1216 = vsel %vm1179, %v1108, %v1215
        %1217 = vst [vmem:[%s1177 + $0x3c] sm:$0xf] %v1216
        %1218 = vst [vmem:[%s1177 + $0x40] sm:$0xf] %v1117
        %v1219 = vld [vmem:[%s1177 + $0x44] sm:$0x1]
        %v1220 = vsel %vm651, %v1118, %v1219
        %1221 = vst [vmem:[%s1177 + $0x44] sm:$0x1] %v1220
        %v1222 = vld [vmem:[%s1177 + $0x48] sm:$0xf]
        %v1223 = vsel %vm1179, %v1125, %v1222
        %1224 = vst [vmem:[%s1177 + $0x48] sm:$0xf] %v1223
        %1225 = vst [vmem:[%s1177 + $0x4c] sm:$0xf] %v1134
        %v1226 = vld [vmem:[%s1177 + $0x50] sm:$0x1]
        %v1227 = vsel %vm651, %v1135, %v1226
        %1228 = vst [vmem:[%s1177 + $0x50] sm:$0x1] %v1227
        %v1229 = vld [vmem:[%s1177 + $0x54] sm:$0xf]
        %v1230 = vsel %vm1179, %v1142, %v1229
        %1231 = vst [vmem:[%s1177 + $0x54] sm:$0xf] %v1230
        %1232 = vst [vmem:[%s1177 + $0x58] sm:$0xf] %v1151
        %v1233 = vld [vmem:[%s1177 + $0x5c] sm:$0x1]
        %v1234 = vsel %vm651, %v1152, %v1233
        %1235 = vst [vmem:[%s1177 + $0x5c] sm:$0x1] %v1234
        %p1236 = scmp.gt.s32.totalorder %s39, 0
        // Predicated region
        $region93: #{tpu_custom_call.1} parent=67 // pred_check
          %p1237 = pneg %p1236
        $region94: #{tpu_custom_call.1} parent=67 // pred_check_branch
          %1239 = sbr.rel (%p1237) target = $region96
        $region95: #{tpu_custom_call.1} parent=67 // pred_region
          %v1240 = vld [vmem:[%s532] sm:$0xf]
          %v1241 = vld [vmem:[%s532 + $0x4] sm:$0xf]
          %v1244 = vunpack.c.l.b16 %v1240
          %v1245 = vunpack.c.l.b16 %v1241
          %v1246 = vpack.c.b16 %v1245, %v1244
          %1248 = vmatprep.subr.bf16.mxu0 0
          %1249 = vmatpush1.bf16.msra.mxu0 %v794
          %1250 = vmatprep.subr.bf16.mxu0 0
          %1251 = vmatpush1.bf16.msra.mxu0 %v795
          %1252 = vmatprep.subr.bf16.mxu0 0
          %1253 = vmatpush1.bf16.msra.mxu0 %v796
          %1254 = vmatprep.subr.bf16.mxu0 0
          %1255 = vmatpush1.bf16.msra.mxu0 %v797
          %1256 = vmatprep.subr.bf16.mxu0 0
          %1257 = vmatpush1.bf16.msra.mxu0 %v798
          %1258 = vmatprep.subr.bf16.mxu0 0
          %1259 = vmatpush1.bf16.msra.mxu0 %v799
          %1260 = vmatprep.subr.bf16.mxu0 0
          %1261 = vmatpush1.bf16.msra.mxu0 %v800
          %1262 = vmatprep.subr.bf16.mxu0 0
          %1263 = vmatpush1.bf16.msra.mxu0 %v801
          %1264 = vmatprep.subr.bf16.mxu0 0
          %1265 = vmatpush1.bf16.msra.mxu0 0
          %1266 = vmatprep.subr.bf16.mxu0 0
          %1267 = vmatpush1.bf16.msra.mxu0 0
          %1268 = vmatprep.subr.bf16.mxu0 0
          %1269 = vmatpush1.bf16.msra.mxu0 0
          %1270 = vmatprep.subr.bf16.mxu0 0
          %1271 = vmatpush1.bf16.msra.mxu0 0
          %1272 = vmatprep.subr.bf16.mxu0 0
          %1273 = vmatpush1.bf16.msra.mxu0 0
          %1274 = vmatprep.subr.bf16.mxu0 0
          %1275 = vmatpush1.bf16.msra.mxu0 0
          %1276 = vmatprep.subr.bf16.mxu0 0
          %1277 = vmatpush1.bf16.msra.mxu0 0
          %1278 = vmatprep.subr.bf16.mxu0 0
          %1279 = vmatpush1.bf16.msra.mxu0 0
          %1280 = vmatprep.mubr.bf16.mxu0 0
          %1281 = vmatmul.mubr.bf16.gmra.mrb[0].mxu0 %v1246
          %v1282 = vpop.f32.mrb[0].mxu0
          %v1283 = vadd.f32 0.0, %v1282
          %v1284 = vpop.f32.mrb[0].mxu0
          %v1285 = vpop.f32.mrb[0].mxu0
          %v1286 = vadd.f32 0.0, %v1285
          %v1287 = vpop.f32.mrb[0].mxu0
          %1288 = vdwg.mxu0
          %v1289 = vmul.f32 %v1283, %v911
          %v1290 = vmul.f32 %v1286, %v911
          %v1291 = vadd.f32 %v1289, %v933
          %v1292 = vadd.f32 %v1290, %v933
          %v1293 = vmax.f32 %v1291, 0.0
          %v1294 = vmax.f32 %v1292, 0.0
          %v1295 = vpack.c.bf16 %v1294, %v1293
          %v1297 = vunpack.c.l.b16 %v1295
          %v1298 = vunpack.c.h.b16 %v1295
          %v1299 = vpack.c.b16 %v1297, %v1297
          %v1300 = vpack.c.b16 %v1298, %v1298
          %v1302 = vshrl.u32 %v1299, 16
          %v1304 = vrot.slane %v1302, 7
          %v1305 = vshll.u32 %v1299, 16
          %v1307 = vor.u32 %v1304, %v1305
          %v1308 = vrot.slane %v1304, 4
          %v1310 = vshrl.u32 %v1300, 16
          %v1312 = vrot.slane %v1310, 7
          %v1313 = vshll.u32 %v1300, 16
          %v1315 = vor.u32 %v1312, %v1313
          %v1316 = vsel %vm1016, %v1308, %v1315
          %v1317 = vrot.slane %v1312, 4
          %v1321 = vld [vmem:[#allocation2] sm:$0xf]
          %v1322 = vsel %vm1179, %v1307, %v1321
          %1323 = vst [vmem:[#allocation2] sm:$0xf] %v1322
          %1324 = vst [vmem:[#allocation2 + $0x4] sm:$0xf] %v1316
          %v1325 = vld [vmem:[#allocation2 + $0x8] sm:$0x1]
          %v1326 = vsel %vm651, %v1317, %v1325
          %1327 = vst [vmem:[#allocation2 + $0x8] sm:$0x1] %v1326
        $region96: #{tpu_custom_call.1} parent=67 // pred_fallthru
          _
        %p1328 = scmp.eq.s32.totalorder %s39, 0
        // Predicated region
        $region97: #{tpu_custom_call.1} parent=67 // pred_check
          %p1329 = pneg %p1328
        $region98: #{tpu_custom_call.1} parent=67 // pred_check_branch
          %1331 = sbr.rel (%p1329) target = $region100
        $region99: #{tpu_custom_call.1} parent=67 // pred_region
          %v1332 = vld [vmem:[#allocation2] sm:$0xf]
          %v1333 = vsel %vm1179, 0, %v1332
          %1334 = vst [vmem:[#allocation2] sm:$0xf] %v1333
          %1335 = vst [vmem:[#allocation2 + $0x4] sm:$0xf] 0
          %v1336 = vld [vmem:[#allocation2 + $0x8] sm:$0x1]
          %v1337 = vsel %vm651, 0, %v1336
          %1338 = vst [vmem:[#allocation2 + $0x8] sm:$0x1] %v1337
        $region100: #{tpu_custom_call.1} parent=67 // pred_fallthru
          _
        %p1339 = scmp.lt.s32.totalorder %s39, 1
        // Predicated region
        $region101: #{tpu_custom_call.1} parent=67 // pred_check
          %p1340 = pneg %p1339
        $region102: #{tpu_custom_call.1} parent=67 // pred_check_branch
          %1342 = sbr.rel (%p1340) target = $region104
        $region103: #{tpu_custom_call.1} parent=67 // pred_region
          %v1343 = vld [vmem:[%s541] sm:$0xf]
          %v1344 = vld [vmem:[%s541 + $0x4] sm:$0xf]
          %v1347 = vunpack.c.l.b16 %v1343
          %v1348 = vunpack.c.l.b16 %v1344
          %v1349 = vpack.c.b16 %v1348, %v1347
          %1351 = vmatprep.subr.bf16.mxu0 0
          %1352 = vmatpush1.bf16.msra.mxu0 %v794
          %1353 = vmatprep.subr.bf16.mxu0 0
          %1354 = vmatpush1.bf16.msra.mxu0 %v795
          %1355 = vmatprep.subr.bf16.mxu0 0
          %1356 = vmatpush1.bf16.msra.mxu0 %v796
          %1357 = vmatprep.subr.bf16.mxu0 0
          %1358 = vmatpush1.bf16.msra.mxu0 %v797
          %1359 = vmatprep.subr.bf16.mxu0 0
          %1360 = vmatpush1.bf16.msra.mxu0 %v798
          %1361 = vmatprep.subr.bf16.mxu0 0
          %1362 = vmatpush1.bf16.msra.mxu0 %v799
          %1363 = vmatprep.subr.bf16.mxu0 0
          %1364 = vmatpush1.bf16.msra.mxu0 %v800
          %1365 = vmatprep.subr.bf16.mxu0 0
          %1366 = vmatpush1.bf16.msra.mxu0 %v801
          %1367 = vmatprep.subr.bf16.mxu0 0
          %1368 = vmatpush1.bf16.msra.mxu0 0
          %1369 = vmatprep.subr.bf16.mxu0 0
          %1370 = vmatpush1.bf16.msra.mxu0 0
          %1371 = vmatprep.subr.bf16.mxu0 0
          %1372 = vmatpush1.bf16.msra.mxu0 0
          %1373 = vmatprep.subr.bf16.mxu0 0
          %1374 = vmatpush1.bf16.msra.mxu0 0
          %1375 = vmatprep.subr.bf16.mxu0 0
          %1376 = vmatpush1.bf16.msra.mxu0 0
          %1377 = vmatprep.subr.bf16.mxu0 0
          %1378 = vmatpush1.bf16.msra.mxu0 0
          %1379 = vmatprep.subr.bf16.mxu0 0
          %1380 = vmatpush1.bf16.msra.mxu0 0
          %1381 = vmatprep.subr.bf16.mxu0 0
          %1382 = vmatpush1.bf16.msra.mxu0 0
          %1383 = vmatprep.mubr.bf16.mxu0 0
          %1384 = vmatmul.mubr.bf16.gmra.mrb[0].mxu0 %v1349
          %v1385 = vpop.f32.mrb[0].mxu0
          %v1386 = vadd.f32 0.0, %v1385
          %v1387 = vpop.f32.mrb[0].mxu0
          %v1388 = vpop.f32.mrb[0].mxu0
          %v1389 = vadd.f32 0.0, %v1388
          %v1390 = vpop.f32.mrb[0].mxu0
          %1391 = vdwg.mxu0
          %v1392 = vmul.f32 %v1386, %v911
          %v1393 = vmul.f32 %v1389, %v911
          %v1394 = vadd.f32 %v1392, %v933
          %v1395 = vadd.f32 %v1393, %v933
          %v1396 = vmax.f32 %v1394, 0.0
          %v1397 = vmax.f32 %v1395, 0.0
          %v1398 = vpack.c.bf16 %v1397, %v1396
          %v1400 = vunpack.c.l.b16 %v1398
          %v1401 = vunpack.c.h.b16 %v1398
          %v1402 = vpack.c.b16 %v1400, %v1400
          %v1403 = vpack.c.b16 %v1401, %v1401
          %v1405 = vshrl.u32 %v1402, 16
          %v1407 = vrot.slane %v1405, 7
          %v1408 = vshll.u32 %v1402, 16
          %v1410 = vor.u32 %v1407, %v1408
          %v1411 = vrot.slane %v1407, 4
          %v1413 = vshrl.u32 %v1403, 16
          %v1415 = vrot.slane %v1413, 7
          %v1416 = vshll.u32 %v1403, 16
          %v1418 = vor.u32 %v1415, %v1416
          %v1419 = vsel %vm1016, %v1411, %v1418
          %v1420 = vrot.slane %v1415, 4
          %s1424 = scalar_lea.vmem [#allocation2], 108
          %v1425 = vld [vmem:[%s1424] sm:$0xf]
          %v1426 = vsel %vm1179, %v1410, %v1425
          %1427 = vst [vmem:[%s1424] sm:$0xf] %v1426
          %1428 = vst [vmem:[%s1424 + $0x4] sm:$0xf] %v1419
          %v1429 = vld [vmem:[%s1424 + $0x8] sm:$0x1]
          %v1430 = vsel %vm651, %v1420, %v1429
          %1431 = vst [vmem:[%s1424 + $0x8] sm:$0x1] %v1430
        $region104: #{tpu_custom_call.1} parent=67 // pred_fallthru
          _
        %p1432 = scmp.eq.s32.totalorder %s39, 1
        // Predicated region
        $region105: #{tpu_custom_call.1} parent=67 // pred_check
          %p1433 = pneg %p1432
        $region106: #{tpu_custom_call.1} parent=67 // pred_check_branch
          %1435 = sbr.rel (%p1433) target = $region108
        $region107: #{tpu_custom_call.1} parent=67 // pred_region
          %s1436 = scalar_lea.vmem [#allocation2], 108
          %v1437 = vld [vmem:[%s1436] sm:$0xf]
          %v1438 = vsel %vm1179, 0, %v1437
          %1439 = vst [vmem:[%s1436] sm:$0xf] %v1438
          %1440 = vst [vmem:[%s1436 + $0x4] sm:$0xf] 0
          %v1441 = vld [vmem:[%s1436 + $0x8] sm:$0x1]
          %v1442 = vsel %vm651, 0, %v1441
          %1443 = vst [vmem:[%s1436 + $0x8] sm:$0x1] %v1442
        $region108: #{tpu_custom_call.1} parent=67 // pred_fallthru
          _
        %v1444 = vld [vmem:[#allocation2] sm:$0xf]
        %v1445 = vld [vmem:[#allocation2 + $0x4] sm:$0xf]
        %v1446 = vld [vmem:[#allocation2 + $0xc] sm:$0xf]
        %v1447 = vld [vmem:[#allocation2 + $0x10] sm:$0xf]
        %v1448 = vld [vmem:[#allocation2 + $0x18] sm:$0xf]
        %v1449 = vld [vmem:[#allocation2 + $0x1c] sm:$0xf]
        %v1450 = vld [vmem:[#allocation2 + $0x24] sm:$0xf]
        %v1451 = vld [vmem:[#allocation2 + $0x28] sm:$0xf]
        %v1452 = vld [vmem:[#allocation2 + $0x30] sm:$0xf]
        %v1453 = vld [vmem:[#allocation2 + $0x34] sm:$0xf]
        %v1454 = vld [vmem:[#allocation2 + $0x3c] sm:$0xf]
        %v1455 = vld [vmem:[#allocation2 + $0x40] sm:$0xf]
        %v1456 = vld [vmem:[#allocation2 + $0x48] sm:$0xf]
        %v1457 = vld [vmem:[#allocation2 + $0x4c] sm:$0xf]
        %v1458 = vld [vmem:[#allocation2 + $0x54] sm:$0xf]
        %v1459 = vld [vmem:[#allocation2 + $0x58] sm:$0xf]
        %v1460 = vld [vmem:[#allocation2 + $0x60] sm:$0xf]
        %v1461 = vld [vmem:[#allocation2 + $0x64] sm:$0xf]
        %v1462 = vld [vmem:[#allocation2 + $0x6c] sm:$0xf]
        %v1463 = vld [vmem:[#allocation2 + $0x70] sm:$0xf]
        %v1464 = vld [vmem:[#allocation2 + $0x8] sm:$0x1]
        %v1465 = vld [vmem:[#allocation2 + $0x14] sm:$0x1]
        %v1466 = vld [vmem:[#allocation2 + $0x20] sm:$0x1]
        %v1467 = vld [vmem:[#allocation2 + $0x2c] sm:$0x1]
        %v1468 = vld [vmem:[#allocation2 + $0x38] sm:$0x1]
        %v1469 = vld [vmem:[#allocation2 + $0x44] sm:$0x1]
        %v1470 = vld [vmem:[#allocation2 + $0x50] sm:$0x1]
        %v1471 = vld [vmem:[#allocation2 + $0x5c] sm:$0x1]
        %v1472 = vld [vmem:[#allocation2 + $0x68] sm:$0x1]
        %v1473 = vld [vmem:[#allocation2 + $0x74] sm:$0x1]
        %v1474 = vld [vmem:[#allocation2] sm:$0xe]
        %v1475 = vld [vmem:[#allocation2 + $0xc] sm:$0xe]
        %v1476 = vld [vmem:[#allocation2 + $0x18] sm:$0xe]
        %v1477 = vld [vmem:[#allocation2 + $0x24] sm:$0xe]
        %v1478 = vld [vmem:[#allocation2 + $0x30] sm:$0xe]
        %v1479 = vld [vmem:[#allocation2 + $0x3c] sm:$0xe]
        %v1480 = vld [vmem:[#allocation2 + $0x48] sm:$0xe]
        %v1481 = vld [vmem:[#allocation2 + $0x54] sm:$0xe]
        %v1482 = vld [vmem:[#allocation2 + $0x60] sm:$0xe]
        %v1483 = vld [vmem:[#allocation2 + $0x6c] sm:$0xe]
        %v1484 = vld [vmem:[#allocation11] sm:$0xf]
        %v1485 = vld [vmem:[#allocation11 + $0x4] sm:$0xf]
        %v1486 = vld [vmem:[#allocation11 + $0x8] sm:$0xf]
        %v1487 = vld [vmem:[#allocation11 + $0xc] sm:$0xf]
        %v1488 = vld [vmem:[#allocation11 + $0x10] sm:$0xf]
        %v1489 = vld [vmem:[#allocation11 + $0x14] sm:$0xf]
        %v1490 = vld [vmem:[#allocation11 + $0x18] sm:$0xf]
        %v1491 = vld [vmem:[#allocation11 + $0x1c] sm:$0xf]
        %v1492 = vld [vmem:[#allocation11 + $0x20] sm:$0xf]
        %v1493 = vld [vmem:[#allocation11 + $0x24] sm:$0xf]
        %v1494 = vld [vmem:[#allocation11 + $0x28] sm:$0xf]
        %v1495 = vld [vmem:[#allocation11 + $0x2c] sm:$0xf]
        %v1496 = vld [vmem:[#allocation11 + $0x30] sm:$0xf]
        %v1497 = vld [vmem:[#allocation11 + $0x34] sm:$0xf]
        %v1498 = vld [vmem:[#allocation11 + $0x38] sm:$0xf]
        %v1499 = vld [vmem:[#allocation11 + $0x3c] sm:$0xf]
        %vm1500 = vsmask.f32 3328
        %vm1501 = vsmask.f32 7440
        %vm1502 = vmor %vm1500, %vm1501
        %v1504 = vshrl.u32 %v1444, 16
        %v1506 = vrot.slane %v1504, 4
        %v1507 = vshll.u32 %v1444, 16
        %v1509 = vrot.slane %v1507, 5
        %v1510 = vor.u32 %v1506, %v1509
        %v1511 = vrot.slane %v1510, 4
        %v1513 = vshll.u32 %v1445, 16
        %v1515 = vrot.slane %v1513, 5
        %v1516 = vsel %vm1502, %v1511, %v1515
        %v1517 = vshrl.u32 %v1445, 16
        %v1519 = vrot.slane %v1517, 4
        %v1520 = vor.u32 %v1519, %v1515
        %v1521 = vrot.slane %v1520, 4
        %v1523 = vshll.u32 %v1464, 16
        %v1525 = vrot.slane %v1523, 5
        %v1526 = vsel %vm1502, %v1521, %v1525
        %v1528 = vshrl.u32 %v1446, 16
        %v1530 = vrot.slane %v1528, 4
        %v1531 = vshll.u32 %v1446, 16
        %v1533 = vrot.slane %v1531, 5
        %v1534 = vor.u32 %v1530, %v1533
        %v1535 = vrot.slane %v1534, 4
        %v1537 = vshll.u32 %v1447, 16
        %v1539 = vrot.slane %v1537, 5
        %v1540 = vsel %vm1502, %v1535, %v1539
        %v1541 = vshrl.u32 %v1447, 16
        %v1543 = vrot.slane %v1541, 4
        %v1544 = vor.u32 %v1543, %v1539
        %v1545 = vrot.slane %v1544, 4
        %v1547 = vshll.u32 %v1465, 16
        %v1549 = vrot.slane %v1547, 5
        %v1550 = vsel %vm1502, %v1545, %v1549
        %v1552 = vshrl.u32 %v1448, 16
        %v1554 = vrot.slane %v1552, 4
        %v1555 = vshll.u32 %v1448, 16
        %v1557 = vrot.slane %v1555, 5
        %v1558 = vor.u32 %v1554, %v1557
        %v1559 = vrot.slane %v1558, 4
        %v1561 = vshll.u32 %v1449, 16
        %v1563 = vrot.slane %v1561, 5
        %v1564 = vsel %vm1502, %v1559, %v1563
        %v1565 = vshrl.u32 %v1449, 16
        %v1567 = vrot.slane %v1565, 4
        %v1568 = vor.u32 %v1567, %v1563
        %v1569 = vrot.slane %v1568, 4
        %v1571 = vshll.u32 %v1466, 16
        %v1573 = vrot.slane %v1571, 5
        %v1574 = vsel %vm1502, %v1569, %v1573
        %v1576 = vshrl.u32 %v1450, 16
        %v1578 = vrot.slane %v1576, 4
        %v1579 = vshll.u32 %v1450, 16
        %v1581 = vrot.slane %v1579, 5
        %v1582 = vor.u32 %v1578, %v1581
        %v1583 = vrot.slane %v1582, 4
        %v1585 = vshll.u32 %v1451, 16
        %v1587 = vrot.slane %v1585, 5
        %v1588 = vsel %vm1502, %v1583, %v1587
        %v1589 = vshrl.u32 %v1451, 16
        %v1591 = vrot.slane %v1589, 4
        %v1592 = vor.u32 %v1591, %v1587
        %v1593 = vrot.slane %v1592, 4
        %v1595 = vshll.u32 %v1467, 16
        %v1597 = vrot.slane %v1595, 5
        %v1598 = vsel %vm1502, %v1593, %v1597
        %v1600 = vshrl.u32 %v1452, 16
        %v1602 = vrot.slane %v1600, 4
        %v1603 = vshll.u32 %v1452, 16
        %v1605 = vrot.slane %v1603, 5
        %v1606 = vor.u32 %v1602, %v1605
        %v1607 = vrot.slane %v1606, 4
        %v1609 = vshll.u32 %v1453, 16
        %v1611 = vrot.slane %v1609, 5
        %v1612 = vsel %vm1502, %v1607, %v1611
        %v1613 = vshrl.u32 %v1453, 16
        %v1615 = vrot.slane %v1613, 4
        %v1616 = vor.u32 %v1615, %v1611
        %v1617 = vrot.slane %v1616, 4
        %v1619 = vshll.u32 %v1468, 16
        %v1621 = vrot.slane %v1619, 5
        %v1622 = vsel %vm1502, %v1617, %v1621
        %v1624 = vshrl.u32 %v1454, 16
        %v1626 = vrot.slane %v1624, 4
        %v1627 = vshll.u32 %v1454, 16
        %v1629 = vrot.slane %v1627, 5
        %v1630 = vor.u32 %v1626, %v1629
        %v1631 = vrot.slane %v1630, 4
        %v1633 = vshll.u32 %v1455, 16
        %v1635 = vrot.slane %v1633, 5
        %v1636 = vsel %vm1502, %v1631, %v1635
        %v1637 = vshrl.u32 %v1455, 16
        %v1639 = vrot.slane %v1637, 4
        %v1640 = vor.u32 %v1639, %v1635
        %v1641 = vrot.slane %v1640, 4
        %v1643 = vshll.u32 %v1469, 16
        %v1645 = vrot.slane %v1643, 5
        %v1646 = vsel %vm1502, %v1641, %v1645
        %v1648 = vshrl.u32 %v1456, 16
        %v1650 = vrot.slane %v1648, 4
        %v1651 = vshll.u32 %v1456, 16
        %v1653 = vrot.slane %v1651, 5
        %v1654 = vor.u32 %v1650, %v1653
        %v1655 = vrot.slane %v1654, 4
        %v1657 = vshll.u32 %v1457, 16
        %v1659 = vrot.slane %v1657, 5
        %v1660 = vsel %vm1502, %v1655, %v1659
        %v1661 = vshrl.u32 %v1457, 16
        %v1663 = vrot.slane %v1661, 4
        %v1664 = vor.u32 %v1663, %v1659
        %v1665 = vrot.slane %v1664, 4
        %v1667 = vshll.u32 %v1470, 16
        %v1669 = vrot.slane %v1667, 5
        %v1670 = vsel %vm1502, %v1665, %v1669
        %v1672 = vshrl.u32 %v1458, 16
        %v1674 = vrot.slane %v1672, 4
        %v1675 = vshll.u32 %v1458, 16
        %v1677 = vrot.slane %v1675, 5
        %v1678 = vor.u32 %v1674, %v1677
        %v1679 = vrot.slane %v1678, 4
        %v1681 = vshll.u32 %v1459, 16
        %v1683 = vrot.slane %v1681, 5
        %v1684 = vsel %vm1502, %v1679, %v1683
        %v1685 = vshrl.u32 %v1459, 16
        %v1687 = vrot.slane %v1685, 4
        %v1688 = vor.u32 %v1687, %v1683
        %v1689 = vrot.slane %v1688, 4
        %v1691 = vshll.u32 %v1471, 16
        %v1693 = vrot.slane %v1691, 5
        %v1694 = vsel %vm1502, %v1689, %v1693
        %s1695 = scalar_lea.vmem [#allocation11], 64
        %v1696 = vld [vmem:[%s1695] sm:$0xf]
        %v1697 = vld [vmem:[%s1695 + $0x4] sm:$0xf]
        %v1698 = vld [vmem:[%s1695 + $0x8] sm:$0xf]
        %v1699 = vld [vmem:[%s1695 + $0xc] sm:$0xf]
        %v1700 = vld [vmem:[%s1695 + $0x10] sm:$0xf]
        %v1701 = vld [vmem:[%s1695 + $0x14] sm:$0xf]
        %v1702 = vld [vmem:[%s1695 + $0x18] sm:$0xf]
        %v1703 = vld [vmem:[%s1695 + $0x1c] sm:$0xf]
        %v1704 = vld [vmem:[%s1695 + $0x20] sm:$0xf]
        %v1705 = vld [vmem:[%s1695 + $0x24] sm:$0xf]
        %v1706 = vld [vmem:[%s1695 + $0x28] sm:$0xf]
        %v1707 = vld [vmem:[%s1695 + $0x2c] sm:$0xf]
        %v1708 = vld [vmem:[%s1695 + $0x30] sm:$0xf]
        %v1709 = vld [vmem:[%s1695 + $0x34] sm:$0xf]
        %v1710 = vld [vmem:[%s1695 + $0x38] sm:$0xf]
        %v1711 = vld [vmem:[%s1695 + $0x3c] sm:$0xf]
        %v1712 = vunpack.c.l.b16 %v1516
        %v1713 = vunpack.c.l.b16 %v1526
        %v1714 = vunpack.c.l.b16 %v1540
        %v1715 = vunpack.c.l.b16 %v1550
        %v1716 = vunpack.c.l.b16 %v1564
        %v1717 = vunpack.c.l.b16 %v1574
        %v1718 = vunpack.c.l.b16 %v1588
        %v1719 = vunpack.c.l.b16 %v1598
        %v1720 = vunpack.c.l.b16 %v1612
        %v1721 = vunpack.c.l.b16 %v1622
        %v1722 = vunpack.c.l.b16 %v1636
        %v1723 = vunpack.c.l.b16 %v1646
        %v1724 = vunpack.c.l.b16 %v1660
        %v1725 = vunpack.c.l.b16 %v1670
        %v1726 = vunpack.c.l.b16 %v1684
        %v1727 = vunpack.c.l.b16 %v1694
        %v1728 = vpack.c.b16 %v1713, %v1712
        %v1729 = vpack.c.b16 %v1715, %v1714
        %v1730 = vpack.c.b16 %v1717, %v1716
        %v1731 = vpack.c.b16 %v1719, %v1718
        %v1732 = vpack.c.b16 %v1721, %v1720
        %v1733 = vpack.c.b16 %v1723, %v1722
        %v1734 = vpack.c.b16 %v1725, %v1724
        %v1735 = vpack.c.b16 %v1727, %v1726
        %v1760 = vunpack.c.l.b16 %v1696
        %v1761 = vunpack.c.l.b16 %v1697
        %v1762 = vunpack.c.l.b16 %v1698
        %v1763 = vunpack.c.l.b16 %v1699
        %v1764 = vunpack.c.l.b16 %v1700
        %v1765 = vunpack.c.l.b16 %v1701
        %v1766 = vunpack.c.l.b16 %v1702
        %v1767 = vunpack.c.l.b16 %v1703
        %v1768 = vunpack.c.l.b16 %v1704
        %v1769 = vunpack.c.l.b16 %v1705
        %v1770 = vunpack.c.l.b16 %v1706
        %v1771 = vunpack.c.l.b16 %v1707
        %v1772 = vunpack.c.l.b16 %v1708
        %v1773 = vunpack.c.l.b16 %v1709
        %v1774 = vunpack.c.l.b16 %v1710
        %v1775 = vunpack.c.l.b16 %v1711
        %v1776 = vpack.c.b16 %v1761, %v1760
        %v1777 = vpack.c.b16 %v1763, %v1762
        %v1778 = vpack.c.b16 %v1765, %v1764
        %v1779 = vpack.c.b16 %v1767, %v1766
        %v1780 = vpack.c.b16 %v1769, %v1768
        %v1781 = vpack.c.b16 %v1771, %v1770
        %v1782 = vpack.c.b16 %v1773, %v1772
        %v1783 = vpack.c.b16 %v1775, %v1774
        %1792 = vmatprep.subr.bf16.mxu0 0
        %1793 = vmatpush1.bf16.msra.mxu0 %v1776
        %1794 = vmatprep.subr.bf16.mxu0 0
        %1795 = vmatpush1.bf16.msra.mxu0 %v1777
        %1796 = vmatprep.subr.bf16.mxu0 0
        %1797 = vmatpush1.bf16.msra.mxu0 %v1778
        %1798 = vmatprep.subr.bf16.mxu0 0
        %1799 = vmatpush1.bf16.msra.mxu0 %v1779
        %1800 = vmatprep.subr.bf16.mxu0 0
        %1801 = vmatpush1.bf16.msra.mxu0 %v1780
        %1802 = vmatprep.subr.bf16.mxu0 0
        %1803 = vmatpush1.bf16.msra.mxu0 %v1781
        %1804 = vmatprep.subr.bf16.mxu0 0
        %1805 = vmatpush1.bf16.msra.mxu0 %v1782
        %1806 = vmatprep.subr.bf16.mxu0 0
        %1807 = vmatpush1.bf16.msra.mxu0 %v1783
        %1808 = vmatprep.subr.bf16.mxu0 0
        %1809 = vmatpush1.bf16.msra.mxu0 0
        %1810 = vmatprep.subr.bf16.mxu0 0
        %1811 = vmatpush1.bf16.msra.mxu0 0
        %1812 = vmatprep.subr.bf16.mxu0 0
        %1813 = vmatpush1.bf16.msra.mxu0 0
        %1814 = vmatprep.subr.bf16.mxu0 0
        %1815 = vmatpush1.bf16.msra.mxu0 0
        %1816 = vmatprep.subr.bf16.mxu0 0
        %1817 = vmatpush1.bf16.msra.mxu0 0
        %1818 = vmatprep.subr.bf16.mxu0 0
        %1819 = vmatpush1.bf16.msra.mxu0 0
        %1820 = vmatprep.subr.bf16.mxu0 0
        %1821 = vmatpush1.bf16.msra.mxu0 0
        %1822 = vmatprep.subr.bf16.mxu0 0
        %1823 = vmatpush1.bf16.msra.mxu0 0
        %1824 = vmatprep.mubr.bf16.mxu0 0
        %1825 = vmatmul.mubr.bf16.gmra.mrb[0].mxu0 %v1728
        %v1826 = vpop.f32.mrb[0].mxu0
        %v1827 = vadd.f32 0.0, %v1826
        %v1828 = vpop.f32.mrb[0].mxu0
        %v1829 = vpop.f32.mrb[0].mxu0
        %v1830 = vadd.f32 0.0, %v1829
        %v1831 = vpop.f32.mrb[0].mxu0
        %1832 = vmatprep.mubr.bf16.mxu0 0
        %1833 = vmatmul.mubr.bf16.gmra.mrb[0].mxu0 %v1729
        %v1834 = vpop.f32.mrb[0].mxu0
        %v1835 = vadd.f32 0.0, %v1834
        %v1836 = vpop.f32.mrb[0].mxu0
        %v1837 = vpop.f32.mrb[0].mxu0
        %v1838 = vadd.f32 0.0, %v1837
        %v1839 = vpop.f32.mrb[0].mxu0
        %1840 = vmatprep.mubr.bf16.mxu0 0
        %1841 = vmatmul.mubr.bf16.gmra.mrb[0].mxu0 %v1730
        %v1842 = vpop.f32.mrb[0].mxu0
        %v1843 = vadd.f32 0.0, %v1842
        %v1844 = vpop.f32.mrb[0].mxu0
        %v1845 = vpop.f32.mrb[0].mxu0
        %v1846 = vadd.f32 0.0, %v1845
        %v1847 = vpop.f32.mrb[0].mxu0
        %1848 = vmatprep.mubr.bf16.mxu0 0
        %1849 = vmatmul.mubr.bf16.gmra.mrb[0].mxu0 %v1731
        %v1850 = vpop.f32.mrb[0].mxu0
        %v1851 = vadd.f32 0.0, %v1850
        %v1852 = vpop.f32.mrb[0].mxu0
        %v1853 = vpop.f32.mrb[0].mxu0
        %v1854 = vadd.f32 0.0, %v1853
        %v1855 = vpop.f32.mrb[0].mxu0
        %1856 = vmatprep.mubr.bf16.mxu0 0
        %1857 = vmatmul.mubr.bf16.gmra.mrb[0].mxu0 %v1732
        %v1858 = vpop.f32.mrb[0].mxu0
        %v1859 = vadd.f32 0.0, %v1858
        %v1860 = vpop.f32.mrb[0].mxu0
        %v1861 = vpop.f32.mrb[0].mxu0
        %v1862 = vadd.f32 0.0, %v1861
        %v1863 = vpop.f32.mrb[0].mxu0
        %1864 = vmatprep.mubr.bf16.mxu0 0
        %1865 = vmatmul.mubr.bf16.gmra.mrb[0].mxu0 %v1733
        %v1866 = vpop.f32.mrb[0].mxu0
        %v1867 = vadd.f32 0.0, %v1866
        %v1868 = vpop.f32.mrb[0].mxu0
        %v1869 = vpop.f32.mrb[0].mxu0
        %v1870 = vadd.f32 0.0, %v1869
        %v1871 = vpop.f32.mrb[0].mxu0
        %1872 = vmatprep.mubr.bf16.mxu0 0
        %1873 = vmatmul.mubr.bf16.gmra.mrb[0].mxu0 %v1734
        %v1874 = vpop.f32.mrb[0].mxu0
        %v1875 = vadd.f32 0.0, %v1874
        %v1876 = vpop.f32.mrb[0].mxu0
        %v1877 = vpop.f32.mrb[0].mxu0
        %v1878 = vadd.f32 0.0, %v1877
        %v1879 = vpop.f32.mrb[0].mxu0
        %1880 = vmatprep.mubr.bf16.mxu0 0
        %1881 = vmatmul.mubr.bf16.gmra.mrb[0].mxu0 %v1735
        %v1882 = vpop.f32.mrb[0].mxu0
        %v1883 = vadd.f32 0.0, %v1882
        %v1884 = vpop.f32.mrb[0].mxu0
        %v1885 = vpop.f32.mrb[0].mxu0
        %v1886 = vadd.f32 0.0, %v1885
        %v1887 = vpop.f32.mrb[0].mxu0
        %1888 = vdwg.mxu0
        %v1905 = vunpack.c.l.b16 %v1444
        %v1906 = vunpack.c.l.b16 %v1445
        %v1907 = vunpack.c.l.b16 %v1446
        %v1908 = vunpack.c.l.b16 %v1447
        %v1909 = vunpack.c.l.b16 %v1448
        %v1910 = vunpack.c.l.b16 %v1449
        %v1911 = vunpack.c.l.b16 %v1450
        %v1912 = vunpack.c.l.b16 %v1451
        %v1913 = vunpack.c.l.b16 %v1452
        %v1914 = vunpack.c.l.b16 %v1453
        %v1915 = vunpack.c.l.b16 %v1454
        %v1916 = vunpack.c.l.b16 %v1455
        %v1917 = vunpack.c.l.b16 %v1456
        %v1918 = vunpack.c.l.b16 %v1457
        %v1919 = vunpack.c.l.b16 %v1458
        %v1920 = vunpack.c.l.b16 %v1459
        %v1921 = vpack.c.b16 %v1906, %v1905
        %v1922 = vpack.c.b16 %v1908, %v1907
        %v1923 = vpack.c.b16 %v1910, %v1909
        %v1924 = vpack.c.b16 %v1912, %v1911
        %v1925 = vpack.c.b16 %v1914, %v1913
        %v1926 = vpack.c.b16 %v1916, %v1915
        %v1927 = vpack.c.b16 %v1918, %v1917
        %v1928 = vpack.c.b16 %v1920, %v1919
        %v1953 = vunpack.c.l.b16 %v1484
        %v1954 = vunpack.c.l.b16 %v1485
        %v1955 = vunpack.c.l.b16 %v1486
        %v1956 = vunpack.c.l.b16 %v1487
        %v1957 = vunpack.c.l.b16 %v1488
        %v1958 = vunpack.c.l.b16 %v1489
        %v1959 = vunpack.c.l.b16 %v1490
        %v1960 = vunpack.c.l.b16 %v1491
        %v1961 = vunpack.c.l.b16 %v1492
        %v1962 = vunpack.c.l.b16 %v1493
        %v1963 = vunpack.c.l.b16 %v1494
        %v1964 = vunpack.c.l.b16 %v1495
        %v1965 = vunpack.c.l.b16 %v1496
        %v1966 = vunpack.c.l.b16 %v1497
        %v1967 = vunpack.c.l.b16 %v1498
        %v1968 = vunpack.c.l.b16 %v1499
        %v1969 = vpack.c.b16 %v1954, %v1953
        %v1970 = vpack.c.b16 %v1956, %v1955
        %v1971 = vpack.c.b16 %v1958, %v1957
        %v1972 = vpack.c.b16 %v1960, %v1959
        %v1973 = vpack.c.b16 %v1962, %v1961
        %v1974 = vpack.c.b16 %v1964, %v1963
        %v1975 = vpack.c.b16 %v1966, %v1965
        %v1976 = vpack.c.b16 %v1968, %v1967
        %1985 = vmatprep.subr.bf16.mxu0 0
        %1986 = vmatpush1.bf16.msra.mxu0 %v1969
        %1987 = vmatprep.subr.bf16.mxu0 0
        %1988 = vmatpush1.bf16.msra.mxu0 %v1970
        %1989 = vmatprep.subr.bf16.mxu0 0
        %1990 = vmatpush1.bf16.msra.mxu0 %v1971
        %1991 = vmatprep.subr.bf16.mxu0 0
        %1992 = vmatpush1.bf16.msra.mxu0 %v1972
        %1993 = vmatprep.subr.bf16.mxu0 0
        %1994 = vmatpush1.bf16.msra.mxu0 %v1973
        %1995 = vmatprep.subr.bf16.mxu0 0
        %1996 = vmatpush1.bf16.msra.mxu0 %v1974
        %1997 = vmatprep.subr.bf16.mxu0 0
        %1998 = vmatpush1.bf16.msra.mxu0 %v1975
        %1999 = vmatprep.subr.bf16.mxu0 0
        %2000 = vmatpush1.bf16.msra.mxu0 %v1976
        %2001 = vmatprep.subr.bf16.mxu0 0
        %2002 = vmatpush1.bf16.msra.mxu0 0
        %2003 = vmatprep.subr.bf16.mxu0 0
        %2004 = vmatpush1.bf16.msra.mxu0 0
        %2005 = vmatprep.subr.bf16.mxu0 0
        %2006 = vmatpush1.bf16.msra.mxu0 0
        %2007 = vmatprep.subr.bf16.mxu0 0
        %2008 = vmatpush1.bf16.msra.mxu0 0
        %2009 = vmatprep.subr.bf16.mxu0 0
        %2010 = vmatpush1.bf16.msra.mxu0 0
        %2011 = vmatprep.subr.bf16.mxu0 0
        %2012 = vmatpush1.bf16.msra.mxu0 0
        %2013 = vmatprep.subr.bf16.mxu0 0
        %2014 = vmatpush1.bf16.msra.mxu0 0
        %2015 = vmatprep.subr.bf16.mxu0 0
        %2016 = vmatpush1.bf16.msra.mxu0 0
        %2017 = vmatprep.mubr.bf16.mxu0 0
        %2018 = vmatmul.mubr.bf16.gmra.mrb[0].mxu0 %v1921
        %v2019 = vpop.f32.mrb[0].mxu0
        %v2020 = vadd.f32 %v1827, %v2019
        %v2021 = vpop.f32.mrb[0].mxu0
        %v2022 = vpop.f32.mrb[0].mxu0
        %v2023 = vadd.f32 %v1830, %v2022
        %v2024 = vpop.f32.mrb[0].mxu0
        %2025 = vmatprep.mubr.bf16.mxu0 0
        %2026 = vmatmul.mubr.bf16.gmra.mrb[0].mxu0 %v1922
        %v2027 = vpop.f32.mrb[0].mxu0
        %v2028 = vadd.f32 %v1835, %v2027
        %v2029 = vpop.f32.mrb[0].mxu0
        %v2030 = vpop.f32.mrb[0].mxu0
        %v2031 = vadd.f32 %v1838, %v2030
        %v2032 = vpop.f32.mrb[0].mxu0
        %2033 = vmatprep.mubr.bf16.mxu0 0
        %2034 = vmatmul.mubr.bf16.gmra.mrb[0].mxu0 %v1923
        %v2035 = vpop.f32.mrb[0].mxu0
        %v2036 = vadd.f32 %v1843, %v2035
        %v2037 = vpop.f32.mrb[0].mxu0
        %v2038 = vpop.f32.mrb[0].mxu0
        %v2039 = vadd.f32 %v1846, %v2038
        %v2040 = vpop.f32.mrb[0].mxu0
        %2041 = vmatprep.mubr.bf16.mxu0 0
        %2042 = vmatmul.mubr.bf16.gmra.mrb[0].mxu0 %v1924
        %v2043 = vpop.f32.mrb[0].mxu0
        %v2044 = vadd.f32 %v1851, %v2043
        %v2045 = vpop.f32.mrb[0].mxu0
        %v2046 = vpop.f32.mrb[0].mxu0
        %v2047 = vadd.f32 %v1854, %v2046
        %v2048 = vpop.f32.mrb[0].mxu0
        %2049 = vmatprep.mubr.bf16.mxu0 0
        %2050 = vmatmul.mubr.bf16.gmra.mrb[0].mxu0 %v1925
        %v2051 = vpop.f32.mrb[0].mxu0
        %v2052 = vadd.f32 %v1859, %v2051
        %v2053 = vpop.f32.mrb[0].mxu0
        %v2054 = vpop.f32.mrb[0].mxu0
        %v2055 = vadd.f32 %v1862, %v2054
        %v2056 = vpop.f32.mrb[0].mxu0
        %2057 = vmatprep.mubr.bf16.mxu0 0
        %2058 = vmatmul.mubr.bf16.gmra.mrb[0].mxu0 %v1926
        %v2059 = vpop.f32.mrb[0].mxu0
        %v2060 = vadd.f32 %v1867, %v2059
        %v2061 = vpop.f32.mrb[0].mxu0
        %v2062 = vpop.f32.mrb[0].mxu0
        %v2063 = vadd.f32 %v1870, %v2062
        %v2064 = vpop.f32.mrb[0].mxu0
        %2065 = vmatprep.mubr.bf16.mxu0 0
        %2066 = vmatmul.mubr.bf16.gmra.mrb[0].mxu0 %v1927
        %v2067 = vpop.f32.mrb[0].mxu0
        %v2068 = vadd.f32 %v1875, %v2067
        %v2069 = vpop.f32.mrb[0].mxu0
        %v2070 = vpop.f32.mrb[0].mxu0
        %v2071 = vadd.f32 %v1878, %v2070
        %v2072 = vpop.f32.mrb[0].mxu0
        %2073 = vmatprep.mubr.bf16.mxu0 0
        %2074 = vmatmul.mubr.bf16.gmra.mrb[0].mxu0 %v1928
        %v2075 = vpop.f32.mrb[0].mxu0
        %v2076 = vadd.f32 %v1883, %v2075
        %v2077 = vpop.f32.mrb[0].mxu0
        %v2078 = vpop.f32.mrb[0].mxu0
        %v2079 = vadd.f32 %v1886, %v2078
        %v2080 = vpop.f32.mrb[0].mxu0
        %2081 = vdwg.mxu0
        %vm2098 = vcmask 1042432
        %vm2099 = vcmask 1046532
        %vm2100 = vmor %vm2098, %vm2099
        %v2101 = vrot.slane %v1474, 5
        %v2102 = vrot.slane %v2101, 4
        %v2103 = vrot.slane %v1445, 5
        %v2104 = vsel %vm2100, %v2102, %v2103
        %v2105 = vrot.slane %v2103, 4
        %v2106 = vrot.slane %v1464, 5
        %v2107 = vsel %vm2100, %v2105, %v2106
        %v2108 = vrot.slane %v1475, 5
        %v2109 = vrot.slane %v2108, 4
        %v2110 = vrot.slane %v1447, 5
        %v2111 = vsel %vm2100, %v2109, %v2110
        %v2112 = vrot.slane %v2110, 4
        %v2113 = vrot.slane %v1465, 5
        %v2114 = vsel %vm2100, %v2112, %v2113
        %v2115 = vrot.slane %v1476, 5
        %v2116 = vrot.slane %v2115, 4
        %v2117 = vrot.slane %v1449, 5
        %v2118 = vsel %vm2100, %v2116, %v2117
        %v2119 = vrot.slane %v2117, 4
        %v2120 = vrot.slane %v1466, 5
        %v2121 = vsel %vm2100, %v2119, %v2120
        %v2122 = vrot.slane %v1477, 5
        %v2123 = vrot.slane %v2122, 4
        %v2124 = vrot.slane %v1451, 5
        %v2125 = vsel %vm2100, %v2123, %v2124
        %v2126 = vrot.slane %v2124, 4
        %v2127 = vrot.slane %v1467, 5
        %v2128 = vsel %vm2100, %v2126, %v2127
        %v2129 = vrot.slane %v1478, 5
        %v2130 = vrot.slane %v2129, 4
        %v2131 = vrot.slane %v1453, 5
        %v2132 = vsel %vm2100, %v2130, %v2131
        %v2133 = vrot.slane %v2131, 4
        %v2134 = vrot.slane %v1468, 5
        %v2135 = vsel %vm2100, %v2133, %v2134
        %v2136 = vrot.slane %v1479, 5
        %v2137 = vrot.slane %v2136, 4
        %v2138 = vrot.slane %v1455, 5
        %v2139 = vsel %vm2100, %v2137, %v2138
        %v2140 = vrot.slane %v2138, 4
        %v2141 = vrot.slane %v1469, 5
        %v2142 = vsel %vm2100, %v2140, %v2141
        %v2143 = vrot.slane %v1480, 5
        %v2144 = vrot.slane %v2143, 4
        %v2145 = vrot.slane %v1457, 5
        %v2146 = vsel %vm2100, %v2144, %v2145
        %v2147 = vrot.slane %v2145, 4
        %v2148 = vrot.slane %v1470, 5
        %v2149 = vsel %vm2100, %v2147, %v2148
        %v2150 = vrot.slane %v1481, 5
        %v2151 = vrot.slane %v2150, 4
        %v2152 = vrot.slane %v1459, 5
        %v2153 = vsel %vm2100, %v2151, %v2152
        %v2154 = vrot.slane %v2152, 4
        %v2155 = vrot.slane %v1471, 5
        %v2156 = vsel %vm2100, %v2154, %v2155
        %s2157 = scalar_lea.vmem [#allocation11], 128
        %v2158 = vld [vmem:[%s2157] sm:$0xf]
        %v2159 = vld [vmem:[%s2157 + $0x4] sm:$0xf]
        %v2160 = vld [vmem:[%s2157 + $0x8] sm:$0xf]
        %v2161 = vld [vmem:[%s2157 + $0xc] sm:$0xf]
        %v2162 = vld [vmem:[%s2157 + $0x10] sm:$0xf]
        %v2163 = vld [vmem:[%s2157 + $0x14] sm:$0xf]
        %v2164 = vld [vmem:[%s2157 + $0x18] sm:$0xf]
        %v2165 = vld [vmem:[%s2157 + $0x1c] sm:$0xf]
        %v2166 = vld [vmem:[%s2157 + $0x20] sm:$0xf]
        %v2167 = vld [vmem:[%s2157 + $0x24] sm:$0xf]
        %v2168 = vld [vmem:[%s2157 + $0x28] sm:$0xf]
        %v2169 = vld [vmem:[%s2157 + $0x2c] sm:$0xf]
        %v2170 = vld [vmem:[%s2157 + $0x30] sm:$0xf]
        %v2171 = vld [vmem:[%s2157 + $0x34] sm:$0xf]
        %v2172 = vld [vmem:[%s2157 + $0x38] sm:$0xf]
        %v2173 = vld [vmem:[%s2157 + $0x3c] sm:$0xf]
        %v2174 = vunpack.c.l.b16 %v2104
        %v2175 = vunpack.c.l.b16 %v2107
        %v2176 = vunpack.c.l.b16 %v2111
        %v2177 = vunpack.c.l.b16 %v2114
        %v2178 = vunpack.c.l.b16 %v2118
        %v2179 = vunpack.c.l.b16 %v2121
        %v2180 = vunpack.c.l.b16 %v2125
        %v2181 = vunpack.c.l.b16 %v2128
        %v2182 = vunpack.c.l.b16 %v2132
        %v2183 = vunpack.c.l.b16 %v2135
        %v2184 = vunpack.c.l.b16 %v2139
        %v2185 = vunpack.c.l.b16 %v2142
        %v2186 = vunpack.c.l.b16 %v2146
        %v2187 = vunpack.c.l.b16 %v2149
        %v2188 = vunpack.c.l.b16 %v2153
        %v2189 = vunpack.c.l.b16 %v2156
        %v2190 = vpack.c.b16 %v2175, %v2174
        %v2191 = vpack.c.b16 %v2177, %v2176
        %v2192 = vpack.c.b16 %v2179, %v2178
        %v2193 = vpack.c.b16 %v2181, %v2180
        %v2194 = vpack.c.b16 %v2183, %v2182
        %v2195 = vpack.c.b16 %v2185, %v2184
        %v2196 = vpack.c.b16 %v2187, %v2186
        %v2197 = vpack.c.b16 %v2189, %v2188
        %v2222 = vunpack.c.l.b16 %v2158
        %v2223 = vunpack.c.l.b16 %v2159
        %v2224 = vunpack.c.l.b16 %v2160
        %v2225 = vunpack.c.l.b16 %v2161
        %v2226 = vunpack.c.l.b16 %v2162
        %v2227 = vunpack.c.l.b16 %v2163
        %v2228 = vunpack.c.l.b16 %v2164
        %v2229 = vunpack.c.l.b16 %v2165
        %v2230 = vunpack.c.l.b16 %v2166
        %v2231 = vunpack.c.l.b16 %v2167
        %v2232 = vunpack.c.l.b16 %v2168
        %v2233 = vunpack.c.l.b16 %v2169
        %v2234 = vunpack.c.l.b16 %v2170
        %v2235 = vunpack.c.l.b16 %v2171
        %v2236 = vunpack.c.l.b16 %v2172
        %v2237 = vunpack.c.l.b16 %v2173
        %v2238 = vpack.c.b16 %v2223, %v2222
        %v2239 = vpack.c.b16 %v2225, %v2224
        %v2240 = vpack.c.b16 %v2227, %v2226
        %v2241 = vpack.c.b16 %v2229, %v2228
        %v2242 = vpack.c.b16 %v2231, %v2230
        %v2243 = vpack.c.b16 %v2233, %v2232
        %v2244 = vpack.c.b16 %v2235, %v2234
        %v2245 = vpack.c.b16 %v2237, %v2236
        %2254 = vmatprep.subr.bf16.mxu0 0
        %2255 = vmatpush1.bf16.msra.mxu0 %v2238
        %2256 = vmatprep.subr.bf16.mxu0 0
        %2257 = vmatpush1.bf16.msra.mxu0 %v2239
        %2258 = vmatprep.subr.bf16.mxu0 0
        %2259 = vmatpush1.bf16.msra.mxu0 %v2240
        %2260 = vmatprep.subr.bf16.mxu0 0
        %2261 = vmatpush1.bf16.msra.mxu0 %v2241
        %2262 = vmatprep.subr.bf16.mxu0 0
        %2263 = vmatpush1.bf16.msra.mxu0 %v2242
        %2264 = vmatprep.subr.bf16.mxu0 0
        %2265 = vmatpush1.bf16.msra.mxu0 %v2243
        %2266 = vmatprep.subr.bf16.mxu0 0
        %2267 = vmatpush1.bf16.msra.mxu0 %v2244
        %2268 = vmatprep.subr.bf16.mxu0 0
        %2269 = vmatpush1.bf16.msra.mxu0 %v2245
        %2270 = vmatprep.subr.bf16.mxu0 0
        %2271 = vmatpush1.bf16.msra.mxu0 0
        %2272 = vmatprep.subr.bf16.mxu0 0
        %2273 = vmatpush1.bf16.msra.mxu0 0
        %2274 = vmatprep.subr.bf16.mxu0 0
        %2275 = vmatpush1.bf16.msra.mxu0 0
        %2276 = vmatprep.subr.bf16.mxu0 0
        %2277 = vmatpush1.bf16.msra.mxu0 0
        %2278 = vmatprep.subr.bf16.mxu0 0
        %2279 = vmatpush1.bf16.msra.mxu0 0
        %2280 = vmatprep.subr.bf16.mxu0 0
        %2281 = vmatpush1.bf16.msra.mxu0 0
        %2282 = vmatprep.subr.bf16.mxu0 0
        %2283 = vmatpush1.bf16.msra.mxu0 0
        %2284 = vmatprep.subr.bf16.mxu0 0
        %2285 = vmatpush1.bf16.msra.mxu0 0
        %2286 = vmatprep.mubr.bf16.mxu0 0
        %2287 = vmatmul.mubr.bf16.gmra.mrb[0].mxu0 %v2190
        %v2288 = vpop.f32.mrb[0].mxu0
        %v2289 = vadd.f32 0.0, %v2288
        %v2290 = vpop.f32.mrb[0].mxu0
        %v2291 = vpop.f32.mrb[0].mxu0
        %v2292 = vadd.f32 0.0, %v2291
        %v2293 = vpop.f32.mrb[0].mxu0
        %2294 = vmatprep.mubr.bf16.mxu0 0
        %2295 = vmatmul.mubr.bf16.gmra.mrb[0].mxu0 %v2191
        %v2296 = vpop.f32.mrb[0].mxu0
        %v2297 = vadd.f32 0.0, %v2296
        %v2298 = vpop.f32.mrb[0].mxu0
        %v2299 = vpop.f32.mrb[0].mxu0
        %v2300 = vadd.f32 0.0, %v2299
        %v2301 = vpop.f32.mrb[0].mxu0
        %2302 = vmatprep.mubr.bf16.mxu0 0
        %2303 = vmatmul.mubr.bf16.gmra.mrb[0].mxu0 %v2192
        %v2304 = vpop.f32.mrb[0].mxu0
        %v2305 = vadd.f32 0.0, %v2304
        %v2306 = vpop.f32.mrb[0].mxu0
        %v2307 = vpop.f32.mrb[0].mxu0
        %v2308 = vadd.f32 0.0, %v2307
        %v2309 = vpop.f32.mrb[0].mxu0
        %2310 = vmatprep.mubr.bf16.mxu0 0
        %2311 = vmatmul.mubr.bf16.gmra.mrb[0].mxu0 %v2193
        %v2312 = vpop.f32.mrb[0].mxu0
        %v2313 = vadd.f32 0.0, %v2312
        %v2314 = vpop.f32.mrb[0].mxu0
        %v2315 = vpop.f32.mrb[0].mxu0
        %v2316 = vadd.f32 0.0, %v2315
        %v2317 = vpop.f32.mrb[0].mxu0
        %2318 = vmatprep.mubr.bf16.mxu0 0
        %2319 = vmatmul.mubr.bf16.gmra.mrb[0].mxu0 %v2194
        %v2320 = vpop.f32.mrb[0].mxu0
        %v2321 = vadd.f32 0.0, %v2320
        %v2322 = vpop.f32.mrb[0].mxu0
        %v2323 = vpop.f32.mrb[0].mxu0
        %v2324 = vadd.f32 0.0, %v2323
        %v2325 = vpop.f32.mrb[0].mxu0
        %2326 = vmatprep.mubr.bf16.mxu0 0
        %2327 = vmatmul.mubr.bf16.gmra.mrb[0].mxu0 %v2195
        %v2328 = vpop.f32.mrb[0].mxu0
        %v2329 = vadd.f32 0.0, %v2328
        %v2330 = vpop.f32.mrb[0].mxu0
        %v2331 = vpop.f32.mrb[0].mxu0
        %v2332 = vadd.f32 0.0, %v2331
        %v2333 = vpop.f32.mrb[0].mxu0
        %2334 = vmatprep.mubr.bf16.mxu0 0
        %2335 = vmatmul.mubr.bf16.gmra.mrb[0].mxu0 %v2196
        %v2336 = vpop.f32.mrb[0].mxu0
        %v2337 = vadd.f32 0.0, %v2336
        %v2338 = vpop.f32.mrb[0].mxu0
        %v2339 = vpop.f32.mrb[0].mxu0
        %v2340 = vadd.f32 0.0, %v2339
        %v2341 = vpop.f32.mrb[0].mxu0
        %2342 = vmatprep.mubr.bf16.mxu0 0
        %2343 = vmatmul.mubr.bf16.gmra.mrb[0].mxu0 %v2197
        %v2344 = vpop.f32.mrb[0].mxu0
        %v2345 = vadd.f32 0.0, %v2344
        %v2346 = vpop.f32.mrb[0].mxu0
        %v2347 = vpop.f32.mrb[0].mxu0
        %v2348 = vadd.f32 0.0, %v2347
        %v2349 = vpop.f32.mrb[0].mxu0
        %2350 = vdwg.mxu0
        %v2351 = vadd.f32 %v2020, %v2289
        %v2352 = vadd.f32 %v2023, %v2292
        %v2353 = vadd.f32 %v2028, %v2297
        %v2354 = vadd.f32 %v2031, %v2300
        %v2355 = vadd.f32 %v2036, %v2305
        %v2356 = vadd.f32 %v2039, %v2308
        %v2357 = vadd.f32 %v2044, %v2313
        %v2358 = vadd.f32 %v2047, %v2316
        %v2359 = vadd.f32 %v2052, %v2321
        %v2360 = vadd.f32 %v2055, %v2324
        %v2361 = vadd.f32 %v2060, %v2329
        %v2362 = vadd.f32 %v2063, %v2332
        %v2363 = vadd.f32 %v2068, %v2337
        %v2364 = vadd.f32 %v2071, %v2340
        %v2365 = vadd.f32 %v2076, %v2345
        %v2366 = vadd.f32 %v2079, %v2348
        %s2367 = scalar_lea.vmem [#allocation11], 192
        %v2368 = vld [vmem:[%s2367] sm:$0xf]
        %v2369 = vld [vmem:[%s2367 + $0x4] sm:$0xf]
        %v2370 = vld [vmem:[%s2367 + $0x8] sm:$0xf]
        %v2371 = vld [vmem:[%s2367 + $0xc] sm:$0xf]
        %v2372 = vld [vmem:[%s2367 + $0x10] sm:$0xf]
        %v2373 = vld [vmem:[%s2367 + $0x14] sm:$0xf]
        %v2374 = vld [vmem:[%s2367 + $0x18] sm:$0xf]
        %v2375 = vld [vmem:[%s2367 + $0x1c] sm:$0xf]
        %v2376 = vld [vmem:[%s2367 + $0x20] sm:$0xf]
        %v2377 = vld [vmem:[%s2367 + $0x24] sm:$0xf]
        %v2378 = vld [vmem:[%s2367 + $0x28] sm:$0xf]
        %v2379 = vld [vmem:[%s2367 + $0x2c] sm:$0xf]
        %v2380 = vld [vmem:[%s2367 + $0x30] sm:$0xf]
        %v2381 = vld [vmem:[%s2367 + $0x34] sm:$0xf]
        %v2382 = vld [vmem:[%s2367 + $0x38] sm:$0xf]
        %v2383 = vld [vmem:[%s2367 + $0x3c] sm:$0xf]
        %v2386 = vunpack.c.l.b16 %v1460
        %v2387 = vunpack.c.l.b16 %v1461
        %v2388 = vpack.c.b16 %v2387, %v2386
        %v2406 = vunpack.c.l.b16 %v2368
        %v2407 = vunpack.c.l.b16 %v2369
        %v2408 = vunpack.c.l.b16 %v2370
        %v2409 = vunpack.c.l.b16 %v2371
        %v2410 = vunpack.c.l.b16 %v2372
        %v2411 = vunpack.c.l.b16 %v2373
        %v2412 = vunpack.c.l.b16 %v2374
        %v2413 = vunpack.c.l.b16 %v2375
        %v2414 = vunpack.c.l.b16 %v2376
        %v2415 = vunpack.c.l.b16 %v2377
        %v2416 = vunpack.c.l.b16 %v2378
        %v2417 = vunpack.c.l.b16 %v2379
        %v2418 = vunpack.c.l.b16 %v2380
        %v2419 = vunpack.c.l.b16 %v2381
        %v2420 = vunpack.c.l.b16 %v2382
        %v2421 = vunpack.c.l.b16 %v2383
        %v2422 = vpack.c.b16 %v2407, %v2406
        %v2423 = vpack.c.b16 %v2409, %v2408
        %v2424 = vpack.c.b16 %v2411, %v2410
        %v2425 = vpack.c.b16 %v2413, %v2412
        %v2426 = vpack.c.b16 %v2415, %v2414
        %v2427 = vpack.c.b16 %v2417, %v2416
        %v2428 = vpack.c.b16 %v2419, %v2418
        %v2429 = vpack.c.b16 %v2421, %v2420
        %2438 = vmatprep.subr.bf16.mxu0 0
        %2439 = vmatpush1.bf16.msra.mxu0 %v2422
        %2440 = vmatprep.subr.bf16.mxu0 0
        %2441 = vmatpush1.bf16.msra.mxu0 %v2423
        %2442 = vmatprep.subr.bf16.mxu0 0
        %2443 = vmatpush1.bf16.msra.mxu0 %v2424
        %2444 = vmatprep.subr.bf16.mxu0 0
        %2445 = vmatpush1.bf16.msra.mxu0 %v2425
        %2446 = vmatprep.subr.bf16.mxu0 0
        %2447 = vmatpush1.bf16.msra.mxu0 %v2426
        %2448 = vmatprep.subr.bf16.mxu0 0
        %2449 = vmatpush1.bf16.msra.mxu0 %v2427
        %2450 = vmatprep.subr.bf16.mxu0 0
        %2451 = vmatpush1.bf16.msra.mxu0 %v2428
        %2452 = vmatprep.subr.bf16.mxu0 0
        %2453 = vmatpush1.bf16.msra.mxu0 %v2429
        %2454 = vmatprep.subr.bf16.mxu0 0
        %2455 = vmatpush1.bf16.msra.mxu0 0
        %2456 = vmatprep.subr.bf16.mxu0 0
        %2457 = vmatpush1.bf16.msra.mxu0 0
        %2458 = vmatprep.subr.bf16.mxu0 0
        %2459 = vmatpush1.bf16.msra.mxu0 0
        %2460 = vmatprep.subr.bf16.mxu0 0
        %2461 = vmatpush1.bf16.msra.mxu0 0
        %2462 = vmatprep.subr.bf16.mxu0 0
        %2463 = vmatpush1.bf16.msra.mxu0 0
        %2464 = vmatprep.subr.bf16.mxu0 0
        %2465 = vmatpush1.bf16.msra.mxu0 0
        %2466 = vmatprep.subr.bf16.mxu0 0
        %2467 = vmatpush1.bf16.msra.mxu0 0
        %2468 = vmatprep.subr.bf16.mxu0 0
        %2469 = vmatpush1.bf16.msra.mxu0 0
        %2470 = vmatprep.mubr.bf16.mxu0 0
        %2471 = vmatmul.mubr.bf16.gmra.mrb[0].mxu0 %v1922
        %v2472 = vpop.f32.mrb[0].mxu0
        %v2473 = vadd.f32 0.0, %v2472
        %v2474 = vpop.f32.mrb[0].mxu0
        %v2475 = vpop.f32.mrb[0].mxu0
        %v2476 = vadd.f32 0.0, %v2475
        %v2477 = vpop.f32.mrb[0].mxu0
        %2478 = vmatprep.mubr.bf16.mxu0 0
        %2479 = vmatmul.mubr.bf16.gmra.mrb[0].mxu0 %v1923
        %v2480 = vpop.f32.mrb[0].mxu0
        %v2481 = vadd.f32 0.0, %v2480
        %v2482 = vpop.f32.mrb[0].mxu0
        %v2483 = vpop.f32.mrb[0].mxu0
        %v2484 = vadd.f32 0.0, %v2483
        %v2485 = vpop.f32.mrb[0].mxu0
        %2486 = vmatprep.mubr.bf16.mxu0 0
        %2487 = vmatmul.mubr.bf16.gmra.mrb[0].mxu0 %v1924
        %v2488 = vpop.f32.mrb[0].mxu0
        %v2489 = vadd.f32 0.0, %v2488
        %v2490 = vpop.f32.mrb[0].mxu0
        %v2491 = vpop.f32.mrb[0].mxu0
        %v2492 = vadd.f32 0.0, %v2491
        %v2493 = vpop.f32.mrb[0].mxu0
        %2494 = vmatprep.mubr.bf16.mxu0 0
        %2495 = vmatmul.mubr.bf16.gmra.mrb[0].mxu0 %v1925
        %v2496 = vpop.f32.mrb[0].mxu0
        %v2497 = vadd.f32 0.0, %v2496
        %v2498 = vpop.f32.mrb[0].mxu0
        %v2499 = vpop.f32.mrb[0].mxu0
        %v2500 = vadd.f32 0.0, %v2499
        %v2501 = vpop.f32.mrb[0].mxu0
        %2502 = vmatprep.mubr.bf16.mxu0 0
        %2503 = vmatmul.mubr.bf16.gmra.mrb[0].mxu0 %v1926
        %v2504 = vpop.f32.mrb[0].mxu0
        %v2505 = vadd.f32 0.0, %v2504
        %v2506 = vpop.f32.mrb[0].mxu0
        %v2507 = vpop.f32.mrb[0].mxu0
        %v2508 = vadd.f32 0.0, %v2507
        %v2509 = vpop.f32.mrb[0].mxu0
        %2510 = vmatprep.mubr.bf16.mxu0 0
        %2511 = vmatmul.mubr.bf16.gmra.mrb[0].mxu0 %v1927
        %v2512 = vpop.f32.mrb[0].mxu0
        %v2513 = vadd.f32 0.0, %v2512
        %v2514 = vpop.f32.mrb[0].mxu0
        %v2515 = vpop.f32.mrb[0].mxu0
        %v2516 = vadd.f32 0.0, %v2515
        %v2517 = vpop.f32.mrb[0].mxu0
        %2518 = vmatprep.mubr.bf16.mxu0 0
        %2519 = vmatmul.mubr.bf16.gmra.mrb[0].mxu0 %v1928
        %v2520 = vpop.f32.mrb[0].mxu0
        %v2521 = vadd.f32 0.0, %v2520
        %v2522 = vpop.f32.mrb[0].mxu0
        %v2523 = vpop.f32.mrb[0].mxu0
        %v2524 = vadd.f32 0.0, %v2523
        %v2525 = vpop.f32.mrb[0].mxu0
        %2526 = vmatprep.mubr.bf16.mxu0 0
        %2527 = vmatmul.mubr.bf16.gmra.mrb[0].mxu0 %v2388
        %v2528 = vpop.f32.mrb[0].mxu0
        %v2529 = vadd.f32 0.0, %v2528
        %v2530 = vpop.f32.mrb[0].mxu0
        %v2531 = vpop.f32.mrb[0].mxu0
        %v2532 = vadd.f32 0.0, %v2531
        %v2533 = vpop.f32.mrb[0].mxu0
        %2534 = vdwg.mxu0
        %v2535 = vadd.f32 %v2351, %v2473
        %v2536 = vadd.f32 %v2352, %v2476
        %v2537 = vadd.f32 %v2353, %v2481
        %v2538 = vadd.f32 %v2354, %v2484
        %v2539 = vadd.f32 %v2355, %v2489
        %v2540 = vadd.f32 %v2356, %v2492
        %v2541 = vadd.f32 %v2357, %v2497
        %v2542 = vadd.f32 %v2358, %v2500
        %v2543 = vadd.f32 %v2359, %v2505
        %v2544 = vadd.f32 %v2360, %v2508
        %v2545 = vadd.f32 %v2361, %v2513
        %v2546 = vadd.f32 %v2362, %v2516
        %v2547 = vadd.f32 %v2363, %v2521
        %v2548 = vadd.f32 %v2364, %v2524
        %v2549 = vadd.f32 %v2365, %v2529
        %v2550 = vadd.f32 %v2366, %v2532
        %v2552 = vshrl.u32 %v1460, 16
        %v2554 = vrot.slane %v2552, 4
        %v2555 = vshll.u32 %v1460, 16
        %v2557 = vrot.slane %v2555, 5
        %v2558 = vor.u32 %v2554, %v2557
        %v2559 = vrot.slane %v2558, 4
        %v2561 = vshll.u32 %v1461, 16
        %v2563 = vrot.slane %v2561, 5
        %v2564 = vsel %vm1502, %v2559, %v2563
        %v2565 = vshrl.u32 %v1461, 16
        %v2567 = vrot.slane %v2565, 4
        %v2568 = vor.u32 %v2567, %v2563
        %v2569 = vrot.slane %v2568, 4
        %v2571 = vshll.u32 %v1472, 16
        %v2573 = vrot.slane %v2571, 5
        %v2574 = vsel %vm1502, %v2569, %v2573
        %s2575 = scalar_lea.vmem [#allocation11], 256
        %v2576 = vld [vmem:[%s2575] sm:$0xf]
        %v2577 = vld [vmem:[%s2575 + $0x4] sm:$0xf]
        %v2578 = vld [vmem:[%s2575 + $0x8] sm:$0xf]
        %v2579 = vld [vmem:[%s2575 + $0xc] sm:$0xf]
        %v2580 = vld [vmem:[%s2575 + $0x10] sm:$0xf]
        %v2581 = vld [vmem:[%s2575 + $0x14] sm:$0xf]
        %v2582 = vld [vmem:[%s2575 + $0x18] sm:$0xf]
        %v2583 = vld [vmem:[%s2575 + $0x1c] sm:$0xf]
        %v2584 = vld [vmem:[%s2575 + $0x20] sm:$0xf]
        %v2585 = vld [vmem:[%s2575 + $0x24] sm:$0xf]
        %v2586 = vld [vmem:[%s2575 + $0x28] sm:$0xf]
        %v2587 = vld [vmem:[%s2575 + $0x2c] sm:$0xf]
        %v2588 = vld [vmem:[%s2575 + $0x30] sm:$0xf]
        %v2589 = vld [vmem:[%s2575 + $0x34] sm:$0xf]
        %v2590 = vld [vmem:[%s2575 + $0x38] sm:$0xf]
        %v2591 = vld [vmem:[%s2575 + $0x3c] sm:$0xf]
        %v2592 = vunpack.c.l.b16 %v2564
        %v2593 = vunpack.c.l.b16 %v2574
        %v2594 = vpack.c.b16 %v2593, %v2592
        %v2612 = vunpack.c.l.b16 %v2576
        %v2613 = vunpack.c.l.b16 %v2577
        %v2614 = vunpack.c.l.b16 %v2578
        %v2615 = vunpack.c.l.b16 %v2579
        %v2616 = vunpack.c.l.b16 %v2580
        %v2617 = vunpack.c.l.b16 %v2581
        %v2618 = vunpack.c.l.b16 %v2582
        %v2619 = vunpack.c.l.b16 %v2583
        %v2620 = vunpack.c.l.b16 %v2584
        %v2621 = vunpack.c.l.b16 %v2585
        %v2622 = vunpack.c.l.b16 %v2586
        %v2623 = vunpack.c.l.b16 %v2587
        %v2624 = vunpack.c.l.b16 %v2588
        %v2625 = vunpack.c.l.b16 %v2589
        %v2626 = vunpack.c.l.b16 %v2590
        %v2627 = vunpack.c.l.b16 %v2591
        %v2628 = vpack.c.b16 %v2613, %v2612
        %v2629 = vpack.c.b16 %v2615, %v2614
        %v2630 = vpack.c.b16 %v2617, %v2616
        %v2631 = vpack.c.b16 %v2619, %v2618
        %v2632 = vpack.c.b16 %v2621, %v2620
        %v2633 = vpack.c.b16 %v2623, %v2622
        %v2634 = vpack.c.b16 %v2625, %v2624
        %v2635 = vpack.c.b16 %v2627, %v2626
        %2644 = vmatprep.subr.bf16.mxu0 0
        %2645 = vmatpush1.bf16.msra.mxu0 %v2628
        %2646 = vmatprep.subr.bf16.mxu0 0
        %2647 = vmatpush1.bf16.msra.mxu0 %v2629
        %2648 = vmatprep.subr.bf16.mxu0 0
        %2649 = vmatpush1.bf16.msra.mxu0 %v2630
        %2650 = vmatprep.subr.bf16.mxu0 0
        %2651 = vmatpush1.bf16.msra.mxu0 %v2631
        %2652 = vmatprep.subr.bf16.mxu0 0
        %2653 = vmatpush1.bf16.msra.mxu0 %v2632
        %2654 = vmatprep.subr.bf16.mxu0 0
        %2655 = vmatpush1.bf16.msra.mxu0 %v2633
        %2656 = vmatprep.subr.bf16.mxu0 0
        %2657 = vmatpush1.bf16.msra.mxu0 %v2634
        %2658 = vmatprep.subr.bf16.mxu0 0
        %2659 = vmatpush1.bf16.msra.mxu0 %v2635
        %2660 = vmatprep.subr.bf16.mxu0 0
        %2661 = vmatpush1.bf16.msra.mxu0 0
        %2662 = vmatprep.subr.bf16.mxu0 0
        %2663 = vmatpush1.bf16.msra.mxu0 0
        %2664 = vmatprep.subr.bf16.mxu0 0
        %2665 = vmatpush1.bf16.msra.mxu0 0
        %2666 = vmatprep.subr.bf16.mxu0 0
        %2667 = vmatpush1.bf16.msra.mxu0 0
        %2668 = vmatprep.subr.bf16.mxu0 0
        %2669 = vmatpush1.bf16.msra.mxu0 0
        %2670 = vmatprep.subr.bf16.mxu0 0
        %2671 = vmatpush1.bf16.msra.mxu0 0
        %2672 = vmatprep.subr.bf16.mxu0 0
        %2673 = vmatpush1.bf16.msra.mxu0 0
        %2674 = vmatprep.subr.bf16.mxu0 0
        %2675 = vmatpush1.bf16.msra.mxu0 0
        %2676 = vmatprep.mubr.bf16.mxu0 0
        %2677 = vmatmul.mubr.bf16.gmra.mrb[0].mxu0 %v1729
        %v2678 = vpop.f32.mrb[0].mxu0
        %v2679 = vadd.f32 0.0, %v2678
        %v2680 = vpop.f32.mrb[0].mxu0
        %v2681 = vpop.f32.mrb[0].mxu0
        %v2682 = vadd.f32 0.0, %v2681
        %v2683 = vpop.f32.mrb[0].mxu0
        %2684 = vmatprep.mubr.bf16.mxu0 0
        %2685 = vmatmul.mubr.bf16.gmra.mrb[0].mxu0 %v1730
        %v2686 = vpop.f32.mrb[0].mxu0
        %v2687 = vadd.f32 0.0, %v2686
        %v2688 = vpop.f32.mrb[0].mxu0
        %v2689 = vpop.f32.mrb[0].mxu0
        %v2690 = vadd.f32 0.0, %v2689
        %v2691 = vpop.f32.mrb[0].mxu0
        %2692 = vmatprep.mubr.bf16.mxu0 0
        %2693 = vmatmul.mubr.bf16.gmra.mrb[0].mxu0 %v1731
        %v2694 = vpop.f32.mrb[0].mxu0
        %v2695 = vadd.f32 0.0, %v2694
        %v2696 = vpop.f32.mrb[0].mxu0
        %v2697 = vpop.f32.mrb[0].mxu0
        %v2698 = vadd.f32 0.0, %v2697
        %v2699 = vpop.f32.mrb[0].mxu0
        %2700 = vmatprep.mubr.bf16.mxu0 0
        %2701 = vmatmul.mubr.bf16.gmra.mrb[0].mxu0 %v1732
        %v2702 = vpop.f32.mrb[0].mxu0
        %v2703 = vadd.f32 0.0, %v2702
        %v2704 = vpop.f32.mrb[0].mxu0
        %v2705 = vpop.f32.mrb[0].mxu0
        %v2706 = vadd.f32 0.0, %v2705
        %v2707 = vpop.f32.mrb[0].mxu0
        %2708 = vmatprep.mubr.bf16.mxu0 0
        %2709 = vmatmul.mubr.bf16.gmra.mrb[0].mxu0 %v1733
        %v2710 = vpop.f32.mrb[0].mxu0
        %v2711 = vadd.f32 0.0, %v2710
        %v2712 = vpop.f32.mrb[0].mxu0
        %v2713 = vpop.f32.mrb[0].mxu0
        %v2714 = vadd.f32 0.0, %v2713
        %v2715 = vpop.f32.mrb[0].mxu0
        %2716 = vmatprep.mubr.bf16.mxu0 0
        %2717 = vmatmul.mubr.bf16.gmra.mrb[0].mxu0 %v1734
        %v2718 = vpop.f32.mrb[0].mxu0
        %v2719 = vadd.f32 0.0, %v2718
        %v2720 = vpop.f32.mrb[0].mxu0
        %v2721 = vpop.f32.mrb[0].mxu0
        %v2722 = vadd.f32 0.0, %v2721
        %v2723 = vpop.f32.mrb[0].mxu0
        %2724 = vmatprep.mubr.bf16.mxu0 0
        %2725 = vmatmul.mubr.bf16.gmra.mrb[0].mxu0 %v1735
        %v2726 = vpop.f32.mrb[0].mxu0
        %v2727 = vadd.f32 0.0, %v2726
        %v2728 = vpop.f32.mrb[0].mxu0
        %v2729 = vpop.f32.mrb[0].mxu0
        %v2730 = vadd.f32 0.0, %v2729
        %v2731 = vpop.f32.mrb[0].mxu0
        %2732 = vmatprep.mubr.bf16.mxu0 0
        %2733 = vmatmul.mubr.bf16.gmra.mrb[0].mxu0 %v2594
        %v2734 = vpop.f32.mrb[0].mxu0
        %v2735 = vadd.f32 0.0, %v2734
        %v2736 = vpop.f32.mrb[0].mxu0
        %v2737 = vpop.f32.mrb[0].mxu0
        %v2738 = vadd.f32 0.0, %v2737
        %v2739 = vpop.f32.mrb[0].mxu0
        %2740 = vdwg.mxu0
        %v2741 = vadd.f32 %v2535, %v2679
        %v2742 = vadd.f32 %v2536, %v2682
        %v2743 = vadd.f32 %v2537, %v2687
        %v2744 = vadd.f32 %v2538, %v2690
        %v2745 = vadd.f32 %v2539, %v2695
        %v2746 = vadd.f32 %v2540, %v2698
        %v2747 = vadd.f32 %v2541, %v2703
        %v2748 = vadd.f32 %v2542, %v2706
        %v2749 = vadd.f32 %v2543, %v2711
        %v2750 = vadd.f32 %v2544, %v2714
        %v2751 = vadd.f32 %v2545, %v2719
        %v2752 = vadd.f32 %v2546, %v2722
        %v2753 = vadd.f32 %v2547, %v2727
        %v2754 = vadd.f32 %v2548, %v2730
        %v2755 = vadd.f32 %v2549, %v2735
        %v2756 = vadd.f32 %v2550, %v2738
        %v2759 = vrot.slane %v1482, 5
        %v2760 = vrot.slane %v2759, 4
        %v2761 = vrot.slane %v1461, 5
        %v2762 = vsel %vm2100, %v2760, %v2761
        %v2763 = vrot.slane %v2761, 4
        %v2764 = vrot.slane %v1472, 5
        %v2765 = vsel %vm2100, %v2763, %v2764
        %s2766 = scalar_lea.vmem [#allocation11], 320
        %v2767 = vld [vmem:[%s2766] sm:$0xf]
        %v2768 = vld [vmem:[%s2766 + $0x4] sm:$0xf]
        %v2769 = vld [vmem:[%s2766 + $0x8] sm:$0xf]
        %v2770 = vld [vmem:[%s2766 + $0xc] sm:$0xf]
        %v2771 = vld [vmem:[%s2766 + $0x10] sm:$0xf]
        %v2772 = vld [vmem:[%s2766 + $0x14] sm:$0xf]
        %v2773 = vld [vmem:[%s2766 + $0x18] sm:$0xf]
        %v2774 = vld [vmem:[%s2766 + $0x1c] sm:$0xf]
        %v2775 = vld [vmem:[%s2766 + $0x20] sm:$0xf]
        %v2776 = vld [vmem:[%s2766 + $0x24] sm:$0xf]
        %v2777 = vld [vmem:[%s2766 + $0x28] sm:$0xf]
        %v2778 = vld [vmem:[%s2766 + $0x2c] sm:$0xf]
        %v2779 = vld [vmem:[%s2766 + $0x30] sm:$0xf]
        %v2780 = vld [vmem:[%s2766 + $0x34] sm:$0xf]
        %v2781 = vld [vmem:[%s2766 + $0x38] sm:$0xf]
        %v2782 = vld [vmem:[%s2766 + $0x3c] sm:$0xf]
        %v2783 = vunpack.c.l.b16 %v2762
        %v2784 = vunpack.c.l.b16 %v2765
        %v2785 = vpack.c.b16 %v2784, %v2783
        %v2803 = vunpack.c.l.b16 %v2767
        %v2804 = vunpack.c.l.b16 %v2768
        %v2805 = vunpack.c.l.b16 %v2769
        %v2806 = vunpack.c.l.b16 %v2770
        %v2807 = vunpack.c.l.b16 %v2771
        %v2808 = vunpack.c.l.b16 %v2772
        %v2809 = vunpack.c.l.b16 %v2773
        %v2810 = vunpack.c.l.b16 %v2774
        %v2811 = vunpack.c.l.b16 %v2775
        %v2812 = vunpack.c.l.b16 %v2776
        %v2813 = vunpack.c.l.b16 %v2777
        %v2814 = vunpack.c.l.b16 %v2778
        %v2815 = vunpack.c.l.b16 %v2779
        %v2816 = vunpack.c.l.b16 %v2780
        %v2817 = vunpack.c.l.b16 %v2781
        %v2818 = vunpack.c.l.b16 %v2782
        %v2819 = vpack.c.b16 %v2804, %v2803
        %v2820 = vpack.c.b16 %v2806, %v2805
        %v2821 = vpack.c.b16 %v2808, %v2807
        %v2822 = vpack.c.b16 %v2810, %v2809
        %v2823 = vpack.c.b16 %v2812, %v2811
        %v2824 = vpack.c.b16 %v2814, %v2813
        %v2825 = vpack.c.b16 %v2816, %v2815
        %v2826 = vpack.c.b16 %v2818, %v2817
        %2835 = vmatprep.subr.bf16.mxu0 0
        %2836 = vmatpush1.bf16.msra.mxu0 %v2819
        %2837 = vmatprep.subr.bf16.mxu0 0
        %2838 = vmatpush1.bf16.msra.mxu0 %v2820
        %2839 = vmatprep.subr.bf16.mxu0 0
        %2840 = vmatpush1.bf16.msra.mxu0 %v2821
        %2841 = vmatprep.subr.bf16.mxu0 0
        %2842 = vmatpush1.bf16.msra.mxu0 %v2822
        %2843 = vmatprep.subr.bf16.mxu0 0
        %2844 = vmatpush1.bf16.msra.mxu0 %v2823
        %2845 = vmatprep.subr.bf16.mxu0 0
        %2846 = vmatpush1.bf16.msra.mxu0 %v2824
        %2847 = vmatprep.subr.bf16.mxu0 0
        %2848 = vmatpush1.bf16.msra.mxu0 %v2825
        %2849 = vmatprep.subr.bf16.mxu0 0
        %2850 = vmatpush1.bf16.msra.mxu0 %v2826
        %2851 = vmatprep.subr.bf16.mxu0 0
        %2852 = vmatpush1.bf16.msra.mxu0 0
        %2853 = vmatprep.subr.bf16.mxu0 0
        %2854 = vmatpush1.bf16.msra.mxu0 0
        %2855 = vmatprep.subr.bf16.mxu0 0
        %2856 = vmatpush1.bf16.msra.mxu0 0
        %2857 = vmatprep.subr.bf16.mxu0 0
        %2858 = vmatpush1.bf16.msra.mxu0 0
        %2859 = vmatprep.subr.bf16.mxu0 0
        %2860 = vmatpush1.bf16.msra.mxu0 0
        %2861 = vmatprep.subr.bf16.mxu0 0
        %2862 = vmatpush1.bf16.msra.mxu0 0
        %2863 = vmatprep.subr.bf16.mxu0 0
        %2864 = vmatpush1.bf16.msra.mxu0 0
        %2865 = vmatprep.subr.bf16.mxu0 0
        %2866 = vmatpush1.bf16.msra.mxu0 0
        %2867 = vmatprep.mubr.bf16.mxu0 0
        %2868 = vmatmul.mubr.bf16.gmra.mrb[0].mxu0 %v2191
        %v2869 = vpop.f32.mrb[0].mxu0
        %v2870 = vadd.f32 0.0, %v2869
        %v2871 = vpop.f32.mrb[0].mxu0
        %v2872 = vpop.f32.mrb[0].mxu0
        %v2873 = vadd.f32 0.0, %v2872
        %v2874 = vpop.f32.mrb[0].mxu0
        %2875 = vmatprep.mubr.bf16.mxu0 0
        %2876 = vmatmul.mubr.bf16.gmra.mrb[0].mxu0 %v2192
        %v2877 = vpop.f32.mrb[0].mxu0
        %v2878 = vadd.f32 0.0, %v2877
        %v2879 = vpop.f32.mrb[0].mxu0
        %v2880 = vpop.f32.mrb[0].mxu0
        %v2881 = vadd.f32 0.0, %v2880
        %v2882 = vpop.f32.mrb[0].mxu0
        %2883 = vmatprep.mubr.bf16.mxu0 0
        %2884 = vmatmul.mubr.bf16.gmra.mrb[0].mxu0 %v2193
        %v2885 = vpop.f32.mrb[0].mxu0
        %v2886 = vadd.f32 0.0, %v2885
        %v2887 = vpop.f32.mrb[0].mxu0
        %v2888 = vpop.f32.mrb[0].mxu0
        %v2889 = vadd.f32 0.0, %v2888
        %v2890 = vpop.f32.mrb[0].mxu0
        %2891 = vmatprep.mubr.bf16.mxu0 0
        %2892 = vmatmul.mubr.bf16.gmra.mrb[0].mxu0 %v2194
        %v2893 = vpop.f32.mrb[0].mxu0
        %v2894 = vadd.f32 0.0, %v2893
        %v2895 = vpop.f32.mrb[0].mxu0
        %v2896 = vpop.f32.mrb[0].mxu0
        %v2897 = vadd.f32 0.0, %v2896
        %v2898 = vpop.f32.mrb[0].mxu0
        %2899 = vmatprep.mubr.bf16.mxu0 0
        %2900 = vmatmul.mubr.bf16.gmra.mrb[0].mxu0 %v2195
        %v2901 = vpop.f32.mrb[0].mxu0
        %v2902 = vadd.f32 0.0, %v2901
        %v2903 = vpop.f32.mrb[0].mxu0
        %v2904 = vpop.f32.mrb[0].mxu0
        %v2905 = vadd.f32 0.0, %v2904
        %v2906 = vpop.f32.mrb[0].mxu0
        %2907 = vmatprep.mubr.bf16.mxu0 0
        %2908 = vmatmul.mubr.bf16.gmra.mrb[0].mxu0 %v2196
        %v2909 = vpop.f32.mrb[0].mxu0
        %v2910 = vadd.f32 0.0, %v2909
        %v2911 = vpop.f32.mrb[0].mxu0
        %v2912 = vpop.f32.mrb[0].mxu0
        %v2913 = vadd.f32 0.0, %v2912
        %v2914 = vpop.f32.mrb[0].mxu0
        %2915 = vmatprep.mubr.bf16.mxu0 0
        %2916 = vmatmul.mubr.bf16.gmra.mrb[0].mxu0 %v2197
        %v2917 = vpop.f32.mrb[0].mxu0
        %v2918 = vadd.f32 0.0, %v2917
        %v2919 = vpop.f32.mrb[0].mxu0
        %v2920 = vpop.f32.mrb[0].mxu0
        %v2921 = vadd.f32 0.0, %v2920
        %v2922 = vpop.f32.mrb[0].mxu0
        %2923 = vmatprep.mubr.bf16.mxu0 0
        %2924 = vmatmul.mubr.bf16.gmra.mrb[0].mxu0 %v2785
        %v2925 = vpop.f32.mrb[0].mxu0
        %v2926 = vadd.f32 0.0, %v2925
        %v2927 = vpop.f32.mrb[0].mxu0
        %v2928 = vpop.f32.mrb[0].mxu0
        %v2929 = vadd.f32 0.0, %v2928
        %v2930 = vpop.f32.mrb[0].mxu0
        %2931 = vdwg.mxu0
        %v2932 = vadd.f32 %v2741, %v2870
        %v2933 = vadd.f32 %v2742, %v2873
        %v2934 = vadd.f32 %v2743, %v2878
        %v2935 = vadd.f32 %v2744, %v2881
        %v2936 = vadd.f32 %v2745, %v2886
        %v2937 = vadd.f32 %v2746, %v2889
        %v2938 = vadd.f32 %v2747, %v2894
        %v2939 = vadd.f32 %v2748, %v2897
        %v2940 = vadd.f32 %v2749, %v2902
        %v2941 = vadd.f32 %v2750, %v2905
        %v2942 = vadd.f32 %v2751, %v2910
        %v2943 = vadd.f32 %v2752, %v2913
        %v2944 = vadd.f32 %v2753, %v2918
        %v2945 = vadd.f32 %v2754, %v2921
        %v2946 = vadd.f32 %v2755, %v2926
        %v2947 = vadd.f32 %v2756, %v2929
        %s2948 = scalar_lea.vmem [#allocation11], 384
        %v2949 = vld [vmem:[%s2948] sm:$0xf]
        %v2950 = vld [vmem:[%s2948 + $0x4] sm:$0xf]
        %v2951 = vld [vmem:[%s2948 + $0x8] sm:$0xf]
        %v2952 = vld [vmem:[%s2948 + $0xc] sm:$0xf]
        %v2953 = vld [vmem:[%s2948 + $0x10] sm:$0xf]
        %v2954 = vld [vmem:[%s2948 + $0x14] sm:$0xf]
        %v2955 = vld [vmem:[%s2948 + $0x18] sm:$0xf]
        %v2956 = vld [vmem:[%s2948 + $0x1c] sm:$0xf]
        %v2957 = vld [vmem:[%s2948 + $0x20] sm:$0xf]
        %v2958 = vld [vmem:[%s2948 + $0x24] sm:$0xf]
        %v2959 = vld [vmem:[%s2948 + $0x28] sm:$0xf]
        %v2960 = vld [vmem:[%s2948 + $0x2c] sm:$0xf]
        %v2961 = vld [vmem:[%s2948 + $0x30] sm:$0xf]
        %v2962 = vld [vmem:[%s2948 + $0x34] sm:$0xf]
        %v2963 = vld [vmem:[%s2948 + $0x38] sm:$0xf]
        %v2964 = vld [vmem:[%s2948 + $0x3c] sm:$0xf]
        %v2967 = vunpack.c.l.b16 %v1462
        %v2968 = vunpack.c.l.b16 %v1463
        %v2969 = vpack.c.b16 %v2968, %v2967
        %v2987 = vunpack.c.l.b16 %v2949
        %v2988 = vunpack.c.l.b16 %v2950
        %v2989 = vunpack.c.l.b16 %v2951
        %v2990 = vunpack.c.l.b16 %v2952
        %v2991 = vunpack.c.l.b16 %v2953
        %v2992 = vunpack.c.l.b16 %v2954
        %v2993 = vunpack.c.l.b16 %v2955
        %v2994 = vunpack.c.l.b16 %v2956
        %v2995 = vunpack.c.l.b16 %v2957
        %v2996 = vunpack.c.l.b16 %v2958
        %v2997 = vunpack.c.l.b16 %v2959
        %v2998 = vunpack.c.l.b16 %v2960
        %v2999 = vunpack.c.l.b16 %v2961
        %v3000 = vunpack.c.l.b16 %v2962
        %v3001 = vunpack.c.l.b16 %v2963
        %v3002 = vunpack.c.l.b16 %v2964
        %v3003 = vpack.c.b16 %v2988, %v2987
        %v3004 = vpack.c.b16 %v2990, %v2989
        %v3005 = vpack.c.b16 %v2992, %v2991
        %v3006 = vpack.c.b16 %v2994, %v2993
        %v3007 = vpack.c.b16 %v2996, %v2995
        %v3008 = vpack.c.b16 %v2998, %v2997
        %v3009 = vpack.c.b16 %v3000, %v2999
        %v3010 = vpack.c.b16 %v3002, %v3001
        %3019 = vmatprep.subr.bf16.mxu0 0
        %3020 = vmatpush1.bf16.msra.mxu0 %v3003
        %3021 = vmatprep.subr.bf16.mxu0 0
        %3022 = vmatpush1.bf16.msra.mxu0 %v3004
        %3023 = vmatprep.subr.bf16.mxu0 0
        %3024 = vmatpush1.bf16.msra.mxu0 %v3005
        %3025 = vmatprep.subr.bf16.mxu0 0
        %3026 = vmatpush1.bf16.msra.mxu0 %v3006
        %3027 = vmatprep.subr.bf16.mxu0 0
        %3028 = vmatpush1.bf16.msra.mxu0 %v3007
        %3029 = vmatprep.subr.bf16.mxu0 0
        %3030 = vmatpush1.bf16.msra.mxu0 %v3008
        %3031 = vmatprep.subr.bf16.mxu0 0
        %3032 = vmatpush1.bf16.msra.mxu0 %v3009
        %3033 = vmatprep.subr.bf16.mxu0 0
        %3034 = vmatpush1.bf16.msra.mxu0 %v3010
        %3035 = vmatprep.subr.bf16.mxu0 0
        %3036 = vmatpush1.bf16.msra.mxu0 0
        %3037 = vmatprep.subr.bf16.mxu0 0
        %3038 = vmatpush1.bf16.msra.mxu0 0
        %3039 = vmatprep.subr.bf16.mxu0 0
        %3040 = vmatpush1.bf16.msra.mxu0 0
        %3041 = vmatprep.subr.bf16.mxu0 0
        %3042 = vmatpush1.bf16.msra.mxu0 0
        %3043 = vmatprep.subr.bf16.mxu0 0
        %3044 = vmatpush1.bf16.msra.mxu0 0
        %3045 = vmatprep.subr.bf16.mxu0 0
        %3046 = vmatpush1.bf16.msra.mxu0 0
        %3047 = vmatprep.subr.bf16.mxu0 0
        %3048 = vmatpush1.bf16.msra.mxu0 0
        %3049 = vmatprep.subr.bf16.mxu0 0
        %3050 = vmatpush1.bf16.msra.mxu0 0
        %3051 = vmatprep.mubr.bf16.mxu0 0
        %3052 = vmatmul.mubr.bf16.gmra.mrb[0].mxu0 %v1923
        %v3053 = vpop.f32.mrb[0].mxu0
        %v3054 = vadd.f32 0.0, %v3053
        %v3055 = vpop.f32.mrb[0].mxu0
        %v3056 = vpop.f32.mrb[0].mxu0
        %v3057 = vadd.f32 0.0, %v3056
        %v3058 = vpop.f32.mrb[0].mxu0
        %3059 = vmatprep.mubr.bf16.mxu0 0
        %3060 = vmatmul.mubr.bf16.gmra.mrb[0].mxu0 %v1924
        %v3061 = vpop.f32.mrb[0].mxu0
        %v3062 = vadd.f32 0.0, %v3061
        %v3063 = vpop.f32.mrb[0].mxu0
        %v3064 = vpop.f32.mrb[0].mxu0
        %v3065 = vadd.f32 0.0, %v3064
        %v3066 = vpop.f32.mrb[0].mxu0
        %3067 = vmatprep.mubr.bf16.mxu0 0
        %3068 = vmatmul.mubr.bf16.gmra.mrb[0].mxu0 %v1925
        %v3069 = vpop.f32.mrb[0].mxu0
        %v3070 = vadd.f32 0.0, %v3069
        %v3071 = vpop.f32.mrb[0].mxu0
        %v3072 = vpop.f32.mrb[0].mxu0
        %v3073 = vadd.f32 0.0, %v3072
        %v3074 = vpop.f32.mrb[0].mxu0
        %3075 = vmatprep.mubr.bf16.mxu0 0
        %3076 = vmatmul.mubr.bf16.gmra.mrb[0].mxu0 %v1926
        %v3077 = vpop.f32.mrb[0].mxu0
        %v3078 = vadd.f32 0.0, %v3077
        %v3079 = vpop.f32.mrb[0].mxu0
        %v3080 = vpop.f32.mrb[0].mxu0
        %v3081 = vadd.f32 0.0, %v3080
        %v3082 = vpop.f32.mrb[0].mxu0
        %3083 = vmatprep.mubr.bf16.mxu0 0
        %3084 = vmatmul.mubr.bf16.gmra.mrb[0].mxu0 %v1927
        %v3085 = vpop.f32.mrb[0].mxu0
        %v3086 = vadd.f32 0.0, %v3085
        %v3087 = vpop.f32.mrb[0].mxu0
        %v3088 = vpop.f32.mrb[0].mxu0
        %v3089 = vadd.f32 0.0, %v3088
        %v3090 = vpop.f32.mrb[0].mxu0
        %3091 = vmatprep.mubr.bf16.mxu0 0
        %3092 = vmatmul.mubr.bf16.gmra.mrb[0].mxu0 %v1928
        %v3093 = vpop.f32.mrb[0].mxu0
        %v3094 = vadd.f32 0.0, %v3093
        %v3095 = vpop.f32.mrb[0].mxu0
        %v3096 = vpop.f32.mrb[0].mxu0
        %v3097 = vadd.f32 0.0, %v3096
        %v3098 = vpop.f32.mrb[0].mxu0
        %3099 = vmatprep.mubr.bf16.mxu0 0
        %3100 = vmatmul.mubr.bf16.gmra.mrb[0].mxu0 %v2388
        %v3101 = vpop.f32.mrb[0].mxu0
        %v3102 = vadd.f32 0.0, %v3101
        %v3103 = vpop.f32.mrb[0].mxu0
        %v3104 = vpop.f32.mrb[0].mxu0
        %v3105 = vadd.f32 0.0, %v3104
        %v3106 = vpop.f32.mrb[0].mxu0
        %3107 = vmatprep.mubr.bf16.mxu0 0
        %3108 = vmatmul.mubr.bf16.gmra.mrb[0].mxu0 %v2969
        %v3109 = vpop.f32.mrb[0].mxu0
        %v3110 = vadd.f32 0.0, %v3109
        %v3111 = vpop.f32.mrb[0].mxu0
        %v3112 = vpop.f32.mrb[0].mxu0
        %v3113 = vadd.f32 0.0, %v3112
        %v3114 = vpop.f32.mrb[0].mxu0
        %3115 = vdwg.mxu0
        %v3116 = vadd.f32 %v2932, %v3054
        %v3117 = vadd.f32 %v2933, %v3057
        %v3118 = vadd.f32 %v2934, %v3062
        %v3119 = vadd.f32 %v2935, %v3065
        %v3120 = vadd.f32 %v2936, %v3070
        %v3121 = vadd.f32 %v2937, %v3073
        %v3122 = vadd.f32 %v2938, %v3078
        %v3123 = vadd.f32 %v2939, %v3081
        %v3124 = vadd.f32 %v2940, %v3086
        %v3125 = vadd.f32 %v2941, %v3089
        %v3126 = vadd.f32 %v2942, %v3094
        %v3127 = vadd.f32 %v2943, %v3097
        %v3128 = vadd.f32 %v2944, %v3102
        %v3129 = vadd.f32 %v2945, %v3105
        %v3130 = vadd.f32 %v2946, %v3110
        %v3131 = vadd.f32 %v2947, %v3113
        %v3133 = vshrl.u32 %v1462, 16
        %v3135 = vrot.slane %v3133, 4
        %v3136 = vshll.u32 %v1462, 16
        %v3138 = vrot.slane %v3136, 5
        %v3139 = vor.u32 %v3135, %v3138
        %v3140 = vrot.slane %v3139, 4
        %v3142 = vshll.u32 %v1463, 16
        %v3144 = vrot.slane %v3142, 5
        %v3145 = vsel %vm1502, %v3140, %v3144
        %v3146 = vshrl.u32 %v1463, 16
        %v3148 = vrot.slane %v3146, 4
        %v3149 = vor.u32 %v3148, %v3144
        %v3150 = vrot.slane %v3149, 4
        %v3152 = vshll.u32 %v1473, 16
        %v3154 = vrot.slane %v3152, 5
        %v3155 = vsel %vm1502, %v3150, %v3154
        %s3156 = scalar_lea.vmem [#allocation11], 448
        %v3157 = vld [vmem:[%s3156] sm:$0xf]
        %v3158 = vld [vmem:[%s3156 + $0x4] sm:$0xf]
        %v3159 = vld [vmem:[%s3156 + $0x8] sm:$0xf]
        %v3160 = vld [vmem:[%s3156 + $0xc] sm:$0xf]
        %v3161 = vld [vmem:[%s3156 + $0x10] sm:$0xf]
        %v3162 = vld [vmem:[%s3156 + $0x14] sm:$0xf]
        %v3163 = vld [vmem:[%s3156 + $0x18] sm:$0xf]
        %v3164 = vld [vmem:[%s3156 + $0x1c] sm:$0xf]
        %v3165 = vld [vmem:[%s3156 + $0x20] sm:$0xf]
        %v3166 = vld [vmem:[%s3156 + $0x24] sm:$0xf]
        %v3167 = vld [vmem:[%s3156 + $0x28] sm:$0xf]
        %v3168 = vld [vmem:[%s3156 + $0x2c] sm:$0xf]
        %v3169 = vld [vmem:[%s3156 + $0x30] sm:$0xf]
        %v3170 = vld [vmem:[%s3156 + $0x34] sm:$0xf]
        %v3171 = vld [vmem:[%s3156 + $0x38] sm:$0xf]
        %v3172 = vld [vmem:[%s3156 + $0x3c] sm:$0xf]
        %v3173 = vunpack.c.l.b16 %v3145
        %v3174 = vunpack.c.l.b16 %v3155
        %v3175 = vpack.c.b16 %v3174, %v3173
        %v3193 = vunpack.c.l.b16 %v3157
        %v3194 = vunpack.c.l.b16 %v3158
        %v3195 = vunpack.c.l.b16 %v3159
        %v3196 = vunpack.c.l.b16 %v3160
        %v3197 = vunpack.c.l.b16 %v3161
        %v3198 = vunpack.c.l.b16 %v3162
        %v3199 = vunpack.c.l.b16 %v3163
        %v3200 = vunpack.c.l.b16 %v3164
        %v3201 = vunpack.c.l.b16 %v3165
        %v3202 = vunpack.c.l.b16 %v3166
        %v3203 = vunpack.c.l.b16 %v3167
        %v3204 = vunpack.c.l.b16 %v3168
        %v3205 = vunpack.c.l.b16 %v3169
        %v3206 = vunpack.c.l.b16 %v3170
        %v3207 = vunpack.c.l.b16 %v3171
        %v3208 = vunpack.c.l.b16 %v3172
        %v3209 = vpack.c.b16 %v3194, %v3193
        %v3210 = vpack.c.b16 %v3196, %v3195
        %v3211 = vpack.c.b16 %v3198, %v3197
        %v3212 = vpack.c.b16 %v3200, %v3199
        %v3213 = vpack.c.b16 %v3202, %v3201
        %v3214 = vpack.c.b16 %v3204, %v3203
        %v3215 = vpack.c.b16 %v3206, %v3205
        %v3216 = vpack.c.b16 %v3208, %v3207
        %3225 = vmatprep.subr.bf16.mxu0 0
        %3226 = vmatpush1.bf16.msra.mxu0 %v3209
        %3227 = vmatprep.subr.bf16.mxu0 0
        %3228 = vmatpush1.bf16.msra.mxu0 %v3210
        %3229 = vmatprep.subr.bf16.mxu0 0
        %3230 = vmatpush1.bf16.msra.mxu0 %v3211
        %3231 = vmatprep.subr.bf16.mxu0 0
        %3232 = vmatpush1.bf16.msra.mxu0 %v3212
        %3233 = vmatprep.subr.bf16.mxu0 0
        %3234 = vmatpush1.bf16.msra.mxu0 %v3213
        %3235 = vmatprep.subr.bf16.mxu0 0
        %3236 = vmatpush1.bf16.msra.mxu0 %v3214
        %3237 = vmatprep.subr.bf16.mxu0 0
        %3238 = vmatpush1.bf16.msra.mxu0 %v3215
        %3239 = vmatprep.subr.bf16.mxu0 0
        %3240 = vmatpush1.bf16.msra.mxu0 %v3216
        %3241 = vmatprep.subr.bf16.mxu0 0
        %3242 = vmatpush1.bf16.msra.mxu0 0
        %3243 = vmatprep.subr.bf16.mxu0 0
        %3244 = vmatpush1.bf16.msra.mxu0 0
        %3245 = vmatprep.subr.bf16.mxu0 0
        %3246 = vmatpush1.bf16.msra.mxu0 0
        %3247 = vmatprep.subr.bf16.mxu0 0
        %3248 = vmatpush1.bf16.msra.mxu0 0
        %3249 = vmatprep.subr.bf16.mxu0 0
        %3250 = vmatpush1.bf16.msra.mxu0 0
        %3251 = vmatprep.subr.bf16.mxu0 0
        %3252 = vmatpush1.bf16.msra.mxu0 0
        %3253 = vmatprep.subr.bf16.mxu0 0
        %3254 = vmatpush1.bf16.msra.mxu0 0
        %3255 = vmatprep.subr.bf16.mxu0 0
        %3256 = vmatpush1.bf16.msra.mxu0 0
        %3257 = vmatprep.mubr.bf16.mxu0 0
        %3258 = vmatmul.mubr.bf16.gmra.mrb[0].mxu0 %v1730
        %v3259 = vpop.f32.mrb[0].mxu0
        %v3260 = vadd.f32 0.0, %v3259
        %v3261 = vpop.f32.mrb[0].mxu0
        %v3262 = vpop.f32.mrb[0].mxu0
        %v3263 = vadd.f32 0.0, %v3262
        %v3264 = vpop.f32.mrb[0].mxu0
        %3265 = vmatprep.mubr.bf16.mxu0 0
        %3266 = vmatmul.mubr.bf16.gmra.mrb[0].mxu0 %v1731
        %v3267 = vpop.f32.mrb[0].mxu0
        %v3268 = vadd.f32 0.0, %v3267
        %v3269 = vpop.f32.mrb[0].mxu0
        %v3270 = vpop.f32.mrb[0].mxu0
        %v3271 = vadd.f32 0.0, %v3270
        %v3272 = vpop.f32.mrb[0].mxu0
        %3273 = vmatprep.mubr.bf16.mxu0 0
        %3274 = vmatmul.mubr.bf16.gmra.mrb[0].mxu0 %v1732
        %v3275 = vpop.f32.mrb[0].mxu0
        %v3276 = vadd.f32 0.0, %v3275
        %v3277 = vpop.f32.mrb[0].mxu0
        %v3278 = vpop.f32.mrb[0].mxu0
        %v3279 = vadd.f32 0.0, %v3278
        %v3280 = vpop.f32.mrb[0].mxu0
        %3281 = vmatprep.mubr.bf16.mxu0 0
        %3282 = vmatmul.mubr.bf16.gmra.mrb[0].mxu0 %v1733
        %v3283 = vpop.f32.mrb[0].mxu0
        %v3284 = vadd.f32 0.0, %v3283
        %v3285 = vpop.f32.mrb[0].mxu0
        %v3286 = vpop.f32.mrb[0].mxu0
        %v3287 = vadd.f32 0.0, %v3286
        %v3288 = vpop.f32.mrb[0].mxu0
        %3289 = vmatprep.mubr.bf16.mxu0 0
        %3290 = vmatmul.mubr.bf16.gmra.mrb[0].mxu0 %v1734
        %v3291 = vpop.f32.mrb[0].mxu0
        %v3292 = vadd.f32 0.0, %v3291
        %v3293 = vpop.f32.mrb[0].mxu0
        %v3294 = vpop.f32.mrb[0].mxu0
        %v3295 = vadd.f32 0.0, %v3294
        %v3296 = vpop.f32.mrb[0].mxu0
        %3297 = vmatprep.mubr.bf16.mxu0 0
        %3298 = vmatmul.mubr.bf16.gmra.mrb[0].mxu0 %v1735
        %v3299 = vpop.f32.mrb[0].mxu0
        %v3300 = vadd.f32 0.0, %v3299
        %v3301 = vpop.f32.mrb[0].mxu0
        %v3302 = vpop.f32.mrb[0].mxu0
        %v3303 = vadd.f32 0.0, %v3302
        %v3304 = vpop.f32.mrb[0].mxu0
        %3305 = vmatprep.mubr.bf16.mxu0 0
        %3306 = vmatmul.mubr.bf16.gmra.mrb[0].mxu0 %v2594
        %v3307 = vpop.f32.mrb[0].mxu0
        %v3308 = vadd.f32 0.0, %v3307
        %v3309 = vpop.f32.mrb[0].mxu0
        %v3310 = vpop.f32.mrb[0].mxu0
        %v3311 = vadd.f32 0.0, %v3310
        %v3312 = vpop.f32.mrb[0].mxu0
        %3313 = vmatprep.mubr.bf16.mxu0 0
        %3314 = vmatmul.mubr.bf16.gmra.mrb[0].mxu0 %v3175
        %v3315 = vpop.f32.mrb[0].mxu0
        %v3316 = vadd.f32 0.0, %v3315
        %v3317 = vpop.f32.mrb[0].mxu0
        %v3318 = vpop.f32.mrb[0].mxu0
        %v3319 = vadd.f32 0.0, %v3318
        %v3320 = vpop.f32.mrb[0].mxu0
        %3321 = vdwg.mxu0
        %v3322 = vadd.f32 %v3116, %v3260
        %v3323 = vadd.f32 %v3117, %v3263
        %v3324 = vadd.f32 %v3118, %v3268
        %v3325 = vadd.f32 %v3119, %v3271
        %v3326 = vadd.f32 %v3120, %v3276
        %v3327 = vadd.f32 %v3121, %v3279
        %v3328 = vadd.f32 %v3122, %v3284
        %v3329 = vadd.f32 %v3123, %v3287
        %v3330 = vadd.f32 %v3124, %v3292
        %v3331 = vadd.f32 %v3125, %v3295
        %v3332 = vadd.f32 %v3126, %v3300
        %v3333 = vadd.f32 %v3127, %v3303
        %v3334 = vadd.f32 %v3128, %v3308
        %v3335 = vadd.f32 %v3129, %v3311
        %v3336 = vadd.f32 %v3130, %v3316
        %v3337 = vadd.f32 %v3131, %v3319
        %v3340 = vrot.slane %v1483, 5
        %v3341 = vrot.slane %v3340, 4
        %v3342 = vrot.slane %v1463, 5
        %v3343 = vsel %vm2100, %v3341, %v3342
        %v3344 = vrot.slane %v3342, 4
        %v3345 = vrot.slane %v1473, 5
        %v3346 = vsel %vm2100, %v3344, %v3345
        %s3347 = scalar_lea.vmem [#allocation11], 512
        %v3348 = vld [vmem:[%s3347] sm:$0xf]
        %v3349 = vld [vmem:[%s3347 + $0x4] sm:$0xf]
        %v3350 = vld [vmem:[%s3347 + $0x8] sm:$0xf]
        %v3351 = vld [vmem:[%s3347 + $0xc] sm:$0xf]
        %v3352 = vld [vmem:[%s3347 + $0x10] sm:$0xf]
        %v3353 = vld [vmem:[%s3347 + $0x14] sm:$0xf]
        %v3354 = vld [vmem:[%s3347 + $0x18] sm:$0xf]
        %v3355 = vld [vmem:[%s3347 + $0x1c] sm:$0xf]
        %v3356 = vld [vmem:[%s3347 + $0x20] sm:$0xf]
        %v3357 = vld [vmem:[%s3347 + $0x24] sm:$0xf]
        %v3358 = vld [vmem:[%s3347 + $0x28] sm:$0xf]
        %v3359 = vld [vmem:[%s3347 + $0x2c] sm:$0xf]
        %v3360 = vld [vmem:[%s3347 + $0x30] sm:$0xf]
        %v3361 = vld [vmem:[%s3347 + $0x34] sm:$0xf]
        %v3362 = vld [vmem:[%s3347 + $0x38] sm:$0xf]
        %v3363 = vld [vmem:[%s3347 + $0x3c] sm:$0xf]
        %v3364 = vunpack.c.l.b16 %v3343
        %v3365 = vunpack.c.l.b16 %v3346
        %v3366 = vpack.c.b16 %v3365, %v3364
        %v3384 = vunpack.c.l.b16 %v3348
        %v3385 = vunpack.c.l.b16 %v3349
        %v3386 = vunpack.c.l.b16 %v3350
        %v3387 = vunpack.c.l.b16 %v3351
        %v3388 = vunpack.c.l.b16 %v3352
        %v3389 = vunpack.c.l.b16 %v3353
        %v3390 = vunpack.c.l.b16 %v3354
        %v3391 = vunpack.c.l.b16 %v3355
        %v3392 = vunpack.c.l.b16 %v3356
        %v3393 = vunpack.c.l.b16 %v3357
        %v3394 = vunpack.c.l.b16 %v3358
        %v3395 = vunpack.c.l.b16 %v3359
        %v3396 = vunpack.c.l.b16 %v3360
        %v3397 = vunpack.c.l.b16 %v3361
        %v3398 = vunpack.c.l.b16 %v3362
        %v3399 = vunpack.c.l.b16 %v3363
        %v3400 = vpack.c.b16 %v3385, %v3384
        %v3401 = vpack.c.b16 %v3387, %v3386
        %v3402 = vpack.c.b16 %v3389, %v3388
        %v3403 = vpack.c.b16 %v3391, %v3390
        %v3404 = vpack.c.b16 %v3393, %v3392
        %v3405 = vpack.c.b16 %v3395, %v3394
        %v3406 = vpack.c.b16 %v3397, %v3396
        %v3407 = vpack.c.b16 %v3399, %v3398
        %3416 = vmatprep.subr.bf16.mxu0 0
        %3417 = vmatpush1.bf16.msra.mxu0 %v3400
        %3418 = vmatprep.subr.bf16.mxu0 0
        %3419 = vmatpush1.bf16.msra.mxu0 %v3401
        %3420 = vmatprep.subr.bf16.mxu0 0
        %3421 = vmatpush1.bf16.msra.mxu0 %v3402
        %3422 = vmatprep.subr.bf16.mxu0 0
        %3423 = vmatpush1.bf16.msra.mxu0 %v3403
        %3424 = vmatprep.subr.bf16.mxu0 0
        %3425 = vmatpush1.bf16.msra.mxu0 %v3404
        %3426 = vmatprep.subr.bf16.mxu0 0
        %3427 = vmatpush1.bf16.msra.mxu0 %v3405
        %3428 = vmatprep.subr.bf16.mxu0 0
        %3429 = vmatpush1.bf16.msra.mxu0 %v3406
        %3430 = vmatprep.subr.bf16.mxu0 0
        %3431 = vmatpush1.bf16.msra.mxu0 %v3407
        %3432 = vmatprep.subr.bf16.mxu0 0
        %3433 = vmatpush1.bf16.msra.mxu0 0
        %3434 = vmatprep.subr.bf16.mxu0 0
        %3435 = vmatpush1.bf16.msra.mxu0 0
        %3436 = vmatprep.subr.bf16.mxu0 0
        %3437 = vmatpush1.bf16.msra.mxu0 0
        %3438 = vmatprep.subr.bf16.mxu0 0
        %3439 = vmatpush1.bf16.msra.mxu0 0
        %3440 = vmatprep.subr.bf16.mxu0 0
        %3441 = vmatpush1.bf16.msra.mxu0 0
        %3442 = vmatprep.subr.bf16.mxu0 0
        %3443 = vmatpush1.bf16.msra.mxu0 0
        %3444 = vmatprep.subr.bf16.mxu0 0
        %3445 = vmatpush1.bf16.msra.mxu0 0
        %3446 = vmatprep.subr.bf16.mxu0 0
        %3447 = vmatpush1.bf16.msra.mxu0 0
        %3448 = vmatprep.mubr.bf16.mxu0 0
        %3449 = vmatmul.mubr.bf16.gmra.mrb[0].mxu0 %v2192
        %v3450 = vpop.f32.mrb[0].mxu0
        %v3451 = vadd.f32 0.0, %v3450
        %v3452 = vpop.f32.mrb[0].mxu0
        %v3453 = vpop.f32.mrb[0].mxu0
        %v3454 = vadd.f32 0.0, %v3453
        %v3455 = vpop.f32.mrb[0].mxu0
        %3456 = vmatprep.mubr.bf16.mxu0 0
        %3457 = vmatmul.mubr.bf16.gmra.mrb[0].mxu0 %v2193
        %v3458 = vpop.f32.mrb[0].mxu0
        %v3459 = vadd.f32 0.0, %v3458
        %v3460 = vpop.f32.mrb[0].mxu0
        %v3461 = vpop.f32.mrb[0].mxu0
        %v3462 = vadd.f32 0.0, %v3461
        %v3463 = vpop.f32.mrb[0].mxu0
        %3464 = vmatprep.mubr.bf16.mxu0 0
        %3465 = vmatmul.mubr.bf16.gmra.mrb[0].mxu0 %v2194
        %v3466 = vpop.f32.mrb[0].mxu0
        %v3467 = vadd.f32 0.0, %v3466
        %v3468 = vpop.f32.mrb[0].mxu0
        %v3469 = vpop.f32.mrb[0].mxu0
        %v3470 = vadd.f32 0.0, %v3469
        %v3471 = vpop.f32.mrb[0].mxu0
        %3472 = vmatprep.mubr.bf16.mxu0 0
        %3473 = vmatmul.mubr.bf16.gmra.mrb[0].mxu0 %v2195
        %v3474 = vpop.f32.mrb[0].mxu0
        %v3475 = vadd.f32 0.0, %v3474
        %v3476 = vpop.f32.mrb[0].mxu0
        %v3477 = vpop.f32.mrb[0].mxu0
        %v3478 = vadd.f32 0.0, %v3477
        %v3479 = vpop.f32.mrb[0].mxu0
        %3480 = vmatprep.mubr.bf16.mxu0 0
        %3481 = vmatmul.mubr.bf16.gmra.mrb[0].mxu0 %v2196
        %v3482 = vpop.f32.mrb[0].mxu0
        %v3483 = vadd.f32 0.0, %v3482
        %v3484 = vpop.f32.mrb[0].mxu0
        %v3485 = vpop.f32.mrb[0].mxu0
        %v3486 = vadd.f32 0.0, %v3485
        %v3487 = vpop.f32.mrb[0].mxu0
        %3488 = vmatprep.mubr.bf16.mxu0 0
        %3489 = vmatmul.mubr.bf16.gmra.mrb[0].mxu0 %v2197
        %v3490 = vpop.f32.mrb[0].mxu0
        %v3491 = vadd.f32 0.0, %v3490
        %v3492 = vpop.f32.mrb[0].mxu0
        %v3493 = vpop.f32.mrb[0].mxu0
        %v3494 = vadd.f32 0.0, %v3493
        %v3495 = vpop.f32.mrb[0].mxu0
        %3496 = vmatprep.mubr.bf16.mxu0 0
        %3497 = vmatmul.mubr.bf16.gmra.mrb[0].mxu0 %v2785
        %v3498 = vpop.f32.mrb[0].mxu0
        %v3499 = vadd.f32 0.0, %v3498
        %v3500 = vpop.f32.mrb[0].mxu0
        %v3501 = vpop.f32.mrb[0].mxu0
        %v3502 = vadd.f32 0.0, %v3501
        %v3503 = vpop.f32.mrb[0].mxu0
        %3504 = vmatprep.mubr.bf16.mxu0 0
        %3505 = vmatmul.mubr.bf16.gmra.mrb[0].mxu0 %v3366
        %v3506 = vpop.f32.mrb[0].mxu0
        %v3507 = vadd.f32 0.0, %v3506
        %v3508 = vpop.f32.mrb[0].mxu0
        %v3509 = vpop.f32.mrb[0].mxu0
        %v3510 = vadd.f32 0.0, %v3509
        %v3511 = vpop.f32.mrb[0].mxu0
        %3512 = vdwg.mxu0
        %v3513 = vadd.f32 %v3322, %v3451
        %v3514 = vadd.f32 %v3323, %v3454
        %v3515 = vadd.f32 %v3324, %v3459
        %v3516 = vadd.f32 %v3325, %v3462
        %v3517 = vadd.f32 %v3326, %v3467
        %v3518 = vadd.f32 %v3327, %v3470
        %v3519 = vadd.f32 %v3328, %v3475
        %v3520 = vadd.f32 %v3329, %v3478
        %v3521 = vadd.f32 %v3330, %v3483
        %v3522 = vadd.f32 %v3331, %v3486
        %v3523 = vadd.f32 %v3332, %v3491
        %v3524 = vadd.f32 %v3333, %v3494
        %v3525 = vadd.f32 %v3334, %v3499
        %v3526 = vadd.f32 %v3335, %v3502
        %v3527 = vadd.f32 %v3336, %v3507
        %v3528 = vadd.f32 %v3337, %v3510
        %v3529 = vld [vmem:[%s7] sm:$0x1]
        %v3531 = vlaneseq
        %v3532 = vshrl.u32 %v3531, 7
        %v3533 = vsub.s32 0, %v3532
        %v3534 = vrot.slane %v3529, %v3533
        %v3536 = vmul.f32 %v3513, %v3534
        %v3537 = vmul.f32 %v3514, %v3534
        %v3538 = vmul.f32 %v3515, %v3534
        %v3539 = vmul.f32 %v3516, %v3534
        %v3540 = vmul.f32 %v3517, %v3534
        %v3541 = vmul.f32 %v3518, %v3534
        %v3542 = vmul.f32 %v3519, %v3534
        %v3543 = vmul.f32 %v3520, %v3534
        %v3544 = vmul.f32 %v3521, %v3534
        %v3545 = vmul.f32 %v3522, %v3534
        %v3546 = vmul.f32 %v3523, %v3534
        %v3547 = vmul.f32 %v3524, %v3534
        %v3548 = vmul.f32 %v3525, %v3534
        %v3549 = vmul.f32 %v3526, %v3534
        %v3550 = vmul.f32 %v3527, %v3534
        %v3551 = vmul.f32 %v3528, %v3534
        %v3552 = vld [vmem:[%s8] sm:$0x1]
        %v3554 = vlaneseq
        %v3555 = vshrl.u32 %v3554, 7
        %v3556 = vsub.s32 0, %v3555
        %v3557 = vrot.slane %v3552, %v3556
        %v3559 = vadd.f32 %v3536, %v3557
        %v3560 = vadd.f32 %v3537, %v3557
        %v3561 = vadd.f32 %v3538, %v3557
        %v3562 = vadd.f32 %v3539, %v3557
        %v3563 = vadd.f32 %v3540, %v3557
        %v3564 = vadd.f32 %v3541, %v3557
        %v3565 = vadd.f32 %v3542, %v3557
        %v3566 = vadd.f32 %v3543, %v3557
        %v3567 = vadd.f32 %v3544, %v3557
        %v3568 = vadd.f32 %v3545, %v3557
        %v3569 = vadd.f32 %v3546, %v3557
        %v3570 = vadd.f32 %v3547, %v3557
        %v3571 = vadd.f32 %v3548, %v3557
        %v3572 = vadd.f32 %v3549, %v3557
        %v3573 = vadd.f32 %v3550, %v3557
        %v3574 = vadd.f32 %v3551, %v3557
        %v3575 = vmax.f32 %v3559, 0.0
        %v3576 = vmax.f32 %v3560, 0.0
        %v3577 = vmax.f32 %v3561, 0.0
        %v3578 = vmax.f32 %v3562, 0.0
        %v3579 = vmax.f32 %v3563, 0.0
        %v3580 = vmax.f32 %v3564, 0.0
        %v3581 = vmax.f32 %v3565, 0.0
        %v3582 = vmax.f32 %v3566, 0.0
        %v3583 = vmax.f32 %v3567, 0.0
        %v3584 = vmax.f32 %v3568, 0.0
        %v3585 = vmax.f32 %v3569, 0.0
        %v3586 = vmax.f32 %v3570, 0.0
        %v3587 = vmax.f32 %v3571, 0.0
        %v3588 = vmax.f32 %v3572, 0.0
        %v3589 = vmax.f32 %v3573, 0.0
        %v3590 = vmax.f32 %v3574, 0.0
        %v3591 = vpack.c.bf16 %v3576, %v3575
        %v3592 = vpack.c.bf16 %v3578, %v3577
        %v3593 = vpack.c.bf16 %v3580, %v3579
        %v3594 = vpack.c.bf16 %v3582, %v3581
        %v3595 = vpack.c.bf16 %v3584, %v3583
        %v3596 = vpack.c.bf16 %v3586, %v3585
        %v3597 = vpack.c.bf16 %v3588, %v3587
        %v3598 = vpack.c.bf16 %v3590, %v3589
        %v3599 = vld [vmem:[#allocation12] sm:$0xf]
        %v3600 = vld [vmem:[#allocation12 + $0x4] sm:$0xf]
        %v3601 = vld [vmem:[#allocation12 + $0x8] sm:$0xf]
        %v3602 = vld [vmem:[#allocation12 + $0xc] sm:$0xf]
        %v3603 = vld [vmem:[#allocation12 + $0x10] sm:$0xf]
        %v3604 = vld [vmem:[#allocation12 + $0x14] sm:$0xf]
        %v3605 = vld [vmem:[#allocation12 + $0x18] sm:$0xf]
        %v3606 = vld [vmem:[#allocation12 + $0x1c] sm:$0xf]
        %v3607 = vld [vmem:[#allocation12 + $0x20] sm:$0xf]
        %v3608 = vld [vmem:[#allocation12 + $0x24] sm:$0xf]
        %v3609 = vld [vmem:[#allocation12 + $0x28] sm:$0xf]
        %v3610 = vld [vmem:[#allocation12 + $0x2c] sm:$0xf]
        %v3611 = vld [vmem:[#allocation12 + $0x30] sm:$0xf]
        %v3612 = vld [vmem:[#allocation12 + $0x34] sm:$0xf]
        %v3613 = vld [vmem:[#allocation12 + $0x38] sm:$0xf]
        %v3614 = vld [vmem:[#allocation12 + $0x3c] sm:$0xf]
        %v3631 = vunpack.c.l.b16 %v3599
        %v3632 = vunpack.c.l.b16 %v3600
        %v3633 = vunpack.c.l.b16 %v3601
        %v3634 = vunpack.c.l.b16 %v3602
        %v3635 = vunpack.c.l.b16 %v3603
        %v3636 = vunpack.c.l.b16 %v3604
        %v3637 = vunpack.c.l.b16 %v3605
        %v3638 = vunpack.c.l.b16 %v3606
        %v3639 = vunpack.c.l.b16 %v3607
        %v3640 = vunpack.c.l.b16 %v3608
        %v3641 = vunpack.c.l.b16 %v3609
        %v3642 = vunpack.c.l.b16 %v3610
        %v3643 = vunpack.c.l.b16 %v3611
        %v3644 = vunpack.c.l.b16 %v3612
        %v3645 = vunpack.c.l.b16 %v3613
        %v3646 = vunpack.c.l.b16 %v3614
        %v3647 = vpack.c.b16 %v3632, %v3631
        %v3648 = vpack.c.b16 %v3634, %v3633
        %v3649 = vpack.c.b16 %v3636, %v3635
        %v3650 = vpack.c.b16 %v3638, %v3637
        %v3651 = vpack.c.b16 %v3640, %v3639
        %v3652 = vpack.c.b16 %v3642, %v3641
        %v3653 = vpack.c.b16 %v3644, %v3643
        %v3654 = vpack.c.b16 %v3646, %v3645
        %3663 = vmatprep.subr.bf16.mxu0 0
        %3664 = vmatpush1.bf16.msra.mxu0 %v3647
        %3665 = vmatprep.subr.bf16.mxu0 0
        %3666 = vmatpush1.bf16.msra.mxu0 %v3648
        %3667 = vmatprep.subr.bf16.mxu0 0
        %3668 = vmatpush1.bf16.msra.mxu0 %v3649
        %3669 = vmatprep.subr.bf16.mxu0 0
        %3670 = vmatpush1.bf16.msra.mxu0 %v3650
        %3671 = vmatprep.subr.bf16.mxu0 0
        %3672 = vmatpush1.bf16.msra.mxu0 %v3651
        %3673 = vmatprep.subr.bf16.mxu0 0
        %3674 = vmatpush1.bf16.msra.mxu0 %v3652
        %3675 = vmatprep.subr.bf16.mxu0 0
        %3676 = vmatpush1.bf16.msra.mxu0 %v3653
        %3677 = vmatprep.subr.bf16.mxu0 0
        %3678 = vmatpush1.bf16.msra.mxu0 %v3654
        %3679 = vmatprep.subr.bf16.mxu0 0
        %3680 = vmatpush1.bf16.msra.mxu0 0
        %3681 = vmatprep.subr.bf16.mxu0 0
        %3682 = vmatpush1.bf16.msra.mxu0 0
        %3683 = vmatprep.subr.bf16.mxu0 0
        %3684 = vmatpush1.bf16.msra.mxu0 0
        %3685 = vmatprep.subr.bf16.mxu0 0
        %3686 = vmatpush1.bf16.msra.mxu0 0
        %3687 = vmatprep.subr.bf16.mxu0 0
        %3688 = vmatpush1.bf16.msra.mxu0 0
        %3689 = vmatprep.subr.bf16.mxu0 0
        %3690 = vmatpush1.bf16.msra.mxu0 0
        %3691 = vmatprep.subr.bf16.mxu0 0
        %3692 = vmatpush1.bf16.msra.mxu0 0
        %3693 = vmatprep.subr.bf16.mxu0 0
        %3694 = vmatpush1.bf16.msra.mxu0 0
        %3695 = vmatprep.mubr.bf16.mxu0 0
        %3696 = vmatmul.mubr.bf16.gmra.mrb[0].mxu0 %v3591
        %v3697 = vpop.f32.mrb[0].mxu0
        %v3698 = vadd.f32 0.0, %v3697
        %v3699 = vpop.f32.mrb[0].mxu0
        %v3700 = vpop.f32.mrb[0].mxu0
        %v3701 = vadd.f32 0.0, %v3700
        %v3702 = vpop.f32.mrb[0].mxu0
        %3703 = vmatprep.mubr.bf16.mxu0 0
        %3704 = vmatmul.mubr.bf16.gmra.mrb[0].mxu0 %v3592
        %v3705 = vpop.f32.mrb[0].mxu0
        %v3706 = vadd.f32 0.0, %v3705
        %v3707 = vpop.f32.mrb[0].mxu0
        %v3708 = vpop.f32.mrb[0].mxu0
        %v3709 = vadd.f32 0.0, %v3708
        %v3710 = vpop.f32.mrb[0].mxu0
        %3711 = vmatprep.mubr.bf16.mxu0 0
        %3712 = vmatmul.mubr.bf16.gmra.mrb[0].mxu0 %v3593
        %v3713 = vpop.f32.mrb[0].mxu0
        %v3714 = vadd.f32 0.0, %v3713
        %v3715 = vpop.f32.mrb[0].mxu0
        %v3716 = vpop.f32.mrb[0].mxu0
        %v3717 = vadd.f32 0.0, %v3716
        %v3718 = vpop.f32.mrb[0].mxu0
        %3719 = vmatprep.mubr.bf16.mxu0 0
        %3720 = vmatmul.mubr.bf16.gmra.mrb[0].mxu0 %v3594
        %v3721 = vpop.f32.mrb[0].mxu0
        %v3722 = vadd.f32 0.0, %v3721
        %v3723 = vpop.f32.mrb[0].mxu0
        %v3724 = vpop.f32.mrb[0].mxu0
        %v3725 = vadd.f32 0.0, %v3724
        %v3726 = vpop.f32.mrb[0].mxu0
        %3727 = vmatprep.mubr.bf16.mxu0 0
        %3728 = vmatmul.mubr.bf16.gmra.mrb[0].mxu0 %v3595
        %v3729 = vpop.f32.mrb[0].mxu0
        %v3730 = vadd.f32 0.0, %v3729
        %v3731 = vpop.f32.mrb[0].mxu0
        %v3732 = vpop.f32.mrb[0].mxu0
        %v3733 = vadd.f32 0.0, %v3732
        %v3734 = vpop.f32.mrb[0].mxu0
        %3735 = vmatprep.mubr.bf16.mxu0 0
        %3736 = vmatmul.mubr.bf16.gmra.mrb[0].mxu0 %v3596
        %v3737 = vpop.f32.mrb[0].mxu0
        %v3738 = vadd.f32 0.0, %v3737
        %v3739 = vpop.f32.mrb[0].mxu0
        %v3740 = vpop.f32.mrb[0].mxu0
        %v3741 = vadd.f32 0.0, %v3740
        %v3742 = vpop.f32.mrb[0].mxu0
        %3743 = vmatprep.mubr.bf16.mxu0 0
        %3744 = vmatmul.mubr.bf16.gmra.mrb[0].mxu0 %v3597
        %v3745 = vpop.f32.mrb[0].mxu0
        %v3746 = vadd.f32 0.0, %v3745
        %v3747 = vpop.f32.mrb[0].mxu0
        %v3748 = vpop.f32.mrb[0].mxu0
        %v3749 = vadd.f32 0.0, %v3748
        %v3750 = vpop.f32.mrb[0].mxu0
        %3751 = vmatprep.mubr.bf16.mxu0 0
        %3752 = vmatmul.mubr.bf16.gmra.mrb[0].mxu0 %v3598
        %v3753 = vpop.f32.mrb[0].mxu0
        %v3754 = vadd.f32 0.0, %v3753
        %v3755 = vpop.f32.mrb[0].mxu0
        %v3756 = vpop.f32.mrb[0].mxu0
        %v3757 = vadd.f32 0.0, %v3756
        %v3758 = vpop.f32.mrb[0].mxu0
        %3759 = vdwg.mxu0
        %v3760 = vld [vmem:[%s10] sm:$0x1]
        %v3762 = vlaneseq
        %v3763 = vshrl.u32 %v3762, 7
        %v3764 = vsub.s32 0, %v3763
        %v3765 = vrot.slane %v3760, %v3764
        %v3767 = vmul.f32 %v3698, %v3765
        %v3768 = vmul.f32 %v3701, %v3765
        %v3769 = vmul.f32 %v3706, %v3765
        %v3770 = vmul.f32 %v3709, %v3765
        %v3771 = vmul.f32 %v3714, %v3765
        %v3772 = vmul.f32 %v3717, %v3765
        %v3773 = vmul.f32 %v3722, %v3765
        %v3774 = vmul.f32 %v3725, %v3765
        %v3775 = vmul.f32 %v3730, %v3765
        %v3776 = vmul.f32 %v3733, %v3765
        %v3777 = vmul.f32 %v3738, %v3765
        %v3778 = vmul.f32 %v3741, %v3765
        %v3779 = vmul.f32 %v3746, %v3765
        %v3780 = vmul.f32 %v3749, %v3765
        %v3781 = vmul.f32 %v3754, %v3765
        %v3782 = vmul.f32 %v3757, %v3765
        %v3783 = vld [vmem:[%s11] sm:$0x1]
        %v3785 = vlaneseq
        %v3786 = vshrl.u32 %v3785, 7
        %v3787 = vsub.s32 0, %v3786
        %v3788 = vrot.slane %v3783, %v3787
        %v3790 = vadd.f32 %v3767, %v3788
        %v3791 = vadd.f32 %v3768, %v3788
        %v3792 = vadd.f32 %v3769, %v3788
        %v3793 = vadd.f32 %v3770, %v3788
        %v3794 = vadd.f32 %v3771, %v3788
        %v3795 = vadd.f32 %v3772, %v3788
        %v3796 = vadd.f32 %v3773, %v3788
        %v3797 = vadd.f32 %v3774, %v3788
        %v3798 = vadd.f32 %v3775, %v3788
        %v3799 = vadd.f32 %v3776, %v3788
        %v3800 = vadd.f32 %v3777, %v3788
        %v3801 = vadd.f32 %v3778, %v3788
        %v3802 = vadd.f32 %v3779, %v3788
        %v3803 = vadd.f32 %v3780, %v3788
        %v3804 = vadd.f32 %v3781, %v3788
        %v3805 = vadd.f32 %v3782, %v3788
        %v3806 = vunpack.c.l.bf16 %v615
        %v3807 = vunpack.c.l.bf16 %v616
        %v3808 = vunpack.c.l.bf16 %v617
        %v3809 = vunpack.c.l.bf16 %v618
        %v3810 = vunpack.c.l.bf16 %v619
        %v3811 = vunpack.c.l.bf16 %v620
        %v3812 = vunpack.c.l.bf16 %v621
        %v3813 = vunpack.c.l.bf16 %v622
        %v3814 = vunpack.c.l.bf16 %v623
        %v3815 = vunpack.c.l.bf16 %v624
        %v3816 = vunpack.c.l.bf16 %v625
        %v3817 = vunpack.c.l.bf16 %v626
        %v3818 = vunpack.c.l.bf16 %v627
        %v3819 = vunpack.c.l.bf16 %v628
        %v3820 = vunpack.c.l.bf16 %v629
        %v3821 = vunpack.c.l.bf16 %v630
        %v3822 = vadd.f32 %v3790, %v3806
        %v3823 = vadd.f32 %v3791, %v3807
        %v3824 = vadd.f32 %v3792, %v3808
        %v3825 = vadd.f32 %v3793, %v3809
        %v3826 = vadd.f32 %v3794, %v3810
        %v3827 = vadd.f32 %v3795, %v3811
        %v3828 = vadd.f32 %v3796, %v3812
        %v3829 = vadd.f32 %v3797, %v3813
        %v3830 = vadd.f32 %v3798, %v3814
        %v3831 = vadd.f32 %v3799, %v3815
        %v3832 = vadd.f32 %v3800, %v3816
        %v3833 = vadd.f32 %v3801, %v3817
        %v3834 = vadd.f32 %v3802, %v3818
        %v3835 = vadd.f32 %v3803, %v3819
        %v3836 = vadd.f32 %v3804, %v3820
        %v3837 = vadd.f32 %v3805, %v3821
        %v3838 = vmax.f32 %v3822, 0.0
        %v3839 = vmax.f32 %v3823, 0.0
        %v3840 = vmax.f32 %v3824, 0.0
        %v3841 = vmax.f32 %v3825, 0.0
        %v3842 = vmax.f32 %v3826, 0.0
        %v3843 = vmax.f32 %v3827, 0.0
        %v3844 = vmax.f32 %v3828, 0.0
        %v3845 = vmax.f32 %v3829, 0.0
        %v3846 = vmax.f32 %v3830, 0.0
        %v3847 = vmax.f32 %v3831, 0.0
        %v3848 = vmax.f32 %v3832, 0.0
        %v3849 = vmax.f32 %v3833, 0.0
        %v3850 = vmax.f32 %v3834, 0.0
        %v3851 = vmax.f32 %v3835, 0.0
        %v3852 = vmax.f32 %v3836, 0.0
        %v3853 = vmax.f32 %v3837, 0.0
        %3854 = vst [vmem:[%s603] sm:$0xff] %v3838
        %3855 = vst [vmem:[%s603 + $0x8] sm:$0xff] %v3839
        %3856 = vst [vmem:[%s603 + $0x10] sm:$0xff] %v3840
        %3857 = vst [vmem:[%s603 + $0x18] sm:$0xff] %v3841
        %3858 = vst [vmem:[%s603 + $0x20] sm:$0xff] %v3842
        %3859 = vst [vmem:[%s603 + $0x28] sm:$0xff] %v3843
        %3860 = vst [vmem:[%s603 + $0x30] sm:$0xff] %v3844
        %3861 = vst [vmem:[%s603 + $0x38] sm:$0xff] %v3845
        %3862 = vst [vmem:[%s603 + $0x40] sm:$0xff] %v3846
        %3863 = vst [vmem:[%s603 + $0x48] sm:$0xff] %v3847
        %3864 = vst [vmem:[%s603 + $0x50] sm:$0xff] %v3848
        %3865 = vst [vmem:[%s603 + $0x58] sm:$0xff] %v3849
        %3866 = vst [vmem:[%s603 + $0x60] sm:$0xff] %v3850
        %3867 = vst [vmem:[%s603 + $0x68] sm:$0xff] %v3851
        %3868 = vst [vmem:[%s603 + $0x70] sm:$0xff] %v3852
        %3869 = vst [vmem:[%s603 + $0x78] sm:$0xff] %v3853
        %s3870 = sand.u32 %s345, 1
        %s3871 = scalar_lea.sflag [#allocation5], %s3870
        %s3872 = sand.u32 %s345, 1
        %s3873 = smul.addr %s3872, 128
        %s3874 = scalar_lea.vmem [#allocation14], %s3873
        // Predicated region
        $region109: #{tpu_custom_call.1} parent=67 // pred_check
          %p3875 = pneg %p355
        $region110: #{tpu_custom_call.1} parent=67 // pred_check_branch
          %3877 = sbr.rel (%p3875) target = $region112
        $region111: #{tpu_custom_call.1} parent=67 // pred_region
          %s3878 = smul.u32 8, %s39
          %s3880 = ssub.s32 2048, 2048
          %3881 = vsyncadd %s3871, %s3880
          %s3882 = smul.addr %s3878, 2
          %s3883 = smul.addr %s38, 32
          %s3884 = sadd.s32 %s3882, %s3883
          %s3885 = smul.addr %s3884, 128
          %s3886 = scalar_lea.hbm %s12, %s3885
          %s3887 = sshll.u32 %s3874, 4
          %s3888 = int_to_ptr.vmem [resolvable:$true] %s3887
          %3893 = dma.vmem_to_hbm [thread:$0]  %s3888, 2048, %s3886, %s3871, 128, 128, 8
        $region112: #{tpu_custom_call.1} parent=67 // pred_fallthru
          _
      $region68: #{tpu_custom_call.1} parent=5 // pred_fallthru
        _
      %p3894 = scmp.le.s32.totalorder 2, %s29
      // Predicated region
      $region113: #{tpu_custom_call.1} parent=5 // pred_check
        %p3895 = pneg %p3894
      $region114: #{tpu_custom_call.1} parent=5 // pred_check_branch
        %3897 = sbr.rel (%p3895) target = $region116
      $region115: #{tpu_custom_call.1} parent=5 // pred_region
        %s3898 = ssub.s32 %s29, 2
        // Predicated region
        $region117: #{tpu_custom_call.1} parent=115 // pred_check
          %p3899 = pneg %p361
        $region118: #{tpu_custom_call.1} parent=115 // pred_check_branch
          %3901 = sbr.rel (%p3899) target = $region120
        $region119: #{tpu_custom_call.1} parent=115 // pred_region
          %s3902 = sand.u32 %s346, 1
          %s3903 = scalar_lea.sflag [#allocation5], %s3902
          %s3904 = sand.u32 %s346, 1
          %s3905 = smul.addr %s3904, 128
          %s3906 = scalar_lea.vmem [#allocation14], %s3905
          %3907 = dma.done %s3903, 2048
        $region120: #{tpu_custom_call.1} parent=115 // pred_fallthru
          _
      $region116: #{tpu_custom_call.1} parent=5 // pred_fallthru
        _
    $region6: #{tpu_custom_call.1} parent=1 // loop_footer
      %s33 = sadd.s32 1, %s29
    $region7: #{tpu_custom_call.1} parent=1 // loop_footer_branch
      %28 = sbr.rel target = $region3
    $region8: #{tpu_custom_call.1} parent=1 // loop_exit
      _
    %3908 = vsyncpa [#allocation4], 1
    %s3909 = scalar_lea.sflag [#allocation4], 1
    %3910 = vsyncpa %s3909, 1
    %3911 = vsyncpa [#allocation7], 1
    %s3912 = scalar_lea.sflag [#allocation7], 1
    %3913 = vsyncpa %s3912, 1
    %3914 = vsyncpa [#allocation10], 1
    %3915 = vsyncpa [#allocation13], 1
    %3916 = vsyncpa [#allocation5], 1
    %s3917 = scalar_lea.sflag [#allocation5], 1
    %3918 = vsyncpa %s3917, 1

// kernel: tpu_custom_call.1
$region0: #{tpu_custom_call.1}
  #allocation0 [shape = 'u32[]', space=smem, size = 0x4, offset = 0x4, fixed_abs, tag = 'smem constant byte address 0x4 - core index']
  #allocation1 [shape = 'u32[144,128]{1,0:T(1,128)}', space=vmem, size = 0x12000, scoped, tag = 'internal scratch']
  #allocation2 [shape = 'bf16[10,18,128]{2,1,0:T(8,128)(2,1)}', space=vmem, size = 0xf000, scoped, tag = 'scratch operand']
  %s0 = inlined_call_operand.hbm [shape: bf16[2,16,16,128], index: 0, kind: input, shape index: {}]
  %s1 = inlined_call_operand.hbm [shape: bf16[2,16,16,128], index: 1, kind: input, shape index: {}]
  %s2 = inlined_call_operand.hbm [shape: bf16[2,16,16,128], index: 2, kind: input, shape index: {}]
  %s3 = inlined_call_operand.hbm [shape: bf16[128,128], index: 3, kind: input, shape index: {}]
  %s4 = inlined_call_operand.vmem [shape: f32[1,128], index: 4, kind: input, shape index: {}]
  %s5 = inlined_call_operand.vmem [shape: f32[1,128], index: 5, kind: input, shape index: {}]
  %s6 = inlined_call_operand.hbm [shape: bf16[9,128,128], index: 6, kind: input, shape index: {}]
  %s7 = inlined_call_operand.vmem [shape: f32[1,128], index: 7, kind: input, shape index: {}]
  %s8 = inlined_call_operand.vmem [shape: f32[1,128], index: 8, kind: input, shape index: {}]
  %s9 = inlined_call_operand.hbm [shape: bf16[128,128], index: 9, kind: input, shape index: {}]
  %s10 = inlined_call_operand.vmem [shape: f32[1,128], index: 10, kind: input, shape index: {}]
  %s11 = inlined_call_operand.vmem [shape: f32[1,128], index: 11, kind: input, shape index: {}]
  %s12 = inlined_call_operand.hbm [shape: f32[2,16,16,128], index: 12, kind: output, shape index: {}]
  %s13 = sld [smem:[#allocation0]]
  $region121: #{tpu_custom_call.1} parent=0
    _
  %s15 = ssub.s32 1, %s13
  %s16 = scalar_select 0, %s15, %s13
  $region1: #{tpu_custom_call.1} parent=0
    #allocation3 [shape = 'u8[65536]{0}', space=vmem, size = 0x10000, scoped, tag = 'input window, operand 0']
    #allocation4 [shape = 's32[2]{0}', space=sflag, size = 0x8, scoped, tag = 'scoped memory for tpu_custom_call.1']
    #allocation5 [shape = 's32[2]{0}', space=sflag, size = 0x8, scoped, tag = 'scoped memory for tpu_custom_call.1']
    #allocation6 [shape = 'u8[8192]{0}', space=vmem, size = 0x2000, scoped, tag = 'input window, operand 1']
    #allocation7 [shape = 's32[2]{0}', space=sflag, size = 0x8, scoped, tag = 'scoped memory for tpu_custom_call.1']
    #allocation8 [shape = 'u8[8192]{0}', space=vmem, size = 0x2000, scoped, tag = 'input window, operand 2']
    #allocation9 [shape = 'u8[32768]{0}', space=vmem, size = 0x8000, scoped, tag = 'input window, operand 3, single buffered']
    #allocation10 [shape = 's32[1]{0}', space=sflag, size = 0x4, scoped, tag = 'scoped memory for tpu_custom_call.1']
    #allocation11 [shape = 'u8[294912]{0}', space=vmem, size = 0x48000, scoped, tag = 'input window, operand 6, single buffered']
    #allocation12 [shape = 'u8[32768]{0}', space=vmem, size = 0x8000, scoped, tag = 'input window, operand 9, single buffered']
    #allocation13 [shape = 's32[1]{0}', space=sflag, size = 0x4, scoped, tag = 'scoped memory for tpu_custom_call.1']
    #allocation14 [shape = 'u8[131072]{0}', space=vmem, size = 0x20000, scoped, tag = 'output window, operand 0']
    %17 = vsyncpa [#allocation4], 0
    %s18 = scalar_lea.sflag [#allocation4], 1
    %19 = vsyncpa %s18, 0
    %20 = vsyncpa [#allocation7], 0
    %s21 = scalar_lea.sflag [#allocation7], 1
    %22 = vsyncpa %s21, 0
    %23 = vsyncpa [#allocation10], 0
    %24 = vsyncpa [#allocation13], 0
    %25 = vsyncpa [#allocation5], 0
    %s26 = scalar_lea.sflag [#allocation5], 1
    %27 = vsyncpa %s26, 0
    loop: start=0, step=1, limit=6
    $region2: #{tpu_custom_call.1} parent=1 // loop_pre_header
      _
    $region3: #{tpu_custom_call.1} parent=1 // loop_header
      %s29 = sphi 0, %s33
      %p30 = scmp.ge.s32.totalorder %s29, 6
      %s36 = sphi 0, %s48
      %s37 = sphi 0, %s44
      %s38 = sphi 0, %s36
      %s39 = sphi 0, %s37
      %s40 = sphi 0, %s38
      %s41 = sphi 0, %s39
      %s53 = sphi 0, %s55
      %s56 = sphi 0, %s53
      %s57 = sphi 0, %s56
      %s73 = sphi 0, %s57
      %s89 = sphi 0, %s91
      %s92 = sphi 0, %s89
      %s93 = sphi 0, %s92
      %s109 = sphi 0, %s93
      %s125 = sphi 0, %s127
      %s128 = sphi 0, %s125
      %s129 = sphi 0, %s128
      %s145 = sphi 0, %s129
      %s149 = sphi 0, %s149
      %s151 = sphi 0, %s149
      %s152 = sphi 0, %s151
      %s166 = sphi 0, %s152
      %s170 = sphi 0, %s170
      %s172 = sphi 0, %s170
      %s173 = sphi 0, %s172
      %s187 = sphi 0, %s173
      %s191 = sphi 0, %s191
      %s193 = sphi 0, %s191
      %s194 = sphi 0, %s193
      %s208 = sphi 0, %s194
      %s212 = sphi 0, %s212
      %s214 = sphi 0, %s212
      %s215 = sphi 0, %s214
      %s229 = sphi 0, %s215
      %s233 = sphi 0, %s233
      %s235 = sphi 0, %s233
      %s236 = sphi 0, %s235
      %s250 = sphi 0, %s236
      %s254 = sphi 0, %s254
      %s256 = sphi 0, %s254
      %s257 = sphi 0, %s256
      %s271 = sphi 0, %s257
      %s275 = sphi 0, %s275
      %s277 = sphi 0, %s275
      %s278 = sphi 0, %s277
      %s292 = sphi 0, %s278
      %s296 = sphi 0, %s296
      %s298 = sphi 0, %s296
      %s299 = sphi 0, %s298
      %s313 = sphi 0, %s299
      %s317 = sphi 0, %s317
      %s319 = sphi 0, %s317
      %s320 = sphi 0, %s319
      %s334 = sphi 0, %s320
      %s342 = sphi 0, %s344
      %s345 = sphi 0, %s342
      %s346 = sphi 0, %s345
      %s362 = sphi 0, %s346
    $region4: #{tpu_custom_call.1} parent=1 // loop_header_branch
      %32 = sbr.rel (%p30) target = $region8
    $region5: #{tpu_custom_call.1} parent=1 // loop_body
      %s34 = ssub.s32 %s29, 1
      %s35 = ssub.s32 %s29, 2
      %s42 = sadd.s32 1, %s37
      %p43 = scmp.ge.s32.totalorder %s42, 2
      %s44 = scalar_select %p43, 0, %s42
      %s45 = sadd.s32 1, %s36
      %s46 = scalar_select %p43, %s45, %s36
      %p47 = scmp.ge.s32.totalorder %s46, 2
      %s48 = scalar_select %p47, 0, %s46
      %s49 = ssub.s32 %s36, %s48
      %s50 = ssub.s32 %s37, %s44
      %s51 = sor.u32 %s49, %s50
      %p52 = scmp.eq.s32.totalorder %s51, 0
      %s54 = sadd.s32 %s53, 1
      %s55 = scalar_select %p52, %s53, %s54
      %p58 = pneg %p52
      %p59 = scmp.eq.s32.totalorder %s29, 3
      %p60 = por %p58, %p59
      %p61 = scmp.ne.s32.totalorder %s53, %s56
      %p62 = scmp.eq.s32.totalorder %s29, 0
      %p63 = por %p61, %p62
      %p64 = scmp.ne.s32.totalorder %s53, %s56
      %p65 = scmp.eq.s32.totalorder %s34, 3
      %p66 = por %p64, %p65
      %p67 = scmp.ne.s32.totalorder %s56, %s57
      %p68 = scmp.eq.s32.totalorder %s34, 0
      %p69 = por %p67, %p68
      %p70 = scmp.ne.s32.totalorder %s56, %s57
      %p71 = scmp.eq.s32.totalorder %s35, 3
      %p72 = por %p70, %p71
      %p74 = scmp.ne.s32.totalorder %s57, %s73
      %p75 = scmp.eq.s32.totalorder %s35, 0
      %p76 = por %p74, %p75
      %s77 = smul.u32 %s37, 8
      %s78 = ssub.s32 %s77, 1
      %p79 = scmp.gt.s32.totalorder %s78, 0
      %s80 = scalar_select %p79, %s78, 0
      %s81 = smul.u32 %s44, 8
      %s82 = ssub.s32 %s81, 1
      %p83 = scmp.gt.s32.totalorder %s82, 0
      %s84 = scalar_select %p83, %s82, 0
      %s85 = ssub.s32 %s36, %s48
      %s86 = ssub.s32 %s80, %s84
      %s87 = sor.u32 %s85, %s86
      %p88 = scmp.eq.s32.totalorder %s87, 0
      %s90 = sadd.s32 %s89, 1
      %s91 = scalar_select %p88, %s89, %s90
      %p94 = pneg %p88
      %p95 = scmp.eq.s32.totalorder %s29, 3
      %p96 = por %p94, %p95
      %p97 = scmp.ne.s32.totalorder %s89, %s92
      %p98 = scmp.eq.s32.totalorder %s29, 0
      %p99 = por %p97, %p98
      %p100 = scmp.ne.s32.totalorder %s89, %s92
      %p101 = scmp.eq.s32.totalorder %s34, 3
      %p102 = por %p100, %p101
      %p103 = scmp.ne.s32.totalorder %s92, %s93
      %p104 = scmp.eq.s32.totalorder %s34, 0
      %p105 = por %p103, %p104
      %p106 = scmp.ne.s32.totalorder %s92, %s93
      %p107 = scmp.eq.s32.totalorder %s35, 3
      %p108 = por %p106, %p107
      %p110 = scmp.ne.s32.totalorder %s93, %s109
      %p111 = scmp.eq.s32.totalorder %s35, 0
      %p112 = por %p110, %p111
      %s113 = sadd.s32 %s37, 1
      %s114 = smul.u32 %s113, 8
      %p115 = scmp.lt.s32.totalorder %s114, 15
      %s116 = scalar_select %p115, %s114, 15
      %s117 = sadd.s32 %s44, 1
      %s118 = smul.u32 %s117, 8
      %p119 = scmp.lt.s32.totalorder %s118, 15
      %s120 = scalar_select %p119, %s118, 15
      %s121 = ssub.s32 %s36, %s48
      %s122 = ssub.s32 %s116, %s120
      %s123 = sor.u32 %s121, %s122
      %p124 = scmp.eq.s32.totalorder %s123, 0
      %s126 = sadd.s32 %s125, 1
      %s127 = scalar_select %p124, %s125, %s126
      %p130 = pneg %p124
      %p131 = scmp.eq.s32.totalorder %s29, 3
      %p132 = por %p130, %p131
      %p133 = scmp.ne.s32.totalorder %s125, %s128
      %p134 = scmp.eq.s32.totalorder %s29, 0
      %p135 = por %p133, %p134
      %p136 = scmp.ne.s32.totalorder %s125, %s128
      %p137 = scmp.eq.s32.totalorder %s34, 3
      %p138 = por %p136, %p137
      %p139 = scmp.ne.s32.totalorder %s128, %s129
      %p140 = scmp.eq.s32.totalorder %s34, 0
      %p141 = por %p139, %p140
      %p142 = scmp.ne.s32.totalorder %s128, %s129
      %p143 = scmp.eq.s32.totalorder %s35, 3
      %p144 = por %p142, %p143
      %p146 = scmp.ne.s32.totalorder %s129, %s145
      %p147 = scmp.eq.s32.totalorder %s35, 0
      %p148 = por %p146, %p147
      %s150 = sadd.s32 %s149, 1
      %p153 = scmp.eq.s32.totalorder %s29, 3
      %p154 = scmp.ne.s32.totalorder %s149, %s151
      %p155 = scmp.eq.s32.totalorder %s29, 0
      %p156 = por %p154, %p155
      %p157 = scmp.ne.s32.totalorder %s149, %s151
      %p158 = scmp.eq.s32.totalorder %s34, 3
      %p159 = por %p157, %p158
      %p160 = scmp.ne.s32.totalorder %s151, %s152
      %p161 = scmp.eq.s32.totalorder %s34, 0
      %p162 = por %p160, %p161
      %p163 = scmp.ne.s32.totalorder %s151, %s152
      %p164 = scmp.eq.s32.totalorder %s35, 3
      %p165 = por %p163, %p164
      %p167 = scmp.ne.s32.totalorder %s152, %s166
      %p168 = scmp.eq.s32.totalorder %s35, 0
      %p169 = por %p167, %p168
      %s171 = sadd.s32 %s170, 1
      %p174 = scmp.eq.s32.totalorder %s29, 3
      %p175 = scmp.ne.s32.totalorder %s170, %s172
      %p176 = scmp.eq.s32.totalorder %s29, 0
      %p177 = por %p175, %p176
      %p178 = scmp.ne.s32.totalorder %s170, %s172
      %p179 = scmp.eq.s32.totalorder %s34, 3
      %p180 = por %p178, %p179
      %p181 = scmp.ne.s32.totalorder %s172, %s173
      %p182 = scmp.eq.s32.totalorder %s34, 0
      %p183 = por %p181, %p182
      %p184 = scmp.ne.s32.totalorder %s172, %s173
      %p185 = scmp.eq.s32.totalorder %s35, 3
      %p186 = por %p184, %p185
      %p188 = scmp.ne.s32.totalorder %s173, %s187
      %p189 = scmp.eq.s32.totalorder %s35, 0
      %p190 = por %p188, %p189
      %s192 = sadd.s32 %s191, 1
      %p195 = scmp.eq.s32.totalorder %s29, 3
      %p196 = scmp.ne.s32.totalorder %s191, %s193
      %p197 = scmp.eq.s32.totalorder %s29, 0
      %p198 = por %p196, %p197
      %p199 = scmp.ne.s32.totalorder %s191, %s193
      %p200 = scmp.eq.s32.totalorder %s34, 3
      %p201 = por %p199, %p200
      %p202 = scmp.ne.s32.totalorder %s193, %s194
      %p203 = scmp.eq.s32.totalorder %s34, 0
      %p204 = por %p202, %p203
      %p205 = scmp.ne.s32.totalorder %s193, %s194
      %p206 = scmp.eq.s32.totalorder %s35, 3
      %p207 = por %p205, %p206
      %p209 = scmp.ne.s32.totalorder %s194, %s208
      %p210 = scmp.eq.s32.totalorder %s35, 0
      %p211 = por %p209, %p210
      %s213 = sadd.s32 %s212, 1
      %p216 = scmp.eq.s32.totalorder %s29, 3
      %p217 = scmp.ne.s32.totalorder %s212, %s214
      %p218 = scmp.eq.s32.totalorder %s29, 0
      %p219 = por %p217, %p218
      %p220 = scmp.ne.s32.totalorder %s212, %s214
      %p221 = scmp.eq.s32.totalorder %s34, 3
      %p222 = por %p220, %p221
      %p223 = scmp.ne.s32.totalorder %s214, %s215
      %p224 = scmp.eq.s32.totalorder %s34, 0
      %p225 = por %p223, %p224
      %p226 = scmp.ne.s32.totalorder %s214, %s215
      %p227 = scmp.eq.s32.totalorder %s35, 3
      %p228 = por %p226, %p227
      %p230 = scmp.ne.s32.totalorder %s215, %s229
      %p231 = scmp.eq.s32.totalorder %s35, 0
      %p232 = por %p230, %p231
      %s234 = sadd.s32 %s233, 1
      %p237 = scmp.eq.s32.totalorder %s29, 3
      %p238 = scmp.ne.s32.totalorder %s233, %s235
      %p239 = scmp.eq.s32.totalorder %s29, 0
      %p240 = por %p238, %p239
      %p241 = scmp.ne.s32.totalorder %s233, %s235
      %p242 = scmp.eq.s32.totalorder %s34, 3
      %p243 = por %p241, %p242
      %p244 = scmp.ne.s32.totalorder %s235, %s236
      %p245 = scmp.eq.s32.totalorder %s34, 0
      %p246 = por %p244, %p245
      %p247 = scmp.ne.s32.totalorder %s235, %s236
      %p248 = scmp.eq.s32.totalorder %s35, 3
      %p249 = por %p247, %p248
      %p251 = scmp.ne.s32.totalorder %s236, %s250
      %p252 = scmp.eq.s32.totalorder %s35, 0
      %p253 = por %p251, %p252
      %s255 = sadd.s32 %s254, 1
      %p258 = scmp.eq.s32.totalorder %s29, 3
      %p259 = scmp.ne.s32.totalorder %s254, %s256
      %p260 = scmp.eq.s32.totalorder %s29, 0
      %p261 = por %p259, %p260
      %p262 = scmp.ne.s32.totalorder %s254, %s256
      %p263 = scmp.eq.s32.totalorder %s34, 3
      %p264 = por %p262, %p263
      %p265 = scmp.ne.s32.totalorder %s256, %s257
      %p266 = scmp.eq.s32.totalorder %s34, 0
      %p267 = por %p265, %p266
      %p268 = scmp.ne.s32.totalorder %s256, %s257
      %p269 = scmp.eq.s32.totalorder %s35, 3
      %p270 = por %p268, %p269
      %p272 = scmp.ne.s32.totalorder %s257, %s271
      %p273 = scmp.eq.s32.totalorder %s35, 0
      %p274 = por %p272, %p273
      %s276 = sadd.s32 %s275, 1
      %p279 = scmp.eq.s32.totalorder %s29, 3
      %p280 = scmp.ne.s32.totalorder %s275, %s277
      %p281 = scmp.eq.s32.totalorder %s29, 0
      %p282 = por %p280, %p281
      %p283 = scmp.ne.s32.totalorder %s275, %s277
      %p284 = scmp.eq.s32.totalorder %s34, 3
      %p285 = por %p283, %p284
      %p286 = scmp.ne.s32.totalorder %s277, %s278
      %p287 = scmp.eq.s32.totalorder %s34, 0
      %p288 = por %p286, %p287
      %p289 = scmp.ne.s32.totalorder %s277, %s278
      %p290 = scmp.eq.s32.totalorder %s35, 3
      %p291 = por %p289, %p290
      %p293 = scmp.ne.s32.totalorder %s278, %s292
      %p294 = scmp.eq.s32.totalorder %s35, 0
      %p295 = por %p293, %p294
      %s297 = sadd.s32 %s296, 1
      %p300 = scmp.eq.s32.totalorder %s29, 3
      %p301 = scmp.ne.s32.totalorder %s296, %s298
      %p302 = scmp.eq.s32.totalorder %s29, 0
      %p303 = por %p301, %p302
      %p304 = scmp.ne.s32.totalorder %s296, %s298
      %p305 = scmp.eq.s32.totalorder %s34, 3
      %p306 = por %p304, %p305
      %p307 = scmp.ne.s32.totalorder %s298, %s299
      %p308 = scmp.eq.s32.totalorder %s34, 0
      %p309 = por %p307, %p308
      %p310 = scmp.ne.s32.totalorder %s298, %s299
      %p311 = scmp.eq.s32.totalorder %s35, 3
      %p312 = por %p310, %p311
      %p314 = scmp.ne.s32.totalorder %s299, %s313
      %p315 = scmp.eq.s32.totalorder %s35, 0
      %p316 = por %p314, %p315
      %s318 = sadd.s32 %s317, 1
      %p321 = scmp.eq.s32.totalorder %s29, 3
      %p322 = scmp.ne.s32.totalorder %s317, %s319
      %p323 = scmp.eq.s32.totalorder %s29, 0
      %p324 = por %p322, %p323
      %p325 = scmp.ne.s32.totalorder %s317, %s319
      %p326 = scmp.eq.s32.totalorder %s34, 3
      %p327 = por %p325, %p326
      %p328 = scmp.ne.s32.totalorder %s319, %s320
      %p329 = scmp.eq.s32.totalorder %s34, 0
      %p330 = por %p328, %p329
      %p331 = scmp.ne.s32.totalorder %s319, %s320
      %p332 = scmp.eq.s32.totalorder %s35, 3
      %p333 = por %p331, %p332
      %p335 = scmp.ne.s32.totalorder %s320, %s334
      %p336 = scmp.eq.s32.totalorder %s35, 0
      %p337 = por %p335, %p336
      %s338 = ssub.s32 %s36, %s48
      %s339 = ssub.s32 %s37, %s44
      %s340 = sor.u32 %s338, %s339
      %p341 = scmp.eq.s32.totalorder %s340, 0
      %s343 = sadd.s32 %s342, 1
      %s344 = scalar_select %p341, %s342, %s343
      %p347 = pneg %p341
      %p348 = scmp.eq.s32.totalorder %s29, 3
      %p349 = por %p347, %p348
      %p350 = scmp.ne.s32.totalorder %s342, %s345
      %p351 = scmp.eq.s32.totalorder %s29, 0
      %p352 = por %p350, %p351
      %p353 = scmp.ne.s32.totalorder %s342, %s345
      %p354 = scmp.eq.s32.totalorder %s34, 3
      %p355 = por %p353, %p354
      %p356 = scmp.ne.s32.totalorder %s345, %s346
      %p357 = scmp.eq.s32.totalorder %s34, 0
      %p358 = por %p356, %p357
      %p359 = scmp.ne.s32.totalorder %s345, %s346
      %p360 = scmp.eq.s32.totalorder %s35, 3
      %p361 = por %p359, %p360
      %p363 = scmp.ne.s32.totalorder %s346, %s362
      %p364 = scmp.eq.s32.totalorder %s35, 0
      %p365 = por %p363, %p364
      %p366 = scmp.le.s32.totalorder 1, %s29
      %p367 = scmp.lt.s32.totalorder %s29, 5
      %p368 = pnand %p366, %p367
      %p369 = pneg %p368
      // Predicated region
      $region9: #{tpu_custom_call.1} parent=5 // pred_check
        _
      $region10: #{tpu_custom_call.1} parent=5 // pred_check_branch
        %371 = sbr.rel (%p368) target = $region12
      $region11: #{tpu_custom_call.1} parent=5 // pred_region
        %s372 = ssub.s32 %s29, 1
        // Predicated region
        $region13: #{tpu_custom_call.1} parent=11 // pred_check
          %p373 = pneg %p162
        $region14: #{tpu_custom_call.1} parent=11 // pred_check_branch
          %375 = sbr.rel (%p373) target = $region16
        $region15: #{tpu_custom_call.1} parent=11 // pred_region
          %s377 = ssub.s32 1024, 1024
          %378 = vsyncadd [#allocation10], %s377
          %s379 = sshll.u32 [#allocation9], 4
          %s380 = int_to_ptr.vmem [resolvable:$true] %s379
          %385 = dma.hbm_to_vmem [thread:$0]  %s3, 1024, %s380, [#allocation10], 64, 64, 4
        $region16: #{tpu_custom_call.1} parent=11 // pred_fallthru
          _
        // Predicated region
        $region17: #{tpu_custom_call.1} parent=11 // pred_check
          %p386 = pneg %p183
        $region18: #{tpu_custom_call.1} parent=11 // pred_check_branch
          %388 = sbr.rel (%p386) target = $region20
        $region19: #{tpu_custom_call.1} parent=11 // pred_region
          _
        $region20: #{tpu_custom_call.1} parent=11 // pred_fallthru
          _
        // Predicated region
        $region21: #{tpu_custom_call.1} parent=11 // pred_check
          %p389 = pneg %p204
        $region22: #{tpu_custom_call.1} parent=11 // pred_check_branch
          %391 = sbr.rel (%p389) target = $region24
        $region23: #{tpu_custom_call.1} parent=11 // pred_region
          _
        $region24: #{tpu_custom_call.1} parent=11 // pred_fallthru
          _
        // Predicated region
        $region25: #{tpu_custom_call.1} parent=11 // pred_check
          %p392 = pneg %p225
        $region26: #{tpu_custom_call.1} parent=11 // pred_check_branch
          %394 = sbr.rel (%p392) target = $region28
        $region27: #{tpu_custom_call.1} parent=11 // pred_region
          %s396 = ssub.s32 9216, 9216
          %397 = vsyncadd [#allocation10], %s396
          %s398 = sshll.u32 [#allocation11], 4
          %s399 = int_to_ptr.vmem [resolvable:$true] %s398
          %404 = dma.hbm_to_vmem [thread:$0]  %s6, 9216, %s399, [#allocation10], 64, 64, 4
        $region28: #{tpu_custom_call.1} parent=11 // pred_fallthru
          _
        // Predicated region
        $region29: #{tpu_custom_call.1} parent=11 // pred_check
          %p405 = pneg %p246
        $region30: #{tpu_custom_call.1} parent=11 // pred_check_branch
          %407 = sbr.rel (%p405) target = $region32
        $region31: #{tpu_custom_call.1} parent=11 // pred_region
          _
        $region32: #{tpu_custom_call.1} parent=11 // pred_fallthru
          _
        // Predicated region
        $region33: #{tpu_custom_call.1} parent=11 // pred_check
          %p408 = pneg %p267
        $region34: #{tpu_custom_call.1} parent=11 // pred_check_branch
          %410 = sbr.rel (%p408) target = $region36
        $region35: #{tpu_custom_call.1} parent=11 // pred_region
          _
        $region36: #{tpu_custom_call.1} parent=11 // pred_fallthru
          _
        // Predicated region
        $region37: #{tpu_custom_call.1} parent=11 // pred_check
          %p411 = pneg %p288
        $region38: #{tpu_custom_call.1} parent=11 // pred_check_branch
          %413 = sbr.rel (%p411) target = $region40
        $region39: #{tpu_custom_call.1} parent=11 // pred_region
          %s415 = ssub.s32 1024, 1024
          %416 = vsyncadd [#allocation13], %s415
          %s417 = sshll.u32 [#allocation12], 4
          %s418 = int_to_ptr.vmem [resolvable:$true] %s417
          %423 = dma.hbm_to_vmem [thread:$0]  %s9, 1024, %s418, [#allocation13], 64, 64, 4
        $region40: #{tpu_custom_call.1} parent=11 // pred_fallthru
          _
        // Predicated region
        $region41: #{tpu_custom_call.1} parent=11 // pred_check
          %p424 = pneg %p309
        $region42: #{tpu_custom_call.1} parent=11 // pred_check_branch
          %426 = sbr.rel (%p424) target = $region44
        $region43: #{tpu_custom_call.1} parent=11 // pred_region
          _
        $region44: #{tpu_custom_call.1} parent=11 // pred_fallthru
          _
        // Predicated region
        $region45: #{tpu_custom_call.1} parent=11 // pred_check
          %p427 = pneg %p330
        $region46: #{tpu_custom_call.1} parent=11 // pred_check_branch
          %429 = sbr.rel (%p427) target = $region48
        $region47: #{tpu_custom_call.1} parent=11 // pred_region
          _
        $region48: #{tpu_custom_call.1} parent=11 // pred_fallthru
          _
      $region12: #{tpu_custom_call.1} parent=5 // pred_fallthru
        _
      %p430 = scmp.lt.s32.totalorder %s29, 4
      // Predicated region
      $region49: #{tpu_custom_call.1} parent=5 // pred_check
        %p431 = pneg %p430
      $region50: #{tpu_custom_call.1} parent=5 // pred_check_branch
        %433 = sbr.rel (%p431) target = $region52
      $region51: #{tpu_custom_call.1} parent=5 // pred_region
        // Predicated region
        $region53: #{tpu_custom_call.1} parent=51 // pred_check
          %p434 = pneg %p63
        $region54: #{tpu_custom_call.1} parent=51 // pred_check_branch
          %436 = sbr.rel (%p434) target = $region56
        $region55: #{tpu_custom_call.1} parent=51 // pred_region
          %s437 = sand.u32 %s53, 1
          %s438 = scalar_lea.sflag [#allocation4], %s437
          %s439 = sand.u32 %s53, 1
          %s440 = smul.addr %s439, 64
          %s441 = scalar_lea.vmem [#allocation3], %s440
          %s442 = smul.u32 8, %s37
          %s444 = ssub.s32 1024, 1024
          %445 = vsyncadd %s438, %s444
          %s446 = smul.addr %s442, 2
          %s447 = smul.addr %s36, 32
          %s448 = sadd.s32 %s446, %s447
          %s449 = smul.addr %s448, 64
          %s450 = scalar_lea.hbm %s0, %s449
          %s451 = sshll.u32 %s441, 4
          %s452 = int_to_ptr.vmem [resolvable:$true] %s451
          %457 = dma.hbm_to_vmem [thread:$0]  %s450, 1024, %s452, %s438, 64, 64, 4
        $region56: #{tpu_custom_call.1} parent=51 // pred_fallthru
          _
        // Predicated region
        $region57: #{tpu_custom_call.1} parent=51 // pred_check
          %p458 = pneg %p99
        $region58: #{tpu_custom_call.1} parent=51 // pred_check_branch
          %460 = sbr.rel (%p458) target = $region60
        $region59: #{tpu_custom_call.1} parent=51 // pred_region
          %s461 = sand.u32 %s29, 1
          %s462 = scalar_lea.sflag [#allocation7], %s461
          %s463 = sand.u32 %s89, 1
          %s464 = smul.addr %s463, 8
          %s465 = scalar_lea.vmem [#allocation6], %s464
          %s466 = smul.u32 %s37, 8
          %s467 = ssub.s32 %s466, 1
          %p468 = scmp.gt.s32.totalorder %s467, 0
          %s469 = scalar_select %p468, %s467, 0
          %s471 = ssub.s32 128, 128
          %472 = vsyncadd %s462, %s471
          %s473 = smul.addr %s469, 2
          %s474 = smul.addr %s36, 32
          %s475 = sadd.s32 %s473, %s474
          %s476 = smul.addr %s475, 64
          %s477 = scalar_lea.hbm %s1, %s476
          %s478 = sshll.u32 %s465, 4
          %s479 = int_to_ptr.vmem [resolvable:$true] %s478
          %484 = dma.hbm_to_vmem [thread:$0]  %s477, 128, %s479, %s462, 64, 64, 4
        $region60: #{tpu_custom_call.1} parent=51 // pred_fallthru
          _
        // Predicated region
        $region61: #{tpu_custom_call.1} parent=51 // pred_check
          %p485 = pneg %p135
        $region62: #{tpu_custom_call.1} parent=51 // pred_check_branch
          %487 = sbr.rel (%p485) target = $region64
        $region63: #{tpu_custom_call.1} parent=51 // pred_region
          %s488 = sand.u32 %s29, 1
          %s489 = scalar_lea.sflag [#allocation7], %s488
          %s490 = sand.u32 %s125, 1
          %s491 = smul.addr %s490, 8
          %s492 = scalar_lea.vmem [#allocation8], %s491
          %s493 = sadd.s32 %s37, 1
          %s494 = smul.u32 %s493, 8
          %p495 = scmp.lt.s32.totalorder %s494, 15
          %s496 = scalar_select %p495, %s494, 15
          %s498 = ssub.s32 128, 128
          %499 = vsyncadd %s489, %s498
          %s500 = smul.addr %s496, 2
          %s501 = smul.addr %s36, 32
          %s502 = sadd.s32 %s500, %s501
          %s503 = smul.addr %s502, 64
          %s504 = scalar_lea.hbm %s2, %s503
          %s505 = sshll.u32 %s492, 4
          %s506 = int_to_ptr.vmem [resolvable:$true] %s505
          %511 = dma.hbm_to_vmem [thread:$0]  %s504, 128, %s506, %s489, 64, 64, 4
        $region64: #{tpu_custom_call.1} parent=51 // pred_fallthru
          _
      $region52: #{tpu_custom_call.1} parent=5 // pred_fallthru
        _
      %p512 = scmp.le.s32.totalorder 1, %s29
      %p513 = scmp.lt.s32.totalorder %s29, 5
      %p514 = pnand %p512, %p513
      %p515 = pneg %p514
      // Predicated region
      $region65: #{tpu_custom_call.1} parent=5 // pred_check
        _
      $region66: #{tpu_custom_call.1} parent=5 // pred_check_branch
        %517 = sbr.rel (%p514) target = $region68
      $region67: #{tpu_custom_call.1} parent=5 // pred_region
        %s518 = ssub.s32 %s29, 1
        %s519 = sand.u32 %s56, 1
        %s520 = scalar_lea.sflag [#allocation4], %s519
        %s521 = sand.u32 %s56, 1
        %s522 = smul.addr %s521, 64
        %s523 = scalar_lea.vmem [#allocation3], %s522
        // Predicated region
        $region69: #{tpu_custom_call.1} parent=67 // pred_check
          %p524 = pneg %p69
        $region70: #{tpu_custom_call.1} parent=67 // pred_check_branch
          %526 = sbr.rel (%p524) target = $region72
        $region71: #{tpu_custom_call.1} parent=67 // pred_region
          %527 = dma.done %s520, 1024
        $region72: #{tpu_custom_call.1} parent=67 // pred_fallthru
          _
        %s528 = sand.u32 %s34, 1
        %s529 = scalar_lea.sflag [#allocation7], %s528
        %s530 = sand.u32 %s92, 1
        %s531 = smul.addr %s530, 8
        %s532 = scalar_lea.vmem [#allocation6], %s531
        // Predicated region
        $region73: #{tpu_custom_call.1} parent=67 // pred_check
          %p533 = pneg %p105
        $region74: #{tpu_custom_call.1} parent=67 // pred_check_branch
          %535 = sbr.rel (%p533) target = $region76
        $region75: #{tpu_custom_call.1} parent=67 // pred_region
          %536 = dma.done %s529, 128
        $region76: #{tpu_custom_call.1} parent=67 // pred_fallthru
          _
        %s537 = sand.u32 %s34, 1
        %s538 = scalar_lea.sflag [#allocation7], %s537
        %s539 = sand.u32 %s128, 1
        %s540 = smul.addr %s539, 8
        %s541 = scalar_lea.vmem [#allocation8], %s540
        // Predicated region
        $region77: #{tpu_custom_call.1} parent=67 // pred_check
          %p542 = pneg %p141
        $region78: #{tpu_custom_call.1} parent=67 // pred_check_branch
          %544 = sbr.rel (%p542) target = $region80
        $region79: #{tpu_custom_call.1} parent=67 // pred_region
          %545 = dma.done %s538, 128
        $region80: #{tpu_custom_call.1} parent=67 // pred_fallthru
          _
        // Predicated region
        $region81: #{tpu_custom_call.1} parent=67 // pred_check
          %p546 = pneg %p162
        $region82: #{tpu_custom_call.1} parent=67 // pred_check_branch
          %548 = sbr.rel (%p546) target = $region84
        $region83: #{tpu_custom_call.1} parent=67 // pred_region
          %549 = dma.done [#allocation10], 1024
        $region84: #{tpu_custom_call.1} parent=67 // pred_fallthru
          _
        // Predicated region
        $region85: #{tpu_custom_call.1} parent=67 // pred_check
          %p550 = pneg %p225
        $region86: #{tpu_custom_call.1} parent=67 // pred_check_branch
          %552 = sbr.rel (%p550) target = $region88
        $region87: #{tpu_custom_call.1} parent=67 // pred_region
          %553 = dma.done [#allocation10], 9216
        $region88: #{tpu_custom_call.1} parent=67 // pred_fallthru
          _
        // Predicated region
        $region89: #{tpu_custom_call.1} parent=67 // pred_check
          %p554 = pneg %p288
        $region90: #{tpu_custom_call.1} parent=67 // pred_check_branch
          %556 = sbr.rel (%p554) target = $region92
        $region91: #{tpu_custom_call.1} parent=67 // pred_region
          %557 = dma.done [#allocation13], 1024
        $region92: #{tpu_custom_call.1} parent=67 // pred_fallthru
          _
        %s558 = sand.u32 %s56, 1
        %s559 = scalar_lea.sflag [#allocation4], %s558
        %s560 = sand.u32 %s56, 1
        %s561 = smul.addr %s560, 64
        %s562 = scalar_lea.vmem [#allocation3], %s561
        %p563 = pneg %p69
        %p564 = pneg %p66
        %s565 = sand.u32 %s34, 1
        %s566 = scalar_lea.sflag [#allocation7], %s565
        %s567 = sand.u32 %s92, 1
        %s568 = smul.addr %s567, 8
        %s569 = scalar_lea.vmem [#allocation6], %s568
        %p570 = pneg %p105
        %p571 = pneg %p102
        %s572 = sand.u32 %s34, 1
        %s573 = scalar_lea.sflag [#allocation7], %s572
        %s574 = sand.u32 %s128, 1
        %s575 = smul.addr %s574, 8
        %s576 = scalar_lea.vmem [#allocation8], %s575
        %p577 = pneg %p141
        %p578 = pneg %p138
        %p579 = pneg %p162
        %p580 = pneg %p159
        %p581 = pneg %p183
        %p582 = pneg %p180
        %p583 = pneg %p204
        %p584 = pneg %p201
        %p585 = pneg %p225
        %p586 = pneg %p222
        %p587 = pneg %p246
        %p588 = pneg %p243
        %p589 = pneg %p267
        %p590 = pneg %p264
        %p591 = pneg %p288
        %p592 = pneg %p285
        %p593 = pneg %p309
        %p594 = pneg %p306
        %p595 = pneg %p330
        %p596 = pneg %p327
        %p597 = pneg %p358
        %p598 = pneg %p355
        %s599 = sand.u32 %s345, 1
        %s600 = scalar_lea.sflag [#allocation5], %s599
        %s601 = sand.u32 %s345, 1
        %s602 = smul.addr %s601, 128
        %s603 = scalar_lea.vmem [#allocation14], %s602
        %s604 = smul.u32 8, %s39
        %s605 = smul.u32 %s39, 8
        %s606 = ssub.s32 %s605, 1
        %p607 = scmp.gt.s32.totalorder %s606, 0
        %s608 = scalar_select %p607, %s606, 0
        %s609 = sadd.s32 %s39, 1
        %s610 = smul.u32 %s609, 8
        %p611 = scmp.lt.s32.totalorder %s610, 15
        %s612 = scalar_select %p611, %s610, 15
        %s613 = smul.u32 8, %s39
        %v615 = vld [vmem:[%s523] sm:$0xf]
        %v616 = vld [vmem:[%s523 + $0x4] sm:$0xf]
        %v617 = vld [vmem:[%s523 + $0x8] sm:$0xf]
        %v618 = vld [vmem:[%s523 + $0xc] sm:$0xf]
        %v619 = vld [vmem:[%s523 + $0x10] sm:$0xf]
        %v620 = vld [vmem:[%s523 + $0x14] sm:$0xf]
        %v621 = vld [vmem:[%s523 + $0x18] sm:$0xf]
        %v622 = vld [vmem:[%s523 + $0x1c] sm:$0xf]
        %v623 = vld [vmem:[%s523 + $0x20] sm:$0xf]
        %v624 = vld [vmem:[%s523 + $0x24] sm:$0xf]
        %v625 = vld [vmem:[%s523 + $0x28] sm:$0xf]
        %v626 = vld [vmem:[%s523 + $0x2c] sm:$0xf]
        %v627 = vld [vmem:[%s523 + $0x30] sm:$0xf]
        %v628 = vld [vmem:[%s523 + $0x34] sm:$0xf]
        %v629 = vld [vmem:[%s523 + $0x38] sm:$0xf]
        %v630 = vld [vmem:[%s523 + $0x3c] sm:$0xf]
        %v631 = vld [vmem:[#allocation9] sm:$0xf]
        %v632 = vld [vmem:[#allocation9 + $0x4] sm:$0xf]
        %v633 = vld [vmem:[#allocation9 + $0x8] sm:$0xf]
        %v634 = vld [vmem:[#allocation9 + $0xc] sm:$0xf]
        %v635 = vld [vmem:[#allocation9 + $0x10] sm:$0xf]
        %v636 = vld [vmem:[#allocation9 + $0x14] sm:$0xf]
        %v637 = vld [vmem:[#allocation9 + $0x18] sm:$0xf]
        %v638 = vld [vmem:[#allocation9 + $0x1c] sm:$0xf]
        %v639 = vld [vmem:[#allocation9 + $0x20] sm:$0xf]
        %v640 = vld [vmem:[#allocation9 + $0x24] sm:$0xf]
        %v641 = vld [vmem:[#allocation9 + $0x28] sm:$0xf]
        %v642 = vld [vmem:[#allocation9 + $0x2c] sm:$0xf]
        %v643 = vld [vmem:[#allocation9 + $0x30] sm:$0xf]
        %v644 = vld [vmem:[#allocation9 + $0x34] sm:$0xf]
        %v645 = vld [vmem:[#allocation9 + $0x38] sm:$0xf]
        %v646 = vld [vmem:[#allocation9 + $0x3c] sm:$0xf]
        %v647 = vld [vmem:[%s4] sm:$0x1]
        %v648 = vld [vmem:[%s5] sm:$0x1]
        %vm649 = vcmask 1040384
        %vm650 = vsmask.f32 256
        %vm651 = vmand %vm649, %vm650
        %v652 = vld [vmem:[#allocation2] sm:$0x1]
        %v653 = vsel %vm651, 0, %v652
        %654 = vst [vmem:[#allocation2] sm:$0x1] %v653
        %v655 = vld [vmem:[#allocation2 + $0xc] sm:$0x1]
        %v656 = vsel %vm651, 0, %v655
        %657 = vst [vmem:[#allocation2 + $0xc] sm:$0x1] %v656
        %v658 = vld [vmem:[#allocation2 + $0x18] sm:$0x1]
        %v659 = vsel %vm651, 0, %v658
        %660 = vst [vmem:[#allocation2 + $0x18] sm:$0x1] %v659
        %v661 = vld [vmem:[#allocation2 + $0x24] sm:$0x1]
        %v662 = vsel %vm651, 0, %v661
        %663 = vst [vmem:[#allocation2 + $0x24] sm:$0x1] %v662
        %v664 = vld [vmem:[#allocation2 + $0x30] sm:$0x1]
        %v665 = vsel %vm651, 0, %v664
        %666 = vst [vmem:[#allocation2 + $0x30] sm:$0x1] %v665
        %v667 = vld [vmem:[#allocation2 + $0x3c] sm:$0x1]
        %v668 = vsel %vm651, 0, %v667
        %669 = vst [vmem:[#allocation2 + $0x3c] sm:$0x1] %v668
        %v670 = vld [vmem:[#allocation2 + $0x48] sm:$0x1]
        %v671 = vsel %vm651, 0, %v670
        %672 = vst [vmem:[#allocation2 + $0x48] sm:$0x1] %v671
        %v673 = vld [vmem:[#allocation2 + $0x54] sm:$0x1]
        %v674 = vsel %vm651, 0, %v673
        %675 = vst [vmem:[#allocation2 + $0x54] sm:$0x1] %v674
        %v676 = vld [vmem:[#allocation2 + $0x60] sm:$0x1]
        %v677 = vsel %vm651, 0, %v676
        %678 = vst [vmem:[#allocation2 + $0x60] sm:$0x1] %v677
        %v679 = vld [vmem:[#allocation2 + $0x6c] sm:$0x1]
        %v680 = vsel %vm651, 0, %v679
        %681 = vst [vmem:[#allocation2 + $0x6c] sm:$0x1] %v680
        %vm682 = vsmask.f32 7938
        %vm683 = vmand %vm649, %vm682
        %v684 = vld [vmem:[#allocation2 + $0x8] sm:$0x1]
        %v685 = vsel %vm683, 0, %v684
        %686 = vst [vmem:[#allocation2 + $0x8] sm:$0x1] %v685
        %v687 = vld [vmem:[#allocation2 + $0x14] sm:$0x1]
        %v688 = vsel %vm683, 0, %v687
        %689 = vst [vmem:[#allocation2 + $0x14] sm:$0x1] %v688
        %v690 = vld [vmem:[#allocation2 + $0x20] sm:$0x1]
        %v691 = vsel %vm683, 0, %v690
        %692 = vst [vmem:[#allocation2 + $0x20] sm:$0x1] %v691
        %v693 = vld [vmem:[#allocation2 + $0x2c] sm:$0x1]
        %v694 = vsel %vm683, 0, %v693
        %695 = vst [vmem:[#allocation2 + $0x2c] sm:$0x1] %v694
        %v696 = vld [vmem:[#allocation2 + $0x38] sm:$0x1]
        %v697 = vsel %vm683, 0, %v696
        %698 = vst [vmem:[#allocation2 + $0x38] sm:$0x1] %v697
        %v699 = vld [vmem:[#allocation2 + $0x44] sm:$0x1]
        %v700 = vsel %vm683, 0, %v699
        %701 = vst [vmem:[#allocation2 + $0x44] sm:$0x1] %v700
        %v702 = vld [vmem:[#allocation2 + $0x50] sm:$0x1]
        %v703 = vsel %vm683, 0, %v702
        %704 = vst [vmem:[#allocation2 + $0x50] sm:$0x1] %v703
        %v705 = vld [vmem:[#allocation2 + $0x5c] sm:$0x1]
        %v706 = vsel %vm683, 0, %v705
        %707 = vst [vmem:[#allocation2 + $0x5c] sm:$0x1] %v706
        %v708 = vld [vmem:[#allocation2 + $0x68] sm:$0x1]
        %v709 = vsel %vm683, 0, %v708
        %710 = vst [vmem:[#allocation2 + $0x68] sm:$0x1] %v709
        %v711 = vld [vmem:[#allocation2 + $0x74] sm:$0x1]
        %v712 = vsel %vm683, 0, %v711
        %713 = vst [vmem:[#allocation2 + $0x74] sm:$0x1] %v712
        %v730 = vunpack.c.l.b16 %v615
        %v731 = vunpack.c.l.b16 %v616
        %v732 = vunpack.c.l.b16 %v617
        %v733 = vunpack.c.l.b16 %v618
        %v734 = vunpack.c.l.b16 %v619
        %v735 = vunpack.c.l.b16 %v620
        %v736 = vunpack.c.l.b16 %v621
        %v737 = vunpack.c.l.b16 %v622
        %v738 = vunpack.c.l.b16 %v623
        %v739 = vunpack.c.l.b16 %v624
        %v740 = vunpack.c.l.b16 %v625
        %v741 = vunpack.c.l.b16 %v626
        %v742 = vunpack.c.l.b16 %v627
        %v743 = vunpack.c.l.b16 %v628
        %v744 = vunpack.c.l.b16 %v629
        %v745 = vunpack.c.l.b16 %v630
        %v746 = vpack.c.b16 %v731, %v730
        %v747 = vpack.c.b16 %v733, %v732
        %v748 = vpack.c.b16 %v735, %v734
        %v749 = vpack.c.b16 %v737, %v736
        %v750 = vpack.c.b16 %v739, %v738
        %v751 = vpack.c.b16 %v741, %v740
        %v752 = vpack.c.b16 %v743, %v742
        %v753 = vpack.c.b16 %v745, %v744
        %v778 = vunpack.c.l.b16 %v631
        %v779 = vunpack.c.l.b16 %v632
        %v780 = vunpack.c.l.b16 %v633
        %v781 = vunpack.c.l.b16 %v634
        %v782 = vunpack.c.l.b16 %v635
        %v783 = vunpack.c.l.b16 %v636
        %v784 = vunpack.c.l.b16 %v637
        %v785 = vunpack.c.l.b16 %v638
        %v786 = vunpack.c.l.b16 %v639
        %v787 = vunpack.c.l.b16 %v640
        %v788 = vunpack.c.l.b16 %v641
        %v789 = vunpack.c.l.b16 %v642
        %v790 = vunpack.c.l.b16 %v643
        %v791 = vunpack.c.l.b16 %v644
        %v792 = vunpack.c.l.b16 %v645
        %v793 = vunpack.c.l.b16 %v646
        %v794 = vpack.c.b16 %v779, %v778
        %v795 = vpack.c.b16 %v781, %v780
        %v796 = vpack.c.b16 %v783, %v782
        %v797 = vpack.c.b16 %v785, %v784
        %v798 = vpack.c.b16 %v787, %v786
        %v799 = vpack.c.b16 %v789, %v788
        %v800 = vpack.c.b16 %v791, %v790
        %v801 = vpack.c.b16 %v793, %v792
        %810 = vmatprep.subr.bf16.mxu0 0
        %811 = vmatpush1.bf16.msra.mxu0 %v794
        %812 = vmatprep.subr.bf16.mxu0 0
        %813 = vmatpush1.bf16.msra.mxu0 %v795
        %814 = vmatprep.subr.bf16.mxu0 0
        %815 = vmatpush1.bf16.msra.mxu0 %v796
        %816 = vmatprep.subr.bf16.mxu0 0
        %817 = vmatpush1.bf16.msra.mxu0 %v797
        %818 = vmatprep.subr.bf16.mxu0 0
        %819 = vmatpush1.bf16.msra.mxu0 %v798
        %820 = vmatprep.subr.bf16.mxu0 0
        %821 = vmatpush1.bf16.msra.mxu0 %v799
        %822 = vmatprep.subr.bf16.mxu0 0
        %823 = vmatpush1.bf16.msra.mxu0 %v800
        %824 = vmatprep.subr.bf16.mxu0 0
        %825 = vmatpush1.bf16.msra.mxu0 %v801
        %826 = vmatprep.subr.bf16.mxu0 0
        %827 = vmatpush1.bf16.msra.mxu0 0
        %828 = vmatprep.subr.bf16.mxu0 0
        %829 = vmatpush1.bf16.msra.mxu0 0
        %830 = vmatprep.subr.bf16.mxu0 0
        %831 = vmatpush1.bf16.msra.mxu0 0
        %832 = vmatprep.subr.bf16.mxu0 0
        %833 = vmatpush1.bf16.msra.mxu0 0
        %834 = vmatprep.subr.bf16.mxu0 0
        %835 = vmatpush1.bf16.msra.mxu0 0
        %836 = vmatprep.subr.bf16.mxu0 0
        %837 = vmatpush1.bf16.msra.mxu0 0
        %838 = vmatprep.subr.bf16.mxu0 0
        %839 = vmatpush1.bf16.msra.mxu0 0
        %840 = vmatprep.subr.bf16.mxu0 0
        %841 = vmatpush1.bf16.msra.mxu0 0
        %842 = vmatprep.mubr.bf16.mxu0 0
        %843 = vmatmul.mubr.bf16.gmra.mrb[0].mxu0 %v746
        %v844 = vpop.f32.mrb[0].mxu0
        %v845 = vadd.f32 0.0, %v844
        %v846 = vpop.f32.mrb[0].mxu0
        %v847 = vpop.f32.mrb[0].mxu0
        %v848 = vadd.f32 0.0, %v847
        %v849 = vpop.f32.mrb[0].mxu0
        %850 = vmatprep.mubr.bf16.mxu0 0
        %851 = vmatmul.mubr.bf16.gmra.mrb[0].mxu0 %v747
        %v852 = vpop.f32.mrb[0].mxu0
        %v853 = vadd.f32 0.0, %v852
        %v854 = vpop.f32.mrb[0].mxu0
        %v855 = vpop.f32.mrb[0].mxu0
        %v856 = vadd.f32 0.0, %v855
        %v857 = vpop.f32.mrb[0].mxu0
        %858 = vmatprep.mubr.bf16.mxu0 0
        %859 = vmatmul.mubr.bf16.gmra.mrb[0].mxu0 %v748
        %v860 = vpop.f32.mrb[0].mxu0
        %v861 = vadd.f32 0.0, %v860
        %v862 = vpop.f32.mrb[0].mxu0
        %v863 = vpop.f32.mrb[0].mxu0
        %v864 = vadd.f32 0.0, %v863
        %v865 = vpop.f32.mrb[0].mxu0
        %866 = vmatprep.mubr.bf16.mxu0 0
        %867 = vmatmul.mubr.bf16.gmra.mrb[0].mxu0 %v749
        %v868 = vpop.f32.mrb[0].mxu0
        %v869 = vadd.f32 0.0, %v868
        %v870 = vpop.f32.mrb[0].mxu0
        %v871 = vpop.f32.mrb[0].mxu0
        %v872 = vadd.f32 0.0, %v871
        %v873 = vpop.f32.mrb[0].mxu0
        %874 = vmatprep.mubr.bf16.mxu0 0
        %875 = vmatmul.mubr.bf16.gmra.mrb[0].mxu0 %v750
        %v876 = vpop.f32.mrb[0].mxu0
        %v877 = vadd.f32 0.0, %v876
        %v878 = vpop.f32.mrb[0].mxu0
        %v879 = vpop.f32.mrb[0].mxu0
        %v880 = vadd.f32 0.0, %v879
        %v881 = vpop.f32.mrb[0].mxu0
        %882 = vmatprep.mubr.bf16.mxu0 0
        %883 = vmatmul.mubr.bf16.gmra.mrb[0].mxu0 %v751
        %v884 = vpop.f32.mrb[0].mxu0
        %v885 = vadd.f32 0.0, %v884
        %v886 = vpop.f32.mrb[0].mxu0
        %v887 = vpop.f32.mrb[0].mxu0
        %v888 = vadd.f32 0.0, %v887
        %v889 = vpop.f32.mrb[0].mxu0
        %890 = vmatprep.mubr.bf16.mxu0 0
        %891 = vmatmul.mubr.bf16.gmra.mrb[0].mxu0 %v752
        %v892 = vpop.f32.mrb[0].mxu0
        %v893 = vadd.f32 0.0, %v892
        %v894 = vpop.f32.mrb[0].mxu0
        %v895 = vpop.f32.mrb[0].mxu0
        %v896 = vadd.f32 0.0, %v895
        %v897 = vpop.f32.mrb[0].mxu0
        %898 = vmatprep.mubr.bf16.mxu0 0
        %899 = vmatmul.mubr.bf16.gmra.mrb[0].mxu0 %v753
        %v900 = vpop.f32.mrb[0].mxu0
        %v901 = vadd.f32 0.0, %v900
        %v902 = vpop.f32.mrb[0].mxu0
        %v903 = vpop.f32.mrb[0].mxu0
        %v904 = vadd.f32 0.0, %v903
        %v905 = vpop.f32.mrb[0].mxu0
        %906 = vdwg.mxu0
        %v908 = vlaneseq
        %v909 = vshrl.u32 %v908, 7
        %v910 = vsub.s32 0, %v909
        %v911 = vrot.slane %v647, %v910
        %v913 = vmul.f32 %v845, %v911
        %v914 = vmul.f32 %v848, %v911
        %v915 = vmul.f32 %v853, %v911
        %v916 = vmul.f32 %v856, %v911
        %v917 = vmul.f32 %v861, %v911
        %v918 = vmul.f32 %v864, %v911
        %v919 = vmul.f32 %v869, %v911
        %v920 = vmul.f32 %v872, %v911
        %v921 = vmul.f32 %v877, %v911
        %v922 = vmul.f32 %v880, %v911
        %v923 = vmul.f32 %v885, %v911
        %v924 = vmul.f32 %v888, %v911
        %v925 = vmul.f32 %v893, %v911
        %v926 = vmul.f32 %v896, %v911
        %v927 = vmul.f32 %v901, %v911
        %v928 = vmul.f32 %v904, %v911
        %v930 = vlaneseq
        %v931 = vshrl.u32 %v930, 7
        %v932 = vsub.s32 0, %v931
        %v933 = vrot.slane %v648, %v932
        %v935 = vadd.f32 %v913, %v933
        %v936 = vadd.f32 %v914, %v933
        %v937 = vadd.f32 %v915, %v933
        %v938 = vadd.f32 %v916, %v933
        %v939 = vadd.f32 %v917, %v933
        %v940 = vadd.f32 %v918, %v933
        %v941 = vadd.f32 %v919, %v933
        %v942 = vadd.f32 %v920, %v933
        %v943 = vadd.f32 %v921, %v933
        %v944 = vadd.f32 %v922, %v933
        %v945 = vadd.f32 %v923, %v933
        %v946 = vadd.f32 %v924, %v933
        %v947 = vadd.f32 %v925, %v933
        %v948 = vadd.f32 %v926, %v933
        %v949 = vadd.f32 %v927, %v933
        %v950 = vadd.f32 %v928, %v933
        %v951 = vmax.f32 %v935, 0.0
        %v952 = vmax.f32 %v936, 0.0
        %v953 = vmax.f32 %v937, 0.0
        %v954 = vmax.f32 %v938, 0.0
        %v955 = vmax.f32 %v939, 0.0
        %v956 = vmax.f32 %v940, 0.0
        %v957 = vmax.f32 %v941, 0.0
        %v958 = vmax.f32 %v942, 0.0
        %v959 = vmax.f32 %v943, 0.0
        %v960 = vmax.f32 %v944, 0.0
        %v961 = vmax.f32 %v945, 0.0
        %v962 = vmax.f32 %v946, 0.0
        %v963 = vmax.f32 %v947, 0.0
        %v964 = vmax.f32 %v948, 0.0
        %v965 = vmax.f32 %v949, 0.0
        %v966 = vmax.f32 %v950, 0.0
        %v967 = vpack.c.bf16 %v952, %v951
        %v968 = vpack.c.bf16 %v954, %v953
        %v969 = vpack.c.bf16 %v956, %v955
        %v970 = vpack.c.bf16 %v958, %v957
        %v971 = vpack.c.bf16 %v960, %v959
        %v972 = vpack.c.bf16 %v962, %v961
        %v973 = vpack.c.bf16 %v964, %v963
        %v974 = vpack.c.bf16 %v966, %v965
        %v983 = vunpack.c.l.b16 %v967
        %v984 = vunpack.c.h.b16 %v967
        %v985 = vunpack.c.l.b16 %v968
        %v986 = vunpack.c.h.b16 %v968
        %v987 = vunpack.c.l.b16 %v969
        %v988 = vunpack.c.h.b16 %v969
        %v989 = vunpack.c.l.b16 %v970
        %v990 = vunpack.c.h.b16 %v970
        %v991 = vunpack.c.l.b16 %v971
        %v992 = vunpack.c.h.b16 %v971
        %v993 = vunpack.c.l.b16 %v972
        %v994 = vunpack.c.h.b16 %v972
        %v995 = vunpack.c.l.b16 %v973
        %v996 = vunpack.c.h.b16 %v973
        %v997 = vunpack.c.l.b16 %v974
        %v998 = vunpack.c.h.b16 %v974
        %v999 = vpack.c.b16 %v983, %v983
        %v1000 = vpack.c.b16 %v984, %v984
        %v1001 = vpack.c.b16 %v985, %v985
        %v1002 = vpack.c.b16 %v986, %v986
        %v1003 = vpack.c.b16 %v987, %v987
        %v1004 = vpack.c.b16 %v988, %v988
        %v1005 = vpack.c.b16 %v989, %v989
        %v1006 = vpack.c.b16 %v990, %v990
        %v1007 = vpack.c.b16 %v991, %v991
        %v1008 = vpack.c.b16 %v992, %v992
        %v1009 = vpack.c.b16 %v993, %v993
        %v1010 = vpack.c.b16 %v994, %v994
        %v1011 = vpack.c.b16 %v995, %v995
        %v1012 = vpack.c.b16 %v996, %v996
        %v1013 = vpack.c.b16 %v997, %v997
        %v1014 = vpack.c.b16 %v998, %v998
        %vm1015 = vsmask.f32 4368
        %vm1016 = vmor %vm650, %vm1015
        %v1018 = vshrl.u32 %v999, 16
        %v1020 = vrot.slane %v1018, 7
        %v1021 = vshll.u32 %v999, 16
        %v1023 = vor.u32 %v1020, %v1021
        %v1024 = vrot.slane %v1020, 4
        %v1026 = vshrl.u32 %v1000, 16
        %v1028 = vrot.slane %v1026, 7
        %v1029 = vshll.u32 %v1000, 16
        %v1031 = vor.u32 %v1028, %v1029
        %v1032 = vsel %vm1016, %v1024, %v1031
        %v1033 = vrot.slane %v1028, 4
        %v1035 = vshrl.u32 %v1001, 16
        %v1037 = vrot.slane %v1035, 7
        %v1038 = vshll.u32 %v1001, 16
        %v1040 = vor.u32 %v1037, %v1038
        %v1041 = vrot.slane %v1037, 4
        %v1043 = vshrl.u32 %v1002, 16
        %v1045 = vrot.slane %v1043, 7
        %v1046 = vshll.u32 %v1002, 16
        %v1048 = vor.u32 %v1045, %v1046
        %v1049 = vsel %vm1016, %v1041, %v1048
        %v1050 = vrot.slane %v1045, 4
        %v1052 = vshrl.u32 %v1003, 16
        %v1054 = vrot.slane %v1052, 7
        %v1055 = vshll.u32 %v1003, 16
        %v1057 = vor.u32 %v1054, %v1055
        %v1058 = vrot.slane %v1054, 4
        %v1060 = vshrl.u32 %v1004, 16
        %v1062 = vrot.slane %v1060, 7
        %v1063 = vshll.u32 %v1004, 16
        %v1065 = vor.u32 %v1062, %v1063
        %v1066 = vsel %vm1016, %v1058, %v1065
        %v1067 = vrot.slane %v1062, 4
        %v1069 = vshrl.u32 %v1005, 16
        %v1071 = vrot.slane %v1069, 7
        %v1072 = vshll.u32 %v1005, 16
        %v1074 = vor.u32 %v1071, %v1072
        %v1075 = vrot.slane %v1071, 4
        %v1077 = vshrl.u32 %v1006, 16
        %v1079 = vrot.slane %v1077, 7
        %v1080 = vshll.u32 %v1006, 16
        %v1082 = vor.u32 %v1079, %v1080
        %v1083 = vsel %vm1016, %v1075, %v1082
        %v1084 = vrot.slane %v1079, 4
        %v1086 = vshrl.u32 %v1007, 16
        %v1088 = vrot.slane %v1086, 7
        %v1089 = vshll.u32 %v1007, 16
        %v1091 = vor.u32 %v1088, %v1089
        %v1092 = vrot.slane %v1088, 4
        %v1094 = vshrl.u32 %v1008, 16
        %v1096 = vrot.slane %v1094, 7
        %v1097 = vshll.u32 %v1008, 16
        %v1099 = vor.u32 %v1096, %v1097
        %v1100 = vsel %vm1016, %v1092, %v1099
        %v1101 = vrot.slane %v1096, 4
        %v1103 = vshrl.u32 %v1009, 16
        %v1105 = vrot.slane %v1103, 7
        %v1106 = vshll.u32 %v1009, 16
        %v1108 = vor.u32 %v1105, %v1106
        %v1109 = vrot.slane %v1105, 4
        %v1111 = vshrl.u32 %v1010, 16
        %v1113 = vrot.slane %v1111, 7
        %v1114 = vshll.u32 %v1010, 16
        %v1116 = vor.u32 %v1113, %v1114
        %v1117 = vsel %vm1016, %v1109, %v1116
        %v1118 = vrot.slane %v1113, 4
        %v1120 = vshrl.u32 %v1011, 16
        %v1122 = vrot.slane %v1120, 7
        %v1123 = vshll.u32 %v1011, 16
        %v1125 = vor.u32 %v1122, %v1123
        %v1126 = vrot.slane %v1122, 4
        %v1128 = vshrl.u32 %v1012, 16
        %v1130 = vrot.slane %v1128, 7
        %v1131 = vshll.u32 %v1012, 16
        %v1133 = vor.u32 %v1130, %v1131
        %v1134 = vsel %vm1016, %v1126, %v1133
        %v1135 = vrot.slane %v1130, 4
        %v1137 = vshrl.u32 %v1013, 16
        %v1139 = vrot.slane %v1137, 7
        %v1140 = vshll.u32 %v1013, 16
        %v1142 = vor.u32 %v1139, %v1140
        %v1143 = vrot.slane %v1139, 4
        %v1145 = vshrl.u32 %v1014, 16
        %v1147 = vrot.slane %v1145, 7
        %v1148 = vshll.u32 %v1014, 16
        %v1150 = vor.u32 %v1147, %v1148
        %v1151 = vsel %vm1016, %v1143, %v1150
        %v1152 = vrot.slane %v1147, 4
        %s1177 = scalar_lea.vmem [#allocation2], 12
        %vm1178 = vcmask 1043456
        %vm1179 = vmand %vm1178, %vm682
        %v1180 = vld [vmem:[%s1177] sm:$0xf]
        %v1181 = vsel %vm1179, %v1023, %v1180
        %1182 = vst [vmem:[%s1177] sm:$0xf] %v1181
        %1183 = vst [vmem:[%s1177 + $0x4] sm:$0xf] %v1032
        %v1184 = vld [vmem:[%s1177 + $0x8] sm:$0x1]
        %v1185 = vsel %vm651, %v1033, %v1184
        %1186 = vst [vmem:[%s1177 + $0x8] sm:$0x1] %v1185
        %v1187 = vld [vmem:[%s1177 + $0xc] sm:$0xf]
        %v1188 = vsel %vm1179, %v1040, %v1187
        %1189 = vst [vmem:[%s1177 + $0xc] sm:$0xf] %v1188
        %1190 = vst [vmem:[%s1177 + $0x10] sm:$0xf] %v1049
        %v1191 = vld [vmem:[%s1177 + $0x14] sm:$0x1]
        %v1192 = vsel %vm651, %v1050, %v1191
        %1193 = vst [vmem:[%s1177 + $0x14] sm:$0x1] %v1192
        %v1194 = vld [vmem:[%s1177 + $0x18] sm:$0xf]
        %v1195 = vsel %vm1179, %v1057, %v1194
        %1196 = vst [vmem:[%s1177 + $0x18] sm:$0xf] %v1195
        %1197 = vst [vmem:[%s1177 + $0x1c] sm:$0xf] %v1066
        %v1198 = vld [vmem:[%s1177 + $0x20] sm:$0x1]
        %v1199 = vsel %vm651, %v1067, %v1198
        %1200 = vst [vmem:[%s1177 + $0x20] sm:$0x1] %v1199
        %v1201 = vld [vmem:[%s1177 + $0x24] sm:$0xf]
        %v1202 = vsel %vm1179, %v1074, %v1201
        %1203 = vst [vmem:[%s1177 + $0x24] sm:$0xf] %v1202
        %1204 = vst [vmem:[%s1177 + $0x28] sm:$0xf] %v1083
        %v1205 = vld [vmem:[%s1177 + $0x2c] sm:$0x1]
        %v1206 = vsel %vm651, %v1084, %v1205
        %1207 = vst [vmem:[%s1177 + $0x2c] sm:$0x1] %v1206
        %v1208 = vld [vmem:[%s1177 + $0x30] sm:$0xf]
        %v1209 = vsel %vm1179, %v1091, %v1208
        %1210 = vst [vmem:[%s1177 + $0x30] sm:$0xf] %v1209
        %1211 = vst [vmem:[%s1177 + $0x34] sm:$0xf] %v1100
        %v1212 = vld [vmem:[%s1177 + $0x38] sm:$0x1]
        %v1213 = vsel %vm651, %v1101, %v1212
        %1214 = vst [vmem:[%s1177 + $0x38] sm:$0x1] %v1213
        %v1215 = vld [vmem:[%s1177 + $0x3c] sm:$0xf]
        %v1216 = vsel %vm1179, %v1108, %v1215
        %1217 = vst [vmem:[%s1177 + $0x3c] sm:$0xf] %v1216
        %1218 = vst [vmem:[%s1177 + $0x40] sm:$0xf] %v1117
        %v1219 = vld [vmem:[%s1177 + $0x44] sm:$0x1]
        %v1220 = vsel %vm651, %v1118, %v1219
        %1221 = vst [vmem:[%s1177 + $0x44] sm:$0x1] %v1220
        %v1222 = vld [vmem:[%s1177 + $0x48] sm:$0xf]
        %v1223 = vsel %vm1179, %v1125, %v1222
        %1224 = vst [vmem:[%s1177 + $0x48] sm:$0xf] %v1223
        %1225 = vst [vmem:[%s1177 + $0x4c] sm:$0xf] %v1134
        %v1226 = vld [vmem:[%s1177 + $0x50] sm:$0x1]
        %v1227 = vsel %vm651, %v1135, %v1226
        %1228 = vst [vmem:[%s1177 + $0x50] sm:$0x1] %v1227
        %v1229 = vld [vmem:[%s1177 + $0x54] sm:$0xf]
        %v1230 = vsel %vm1179, %v1142, %v1229
        %1231 = vst [vmem:[%s1177 + $0x54] sm:$0xf] %v1230
        %1232 = vst [vmem:[%s1177 + $0x58] sm:$0xf] %v1151
        %v1233 = vld [vmem:[%s1177 + $0x5c] sm:$0x1]
        %v1234 = vsel %vm651, %v1152, %v1233
        %1235 = vst [vmem:[%s1177 + $0x5c] sm:$0x1] %v1234
        %p1236 = scmp.gt.s32.totalorder %s39, 0
        // Predicated region
        $region93: #{tpu_custom_call.1} parent=67 // pred_check
          %p1237 = pneg %p1236
        $region94: #{tpu_custom_call.1} parent=67 // pred_check_branch
          %1239 = sbr.rel (%p1237) target = $region96
        $region95: #{tpu_custom_call.1} parent=67 // pred_region
          %v1240 = vld [vmem:[%s532] sm:$0xf]
          %v1241 = vld [vmem:[%s532 + $0x4] sm:$0xf]
          %v1244 = vunpack.c.l.b16 %v1240
          %v1245 = vunpack.c.l.b16 %v1241
          %v1246 = vpack.c.b16 %v1245, %v1244
          %1248 = vmatprep.subr.bf16.mxu0 0
          %1249 = vmatpush1.bf16.msra.mxu0 %v794
          %1250 = vmatprep.subr.bf16.mxu0 0
          %1251 = vmatpush1.bf16.msra.mxu0 %v795
          %1252 = vmatprep.subr.bf16.mxu0 0
          %1253 = vmatpush1.bf16.msra.mxu0 %v796
          %1254 = vmatprep.subr.bf16.mxu0 0
          %1255 = vmatpush1.bf16.msra.mxu0 %v797
          %1256 = vmatprep.subr.bf16.mxu0 0
          %1257 = vmatpush1.bf16.msra.mxu0 %v798
          %1258 = vmatprep.subr.bf16.mxu0 0
          %1259 = vmatpush1.bf16.msra.mxu0 %v799
          %1260 = vmatprep.subr.bf16.mxu0 0
          %1261 = vmatpush1.bf16.msra.mxu0 %v800
          %1262 = vmatprep.subr.bf16.mxu0 0
          %1263 = vmatpush1.bf16.msra.mxu0 %v801
          %1264 = vmatprep.subr.bf16.mxu0 0
          %1265 = vmatpush1.bf16.msra.mxu0 0
          %1266 = vmatprep.subr.bf16.mxu0 0
          %1267 = vmatpush1.bf16.msra.mxu0 0
          %1268 = vmatprep.subr.bf16.mxu0 0
          %1269 = vmatpush1.bf16.msra.mxu0 0
          %1270 = vmatprep.subr.bf16.mxu0 0
          %1271 = vmatpush1.bf16.msra.mxu0 0
          %1272 = vmatprep.subr.bf16.mxu0 0
          %1273 = vmatpush1.bf16.msra.mxu0 0
          %1274 = vmatprep.subr.bf16.mxu0 0
          %1275 = vmatpush1.bf16.msra.mxu0 0
          %1276 = vmatprep.subr.bf16.mxu0 0
          %1277 = vmatpush1.bf16.msra.mxu0 0
          %1278 = vmatprep.subr.bf16.mxu0 0
          %1279 = vmatpush1.bf16.msra.mxu0 0
          %1280 = vmatprep.mubr.bf16.mxu0 0
          %1281 = vmatmul.mubr.bf16.gmra.mrb[0].mxu0 %v1246
          %v1282 = vpop.f32.mrb[0].mxu0
          %v1283 = vadd.f32 0.0, %v1282
          %v1284 = vpop.f32.mrb[0].mxu0
          %v1285 = vpop.f32.mrb[0].mxu0
          %v1286 = vadd.f32 0.0, %v1285
          %v1287 = vpop.f32.mrb[0].mxu0
          %1288 = vdwg.mxu0
          %v1289 = vmul.f32 %v1283, %v911
          %v1290 = vmul.f32 %v1286, %v911
          %v1291 = vadd.f32 %v1289, %v933
          %v1292 = vadd.f32 %v1290, %v933
          %v1293 = vmax.f32 %v1291, 0.0
          %v1294 = vmax.f32 %v1292, 0.0
          %v1295 = vpack.c.bf16 %v1294, %v1293
          %v1297 = vunpack.c.l.b16 %v1295
          %v1298 = vunpack.c.h.b16 %v1295
          %v1299 = vpack.c.b16 %v1297, %v1297
          %v1300 = vpack.c.b16 %v1298, %v1298
          %v1302 = vshrl.u32 %v1299, 16
          %v1304 = vrot.slane %v1302, 7
          %v1305 = vshll.u32 %v1299, 16
          %v1307 = vor.u32 %v1304, %v1305
          %v1308 = vrot.slane %v1304, 4
          %v1310 = vshrl.u32 %v1300, 16
          %v1312 = vrot.slane %v1310, 7
          %v1313 = vshll.u32 %v1300, 16
          %v1315 = vor.u32 %v1312, %v1313
          %v1316 = vsel %vm1016, %v1308, %v1315
          %v1317 = vrot.slane %v1312, 4
          %v1321 = vld [vmem:[#allocation2] sm:$0xf]
          %v1322 = vsel %vm1179, %v1307, %v1321
          %1323 = vst [vmem:[#allocation2] sm:$0xf] %v1322
          %1324 = vst [vmem:[#allocation2 + $0x4] sm:$0xf] %v1316
          %v1325 = vld [vmem:[#allocation2 + $0x8] sm:$0x1]
          %v1326 = vsel %vm651, %v1317, %v1325
          %1327 = vst [vmem:[#allocation2 + $0x8] sm:$0x1] %v1326
        $region96: #{tpu_custom_call.1} parent=67 // pred_fallthru
          _
        %p1328 = scmp.eq.s32.totalorder %s39, 0
        // Predicated region
        $region97: #{tpu_custom_call.1} parent=67 // pred_check
          %p1329 = pneg %p1328
        $region98: #{tpu_custom_call.1} parent=67 // pred_check_branch
          %1331 = sbr.rel (%p1329) target = $region100
        $region99: #{tpu_custom_call.1} parent=67 // pred_region
          %v1332 = vld [vmem:[#allocation2] sm:$0xf]
          %v1333 = vsel %vm1179, 0, %v1332
          %1334 = vst [vmem:[#allocation2] sm:$0xf] %v1333
          %1335 = vst [vmem:[#allocation2 + $0x4] sm:$0xf] 0
          %v1336 = vld [vmem:[#allocation2 + $0x8] sm:$0x1]
          %v1337 = vsel %vm651, 0, %v1336
          %1338 = vst [vmem:[#allocation2 + $0x8] sm:$0x1] %v1337
        $region100: #{tpu_custom_call.1} parent=67 // pred_fallthru
          _
        %p1339 = scmp.lt.s32.totalorder %s39, 1
        // Predicated region
        $region101: #{tpu_custom_call.1} parent=67 // pred_check
          %p1340 = pneg %p1339
        $region102: #{tpu_custom_call.1} parent=67 // pred_check_branch
          %1342 = sbr.rel (%p1340) target = $region104
        $region103: #{tpu_custom_call.1} parent=67 // pred_region
          %v1343 = vld [vmem:[%s541] sm:$0xf]
          %v1344 = vld [vmem:[%s541 + $0x4] sm:$0xf]
          %v1347 = vunpack.c.l.b16 %v1343
          %v1348 = vunpack.c.l.b16 %v1344
          %v1349 = vpack.c.b16 %v1348, %v1347
          %1351 = vmatprep.subr.bf16.mxu0 0
          %1352 = vmatpush1.bf16.msra.mxu0 %v794
          %1353 = vmatprep.subr.bf16.mxu0 0
          %1354 = vmatpush1.bf16.msra.mxu0 %v795
          %1355 = vmatprep.subr.bf16.mxu0 0
          %1356 = vmatpush1.bf16.msra.mxu0 %v796
          %1357 = vmatprep.subr.bf16.mxu0 0
          %1358 = vmatpush1.bf16.msra.mxu0 %v797
          %1359 = vmatprep.subr.bf16.mxu0 0
          %1360 = vmatpush1.bf16.msra.mxu0 %v798
          %1361 = vmatprep.subr.bf16.mxu0 0
          %1362 = vmatpush1.bf16.msra.mxu0 %v799
          %1363 = vmatprep.subr.bf16.mxu0 0
          %1364 = vmatpush1.bf16.msra.mxu0 %v800
          %1365 = vmatprep.subr.bf16.mxu0 0
          %1366 = vmatpush1.bf16.msra.mxu0 %v801
          %1367 = vmatprep.subr.bf16.mxu0 0
          %1368 = vmatpush1.bf16.msra.mxu0 0
          %1369 = vmatprep.subr.bf16.mxu0 0
          %1370 = vmatpush1.bf16.msra.mxu0 0
          %1371 = vmatprep.subr.bf16.mxu0 0
          %1372 = vmatpush1.bf16.msra.mxu0 0
          %1373 = vmatprep.subr.bf16.mxu0 0
          %1374 = vmatpush1.bf16.msra.mxu0 0
          %1375 = vmatprep.subr.bf16.mxu0 0
          %1376 = vmatpush1.bf16.msra.mxu0 0
          %1377 = vmatprep.subr.bf16.mxu0 0
          %1378 = vmatpush1.bf16.msra.mxu0 0
          %1379 = vmatprep.subr.bf16.mxu0 0
          %1380 = vmatpush1.bf16.msra.mxu0 0
          %1381 = vmatprep.subr.bf16.mxu0 0
          %1382 = vmatpush1.bf16.msra.mxu0 0
          %1383 = vmatprep.mubr.bf16.mxu0 0
          %1384 = vmatmul.mubr.bf16.gmra.mrb[0].mxu0 %v1349
          %v1385 = vpop.f32.mrb[0].mxu0
          %v1386 = vadd.f32 0.0, %v1385
          %v1387 = vpop.f32.mrb[0].mxu0
          %v1388 = vpop.f32.mrb[0].mxu0
          %v1389 = vadd.f32 0.0, %v1388
          %v1390 = vpop.f32.mrb[0].mxu0
          %1391 = vdwg.mxu0
          %v1392 = vmul.f32 %v1386, %v911
          %v1393 = vmul.f32 %v1389, %v911
          %v1394 = vadd.f32 %v1392, %v933
          %v1395 = vadd.f32 %v1393, %v933
          %v1396 = vmax.f32 %v1394, 0.0
          %v1397 = vmax.f32 %v1395, 0.0
          %v1398 = vpack.c.bf16 %v1397, %v1396
          %v1400 = vunpack.c.l.b16 %v1398
          %v1401 = vunpack.c.h.b16 %v1398
          %v1402 = vpack.c.b16 %v1400, %v1400
          %v1403 = vpack.c.b16 %v1401, %v1401
          %v1405 = vshrl.u32 %v1402, 16
          %v1407 = vrot.slane %v1405, 7
          %v1408 = vshll.u32 %v1402, 16
          %v1410 = vor.u32 %v1407, %v1408
          %v1411 = vrot.slane %v1407, 4
          %v1413 = vshrl.u32 %v1403, 16
          %v1415 = vrot.slane %v1413, 7
          %v1416 = vshll.u32 %v1403, 16
          %v1418 = vor.u32 %v1415, %v1416
          %v1419 = vsel %vm1016, %v1411, %v1418
          %v1420 = vrot.slane %v1415, 4
          %s1424 = scalar_lea.vmem [#allocation2], 108
          %v1425 = vld [vmem:[%s1424] sm:$0xf]
          %v1426 = vsel %vm1179, %v1410, %v1425
          %1427 = vst [vmem:[%s1424] sm:$0xf] %v1426
          %1428 = vst [vmem:[%s1424 + $0x4] sm:$0xf] %v1419
          %v1429 = vld [vmem:[%s1424 + $0x8] sm:$0x1]
          %v1430 = vsel %vm651, %v1420, %v1429
          %1431 = vst [vmem:[%s1424 + $0x8] sm:$0x1] %v1430
        $region104: #{tpu_custom_call.1} parent=67 // pred_fallthru
          _
        %p1432 = scmp.eq.s32.totalorder %s39, 1
        // Predicated region
        $region105: #{tpu_custom_call.1} parent=67 // pred_check
          %p1433 = pneg %p1432
        $region106: #{tpu_custom_call.1} parent=67 // pred_check_branch
          %1435 = sbr.rel (%p1433) target = $region108
        $region107: #{tpu_custom_call.1} parent=67 // pred_region
          %s1436 = scalar_lea.vmem [#allocation2], 108
          %v1437 = vld [vmem:[%s1436] sm:$0xf]
          %v1438 = vsel %vm1179, 0, %v1437
          %1439 = vst [vmem:[%s1436] sm:$0xf] %v1438
          %1440 = vst [vmem:[%s1436 + $0x4] sm:$0xf] 0
          %v1441 = vld [vmem:[%s1436 + $0x8] sm:$0x1]
          %v1442 = vsel %vm651, 0, %v1441
          %1443 = vst [vmem:[%s1436 + $0x8] sm:$0x1] %v1442
        $region108: #{tpu_custom_call.1} parent=67 // pred_fallthru
          _
        %v1444 = vld [vmem:[#allocation2] sm:$0xf]
        %v1445 = vld [vmem:[#allocation2 + $0x4] sm:$0xf]
        %v1446 = vld [vmem:[#allocation2 + $0xc] sm:$0xf]
        %v1447 = vld [vmem:[#allocation2 + $0x10] sm:$0xf]
        %v1448 = vld [vmem:[#allocation2 + $0x18] sm:$0xf]
        %v1449 = vld [vmem:[#allocation2 + $0x1c] sm:$0xf]
        %v1450 = vld [vmem:[#allocation2 + $0x24] sm:$0xf]
        %v1451 = vld [vmem:[#allocation2 + $0x28] sm:$0xf]
        %v1452 = vld [vmem:[#allocation2 + $0x30] sm:$0xf]
        %v1453 = vld [vmem:[#allocation2 + $0x34] sm:$0xf]
        %v1454 = vld [vmem:[#allocation2 + $0x3c] sm:$0xf]
        %v1455 = vld [vmem:[#allocation2 + $0x40] sm:$0xf]
        %v1456 = vld [vmem:[#allocation2 + $0x48] sm:$0xf]
        %v1457 = vld [vmem:[#allocation2 + $0x4c] sm:$0xf]
        %v1458 = vld [vmem:[#allocation2 + $0x54] sm:$0xf]
        %v1459 = vld [vmem:[#allocation2 + $0x58] sm:$0xf]
        %v1460 = vld [vmem:[#allocation2 + $0x60] sm:$0xf]
        %v1461 = vld [vmem:[#allocation2 + $0x64] sm:$0xf]
        %v1462 = vld [vmem:[#allocation2 + $0x6c] sm:$0xf]
        %v1463 = vld [vmem:[#allocation2 + $0x70] sm:$0xf]
        %v1464 = vld [vmem:[#allocation2 + $0x8] sm:$0x1]
        %v1465 = vld [vmem:[#allocation2 + $0x14] sm:$0x1]
        %v1466 = vld [vmem:[#allocation2 + $0x20] sm:$0x1]
        %v1467 = vld [vmem:[#allocation2 + $0x2c] sm:$0x1]
        %v1468 = vld [vmem:[#allocation2 + $0x38] sm:$0x1]
        %v1469 = vld [vmem:[#allocation2 + $0x44] sm:$0x1]
        %v1470 = vld [vmem:[#allocation2 + $0x50] sm:$0x1]
        %v1471 = vld [vmem:[#allocation2 + $0x5c] sm:$0x1]
        %v1472 = vld [vmem:[#allocation2 + $0x68] sm:$0x1]
        %v1473 = vld [vmem:[#allocation2 + $0x74] sm:$0x1]
        %v1474 = vld [vmem:[#allocation2] sm:$0xe]
        %v1475 = vld [vmem:[#allocation2 + $0xc] sm:$0xe]
        %v1476 = vld [vmem:[#allocation2 + $0x18] sm:$0xe]
        %v1477 = vld [vmem:[#allocation2 + $0x24] sm:$0xe]
        %v1478 = vld [vmem:[#allocation2 + $0x30] sm:$0xe]
        %v1479 = vld [vmem:[#allocation2 + $0x3c] sm:$0xe]
        %v1480 = vld [vmem:[#allocation2 + $0x48] sm:$0xe]
        %v1481 = vld [vmem:[#allocation2 + $0x54] sm:$0xe]
        %v1482 = vld [vmem:[#allocation2 + $0x60] sm:$0xe]
        %v1483 = vld [vmem:[#allocation2 + $0x6c] sm:$0xe]
        %v1484 = vld [vmem:[#allocation11] sm:$0xf]
        %v1485 = vld [vmem:[#allocation11 + $0x4] sm:$0xf]
        %v1486 = vld [vmem:[#allocation11 + $0x8] sm:$0xf]
        %v1487 = vld [vmem:[#allocation11 + $0xc] sm:$0xf]
        %v1488 = vld [vmem:[#allocation11 + $0x10] sm:$0xf]
        %v1489 = vld [vmem:[#allocation11 + $0x14] sm:$0xf]
        %v1490 = vld [vmem:[#allocation11 + $0x18] sm:$0xf]
        %v1491 = vld [vmem:[#allocation11 + $0x1c] sm:$0xf]
        %v1492 = vld [vmem:[#allocation11 + $0x20] sm:$0xf]
        %v1493 = vld [vmem:[#allocation11 + $0x24] sm:$0xf]
        %v1494 = vld [vmem:[#allocation11 + $0x28] sm:$0xf]
        %v1495 = vld [vmem:[#allocation11 + $0x2c] sm:$0xf]
        %v1496 = vld [vmem:[#allocation11 + $0x30] sm:$0xf]
        %v1497 = vld [vmem:[#allocation11 + $0x34] sm:$0xf]
        %v1498 = vld [vmem:[#allocation11 + $0x38] sm:$0xf]
        %v1499 = vld [vmem:[#allocation11 + $0x3c] sm:$0xf]
        %vm1500 = vsmask.f32 3328
        %vm1501 = vsmask.f32 7440
        %vm1502 = vmor %vm1500, %vm1501
        %v1504 = vshrl.u32 %v1444, 16
        %v1506 = vrot.slane %v1504, 4
        %v1507 = vshll.u32 %v1444, 16
        %v1509 = vrot.slane %v1507, 5
        %v1510 = vor.u32 %v1506, %v1509
        %v1511 = vrot.slane %v1510, 4
        %v1513 = vshll.u32 %v1445, 16
        %v1515 = vrot.slane %v1513, 5
        %v1516 = vsel %vm1502, %v1511, %v1515
        %v1517 = vshrl.u32 %v1445, 16
        %v1519 = vrot.slane %v1517, 4
        %v1520 = vor.u32 %v1519, %v1515
        %v1521 = vrot.slane %v1520, 4
        %v1523 = vshll.u32 %v1464, 16
        %v1525 = vrot.slane %v1523, 5
        %v1526 = vsel %vm1502, %v1521, %v1525
        %v1528 = vshrl.u32 %v1446, 16
        %v1530 = vrot.slane %v1528, 4
        %v1531 = vshll.u32 %v1446, 16
        %v1533 = vrot.slane %v1531, 5
        %v1534 = vor.u32 %v1530, %v1533
        %v1535 = vrot.slane %v1534, 4
        %v1537 = vshll.u32 %v1447, 16
        %v1539 = vrot.slane %v1537, 5
        %v1540 = vsel %vm1502, %v1535, %v1539
        %v1541 = vshrl.u32 %v1447, 16
        %v1543 = vrot.slane %v1541, 4
        %v1544 = vor.u32 %v1543, %v1539
        %v1545 = vrot.slane %v1544, 4
        %v1547 = vshll.u32 %v1465, 16
        %v1549 = vrot.slane %v1547, 5
        %v1550 = vsel %vm1502, %v1545, %v1549
        %v1552 = vshrl.u32 %v1448, 16
        %v1554 = vrot.slane %v1552, 4
        %v1555 = vshll.u32 %v1448, 16
        %v1557 = vrot.slane %v1555, 5
        %v1558 = vor.u32 %v1554, %v1557
        %v1559 = vrot.slane %v1558, 4
        %v1561 = vshll.u32 %v1449, 16
        %v1563 = vrot.slane %v1561, 5
        %v1564 = vsel %vm1502, %v1559, %v1563
        %v1565 = vshrl.u32 %v1449, 16
        %v1567 = vrot.slane %v1565, 4
        %v1568 = vor.u32 %v1567, %v1563
        %v1569 = vrot.slane %v1568, 4
        %v1571 = vshll.u32 %v1466, 16
        %v1573 = vrot.slane %v1571, 5
        %v1574 = vsel %vm1502, %v1569, %v1573
        %v1576 = vshrl.u32 %v1450, 16
        %v1578 = vrot.slane %v1576, 4
        %v1579 = vshll.u32 %v1450, 16
        %v1581 = vrot.slane %v1579, 5
        %v1582 = vor.u32 %v1578, %v1581
        %v1583 = vrot.slane %v1582, 4
        %v1585 = vshll.u32 %v1451, 16
        %v1587 = vrot.slane %v1585, 5
        %v1588 = vsel %vm1502, %v1583, %v1587
        %v1589 = vshrl.u32 %v1451, 16
        %v1591 = vrot.slane %v1589, 4
        %v1592 = vor.u32 %v1591, %v1587
        %v1593 = vrot.slane %v1592, 4
        %v1595 = vshll.u32 %v1467, 16
        %v1597 = vrot.slane %v1595, 5
        %v1598 = vsel %vm1502, %v1593, %v1597
        %v1600 = vshrl.u32 %v1452, 16
        %v1602 = vrot.slane %v1600, 4
        %v1603 = vshll.u32 %v1452, 16
        %v1605 = vrot.slane %v1603, 5
        %v1606 = vor.u32 %v1602, %v1605
        %v1607 = vrot.slane %v1606, 4
        %v1609 = vshll.u32 %v1453, 16
        %v1611 = vrot.slane %v1609, 5
        %v1612 = vsel %vm1502, %v1607, %v1611
        %v1613 = vshrl.u32 %v1453, 16
        %v1615 = vrot.slane %v1613, 4
        %v1616 = vor.u32 %v1615, %v1611
        %v1617 = vrot.slane %v1616, 4
        %v1619 = vshll.u32 %v1468, 16
        %v1621 = vrot.slane %v1619, 5
        %v1622 = vsel %vm1502, %v1617, %v1621
        %v1624 = vshrl.u32 %v1454, 16
        %v1626 = vrot.slane %v1624, 4
        %v1627 = vshll.u32 %v1454, 16
        %v1629 = vrot.slane %v1627, 5
        %v1630 = vor.u32 %v1626, %v1629
        %v1631 = vrot.slane %v1630, 4
        %v1633 = vshll.u32 %v1455, 16
        %v1635 = vrot.slane %v1633, 5
        %v1636 = vsel %vm1502, %v1631, %v1635
        %v1637 = vshrl.u32 %v1455, 16
        %v1639 = vrot.slane %v1637, 4
        %v1640 = vor.u32 %v1639, %v1635
        %v1641 = vrot.slane %v1640, 4
        %v1643 = vshll.u32 %v1469, 16
        %v1645 = vrot.slane %v1643, 5
        %v1646 = vsel %vm1502, %v1641, %v1645
        %v1648 = vshrl.u32 %v1456, 16
        %v1650 = vrot.slane %v1648, 4
        %v1651 = vshll.u32 %v1456, 16
        %v1653 = vrot.slane %v1651, 5
        %v1654 = vor.u32 %v1650, %v1653
        %v1655 = vrot.slane %v1654, 4
        %v1657 = vshll.u32 %v1457, 16
        %v1659 = vrot.slane %v1657, 5
        %v1660 = vsel %vm1502, %v1655, %v1659
        %v1661 = vshrl.u32 %v1457, 16
        %v1663 = vrot.slane %v1661, 4
        %v1664 = vor.u32 %v1663, %v1659
        %v1665 = vrot.slane %v1664, 4
        %v1667 = vshll.u32 %v1470, 16
        %v1669 = vrot.slane %v1667, 5
        %v1670 = vsel %vm1502, %v1665, %v1669
        %v1672 = vshrl.u32 %v1458, 16
        %v1674 = vrot.slane %v1672, 4
        %v1675 = vshll.u32 %v1458, 16
        %v1677 = vrot.slane %v1675, 5
        %v1678 = vor.u32 %v1674, %v1677
        %v1679 = vrot.slane %v1678, 4
        %v1681 = vshll.u32 %v1459, 16
        %v1683 = vrot.slane %v1681, 5
        %v1684 = vsel %vm1502, %v1679, %v1683
        %v1685 = vshrl.u32 %v1459, 16
        %v1687 = vrot.slane %v1685, 4
        %v1688 = vor.u32 %v1687, %v1683
        %v1689 = vrot.slane %v1688, 4
        %v1691 = vshll.u32 %v1471, 16
        %v1693 = vrot.slane %v1691, 5
        %v1694 = vsel %vm1502, %v1689, %v1693
        %s1695 = scalar_lea.vmem [#allocation11], 64
        %v1696 = vld [vmem:[%s1695] sm:$0xf]
        %v1697 = vld [vmem:[%s1695 + $0x4] sm:$0xf]
        %v1698 = vld [vmem:[%s1695 + $0x8] sm:$0xf]
        %v1699 = vld [vmem:[%s1695 + $0xc] sm:$0xf]
        %v1700 = vld [vmem:[%s1695 + $0x10] sm:$0xf]
        %v1701 = vld [vmem:[%s1695 + $0x14] sm:$0xf]
        %v1702 = vld [vmem:[%s1695 + $0x18] sm:$0xf]
        %v1703 = vld [vmem:[%s1695 + $0x1c] sm:$0xf]
        %v1704 = vld [vmem:[%s1695 + $0x20] sm:$0xf]
        %v1705 = vld [vmem:[%s1695 + $0x24] sm:$0xf]
        %v1706 = vld [vmem:[%s1695 + $0x28] sm:$0xf]
        %v1707 = vld [vmem:[%s1695 + $0x2c] sm:$0xf]
        %v1708 = vld [vmem:[%s1695 + $0x30] sm:$0xf]
        %v1709 = vld [vmem:[%s1695 + $0x34] sm:$0xf]
        %v1710 = vld [vmem:[%s1695 + $0x38] sm:$0xf]
        %v1711 = vld [vmem:[%s1695 + $0x3c] sm:$0xf]
        %v1712 = vunpack.c.l.b16 %v1516
        %v1713 = vunpack.c.l.b16 %v1526
        %v1714 = vunpack.c.l.b16 %v1540
        %v1715 = vunpack.c.l.b16 %v1550
        %v1716 = vunpack.c.l.b16 %v1564
        %v1717 = vunpack.c.l.b16 %v1574
        %v1718 = vunpack.c.l.b16 %v1588
        %v1719 = vunpack.c.l.b16 %v1598
        %v1720 = vunpack.c.l.b16 %v1612
        %v1721 = vunpack.c.l.b16 %v1622
        %v1722 = vunpack.c.l.b16 %v1636
        %v1723 = vunpack.c.l.b16 %v1646
        %v1724 = vunpack.c.l.b16 %v1660
        %v1725 = vunpack.c.l.b16 %v1670
        %v1726 = vunpack.c.l.b16 %v1684
        %v1727 = vunpack.c.l.b16 %v1694
        %v1728 = vpack.c.b16 %v1713, %v1712
        %v1729 = vpack.c.b16 %v1715, %v1714
        %v1730 = vpack.c.b16 %v1717, %v1716
        %v1731 = vpack.c.b16 %v1719, %v1718
        %v1732 = vpack.c.b16 %v1721, %v1720
        %v1733 = vpack.c.b16 %v1723, %v1722
        %v1734 = vpack.c.b16 %v1725, %v1724
        %v1735 = vpack.c.b16 %v1727, %v1726
        %v1760 = vunpack.c.l.b16 %v1696
        %v1761 = vunpack.c.l.b16 %v1697
        %v1762 = vunpack.c.l.b16 %v1698
        %v1763 = vunpack.c.l.b16 %v1699
        %v1764 = vunpack.c.l.b16 %v1700
        %v1765 = vunpack.c.l.b16 %v1701
        %v1766 = vunpack.c.l.b16 %v1702
        %v1767 = vunpack.c.l.b16 %v1703
        %v1768 = vunpack.c.l.b16 %v1704
        %v1769 = vunpack.c.l.b16 %v1705
        %v1770 = vunpack.c.l.b16 %v1706
        %v1771 = vunpack.c.l.b16 %v1707
        %v1772 = vunpack.c.l.b16 %v1708
        %v1773 = vunpack.c.l.b16 %v1709
        %v1774 = vunpack.c.l.b16 %v1710
        %v1775 = vunpack.c.l.b16 %v1711
        %v1776 = vpack.c.b16 %v1761, %v1760
        %v1777 = vpack.c.b16 %v1763, %v1762
        %v1778 = vpack.c.b16 %v1765, %v1764
        %v1779 = vpack.c.b16 %v1767, %v1766
        %v1780 = vpack.c.b16 %v1769, %v1768
        %v1781 = vpack.c.b16 %v1771, %v1770
        %v1782 = vpack.c.b16 %v1773, %v1772
        %v1783 = vpack.c.b16 %v1775, %v1774
        %1792 = vmatprep.subr.bf16.mxu0 0
        %1793 = vmatpush1.bf16.msra.mxu0 %v1776
        %1794 = vmatprep.subr.bf16.mxu0 0
        %1795 = vmatpush1.bf16.msra.mxu0 %v1777
        %1796 = vmatprep.subr.bf16.mxu0 0
        %1797 = vmatpush1.bf16.msra.mxu0 %v1778
        %1798 = vmatprep.subr.bf16.mxu0 0
        %1799 = vmatpush1.bf16.msra.mxu0 %v1779
        %1800 = vmatprep.subr.bf16.mxu0 0
        %1801 = vmatpush1.bf16.msra.mxu0 %v1780
        %1802 = vmatprep.subr.bf16.mxu0 0
        %1803 = vmatpush1.bf16.msra.mxu0 %v1781
        %1804 = vmatprep.subr.bf16.mxu0 0
        %1805 = vmatpush1.bf16.msra.mxu0 %v1782
        %1806 = vmatprep.subr.bf16.mxu0 0
        %1807 = vmatpush1.bf16.msra.mxu0 %v1783
        %1808 = vmatprep.subr.bf16.mxu0 0
        %1809 = vmatpush1.bf16.msra.mxu0 0
        %1810 = vmatprep.subr.bf16.mxu0 0
        %1811 = vmatpush1.bf16.msra.mxu0 0
        %1812 = vmatprep.subr.bf16.mxu0 0
        %1813 = vmatpush1.bf16.msra.mxu0 0
        %1814 = vmatprep.subr.bf16.mxu0 0
        %1815 = vmatpush1.bf16.msra.mxu0 0
        %1816 = vmatprep.subr.bf16.mxu0 0
        %1817 = vmatpush1.bf16.msra.mxu0 0
        %1818 = vmatprep.subr.bf16.mxu0 0
        %1819 = vmatpush1.bf16.msra.mxu0 0
        %1820 = vmatprep.subr.bf16.mxu0 0
        %1821 = vmatpush1.bf16.msra.mxu0 0
        %1822 = vmatprep.subr.bf16.mxu0 0
        %1823 = vmatpush1.bf16.msra.mxu0 0
        %1824 = vmatprep.mubr.bf16.mxu0 0
        %1825 = vmatmul.mubr.bf16.gmra.mrb[0].mxu0 %v1728
        %v1826 = vpop.f32.mrb[0].mxu0
        %v1827 = vadd.f32 0.0, %v1826
        %v1828 = vpop.f32.mrb[0].mxu0
        %v1829 = vpop.f32.mrb[0].mxu0
        %v1830 = vadd.f32 0.0, %v1829
        %v1831 = vpop.f32.mrb[0].mxu0
        %1832 = vmatprep.mubr.bf16.mxu0 0
        %1833 = vmatmul.mubr.bf16.gmra.mrb[0].mxu0 %v1729
        %v1834 = vpop.f32.mrb[0].mxu0
        %v1835 = vadd.f32 0.0, %v1834
        %v1836 = vpop.f32.mrb[0].mxu0
        %v1837 = vpop.f32.mrb[0].mxu0
        %v1838 = vadd.f32 0.0, %v1837
        %v1839 = vpop.f32.mrb[0].mxu0
        %1840 = vmatprep.mubr.bf16.mxu0 0
        %1841 = vmatmul.mubr.bf16.gmra.mrb[0].mxu0 %v1730
        %v1842 = vpop.f32.mrb[0].mxu0
        %v1843 = vadd.f32 0.0, %v1842
        %v1844 = vpop.f32.mrb[0].mxu0
        %v1845 = vpop.f32.mrb[0].mxu0
        %v1846 = vadd.f32 0.0, %v1845
        %v1847 = vpop.f32.mrb[0].mxu0
        %1848 = vmatprep.mubr.bf16.mxu0 0
        %1849 = vmatmul.mubr.bf16.gmra.mrb[0].mxu0 %v1731
        %v1850 = vpop.f32.mrb[0].mxu0
        %v1851 = vadd.f32 0.0, %v1850
        %v1852 = vpop.f32.mrb[0].mxu0
        %v1853 = vpop.f32.mrb[0].mxu0
        %v1854 = vadd.f32 0.0, %v1853
        %v1855 = vpop.f32.mrb[0].mxu0
        %1856 = vmatprep.mubr.bf16.mxu0 0
        %1857 = vmatmul.mubr.bf16.gmra.mrb[0].mxu0 %v1732
        %v1858 = vpop.f32.mrb[0].mxu0
        %v1859 = vadd.f32 0.0, %v1858
        %v1860 = vpop.f32.mrb[0].mxu0
        %v1861 = vpop.f32.mrb[0].mxu0
        %v1862 = vadd.f32 0.0, %v1861
        %v1863 = vpop.f32.mrb[0].mxu0
        %1864 = vmatprep.mubr.bf16.mxu0 0
        %1865 = vmatmul.mubr.bf16.gmra.mrb[0].mxu0 %v1733
        %v1866 = vpop.f32.mrb[0].mxu0
        %v1867 = vadd.f32 0.0, %v1866
        %v1868 = vpop.f32.mrb[0].mxu0
        %v1869 = vpop.f32.mrb[0].mxu0
        %v1870 = vadd.f32 0.0, %v1869
        %v1871 = vpop.f32.mrb[0].mxu0
        %1872 = vmatprep.mubr.bf16.mxu0 0
        %1873 = vmatmul.mubr.bf16.gmra.mrb[0].mxu0 %v1734
        %v1874 = vpop.f32.mrb[0].mxu0
        %v1875 = vadd.f32 0.0, %v1874
        %v1876 = vpop.f32.mrb[0].mxu0
        %v1877 = vpop.f32.mrb[0].mxu0
        %v1878 = vadd.f32 0.0, %v1877
        %v1879 = vpop.f32.mrb[0].mxu0
        %1880 = vmatprep.mubr.bf16.mxu0 0
        %1881 = vmatmul.mubr.bf16.gmra.mrb[0].mxu0 %v1735
        %v1882 = vpop.f32.mrb[0].mxu0
        %v1883 = vadd.f32 0.0, %v1882
        %v1884 = vpop.f32.mrb[0].mxu0
        %v1885 = vpop.f32.mrb[0].mxu0
        %v1886 = vadd.f32 0.0, %v1885
        %v1887 = vpop.f32.mrb[0].mxu0
        %1888 = vdwg.mxu0
        %v1905 = vunpack.c.l.b16 %v1444
        %v1906 = vunpack.c.l.b16 %v1445
        %v1907 = vunpack.c.l.b16 %v1446
        %v1908 = vunpack.c.l.b16 %v1447
        %v1909 = vunpack.c.l.b16 %v1448
        %v1910 = vunpack.c.l.b16 %v1449
        %v1911 = vunpack.c.l.b16 %v1450
        %v1912 = vunpack.c.l.b16 %v1451
        %v1913 = vunpack.c.l.b16 %v1452
        %v1914 = vunpack.c.l.b16 %v1453
        %v1915 = vunpack.c.l.b16 %v1454
        %v1916 = vunpack.c.l.b16 %v1455
        %v1917 = vunpack.c.l.b16 %v1456
        %v1918 = vunpack.c.l.b16 %v1457
        %v1919 = vunpack.c.l.b16 %v1458
        %v1920 = vunpack.c.l.b16 %v1459
        %v1921 = vpack.c.b16 %v1906, %v1905
        %v1922 = vpack.c.b16 %v1908, %v1907
        %v1923 = vpack.c.b16 %v1910, %v1909
        %v1924 = vpack.c.b16 %v1912, %v1911
        %v1925 = vpack.c.b16 %v1914, %v1913
        %v1926 = vpack.c.b16 %v1916, %v1915
        %v1927 = vpack.c.b16 %v1918, %v1917
        %v1928 = vpack.c.b16 %v1920, %v1919
        %v1953 = vunpack.c.l.b16 %v1484
        %v1954 = vunpack.c.l.b16 %v1485
        %v1955 = vunpack.c.l.b16 %v1486
        %v1956 = vunpack.c.l.b16 %v1487
        %v1957 = vunpack.c.l.b16 %v1488
        %v1958 = vunpack.c.l.b16 %v1489
        %v1959 = vunpack.c.l.b16 %v1490
        %v1960 = vunpack.c.l.b16 %v1491
        %v1961 = vunpack.c.l.b16 %v1492
        %v1962 = vunpack.c.l.b16 %v1493
        %v1963 = vunpack.c.l.b16 %v1494
        %v1964 = vunpack.c.l.b16 %v1495
        %v1965 = vunpack.c.l.b16 %v1496
        %v1966 = vunpack.c.l.b16 %v1497
        %v1967 = vunpack.c.l.b16 %v1498
        %v1968 = vunpack.c.l.b16 %v1499
        %v1969 = vpack.c.b16 %v1954, %v1953
        %v1970 = vpack.c.b16 %v1956, %v1955
        %v1971 = vpack.c.b16 %v1958, %v1957
        %v1972 = vpack.c.b16 %v1960, %v1959
        %v1973 = vpack.c.b16 %v1962, %v1961
        %v1974 = vpack.c.b16 %v1964, %v1963
        %v1975 = vpack.c.b16 %v1966, %v1965
        %v1976 = vpack.c.b16 %v1968, %v1967
        %1985 = vmatprep.subr.bf16.mxu0 0
        %1986 = vmatpush1.bf16.msra.mxu0 %v1969
        %1987 = vmatprep.subr.bf16.mxu0 0
        %1988 = vmatpush1.bf16.msra.mxu0 %v1970
        %1989 = vmatprep.subr.bf16.mxu0 0
        %1990 = vmatpush1.bf16.msra.mxu0 %v1971
        %1991 = vmatprep.subr.bf16.mxu0 0
        %1992 = vmatpush1.bf16.msra.mxu0 %v1972
        %1993 = vmatprep.subr.bf16.mxu0 0
        %1994 = vmatpush1.bf16.msra.mxu0 %v1973
        %1995 = vmatprep.subr.bf16.mxu0 0
        %1996 = vmatpush1.bf16.msra.mxu0 %v1974
        %1997 = vmatprep.subr.bf16.mxu0 0
        %1998 = vmatpush1.bf16.msra.mxu0 %v1975
        %1999 = vmatprep.subr.bf16.mxu0 0
        %2000 = vmatpush1.bf16.msra.mxu0 %v1976
        %2001 = vmatprep.subr.bf16.mxu0 0
        %2002 = vmatpush1.bf16.msra.mxu0 0
        %2003 = vmatprep.subr.bf16.mxu0 0
        %2004 = vmatpush1.bf16.msra.mxu0 0
        %2005 = vmatprep.subr.bf16.mxu0 0
        %2006 = vmatpush1.bf16.msra.mxu0 0
        %2007 = vmatprep.subr.bf16.mxu0 0
        %2008 = vmatpush1.bf16.msra.mxu0 0
        %2009 = vmatprep.subr.bf16.mxu0 0
        %2010 = vmatpush1.bf16.msra.mxu0 0
        %2011 = vmatprep.subr.bf16.mxu0 0
        %2012 = vmatpush1.bf16.msra.mxu0 0
        %2013 = vmatprep.subr.bf16.mxu0 0
        %2014 = vmatpush1.bf16.msra.mxu0 0
        %2015 = vmatprep.subr.bf16.mxu0 0
        %2016 = vmatpush1.bf16.msra.mxu0 0
        %2017 = vmatprep.mubr.bf16.mxu0 0
        %2018 = vmatmul.mubr.bf16.gmra.mrb[0].mxu0 %v1921
        %v2019 = vpop.f32.mrb[0].mxu0
        %v2020 = vadd.f32 %v1827, %v2019
        %v2021 = vpop.f32.mrb[0].mxu0
        %v2022 = vpop.f32.mrb[0].mxu0
        %v2023 = vadd.f32 %v1830, %v2022
        %v2024 = vpop.f32.mrb[0].mxu0
        %2025 = vmatprep.mubr.bf16.mxu0 0
        %2026 = vmatmul.mubr.bf16.gmra.mrb[0].mxu0 %v1922
        %v2027 = vpop.f32.mrb[0].mxu0
        %v2028 = vadd.f32 %v1835, %v2027
        %v2029 = vpop.f32.mrb[0].mxu0
        %v2030 = vpop.f32.mrb[0].mxu0
        %v2031 = vadd.f32 %v1838, %v2030
        %v2032 = vpop.f32.mrb[0].mxu0
        %2033 = vmatprep.mubr.bf16.mxu0 0
        %2034 = vmatmul.mubr.bf16.gmra.mrb[0].mxu0 %v1923
        %v2035 = vpop.f32.mrb[0].mxu0
        %v2036 = vadd.f32 %v1843, %v2035
        %v2037 = vpop.f32.mrb[0].mxu0
        %v2038 = vpop.f32.mrb[0].mxu0
        %v2039 = vadd.f32 %v1846, %v2038
        %v2040 = vpop.f32.mrb[0].mxu0
        %2041 = vmatprep.mubr.bf16.mxu0 0
        %2042 = vmatmul.mubr.bf16.gmra.mrb[0].mxu0 %v1924
        %v2043 = vpop.f32.mrb[0].mxu0
        %v2044 = vadd.f32 %v1851, %v2043
        %v2045 = vpop.f32.mrb[0].mxu0
        %v2046 = vpop.f32.mrb[0].mxu0
        %v2047 = vadd.f32 %v1854, %v2046
        %v2048 = vpop.f32.mrb[0].mxu0
        %2049 = vmatprep.mubr.bf16.mxu0 0
        %2050 = vmatmul.mubr.bf16.gmra.mrb[0].mxu0 %v1925
        %v2051 = vpop.f32.mrb[0].mxu0
        %v2052 = vadd.f32 %v1859, %v2051
        %v2053 = vpop.f32.mrb[0].mxu0
        %v2054 = vpop.f32.mrb[0].mxu0
        %v2055 = vadd.f32 %v1862, %v2054
        %v2056 = vpop.f32.mrb[0].mxu0
        %2057 = vmatprep.mubr.bf16.mxu0 0
        %2058 = vmatmul.mubr.bf16.gmra.mrb[0].mxu0 %v1926
        %v2059 = vpop.f32.mrb[0].mxu0
        %v2060 = vadd.f32 %v1867, %v2059
        %v2061 = vpop.f32.mrb[0].mxu0
        %v2062 = vpop.f32.mrb[0].mxu0
        %v2063 = vadd.f32 %v1870, %v2062
        %v2064 = vpop.f32.mrb[0].mxu0
        %2065 = vmatprep.mubr.bf16.mxu0 0
        %2066 = vmatmul.mubr.bf16.gmra.mrb[0].mxu0 %v1927
        %v2067 = vpop.f32.mrb[0].mxu0
        %v2068 = vadd.f32 %v1875, %v2067
        %v2069 = vpop.f32.mrb[0].mxu0
        %v2070 = vpop.f32.mrb[0].mxu0
        %v2071 = vadd.f32 %v1878, %v2070
        %v2072 = vpop.f32.mrb[0].mxu0
        %2073 = vmatprep.mubr.bf16.mxu0 0
        %2074 = vmatmul.mubr.bf16.gmra.mrb[0].mxu0 %v1928
        %v2075 = vpop.f32.mrb[0].mxu0
        %v2076 = vadd.f32 %v1883, %v2075
        %v2077 = vpop.f32.mrb[0].mxu0
        %v2078 = vpop.f32.mrb[0].mxu0
        %v2079 = vadd.f32 %v1886, %v2078
        %v2080 = vpop.f32.mrb[0].mxu0
        %2081 = vdwg.mxu0
        %vm2098 = vcmask 1042432
        %vm2099 = vcmask 1046532
        %vm2100 = vmor %vm2098, %vm2099
        %v2101 = vrot.slane %v1474, 5
        %v2102 = vrot.slane %v2101, 4
        %v2103 = vrot.slane %v1445, 5
        %v2104 = vsel %vm2100, %v2102, %v2103
        %v2105 = vrot.slane %v2103, 4
        %v2106 = vrot.slane %v1464, 5
        %v2107 = vsel %vm2100, %v2105, %v2106
        %v2108 = vrot.slane %v1475, 5
        %v2109 = vrot.slane %v2108, 4
        %v2110 = vrot.slane %v1447, 5
        %v2111 = vsel %vm2100, %v2109, %v2110
        %v2112 = vrot.slane %v2110, 4
        %v2113 = vrot.slane %v1465, 5
        %v2114 = vsel %vm2100, %v2112, %v2113
        %v2115 = vrot.slane %v1476, 5
        %v2116 = vrot.slane %v2115, 4
        %v2117 = vrot.slane %v1449, 5
        %v2118 = vsel %vm2100, %v2116, %v2117
        %v2119 = vrot.slane %v2117, 4
        %v2120 = vrot.slane %v1466, 5
        %v2121 = vsel %vm2100, %v2119, %v2120
        %v2122 = vrot.slane %v1477, 5
        %v2123 = vrot.slane %v2122, 4
        %v2124 = vrot.slane %v1451, 5
        %v2125 = vsel %vm2100, %v2123, %v2124
        %v2126 = vrot.slane %v2124, 4
        %v2127 = vrot.slane %v1467, 5
        %v2128 = vsel %vm2100, %v2126, %v2127
        %v2129 = vrot.slane %v1478, 5
        %v2130 = vrot.slane %v2129, 4
        %v2131 = vrot.slane %v1453, 5
        %v2132 = vsel %vm2100, %v2130, %v2131
        %v2133 = vrot.slane %v2131, 4
        %v2134 = vrot.slane %v1468, 5
        %v2135 = vsel %vm2100, %v2133, %v2134
        %v2136 = vrot.slane %v1479, 5
        %v2137 = vrot.slane %v2136, 4
        %v2138 = vrot.slane %v1455, 5
        %v2139 = vsel %vm2100, %v2137, %v2138
        %v2140 = vrot.slane %v2138, 4
        %v2141 = vrot.slane %v1469, 5
        %v2142 = vsel %vm2100, %v2140, %v2141
        %v2143 = vrot.slane %v1480, 5
        %v2144 = vrot.slane %v2143, 4
        %v2145 = vrot.slane %v1457, 5
        %v2146 = vsel %vm2100, %v2144, %v2145
        %v2147 = vrot.slane %v2145, 4
        %v2148 = vrot.slane %v1470, 5
        %v2149 = vsel %vm2100, %v2147, %v2148
        %v2150 = vrot.slane %v1481, 5
        %v2151 = vrot.slane %v2150, 4
        %v2152 = vrot.slane %v1459, 5
        %v2153 = vsel %vm2100, %v2151, %v2152
        %v2154 = vrot.slane %v2152, 4
        %v2155 = vrot.slane %v1471, 5
        %v2156 = vsel %vm2100, %v2154, %v2155
        %s2157 = scalar_lea.vmem [#allocation11], 128
        %v2158 = vld [vmem:[%s2157] sm:$0xf]
        %v2159 = vld [vmem:[%s2157 + $0x4] sm:$0xf]
        %v2160 = vld [vmem:[%s2157 + $0x8] sm:$0xf]
        %v2161 = vld [vmem:[%s2157 + $0xc] sm:$0xf]
        %v2162 = vld [vmem:[%s2157 + $0x10] sm:$0xf]
        %v2163 = vld [vmem:[%s2157 + $0x14] sm:$0xf]
        %v2164 = vld [vmem:[%s2157 + $0x18] sm:$0xf]
        %v2165 = vld [vmem:[%s2157 + $0x1c] sm:$0xf]
        %v2166 = vld [vmem:[%s2157 + $0x20] sm:$0xf]
        %v2167 = vld [vmem:[%s2157 + $0x24] sm:$0xf]
        %v2168 = vld [vmem:[%s2157 + $0x28] sm:$0xf]
        %v2169 = vld [vmem:[%s2157 + $0x2c] sm:$0xf]
        %v2170 = vld [vmem:[%s2157 + $0x30] sm:$0xf]
        %v2171 = vld [vmem:[%s2157 + $0x34] sm:$0xf]
        %v2172 = vld [vmem:[%s2157 + $0x38] sm:$0xf]
        %v2173 = vld [vmem:[%s2157 + $0x3c] sm:$0xf]
        %v2174 = vunpack.c.l.b16 %v2104
        %v2175 = vunpack.c.l.b16 %v2107
        %v2176 = vunpack.c.l.b16 %v2111
        %v2177 = vunpack.c.l.b16 %v2114
        %v2178 = vunpack.c.l.b16 %v2118
        %v2179 = vunpack.c.l.b16 %v2121
        %v2180 = vunpack.c.l.b16 %v2125
        %v2181 = vunpack.c.l.b16 %v2128
        %v2182 = vunpack.c.l.b16 %v2132
        %v2183 = vunpack.c.l.b16 %v2135
        %v2184 = vunpack.c.l.b16 %v2139
        %v2185 = vunpack.c.l.b16 %v2142
        %v2186 = vunpack.c.l.b16 %v2146
        %v2187 = vunpack.c.l.b16 %v2149
        %v2188 = vunpack.c.l.b16 %v2153
        %v2189 = vunpack.c.l.b16 %v2156
        %v2190 = vpack.c.b16 %v2175, %v2174
        %v2191 = vpack.c.b16 %v2177, %v2176
        %v2192 = vpack.c.b16 %v2179, %v2178
        %v2193 = vpack.c.b16 %v2181, %v2180
        %v2194 = vpack.c.b16 %v2183, %v2182
        %v2195 = vpack.c.b16 %v2185, %v2184
        %v2196 = vpack.c.b16 %v2187, %v2186
        %v2197 = vpack.c.b16 %v2189, %v2188
        %v2222 = vunpack.c.l.b16 %v2158
        %v2223 = vunpack.c.l.b16 %v2159
        %v2224 = vunpack.c.l.b16 %v2160
        %v2225 = vunpack.c.l.b16 %v2161
        %v2226 = vunpack.c.l.b16 %v2162
        %v2227 = vunpack.c.l.b16 %v2163
        %v2228 = vunpack.c.l.b16 %v2164
        %v2229 = vunpack.c.l.b16 %v2165
        %v2230 = vunpack.c.l.b16 %v2166
        %v2231 = vunpack.c.l.b16 %v2167
        %v2232 = vunpack.c.l.b16 %v2168
        %v2233 = vunpack.c.l.b16 %v2169
        %v2234 = vunpack.c.l.b16 %v2170
        %v2235 = vunpack.c.l.b16 %v2171
        %v2236 = vunpack.c.l.b16 %v2172
        %v2237 = vunpack.c.l.b16 %v2173
        %v2238 = vpack.c.b16 %v2223, %v2222
        %v2239 = vpack.c.b16 %v2225, %v2224
        %v2240 = vpack.c.b16 %v2227, %v2226
        %v2241 = vpack.c.b16 %v2229, %v2228
        %v2242 = vpack.c.b16 %v2231, %v2230
        %v2243 = vpack.c.b16 %v2233, %v2232
        %v2244 = vpack.c.b16 %v2235, %v2234
        %v2245 = vpack.c.b16 %v2237, %v2236
        %2254 = vmatprep.subr.bf16.mxu0 0
        %2255 = vmatpush1.bf16.msra.mxu0 %v2238
        %2256 = vmatprep.subr.bf16.mxu0 0
        %2257 = vmatpush1.bf16.msra.mxu0 %v2239
        %2258 = vmatprep.subr.bf16.mxu0 0
        %2259 = vmatpush1.bf16.msra.mxu0 %v2240
        %2260 = vmatprep.subr.bf16.mxu0 0
        %2261 = vmatpush1.bf16.msra.mxu0 %v2241
        %2262 = vmatprep.subr.bf16.mxu0 0
        %2263 = vmatpush1.bf16.msra.mxu0 %v2242
        %2264 = vmatprep.subr.bf16.mxu0 0
        %2265 = vmatpush1.bf16.msra.mxu0 %v2243
        %2266 = vmatprep.subr.bf16.mxu0 0
        %2267 = vmatpush1.bf16.msra.mxu0 %v2244
        %2268 = vmatprep.subr.bf16.mxu0 0
        %2269 = vmatpush1.bf16.msra.mxu0 %v2245
        %2270 = vmatprep.subr.bf16.mxu0 0
        %2271 = vmatpush1.bf16.msra.mxu0 0
        %2272 = vmatprep.subr.bf16.mxu0 0
        %2273 = vmatpush1.bf16.msra.mxu0 0
        %2274 = vmatprep.subr.bf16.mxu0 0
        %2275 = vmatpush1.bf16.msra.mxu0 0
        %2276 = vmatprep.subr.bf16.mxu0 0
        %2277 = vmatpush1.bf16.msra.mxu0 0
        %2278 = vmatprep.subr.bf16.mxu0 0
        %2279 = vmatpush1.bf16.msra.mxu0 0
        %2280 = vmatprep.subr.bf16.mxu0 0
        %2281 = vmatpush1.bf16.msra.mxu0 0
        %2282 = vmatprep.subr.bf16.mxu0 0
        %2283 = vmatpush1.bf16.msra.mxu0 0
        %2284 = vmatprep.subr.bf16.mxu0 0
        %2285 = vmatpush1.bf16.msra.mxu0 0
        %2286 = vmatprep.mubr.bf16.mxu0 0
        %2287 = vmatmul.mubr.bf16.gmra.mrb[0].mxu0 %v2190
        %v2288 = vpop.f32.mrb[0].mxu0
        %v2289 = vadd.f32 0.0, %v2288
        %v2290 = vpop.f32.mrb[0].mxu0
        %v2291 = vpop.f32.mrb[0].mxu0
        %v2292 = vadd.f32 0.0, %v2291
        %v2293 = vpop.f32.mrb[0].mxu0
        %2294 = vmatprep.mubr.bf16.mxu0 0
        %2295 = vmatmul.mubr.bf16.gmra.mrb[0].mxu0 %v2191
        %v2296 = vpop.f32.mrb[0].mxu0
        %v2297 = vadd.f32 0.0, %v2296
        %v2298 = vpop.f32.mrb[0].mxu0
        %v2299 = vpop.f32.mrb[0].mxu0
        %v2300 = vadd.f32 0.0, %v2299
        %v2301 = vpop.f32.mrb[0].mxu0
        %2302 = vmatprep.mubr.bf16.mxu0 0
        %2303 = vmatmul.mubr.bf16.gmra.mrb[0].mxu0 %v2192
        %v2304 = vpop.f32.mrb[0].mxu0
        %v2305 = vadd.f32 0.0, %v2304
        %v2306 = vpop.f32.mrb[0].mxu0
        %v2307 = vpop.f32.mrb[0].mxu0
        %v2308 = vadd.f32 0.0, %v2307
        %v2309 = vpop.f32.mrb[0].mxu0
        %2310 = vmatprep.mubr.bf16.mxu0 0
        %2311 = vmatmul.mubr.bf16.gmra.mrb[0].mxu0 %v2193
        %v2312 = vpop.f32.mrb[0].mxu0
        %v2313 = vadd.f32 0.0, %v2312
        %v2314 = vpop.f32.mrb[0].mxu0
        %v2315 = vpop.f32.mrb[0].mxu0
        %v2316 = vadd.f32 0.0, %v2315
        %v2317 = vpop.f32.mrb[0].mxu0
        %2318 = vmatprep.mubr.bf16.mxu0 0
        %2319 = vmatmul.mubr.bf16.gmra.mrb[0].mxu0 %v2194
        %v2320 = vpop.f32.mrb[0].mxu0
        %v2321 = vadd.f32 0.0, %v2320
        %v2322 = vpop.f32.mrb[0].mxu0
        %v2323 = vpop.f32.mrb[0].mxu0
        %v2324 = vadd.f32 0.0, %v2323
        %v2325 = vpop.f32.mrb[0].mxu0
        %2326 = vmatprep.mubr.bf16.mxu0 0
        %2327 = vmatmul.mubr.bf16.gmra.mrb[0].mxu0 %v2195
        %v2328 = vpop.f32.mrb[0].mxu0
        %v2329 = vadd.f32 0.0, %v2328
        %v2330 = vpop.f32.mrb[0].mxu0
        %v2331 = vpop.f32.mrb[0].mxu0
        %v2332 = vadd.f32 0.0, %v2331
        %v2333 = vpop.f32.mrb[0].mxu0
        %2334 = vmatprep.mubr.bf16.mxu0 0
        %2335 = vmatmul.mubr.bf16.gmra.mrb[0].mxu0 %v2196
        %v2336 = vpop.f32.mrb[0].mxu0
        %v2337 = vadd.f32 0.0, %v2336
        %v2338 = vpop.f32.mrb[0].mxu0
        %v2339 = vpop.f32.mrb[0].mxu0
        %v2340 = vadd.f32 0.0, %v2339
        %v2341 = vpop.f32.mrb[0].mxu0
        %2342 = vmatprep.mubr.bf16.mxu0 0
        %2343 = vmatmul.mubr.bf16.gmra.mrb[0].mxu0 %v2197
        %v2344 = vpop.f32.mrb[0].mxu0
        %v2345 = vadd.f32 0.0, %v2344
        %v2346 = vpop.f32.mrb[0].mxu0
        %v2347 = vpop.f32.mrb[0].mxu0
        %v2348 = vadd.f32 0.0, %v2347
        %v2349 = vpop.f32.mrb[0].mxu0
        %2350 = vdwg.mxu0
        %v2351 = vadd.f32 %v2020, %v2289
        %v2352 = vadd.f32 %v2023, %v2292
        %v2353 = vadd.f32 %v2028, %v2297
        %v2354 = vadd.f32 %v2031, %v2300
        %v2355 = vadd.f32 %v2036, %v2305
        %v2356 = vadd.f32 %v2039, %v2308
        %v2357 = vadd.f32 %v2044, %v2313
        %v2358 = vadd.f32 %v2047, %v2316
        %v2359 = vadd.f32 %v2052, %v2321
        %v2360 = vadd.f32 %v2055, %v2324
        %v2361 = vadd.f32 %v2060, %v2329
        %v2362 = vadd.f32 %v2063, %v2332
        %v2363 = vadd.f32 %v2068, %v2337
        %v2364 = vadd.f32 %v2071, %v2340
        %v2365 = vadd.f32 %v2076, %v2345
        %v2366 = vadd.f32 %v2079, %v2348
        %s2367 = scalar_lea.vmem [#allocation11], 192
        %v2368 = vld [vmem:[%s2367] sm:$0xf]
        %v2369 = vld [vmem:[%s2367 + $0x4] sm:$0xf]
        %v2370 = vld [vmem:[%s2367 + $0x8] sm:$0xf]
        %v2371 = vld [vmem:[%s2367 + $0xc] sm:$0xf]
        %v2372 = vld [vmem:[%s2367 + $0x10] sm:$0xf]
        %v2373 = vld [vmem:[%s2367 + $0x14] sm:$0xf]
        %v2374 = vld [vmem:[%s2367 + $0x18] sm:$0xf]
        %v2375 = vld [vmem:[%s2367 + $0x1c] sm:$0xf]
        %v2376 = vld [vmem:[%s2367 + $0x20] sm:$0xf]
        %v2377 = vld [vmem:[%s2367 + $0x24] sm:$0xf]
        %v2378 = vld [vmem:[%s2367 + $0x28] sm:$0xf]
        %v2379 = vld [vmem:[%s2367 + $0x2c] sm:$0xf]
        %v2380 = vld [vmem:[%s2367 + $0x30] sm:$0xf]
        %v2381 = vld [vmem:[%s2367 + $0x34] sm:$0xf]
        %v2382 = vld [vmem:[%s2367 + $0x38] sm:$0xf]
        %v2383 = vld [vmem:[%s2367 + $0x3c] sm:$0xf]
        %v2386 = vunpack.c.l.b16 %v1460
        %v2387 = vunpack.c.l.b16 %v1461
        %v2388 = vpack.c.b16 %v2387, %v2386
        %v2406 = vunpack.c.l.b16 %v2368
        %v2407 = vunpack.c.l.b16 %v2369
        %v2408 = vunpack.c.l.b16 %v2370
        %v2409 = vunpack.c.l.b16 %v2371
        %v2410 = vunpack.c.l.b16 %v2372
        %v2411 = vunpack.c.l.b16 %v2373
        %v2412 = vunpack.c.l.b16 %v2374
        %v2413 = vunpack.c.l.b16 %v2375
        %v2414 = vunpack.c.l.b16 %v2376
        %v2415 = vunpack.c.l.b16 %v2377
        %v2416 = vunpack.c.l.b16 %v2378
        %v2417 = vunpack.c.l.b16 %v2379
        %v2418 = vunpack.c.l.b16 %v2380
        %v2419 = vunpack.c.l.b16 %v2381
        %v2420 = vunpack.c.l.b16 %v2382
        %v2421 = vunpack.c.l.b16 %v2383
        %v2422 = vpack.c.b16 %v2407, %v2406
        %v2423 = vpack.c.b16 %v2409, %v2408
        %v2424 = vpack.c.b16 %v2411, %v2410
        %v2425 = vpack.c.b16 %v2413, %v2412
        %v2426 = vpack.c.b16 %v2415, %v2414
        %v2427 = vpack.c.b16 %v2417, %v2416
        %v2428 = vpack.c.b16 %v2419, %v2418
        %v2429 = vpack.c.b16 %v2421, %v2420
        %2438 = vmatprep.subr.bf16.mxu0 0
        %2439 = vmatpush1.bf16.msra.mxu0 %v2422
        %2440 = vmatprep.subr.bf16.mxu0 0
        %2441 = vmatpush1.bf16.msra.mxu0 %v2423
        %2442 = vmatprep.subr.bf16.mxu0 0
        %2443 = vmatpush1.bf16.msra.mxu0 %v2424
        %2444 = vmatprep.subr.bf16.mxu0 0
        %2445 = vmatpush1.bf16.msra.mxu0 %v2425
        %2446 = vmatprep.subr.bf16.mxu0 0
        %2447 = vmatpush1.bf16.msra.mxu0 %v2426
        %2448 = vmatprep.subr.bf16.mxu0 0
        %2449 = vmatpush1.bf16.msra.mxu0 %v2427
        %2450 = vmatprep.subr.bf16.mxu0 0
        %2451 = vmatpush1.bf16.msra.mxu0 %v2428
        %2452 = vmatprep.subr.bf16.mxu0 0
        %2453 = vmatpush1.bf16.msra.mxu0 %v2429
        %2454 = vmatprep.subr.bf16.mxu0 0
        %2455 = vmatpush1.bf16.msra.mxu0 0
        %2456 = vmatprep.subr.bf16.mxu0 0
        %2457 = vmatpush1.bf16.msra.mxu0 0
        %2458 = vmatprep.subr.bf16.mxu0 0
        %2459 = vmatpush1.bf16.msra.mxu0 0
        %2460 = vmatprep.subr.bf16.mxu0 0
        %2461 = vmatpush1.bf16.msra.mxu0 0
        %2462 = vmatprep.subr.bf16.mxu0 0
        %2463 = vmatpush1.bf16.msra.mxu0 0
        %2464 = vmatprep.subr.bf16.mxu0 0
        %2465 = vmatpush1.bf16.msra.mxu0 0
        %2466 = vmatprep.subr.bf16.mxu0 0
        %2467 = vmatpush1.bf16.msra.mxu0 0
        %2468 = vmatprep.subr.bf16.mxu0 0
        %2469 = vmatpush1.bf16.msra.mxu0 0
        %2470 = vmatprep.mubr.bf16.mxu0 0
        %2471 = vmatmul.mubr.bf16.gmra.mrb[0].mxu0 %v1922
        %v2472 = vpop.f32.mrb[0].mxu0
        %v2473 = vadd.f32 0.0, %v2472
        %v2474 = vpop.f32.mrb[0].mxu0
        %v2475 = vpop.f32.mrb[0].mxu0
        %v2476 = vadd.f32 0.0, %v2475
        %v2477 = vpop.f32.mrb[0].mxu0
        %2478 = vmatprep.mubr.bf16.mxu0 0
        %2479 = vmatmul.mubr.bf16.gmra.mrb[0].mxu0 %v1923
        %v2480 = vpop.f32.mrb[0].mxu0
        %v2481 = vadd.f32 0.0, %v2480
        %v2482 = vpop.f32.mrb[0].mxu0
        %v2483 = vpop.f32.mrb[0].mxu0
        %v2484 = vadd.f32 0.0, %v2483
        %v2485 = vpop.f32.mrb[0].mxu0
        %2486 = vmatprep.mubr.bf16.mxu0 0
        %2487 = vmatmul.mubr.bf16.gmra.mrb[0].mxu0 %v1924
        %v2488 = vpop.f32.mrb[0].mxu0
        %v2489 = vadd.f32 0.0, %v2488
        %v2490 = vpop.f32.mrb[0].mxu0
        %v2491 = vpop.f32.mrb[0].mxu0
        %v2492 = vadd.f32 0.0, %v2491
        %v2493 = vpop.f32.mrb[0].mxu0
        %2494 = vmatprep.mubr.bf16.mxu0 0
        %2495 = vmatmul.mubr.bf16.gmra.mrb[0].mxu0 %v1925
        %v2496 = vpop.f32.mrb[0].mxu0
        %v2497 = vadd.f32 0.0, %v2496
        %v2498 = vpop.f32.mrb[0].mxu0
        %v2499 = vpop.f32.mrb[0].mxu0
        %v2500 = vadd.f32 0.0, %v2499
        %v2501 = vpop.f32.mrb[0].mxu0
        %2502 = vmatprep.mubr.bf16.mxu0 0
        %2503 = vmatmul.mubr.bf16.gmra.mrb[0].mxu0 %v1926
        %v2504 = vpop.f32.mrb[0].mxu0
        %v2505 = vadd.f32 0.0, %v2504
        %v2506 = vpop.f32.mrb[0].mxu0
        %v2507 = vpop.f32.mrb[0].mxu0
        %v2508 = vadd.f32 0.0, %v2507
        %v2509 = vpop.f32.mrb[0].mxu0
        %2510 = vmatprep.mubr.bf16.mxu0 0
        %2511 = vmatmul.mubr.bf16.gmra.mrb[0].mxu0 %v1927
        %v2512 = vpop.f32.mrb[0].mxu0
        %v2513 = vadd.f32 0.0, %v2512
        %v2514 = vpop.f32.mrb[0].mxu0
        %v2515 = vpop.f32.mrb[0].mxu0
        %v2516 = vadd.f32 0.0, %v2515
        %v2517 = vpop.f32.mrb[0].mxu0
        %2518 = vmatprep.mubr.bf16.mxu0 0
        %2519 = vmatmul.mubr.bf16.gmra.mrb[0].mxu0 %v1928
        %v2520 = vpop.f32.mrb[0].mxu0
        %v2521 = vadd.f32 0.0, %v2520
        %v2522 = vpop.f32.mrb[0].mxu0
        %v2523 = vpop.f32.mrb[0].mxu0
        %v2524 = vadd.f32 0.0, %v2523
        %v2525 = vpop.f32.mrb[0].mxu0
        %2526 = vmatprep.mubr.bf16.mxu0 0
        %2527 = vmatmul.mubr.bf16.gmra.mrb[0].mxu0 %v2388
        %v2528 = vpop.f32.mrb[0].mxu0
        %v2529 = vadd.f32 0.0, %v2528
        %v2530 = vpop.f32.mrb[0].mxu0
        %v2531 = vpop.f32.mrb[0].mxu0
        %v2532 = vadd.f32 0.0, %v2531
        %v2533 = vpop.f32.mrb[0].mxu0
        %2534 = vdwg.mxu0
        %v2535 = vadd.f32 %v2351, %v2473
        %v2536 = vadd.f32 %v2352, %v2476
        %v2537 = vadd.f32 %v2353, %v2481
        %v2538 = vadd.f32 %v2354, %v2484
        %v2539 = vadd.f32 %v2355, %v2489
        %v2540 = vadd.f32 %v2356, %v2492
        %v2541 = vadd.f32 %v2357, %v2497
        %v2542 = vadd.f32 %v2358, %v2500
        %v2543 = vadd.f32 %v2359, %v2505
        %v2544 = vadd.f32 %v2360, %v2508
        %v2545 = vadd.f32 %v2361, %v2513
        %v2546 = vadd.f32 %v2362, %v2516
        %v2547 = vadd.f32 %v2363, %v2521
        %v2548 = vadd.f32 %v2364, %v2524
        %v2549 = vadd.f32 %v2365, %v2529
        %v2550 = vadd.f32 %v2366, %v2532
        %v2552 = vshrl.u32 %v1460, 16
        %v2554 = vrot.slane %v2552, 4
        %v2555 = vshll.u32 %v1460, 16
        %v2557 = vrot.slane %v2555, 5
        %v2558 = vor.u32 %v2554, %v2557
        %v2559 = vrot.slane %v2558, 4
        %v2561 = vshll.u32 %v1461, 16
        %v2563 = vrot.slane %v2561, 5
        %v2564 = vsel %vm1502, %v2559, %v2563
        %v2565 = vshrl.u32 %v1461, 16
        %v2567 = vrot.slane %v2565, 4
        %v2568 = vor.u32 %v2567, %v2563
        %v2569 = vrot.slane %v2568, 4
        %v2571 = vshll.u32 %v1472, 16
        %v2573 = vrot.slane %v2571, 5
        %v2574 = vsel %vm1502, %v2569, %v2573
        %s2575 = scalar_lea.vmem [#allocation11], 256
        %v2576 = vld [vmem:[%s2575] sm:$0xf]
        %v2577 = vld [vmem:[%s2575 + $0x4] sm:$0xf]
        %v2578 = vld [vmem:[%s2575 + $0x8] sm:$0xf]
        %v2579 = vld [vmem:[%s2575 + $0xc] sm:$0xf]
        %v2580 = vld [vmem:[%s2575 + $0x10] sm:$0xf]
        %v2581 = vld [vmem:[%s2575 + $0x14] sm:$0xf]
        %v2582 = vld [vmem:[%s2575 + $0x18] sm:$0xf]
        %v2583 = vld [vmem:[%s2575 + $0x1c] sm:$0xf]
        %v2584 = vld [vmem:[%s2575 + $0x20] sm:$0xf]
        %v2585 = vld [vmem:[%s2575 + $0x24] sm:$0xf]
        %v2586 = vld [vmem:[%s2575 + $0x28] sm:$0xf]
        %v2587 = vld [vmem:[%s2575 + $0x2c] sm:$0xf]
        %v2588 = vld [vmem:[%s2575 + $0x30] sm:$0xf]
        %v2589 = vld [vmem:[%s2575 + $0x34] sm:$0xf]
        %v2590 = vld [vmem:[%s2575 + $0x38] sm:$0xf]
        %v2591 = vld [vmem:[%s2575 + $0x3c] sm:$0xf]
        %v2592 = vunpack.c.l.b16 %v2564
        %v2593 = vunpack.c.l.b16 %v2574
        %v2594 = vpack.c.b16 %v2593, %v2592
        %v2612 = vunpack.c.l.b16 %v2576
        %v2613 = vunpack.c.l.b16 %v2577
        %v2614 = vunpack.c.l.b16 %v2578
        %v2615 = vunpack.c.l.b16 %v2579
        %v2616 = vunpack.c.l.b16 %v2580
        %v2617 = vunpack.c.l.b16 %v2581
        %v2618 = vunpack.c.l.b16 %v2582
        %v2619 = vunpack.c.l.b16 %v2583
        %v2620 = vunpack.c.l.b16 %v2584
        %v2621 = vunpack.c.l.b16 %v2585
        %v2622 = vunpack.c.l.b16 %v2586
        %v2623 = vunpack.c.l.b16 %v2587
        %v2624 = vunpack.c.l.b16 %v2588
        %v2625 = vunpack.c.l.b16 %v2589
        %v2626 = vunpack.c.l.b16 %v2590
        %v2627 = vunpack.c.l.b16 %v2591
        %v2628 = vpack.c.b16 %v2613, %v2612
        %v2629 = vpack.c.b16 %v2615, %v2614
        %v2630 = vpack.c.b16 %v2617, %v2616
        %v2631 = vpack.c.b16 %v2619, %v2618
        %v2632 = vpack.c.b16 %v2621, %v2620
        %v2633 = vpack.c.b16 %v2623, %v2622
        %v2634 = vpack.c.b16 %v2625, %v2624
        %v2635 = vpack.c.b16 %v2627, %v2626
        %2644 = vmatprep.subr.bf16.mxu0 0
        %2645 = vmatpush1.bf16.msra.mxu0 %v2628
        %2646 = vmatprep.subr.bf16.mxu0 0
        %2647 = vmatpush1.bf16.msra.mxu0 %v2629
        %2648 = vmatprep.subr.bf16.mxu0 0
        %2649 = vmatpush1.bf16.msra.mxu0 %v2630
        %2650 = vmatprep.subr.bf16.mxu0 0
        %2651 = vmatpush1.bf16.msra.mxu0 %v2631
        %2652 = vmatprep.subr.bf16.mxu0 0
        %2653 = vmatpush1.bf16.msra.mxu0 %v2632
        %2654 = vmatprep.subr.bf16.mxu0 0
        %2655 = vmatpush1.bf16.msra.mxu0 %v2633
        %2656 = vmatprep.subr.bf16.mxu0 0
        %2657 = vmatpush1.bf16.msra.mxu0 %v2634
        %2658 = vmatprep.subr.bf16.mxu0 0
        %2659 = vmatpush1.bf16.msra.mxu0 %v2635
        %2660 = vmatprep.subr.bf16.mxu0 0
        %2661 = vmatpush1.bf16.msra.mxu0 0
        %2662 = vmatprep.subr.bf16.mxu0 0
        %2663 = vmatpush1.bf16.msra.mxu0 0
        %2664 = vmatprep.subr.bf16.mxu0 0
        %2665 = vmatpush1.bf16.msra.mxu0 0
        %2666 = vmatprep.subr.bf16.mxu0 0
        %2667 = vmatpush1.bf16.msra.mxu0 0
        %2668 = vmatprep.subr.bf16.mxu0 0
        %2669 = vmatpush1.bf16.msra.mxu0 0
        %2670 = vmatprep.subr.bf16.mxu0 0
        %2671 = vmatpush1.bf16.msra.mxu0 0
        %2672 = vmatprep.subr.bf16.mxu0 0
        %2673 = vmatpush1.bf16.msra.mxu0 0
        %2674 = vmatprep.subr.bf16.mxu0 0
        %2675 = vmatpush1.bf16.msra.mxu0 0
        %2676 = vmatprep.mubr.bf16.mxu0 0
        %2677 = vmatmul.mubr.bf16.gmra.mrb[0].mxu0 %v1729
        %v2678 = vpop.f32.mrb[0].mxu0
        %v2679 = vadd.f32 0.0, %v2678
        %v2680 = vpop.f32.mrb[0].mxu0
        %v2681 = vpop.f32.mrb[0].mxu0
        %v2682 = vadd.f32 0.0, %v2681
        %v2683 = vpop.f32.mrb[0].mxu0
        %2684 = vmatprep.mubr.bf16.mxu0 0
        %2685 = vmatmul.mubr.bf16.gmra.mrb[0].mxu0 %v1730
        %v2686 = vpop.f32.mrb[0].mxu0
        %v2687 = vadd.f32 0.0, %v2686
        %v2688 = vpop.f32.mrb[0].mxu0
        %v2689 = vpop.f32.mrb[0].mxu0
        %v2690 = vadd.f32 0.0, %v2689
        %v2691 = vpop.f32.mrb[0].mxu0
        %2692 = vmatprep.mubr.bf16.mxu0 0
        %2693 = vmatmul.mubr.bf16.gmra.mrb[0].mxu0 %v1731
        %v2694 = vpop.f32.mrb[0].mxu0
        %v2695 = vadd.f32 0.0, %v2694
        %v2696 = vpop.f32.mrb[0].mxu0
        %v2697 = vpop.f32.mrb[0].mxu0
        %v2698 = vadd.f32 0.0, %v2697
        %v2699 = vpop.f32.mrb[0].mxu0
        %2700 = vmatprep.mubr.bf16.mxu0 0
        %2701 = vmatmul.mubr.bf16.gmra.mrb[0].mxu0 %v1732
        %v2702 = vpop.f32.mrb[0].mxu0
        %v2703 = vadd.f32 0.0, %v2702
        %v2704 = vpop.f32.mrb[0].mxu0
        %v2705 = vpop.f32.mrb[0].mxu0
        %v2706 = vadd.f32 0.0, %v2705
        %v2707 = vpop.f32.mrb[0].mxu0
        %2708 = vmatprep.mubr.bf16.mxu0 0
        %2709 = vmatmul.mubr.bf16.gmra.mrb[0].mxu0 %v1733
        %v2710 = vpop.f32.mrb[0].mxu0
        %v2711 = vadd.f32 0.0, %v2710
        %v2712 = vpop.f32.mrb[0].mxu0
        %v2713 = vpop.f32.mrb[0].mxu0
        %v2714 = vadd.f32 0.0, %v2713
        %v2715 = vpop.f32.mrb[0].mxu0
        %2716 = vmatprep.mubr.bf16.mxu0 0
        %2717 = vmatmul.mubr.bf16.gmra.mrb[0].mxu0 %v1734
        %v2718 = vpop.f32.mrb[0].mxu0
        %v2719 = vadd.f32 0.0, %v2718
        %v2720 = vpop.f32.mrb[0].mxu0
        %v2721 = vpop.f32.mrb[0].mxu0
        %v2722 = vadd.f32 0.0, %v2721
        %v2723 = vpop.f32.mrb[0].mxu0
        %2724 = vmatprep.mubr.bf16.mxu0 0
        %2725 = vmatmul.mubr.bf16.gmra.mrb[0].mxu0 %v1735
        %v2726 = vpop.f32.mrb[0].mxu0
        %v2727 = vadd.f32 0.0, %v2726
        %v2728 = vpop.f32.mrb[0].mxu0
        %v2729 = vpop.f32.mrb[0].mxu0
        %v2730 = vadd.f32 0.0, %v2729
        %v2731 = vpop.f32.mrb[0].mxu0
        %2732 = vmatprep.mubr.bf16.mxu0 0
        %2733 = vmatmul.mubr.bf16.gmra.mrb[0].mxu0 %v2594
        %v2734 = vpop.f32.mrb[0].mxu0
        %v2735 = vadd.f32 0.0, %v2734
        %v2736 = vpop.f32.mrb[0].mxu0
        %v2737 = vpop.f32.mrb[0].mxu0
        %v2738 = vadd.f32 0.0, %v2737
        %v2739 = vpop.f32.mrb[0].mxu0
        %2740 = vdwg.mxu0
        %v2741 = vadd.f32 %v2535, %v2679
        %v2742 = vadd.f32 %v2536, %v2682
        %v2743 = vadd.f32 %v2537, %v2687
        %v2744 = vadd.f32 %v2538, %v2690
        %v2745 = vadd.f32 %v2539, %v2695
        %v2746 = vadd.f32 %v2540, %v2698
        %v2747 = vadd.f32 %v2541, %v2703
        %v2748 = vadd.f32 %v2542, %v2706
        %v2749 = vadd.f32 %v2543, %v2711
        %v2750 = vadd.f32 %v2544, %v2714
        %v2751 = vadd.f32 %v2545, %v2719
        %v2752 = vadd.f32 %v2546, %v2722
        %v2753 = vadd.f32 %v2547, %v2727
        %v2754 = vadd.f32 %v2548, %v2730
        %v2755 = vadd.f32 %v2549, %v2735
        %v2756 = vadd.f32 %v2550, %v2738
        %v2759 = vrot.slane %v1482, 5
        %v2760 = vrot.slane %v2759, 4
        %v2761 = vrot.slane %v1461, 5
        %v2762 = vsel %vm2100, %v2760, %v2761
        %v2763 = vrot.slane %v2761, 4
        %v2764 = vrot.slane %v1472, 5
        %v2765 = vsel %vm2100, %v2763, %v2764
        %s2766 = scalar_lea.vmem [#allocation11], 320
        %v2767 = vld [vmem:[%s2766] sm:$0xf]
        %v2768 = vld [vmem:[%s2766 + $0x4] sm:$0xf]
        %v2769 = vld [vmem:[%s2766 + $0x8] sm:$0xf]
        %v2770 = vld [vmem:[%s2766 + $0xc] sm:$0xf]
        %v2771 = vld [vmem:[%s2766 + $0x10] sm:$0xf]
        %v2772 = vld [vmem:[%s2766 + $0x14] sm:$0xf]
        %v2773 = vld [vmem:[%s2766 + $0x18] sm:$0xf]
        %v2774 = vld [vmem:[%s2766 + $0x1c] sm:$0xf]
        %v2775 = vld [vmem:[%s2766 + $0x20] sm:$0xf]
        %v2776 = vld [vmem:[%s2766 + $0x24] sm:$0xf]
        %v2777 = vld [vmem:[%s2766 + $0x28] sm:$0xf]
        %v2778 = vld [vmem:[%s2766 + $0x2c] sm:$0xf]
        %v2779 = vld [vmem:[%s2766 + $0x30] sm:$0xf]
        %v2780 = vld [vmem:[%s2766 + $0x34] sm:$0xf]
        %v2781 = vld [vmem:[%s2766 + $0x38] sm:$0xf]
        %v2782 = vld [vmem:[%s2766 + $0x3c] sm:$0xf]
        %v2783 = vunpack.c.l.b16 %v2762
        %v2784 = vunpack.c.l.b16 %v2765
        %v2785 = vpack.c.b16 %v2784, %v2783
        %v2803 = vunpack.c.l.b16 %v2767
        %v2804 = vunpack.c.l.b16 %v2768
        %v2805 = vunpack.c.l.b16 %v2769
        %v2806 = vunpack.c.l.b16 %v2770
        %v2807 = vunpack.c.l.b16 %v2771
        %v2808 = vunpack.c.l.b16 %v2772
        %v2809 = vunpack.c.l.b16 %v2773
        %v2810 = vunpack.c.l.b16 %v2774
        %v2811 = vunpack.c.l.b16 %v2775
        %v2812 = vunpack.c.l.b16 %v2776
        %v2813 = vunpack.c.l.b16 %v2777
        %v2814 = vunpack.c.l.b16 %v2778
        %v2815 = vunpack.c.l.b16 %v2779
        %v2816 = vunpack.c.l.b16 %v2780
        %v2817 = vunpack.c.l.b16 %v2781
        %v2818 = vunpack.c.l.b16 %v2782
        %v2819 = vpack.c.b16 %v2804, %v2803
        %v2820 = vpack.c.b16 %v2806, %v2805
        %v2821 = vpack.c.b16 %v2808, %v2807
        %v2822 = vpack.c.b16 %v2810, %v2809
        %v2823 = vpack.c.b16 %v2812, %v2811
        %v2824 = vpack.c.b16 %v2814, %v2813
        %v2825 = vpack.c.b16 %v2816, %v2815
        %v2826 = vpack.c.b16 %v2818, %v2817
        %2835 = vmatprep.subr.bf16.mxu0 0
        %2836 = vmatpush1.bf16.msra.mxu0 %v2819
        %2837 = vmatprep.subr.bf16.mxu0 0
        %2838 = vmatpush1.bf16.msra.mxu0 %v2820
        %2839 = vmatprep.subr.bf16.mxu0 0
        %2840 = vmatpush1.bf16.msra.mxu0 %v2821
        %2841 = vmatprep.subr.bf16.mxu0 0
        %2842 = vmatpush1.bf16.msra.mxu0 %v2822
        %2843 = vmatprep.subr.bf16.mxu0 0
        %2844 = vmatpush1.bf16.msra.mxu0 %v2823
        %2845 = vmatprep.subr.bf16.mxu0 0
        %2846 = vmatpush1.bf16.msra.mxu0 %v2824
        %2847 = vmatprep.subr.bf16.mxu0 0
        %2848 = vmatpush1.bf16.msra.mxu0 %v2825
        %2849 = vmatprep.subr.bf16.mxu0 0
        %2850 = vmatpush1.bf16.msra.mxu0 %v2826
        %2851 = vmatprep.subr.bf16.mxu0 0
        %2852 = vmatpush1.bf16.msra.mxu0 0
        %2853 = vmatprep.subr.bf16.mxu0 0
        %2854 = vmatpush1.bf16.msra.mxu0 0
        %2855 = vmatprep.subr.bf16.mxu0 0
        %2856 = vmatpush1.bf16.msra.mxu0 0
        %2857 = vmatprep.subr.bf16.mxu0 0
        %2858 = vmatpush1.bf16.msra.mxu0 0
        %2859 = vmatprep.subr.bf16.mxu0 0
        %2860 = vmatpush1.bf16.msra.mxu0 0
        %2861 = vmatprep.subr.bf16.mxu0 0
        %2862 = vmatpush1.bf16.msra.mxu0 0
        %2863 = vmatprep.subr.bf16.mxu0 0
        %2864 = vmatpush1.bf16.msra.mxu0 0
        %2865 = vmatprep.subr.bf16.mxu0 0
        %2866 = vmatpush1.bf16.msra.mxu0 0
        %2867 = vmatprep.mubr.bf16.mxu0 0
        %2868 = vmatmul.mubr.bf16.gmra.mrb[0].mxu0 %v2191
        %v2869 = vpop.f32.mrb[0].mxu0
        %v2870 = vadd.f32 0.0, %v2869
        %v2871 = vpop.f32.mrb[0].mxu0
        %v2872 = vpop.f32.mrb[0].mxu0
        %v2873 = vadd.f32 0.0, %v2872
        %v2874 = vpop.f32.mrb[0].mxu0
        %2875 = vmatprep.mubr.bf16.mxu0 0
        %2876 = vmatmul.mubr.bf16.gmra.mrb[0].mxu0 %v2192
        %v2877 = vpop.f32.mrb[0].mxu0
        %v2878 = vadd.f32 0.0, %v2877
        %v2879 = vpop.f32.mrb[0].mxu0
        %v2880 = vpop.f32.mrb[0].mxu0
        %v2881 = vadd.f32 0.0, %v2880
        %v2882 = vpop.f32.mrb[0].mxu0
        %2883 = vmatprep.mubr.bf16.mxu0 0
        %2884 = vmatmul.mubr.bf16.gmra.mrb[0].mxu0 %v2193
        %v2885 = vpop.f32.mrb[0].mxu0
        %v2886 = vadd.f32 0.0, %v2885
        %v2887 = vpop.f32.mrb[0].mxu0
        %v2888 = vpop.f32.mrb[0].mxu0
        %v2889 = vadd.f32 0.0, %v2888
        %v2890 = vpop.f32.mrb[0].mxu0
        %2891 = vmatprep.mubr.bf16.mxu0 0
        %2892 = vmatmul.mubr.bf16.gmra.mrb[0].mxu0 %v2194
        %v2893 = vpop.f32.mrb[0].mxu0
        %v2894 = vadd.f32 0.0, %v2893
        %v2895 = vpop.f32.mrb[0].mxu0
        %v2896 = vpop.f32.mrb[0].mxu0
        %v2897 = vadd.f32 0.0, %v2896
        %v2898 = vpop.f32.mrb[0].mxu0
        %2899 = vmatprep.mubr.bf16.mxu0 0
        %2900 = vmatmul.mubr.bf16.gmra.mrb[0].mxu0 %v2195
        %v2901 = vpop.f32.mrb[0].mxu0
        %v2902 = vadd.f32 0.0, %v2901
        %v2903 = vpop.f32.mrb[0].mxu0
        %v2904 = vpop.f32.mrb[0].mxu0
        %v2905 = vadd.f32 0.0, %v2904
        %v2906 = vpop.f32.mrb[0].mxu0
        %2907 = vmatprep.mubr.bf16.mxu0 0
        %2908 = vmatmul.mubr.bf16.gmra.mrb[0].mxu0 %v2196
        %v2909 = vpop.f32.mrb[0].mxu0
        %v2910 = vadd.f32 0.0, %v2909
        %v2911 = vpop.f32.mrb[0].mxu0
        %v2912 = vpop.f32.mrb[0].mxu0
        %v2913 = vadd.f32 0.0, %v2912
        %v2914 = vpop.f32.mrb[0].mxu0
        %2915 = vmatprep.mubr.bf16.mxu0 0
        %2916 = vmatmul.mubr.bf16.gmra.mrb[0].mxu0 %v2197
        %v2917 = vpop.f32.mrb[0].mxu0
        %v2918 = vadd.f32 0.0, %v2917
        %v2919 = vpop.f32.mrb[0].mxu0
        %v2920 = vpop.f32.mrb[0].mxu0
        %v2921 = vadd.f32 0.0, %v2920
        %v2922 = vpop.f32.mrb[0].mxu0
        %2923 = vmatprep.mubr.bf16.mxu0 0
        %2924 = vmatmul.mubr.bf16.gmra.mrb[0].mxu0 %v2785
        %v2925 = vpop.f32.mrb[0].mxu0
        %v2926 = vadd.f32 0.0, %v2925
        %v2927 = vpop.f32.mrb[0].mxu0
        %v2928 = vpop.f32.mrb[0].mxu0
        %v2929 = vadd.f32 0.0, %v2928
        %v2930 = vpop.f32.mrb[0].mxu0
        %2931 = vdwg.mxu0
        %v2932 = vadd.f32 %v2741, %v2870
        %v2933 = vadd.f32 %v2742, %v2873
        %v2934 = vadd.f32 %v2743, %v2878
        %v2935 = vadd.f32 %v2744, %v2881
        %v2936 = vadd.f32 %v2745, %v2886
        %v2937 = vadd.f32 %v2746, %v2889
        %v2938 = vadd.f32 %v2747, %v2894
        %v2939 = vadd.f32 %v2748, %v2897
        %v2940 = vadd.f32 %v2749, %v2902
        %v2941 = vadd.f32 %v2750, %v2905
        %v2942 = vadd.f32 %v2751, %v2910
        %v2943 = vadd.f32 %v2752, %v2913
        %v2944 = vadd.f32 %v2753, %v2918
        %v2945 = vadd.f32 %v2754, %v2921
        %v2946 = vadd.f32 %v2755, %v2926
        %v2947 = vadd.f32 %v2756, %v2929
        %s2948 = scalar_lea.vmem [#allocation11], 384
        %v2949 = vld [vmem:[%s2948] sm:$0xf]
        %v2950 = vld [vmem:[%s2948 + $0x4] sm:$0xf]
        %v2951 = vld [vmem:[%s2948 + $0x8] sm:$0xf]
        %v2952 = vld [vmem:[%s2948 + $0xc] sm:$0xf]
        %v2953 = vld [vmem:[%s2948 + $0x10] sm:$0xf]
        %v2954 = vld [vmem:[%s2948 + $0x14] sm:$0xf]
        %v2955 = vld [vmem:[%s2948 + $0x18] sm:$0xf]
        %v2956 = vld [vmem:[%s2948 + $0x1c] sm:$0xf]
        %v2957 = vld [vmem:[%s2948 + $0x20] sm:$0xf]
        %v2958 = vld [vmem:[%s2948 + $0x24] sm:$0xf]
        %v2959 = vld [vmem:[%s2948 + $0x28] sm:$0xf]
        %v2960 = vld [vmem:[%s2948 + $0x2c] sm:$0xf]
        %v2961 = vld [vmem:[%s2948 + $0x30] sm:$0xf]
        %v2962 = vld [vmem:[%s2948 + $0x34] sm:$0xf]
        %v2963 = vld [vmem:[%s2948 + $0x38] sm:$0xf]
        %v2964 = vld [vmem:[%s2948 + $0x3c] sm:$0xf]
        %v2967 = vunpack.c.l.b16 %v1462
        %v2968 = vunpack.c.l.b16 %v1463
        %v2969 = vpack.c.b16 %v2968, %v2967
        %v2987 = vunpack.c.l.b16 %v2949
        %v2988 = vunpack.c.l.b16 %v2950
        %v2989 = vunpack.c.l.b16 %v2951
        %v2990 = vunpack.c.l.b16 %v2952
        %v2991 = vunpack.c.l.b16 %v2953
        %v2992 = vunpack.c.l.b16 %v2954
        %v2993 = vunpack.c.l.b16 %v2955
        %v2994 = vunpack.c.l.b16 %v2956
        %v2995 = vunpack.c.l.b16 %v2957
        %v2996 = vunpack.c.l.b16 %v2958
        %v2997 = vunpack.c.l.b16 %v2959
        %v2998 = vunpack.c.l.b16 %v2960
        %v2999 = vunpack.c.l.b16 %v2961
        %v3000 = vunpack.c.l.b16 %v2962
        %v3001 = vunpack.c.l.b16 %v2963
        %v3002 = vunpack.c.l.b16 %v2964
        %v3003 = vpack.c.b16 %v2988, %v2987
        %v3004 = vpack.c.b16 %v2990, %v2989
        %v3005 = vpack.c.b16 %v2992, %v2991
        %v3006 = vpack.c.b16 %v2994, %v2993
        %v3007 = vpack.c.b16 %v2996, %v2995
        %v3008 = vpack.c.b16 %v2998, %v2997
        %v3009 = vpack.c.b16 %v3000, %v2999
        %v3010 = vpack.c.b16 %v3002, %v3001
        %3019 = vmatprep.subr.bf16.mxu0 0
        %3020 = vmatpush1.bf16.msra.mxu0 %v3003
        %3021 = vmatprep.subr.bf16.mxu0 0
        %3022 = vmatpush1.bf16.msra.mxu0 %v3004
        %3023 = vmatprep.subr.bf16.mxu0 0
        %3024 = vmatpush1.bf16.msra.mxu0 %v3005
        %3025 = vmatprep.subr.bf16.mxu0 0
        %3026 = vmatpush1.bf16.msra.mxu0 %v3006
        %3027 = vmatprep.subr.bf16.mxu0 0
        %3028 = vmatpush1.bf16.msra.mxu0 %v3007
        %3029 = vmatprep.subr.bf16.mxu0 0
        %3030 = vmatpush1.bf16.msra.mxu0 %v3008
        %3031 = vmatprep.subr.bf16.mxu0 0
        %3032 = vmatpush1.bf16.msra.mxu0 %v3009
        %3033 = vmatprep.subr.bf16.mxu0 0
        %3034 = vmatpush1.bf16.msra.mxu0 %v3010
        %3035 = vmatprep.subr.bf16.mxu0 0
        %3036 = vmatpush1.bf16.msra.mxu0 0
        %3037 = vmatprep.subr.bf16.mxu0 0
        %3038 = vmatpush1.bf16.msra.mxu0 0
        %3039 = vmatprep.subr.bf16.mxu0 0
        %3040 = vmatpush1.bf16.msra.mxu0 0
        %3041 = vmatprep.subr.bf16.mxu0 0
        %3042 = vmatpush1.bf16.msra.mxu0 0
        %3043 = vmatprep.subr.bf16.mxu0 0
        %3044 = vmatpush1.bf16.msra.mxu0 0
        %3045 = vmatprep.subr.bf16.mxu0 0
        %3046 = vmatpush1.bf16.msra.mxu0 0
        %3047 = vmatprep.subr.bf16.mxu0 0
        %3048 = vmatpush1.bf16.msra.mxu0 0
        %3049 = vmatprep.subr.bf16.mxu0 0
        %3050 = vmatpush1.bf16.msra.mxu0 0
        %3051 = vmatprep.mubr.bf16.mxu0 0
        %3052 = vmatmul.mubr.bf16.gmra.mrb[0].mxu0 %v1923
        %v3053 = vpop.f32.mrb[0].mxu0
        %v3054 = vadd.f32 0.0, %v3053
        %v3055 = vpop.f32.mrb[0].mxu0
        %v3056 = vpop.f32.mrb[0].mxu0
        %v3057 = vadd.f32 0.0, %v3056
        %v3058 = vpop.f32.mrb[0].mxu0
        %3059 = vmatprep.mubr.bf16.mxu0 0
        %3060 = vmatmul.mubr.bf16.gmra.mrb[0].mxu0 %v1924
        %v3061 = vpop.f32.mrb[0].mxu0
        %v3062 = vadd.f32 0.0, %v3061
        %v3063 = vpop.f32.mrb[0].mxu0
        %v3064 = vpop.f32.mrb[0].mxu0
        %v3065 = vadd.f32 0.0, %v3064
        %v3066 = vpop.f32.mrb[0].mxu0
        %3067 = vmatprep.mubr.bf16.mxu0 0
        %3068 = vmatmul.mubr.bf16.gmra.mrb[0].mxu0 %v1925
        %v3069 = vpop.f32.mrb[0].mxu0
        %v3070 = vadd.f32 0.0, %v3069
        %v3071 = vpop.f32.mrb[0].mxu0
        %v3072 = vpop.f32.mrb[0].mxu0
        %v3073 = vadd.f32 0.0, %v3072
        %v3074 = vpop.f32.mrb[0].mxu0
        %3075 = vmatprep.mubr.bf16.mxu0 0
        %3076 = vmatmul.mubr.bf16.gmra.mrb[0].mxu0 %v1926
        %v3077 = vpop.f32.mrb[0].mxu0
        %v3078 = vadd.f32 0.0, %v3077
        %v3079 = vpop.f32.mrb[0].mxu0
        %v3080 = vpop.f32.mrb[0].mxu0
        %v3081 = vadd.f32 0.0, %v3080
        %v3082 = vpop.f32.mrb[0].mxu0
        %3083 = vmatprep.mubr.bf16.mxu0 0
        %3084 = vmatmul.mubr.bf16.gmra.mrb[0].mxu0 %v1927
        %v3085 = vpop.f32.mrb[0].mxu0
        %v3086 = vadd.f32 0.0, %v3085
        %v3087 = vpop.f32.mrb[0].mxu0
        %v3088 = vpop.f32.mrb[0].mxu0
        %v3089 = vadd.f32 0.0, %v3088
        %v3090 = vpop.f32.mrb[0].mxu0
        %3091 = vmatprep.mubr.bf16.mxu0 0
        %3092 = vmatmul.mubr.bf16.gmra.mrb[0].mxu0 %v1928
        %v3093 = vpop.f32.mrb[0].mxu0
        %v3094 = vadd.f32 0.0, %v3093
        %v3095 = vpop.f32.mrb[0].mxu0
        %v3096 = vpop.f32.mrb[0].mxu0
        %v3097 = vadd.f32 0.0, %v3096
        %v3098 = vpop.f32.mrb[0].mxu0
        %3099 = vmatprep.mubr.bf16.mxu0 0
        %3100 = vmatmul.mubr.bf16.gmra.mrb[0].mxu0 %v2388
        %v3101 = vpop.f32.mrb[0].mxu0
        %v3102 = vadd.f32 0.0, %v3101
        %v3103 = vpop.f32.mrb[0].mxu0
        %v3104 = vpop.f32.mrb[0].mxu0
        %v3105 = vadd.f32 0.0, %v3104
        %v3106 = vpop.f32.mrb[0].mxu0
        %3107 = vmatprep.mubr.bf16.mxu0 0
        %3108 = vmatmul.mubr.bf16.gmra.mrb[0].mxu0 %v2969
        %v3109 = vpop.f32.mrb[0].mxu0
        %v3110 = vadd.f32 0.0, %v3109
        %v3111 = vpop.f32.mrb[0].mxu0
        %v3112 = vpop.f32.mrb[0].mxu0
        %v3113 = vadd.f32 0.0, %v3112
        %v3114 = vpop.f32.mrb[0].mxu0
        %3115 = vdwg.mxu0
        %v3116 = vadd.f32 %v2932, %v3054
        %v3117 = vadd.f32 %v2933, %v3057
        %v3118 = vadd.f32 %v2934, %v3062
        %v3119 = vadd.f32 %v2935, %v3065
        %v3120 = vadd.f32 %v2936, %v3070
        %v3121 = vadd.f32 %v2937, %v3073
        %v3122 = vadd.f32 %v2938, %v3078
        %v3123 = vadd.f32 %v2939, %v3081
        %v3124 = vadd.f32 %v2940, %v3086
        %v3125 = vadd.f32 %v2941, %v3089
        %v3126 = vadd.f32 %v2942, %v3094
        %v3127 = vadd.f32 %v2943, %v3097
        %v3128 = vadd.f32 %v2944, %v3102
        %v3129 = vadd.f32 %v2945, %v3105
        %v3130 = vadd.f32 %v2946, %v3110
        %v3131 = vadd.f32 %v2947, %v3113
        %v3133 = vshrl.u32 %v1462, 16
        %v3135 = vrot.slane %v3133, 4
        %v3136 = vshll.u32 %v1462, 16
        %v3138 = vrot.slane %v3136, 5
        %v3139 = vor.u32 %v3135, %v3138
        %v3140 = vrot.slane %v3139, 4
        %v3142 = vshll.u32 %v1463, 16
        %v3144 = vrot.slane %v3142, 5
        %v3145 = vsel %vm1502, %v3140, %v3144
        %v3146 = vshrl.u32 %v1463, 16
        %v3148 = vrot.slane %v3146, 4
        %v3149 = vor.u32 %v3148, %v3144
        %v3150 = vrot.slane %v3149, 4
        %v3152 = vshll.u32 %v1473, 16
        %v3154 = vrot.slane %v3152, 5
        %v3155 = vsel %vm1502, %v3150, %v3154
        %s3156 = scalar_lea.vmem [#allocation11], 448
        %v3157 = vld [vmem:[%s3156] sm:$0xf]
        %v3158 = vld [vmem:[%s3156 + $0x4] sm:$0xf]
        %v3159 = vld [vmem:[%s3156 + $0x8] sm:$0xf]
        %v3160 = vld [vmem:[%s3156 + $0xc] sm:$0xf]
        %v3161 = vld [vmem:[%s3156 + $0x10] sm:$0xf]
        %v3162 = vld [vmem:[%s3156 + $0x14] sm:$0xf]
        %v3163 = vld [vmem:[%s3156 + $0x18] sm:$0xf]
        %v3164 = vld [vmem:[%s3156 + $0x1c] sm:$0xf]
        %v3165 = vld [vmem:[%s3156 + $0x20] sm:$0xf]
        %v3166 = vld [vmem:[%s3156 + $0x24] sm:$0xf]
        %v3167 = vld [vmem:[%s3156 + $0x28] sm:$0xf]
        %v3168 = vld [vmem:[%s3156 + $0x2c] sm:$0xf]
        %v3169 = vld [vmem:[%s3156 + $0x30] sm:$0xf]
        %v3170 = vld [vmem:[%s3156 + $0x34] sm:$0xf]
        %v3171 = vld [vmem:[%s3156 + $0x38] sm:$0xf]
        %v3172 = vld [vmem:[%s3156 + $0x3c] sm:$0xf]
        %v3173 = vunpack.c.l.b16 %v3145
        %v3174 = vunpack.c.l.b16 %v3155
        %v3175 = vpack.c.b16 %v3174, %v3173
        %v3193 = vunpack.c.l.b16 %v3157
        %v3194 = vunpack.c.l.b16 %v3158
        %v3195 = vunpack.c.l.b16 %v3159
        %v3196 = vunpack.c.l.b16 %v3160
        %v3197 = vunpack.c.l.b16 %v3161
        %v3198 = vunpack.c.l.b16 %v3162
        %v3199 = vunpack.c.l.b16 %v3163
        %v3200 = vunpack.c.l.b16 %v3164
        %v3201 = vunpack.c.l.b16 %v3165
        %v3202 = vunpack.c.l.b16 %v3166
        %v3203 = vunpack.c.l.b16 %v3167
        %v3204 = vunpack.c.l.b16 %v3168
        %v3205 = vunpack.c.l.b16 %v3169
        %v3206 = vunpack.c.l.b16 %v3170
        %v3207 = vunpack.c.l.b16 %v3171
        %v3208 = vunpack.c.l.b16 %v3172
        %v3209 = vpack.c.b16 %v3194, %v3193
        %v3210 = vpack.c.b16 %v3196, %v3195
        %v3211 = vpack.c.b16 %v3198, %v3197
        %v3212 = vpack.c.b16 %v3200, %v3199
        %v3213 = vpack.c.b16 %v3202, %v3201
        %v3214 = vpack.c.b16 %v3204, %v3203
        %v3215 = vpack.c.b16 %v3206, %v3205
        %v3216 = vpack.c.b16 %v3208, %v3207
        %3225 = vmatprep.subr.bf16.mxu0 0
        %3226 = vmatpush1.bf16.msra.mxu0 %v3209
        %3227 = vmatprep.subr.bf16.mxu0 0
        %3228 = vmatpush1.bf16.msra.mxu0 %v3210
        %3229 = vmatprep.subr.bf16.mxu0 0
        %3230 = vmatpush1.bf16.msra.mxu0 %v3211
        %3231 = vmatprep.subr.bf16.mxu0 0
        %3232 = vmatpush1.bf16.msra.mxu0 %v3212
        %3233 = vmatprep.subr.bf16.mxu0 0
        %3234 = vmatpush1.bf16.msra.mxu0 %v3213
        %3235 = vmatprep.subr.bf16.mxu0 0
        %3236 = vmatpush1.bf16.msra.mxu0 %v3214
        %3237 = vmatprep.subr.bf16.mxu0 0
        %3238 = vmatpush1.bf16.msra.mxu0 %v3215
        %3239 = vmatprep.subr.bf16.mxu0 0
        %3240 = vmatpush1.bf16.msra.mxu0 %v3216
        %3241 = vmatprep.subr.bf16.mxu0 0
        %3242 = vmatpush1.bf16.msra.mxu0 0
        %3243 = vmatprep.subr.bf16.mxu0 0
        %3244 = vmatpush1.bf16.msra.mxu0 0
        %3245 = vmatprep.subr.bf16.mxu0 0
        %3246 = vmatpush1.bf16.msra.mxu0 0
        %3247 = vmatprep.subr.bf16.mxu0 0
        %3248 = vmatpush1.bf16.msra.mxu0 0
        %3249 = vmatprep.subr.bf16.mxu0 0
        %3250 = vmatpush1.bf16.msra.mxu0 0
        %3251 = vmatprep.subr.bf16.mxu0 0
        %3252 = vmatpush1.bf16.msra.mxu0 0
        %3253 = vmatprep.subr.bf16.mxu0 0
        %3254 = vmatpush1.bf16.msra.mxu0 0
        %3255 = vmatprep.subr.bf16.mxu0 0
        %3256 = vmatpush1.bf16.msra.mxu0 0
        %3257 = vmatprep.mubr.bf16.mxu0 0
        %3258 = vmatmul.mubr.bf16.gmra.mrb[0].mxu0 %v1730
        %v3259 = vpop.f32.mrb[0].mxu0
        %v3260 = vadd.f32 0.0, %v3259
        %v3261 = vpop.f32.mrb[0].mxu0
        %v3262 = vpop.f32.mrb[0].mxu0
        %v3263 = vadd.f32 0.0, %v3262
        %v3264 = vpop.f32.mrb[0].mxu0
        %3265 = vmatprep.mubr.bf16.mxu0 0
        %3266 = vmatmul.mubr.bf16.gmra.mrb[0].mxu0 %v1731
        %v3267 = vpop.f32.mrb[0].mxu0
        %v3268 = vadd.f32 0.0, %v3267
        %v3269 = vpop.f32.mrb[0].mxu0
        %v3270 = vpop.f32.mrb[0].mxu0
        %v3271 = vadd.f32 0.0, %v3270
        %v3272 = vpop.f32.mrb[0].mxu0
        %3273 = vmatprep.mubr.bf16.mxu0 0
        %3274 = vmatmul.mubr.bf16.gmra.mrb[0].mxu0 %v1732
        %v3275 = vpop.f32.mrb[0].mxu0
        %v3276 = vadd.f32 0.0, %v3275
        %v3277 = vpop.f32.mrb[0].mxu0
        %v3278 = vpop.f32.mrb[0].mxu0
        %v3279 = vadd.f32 0.0, %v3278
        %v3280 = vpop.f32.mrb[0].mxu0
        %3281 = vmatprep.mubr.bf16.mxu0 0
        %3282 = vmatmul.mubr.bf16.gmra.mrb[0].mxu0 %v1733
        %v3283 = vpop.f32.mrb[0].mxu0
        %v3284 = vadd.f32 0.0, %v3283
        %v3285 = vpop.f32.mrb[0].mxu0
        %v3286 = vpop.f32.mrb[0].mxu0
        %v3287 = vadd.f32 0.0, %v3286
        %v3288 = vpop.f32.mrb[0].mxu0
        %3289 = vmatprep.mubr.bf16.mxu0 0
        %3290 = vmatmul.mubr.bf16.gmra.mrb[0].mxu0 %v1734
        %v3291 = vpop.f32.mrb[0].mxu0
        %v3292 = vadd.f32 0.0, %v3291
        %v3293 = vpop.f32.mrb[0].mxu0
        %v3294 = vpop.f32.mrb[0].mxu0
        %v3295 = vadd.f32 0.0, %v3294
        %v3296 = vpop.f32.mrb[0].mxu0
        %3297 = vmatprep.mubr.bf16.mxu0 0
        %3298 = vmatmul.mubr.bf16.gmra.mrb[0].mxu0 %v1735
        %v3299 = vpop.f32.mrb[0].mxu0
        %v3300 = vadd.f32 0.0, %v3299
        %v3301 = vpop.f32.mrb[0].mxu0
        %v3302 = vpop.f32.mrb[0].mxu0
        %v3303 = vadd.f32 0.0, %v3302
        %v3304 = vpop.f32.mrb[0].mxu0
        %3305 = vmatprep.mubr.bf16.mxu0 0
        %3306 = vmatmul.mubr.bf16.gmra.mrb[0].mxu0 %v2594
        %v3307 = vpop.f32.mrb[0].mxu0
        %v3308 = vadd.f32 0.0, %v3307
        %v3309 = vpop.f32.mrb[0].mxu0
        %v3310 = vpop.f32.mrb[0].mxu0
        %v3311 = vadd.f32 0.0, %v3310
        %v3312 = vpop.f32.mrb[0].mxu0
        %3313 = vmatprep.mubr.bf16.mxu0 0
        %3314 = vmatmul.mubr.bf16.gmra.mrb[0].mxu0 %v3175
        %v3315 = vpop.f32.mrb[0].mxu0
        %v3316 = vadd.f32 0.0, %v3315
        %v3317 = vpop.f32.mrb[0].mxu0
        %v3318 = vpop.f32.mrb[0].mxu0
        %v3319 = vadd.f32 0.0, %v3318
        %v3320 = vpop.f32.mrb[0].mxu0
        %3321 = vdwg.mxu0
        %v3322 = vadd.f32 %v3116, %v3260
        %v3323 = vadd.f32 %v3117, %v3263
        %v3324 = vadd.f32 %v3118, %v3268
        %v3325 = vadd.f32 %v3119, %v3271
        %v3326 = vadd.f32 %v3120, %v3276
        %v3327 = vadd.f32 %v3121, %v3279
        %v3328 = vadd.f32 %v3122, %v3284
        %v3329 = vadd.f32 %v3123, %v3287
        %v3330 = vadd.f32 %v3124, %v3292
        %v3331 = vadd.f32 %v3125, %v3295
        %v3332 = vadd.f32 %v3126, %v3300
        %v3333 = vadd.f32 %v3127, %v3303
        %v3334 = vadd.f32 %v3128, %v3308
        %v3335 = vadd.f32 %v3129, %v3311
        %v3336 = vadd.f32 %v3130, %v3316
        %v3337 = vadd.f32 %v3131, %v3319
        %v3340 = vrot.slane %v1483, 5
        %v3341 = vrot.slane %v3340, 4
        %v3342 = vrot.slane %v1463, 5
        %v3343 = vsel %vm2100, %v3341, %v3342
        %v3344 = vrot.slane %v3342, 4
        %v3345 = vrot.slane %v1473, 5
        %v3346 = vsel %vm2100, %v3344, %v3345
        %s3347 = scalar_lea.vmem [#allocation11], 512
        %v3348 = vld [vmem:[%s3347] sm:$0xf]
        %v3349 = vld [vmem:[%s3347 + $0x4] sm:$0xf]
        %v3350 = vld [vmem:[%s3347 + $0x8] sm:$0xf]
        %v3351 = vld [vmem:[%s3347 + $0xc] sm:$0xf]
        %v3352 = vld [vmem:[%s3347 + $0x10] sm:$0xf]
        %v3353 = vld [vmem:[%s3347 + $0x14] sm:$0xf]
        %v3354 = vld [vmem:[%s3347 + $0x18] sm:$0xf]
        %v3355 = vld [vmem:[%s3347 + $0x1c] sm:$0xf]
        %v3356 = vld [vmem:[%s3347 + $0x20] sm:$0xf]
        %v3357 = vld [vmem:[%s3347 + $0x24] sm:$0xf]
        %v3358 = vld [vmem:[%s3347 + $0x28] sm:$0xf]
        %v3359 = vld [vmem:[%s3347 + $0x2c] sm:$0xf]
        %v3360 = vld [vmem:[%s3347 + $0x30] sm:$0xf]
        %v3361 = vld [vmem:[%s3347 + $0x34] sm:$0xf]
        %v3362 = vld [vmem:[%s3347 + $0x38] sm:$0xf]
        %v3363 = vld [vmem:[%s3347 + $0x3c] sm:$0xf]
        %v3364 = vunpack.c.l.b16 %v3343
        %v3365 = vunpack.c.l.b16 %v3346
        %v3366 = vpack.c.b16 %v3365, %v3364
        %v3384 = vunpack.c.l.b16 %v3348
        %v3385 = vunpack.c.l.b16 %v3349
        %v3386 = vunpack.c.l.b16 %v3350
        %v3387 = vunpack.c.l.b16 %v3351
        %v3388 = vunpack.c.l.b16 %v3352
        %v3389 = vunpack.c.l.b16 %v3353
        %v3390 = vunpack.c.l.b16 %v3354
        %v3391 = vunpack.c.l.b16 %v3355
        %v3392 = vunpack.c.l.b16 %v3356
        %v3393 = vunpack.c.l.b16 %v3357
        %v3394 = vunpack.c.l.b16 %v3358
        %v3395 = vunpack.c.l.b16 %v3359
        %v3396 = vunpack.c.l.b16 %v3360
        %v3397 = vunpack.c.l.b16 %v3361
        %v3398 = vunpack.c.l.b16 %v3362
        %v3399 = vunpack.c.l.b16 %v3363
        %v3400 = vpack.c.b16 %v3385, %v3384
        %v3401 = vpack.c.b16 %v3387, %v3386
        %v3402 = vpack.c.b16 %v3389, %v3388
        %v3403 = vpack.c.b16 %v3391, %v3390
        %v3404 = vpack.c.b16 %v3393, %v3392
        %v3405 = vpack.c.b16 %v3395, %v3394
        %v3406 = vpack.c.b16 %v3397, %v3396
        %v3407 = vpack.c.b16 %v3399, %v3398
        %3416 = vmatprep.subr.bf16.mxu0 0
        %3417 = vmatpush1.bf16.msra.mxu0 %v3400
        %3418 = vmatprep.subr.bf16.mxu0 0
        %3419 = vmatpush1.bf16.msra.mxu0 %v3401
        %3420 = vmatprep.subr.bf16.mxu0 0
        %3421 = vmatpush1.bf16.msra.mxu0 %v3402
        %3422 = vmatprep.subr.bf16.mxu0 0
        %3423 = vmatpush1.bf16.msra.mxu0 %v3403
        %3424 = vmatprep.subr.bf16.mxu0 0
        %3425 = vmatpush1.bf16.msra.mxu0 %v3404
        %3426 = vmatprep.subr.bf16.mxu0 0
        %3427 = vmatpush1.bf16.msra.mxu0 %v3405
        %3428 = vmatprep.subr.bf16.mxu0 0
        %3429 = vmatpush1.bf16.msra.mxu0 %v3406
        %3430 = vmatprep.subr.bf16.mxu0 0
        %3431 = vmatpush1.bf16.msra.mxu0 %v3407
        %3432 = vmatprep.subr.bf16.mxu0 0
        %3433 = vmatpush1.bf16.msra.mxu0 0
        %3434 = vmatprep.subr.bf16.mxu0 0
        %3435 = vmatpush1.bf16.msra.mxu0 0
        %3436 = vmatprep.subr.bf16.mxu0 0
        %3437 = vmatpush1.bf16.msra.mxu0 0
        %3438 = vmatprep.subr.bf16.mxu0 0
        %3439 = vmatpush1.bf16.msra.mxu0 0
        %3440 = vmatprep.subr.bf16.mxu0 0
        %3441 = vmatpush1.bf16.msra.mxu0 0
        %3442 = vmatprep.subr.bf16.mxu0 0
        %3443 = vmatpush1.bf16.msra.mxu0 0
        %3444 = vmatprep.subr.bf16.mxu0 0
        %3445 = vmatpush1.bf16.msra.mxu0 0
        %3446 = vmatprep.subr.bf16.mxu0 0
        %3447 = vmatpush1.bf16.msra.mxu0 0
        %3448 = vmatprep.mubr.bf16.mxu0 0
        %3449 = vmatmul.mubr.bf16.gmra.mrb[0].mxu0 %v2192
        %v3450 = vpop.f32.mrb[0].mxu0
        %v3451 = vadd.f32 0.0, %v3450
        %v3452 = vpop.f32.mrb[0].mxu0
        %v3453 = vpop.f32.mrb[0].mxu0
        %v3454 = vadd.f32 0.0, %v3453
        %v3455 = vpop.f32.mrb[0].mxu0
        %3456 = vmatprep.mubr.bf16.mxu0 0
        %3457 = vmatmul.mubr.bf16.gmra.mrb[0].mxu0 %v2193
        %v3458 = vpop.f32.mrb[0].mxu0
        %v3459 = vadd.f32 0.0, %v3458
        %v3460 = vpop.f32.mrb[0].mxu0
        %v3461 = vpop.f32.mrb[0].mxu0
        %v3462 = vadd.f32 0.0, %v3461
        %v3463 = vpop.f32.mrb[0].mxu0
        %3464 = vmatprep.mubr.bf16.mxu0 0
        %3465 = vmatmul.mubr.bf16.gmra.mrb[0].mxu0 %v2194
        %v3466 = vpop.f32.mrb[0].mxu0
        %v3467 = vadd.f32 0.0, %v3466
        %v3468 = vpop.f32.mrb[0].mxu0
        %v3469 = vpop.f32.mrb[0].mxu0
        %v3470 = vadd.f32 0.0, %v3469
        %v3471 = vpop.f32.mrb[0].mxu0
        %3472 = vmatprep.mubr.bf16.mxu0 0
        %3473 = vmatmul.mubr.bf16.gmra.mrb[0].mxu0 %v2195
        %v3474 = vpop.f32.mrb[0].mxu0
        %v3475 = vadd.f32 0.0, %v3474
        %v3476 = vpop.f32.mrb[0].mxu0
        %v3477 = vpop.f32.mrb[0].mxu0
        %v3478 = vadd.f32 0.0, %v3477
        %v3479 = vpop.f32.mrb[0].mxu0
        %3480 = vmatprep.mubr.bf16.mxu0 0
        %3481 = vmatmul.mubr.bf16.gmra.mrb[0].mxu0 %v2196
        %v3482 = vpop.f32.mrb[0].mxu0
        %v3483 = vadd.f32 0.0, %v3482
        %v3484 = vpop.f32.mrb[0].mxu0
        %v3485 = vpop.f32.mrb[0].mxu0
        %v3486 = vadd.f32 0.0, %v3485
        %v3487 = vpop.f32.mrb[0].mxu0
        %3488 = vmatprep.mubr.bf16.mxu0 0
        %3489 = vmatmul.mubr.bf16.gmra.mrb[0].mxu0 %v2197
        %v3490 = vpop.f32.mrb[0].mxu0
        %v3491 = vadd.f32 0.0, %v3490
        %v3492 = vpop.f32.mrb[0].mxu0
        %v3493 = vpop.f32.mrb[0].mxu0
        %v3494 = vadd.f32 0.0, %v3493
        %v3495 = vpop.f32.mrb[0].mxu0
        %3496 = vmatprep.mubr.bf16.mxu0 0
        %3497 = vmatmul.mubr.bf16.gmra.mrb[0].mxu0 %v2785
        %v3498 = vpop.f32.mrb[0].mxu0
        %v3499 = vadd.f32 0.0, %v3498
        %v3500 = vpop.f32.mrb[0].mxu0
        %v3501 = vpop.f32.mrb[0].mxu0
        %v3502 = vadd.f32 0.0, %v3501
        %v3503 = vpop.f32.mrb[0].mxu0
        %3504 = vmatprep.mubr.bf16.mxu0 0
        %3505 = vmatmul.mubr.bf16.gmra.mrb[0].mxu0 %v3366
        %v3506 = vpop.f32.mrb[0].mxu0
        %v3507 = vadd.f32 0.0, %v3506
        %v3508 = vpop.f32.mrb[0].mxu0
        %v3509 = vpop.f32.mrb[0].mxu0
        %v3510 = vadd.f32 0.0, %v3509
        %v3511 = vpop.f32.mrb[0].mxu0
        %3512 = vdwg.mxu0
        %v3513 = vadd.f32 %v3322, %v3451
        %v3514 = vadd.f32 %v3323, %v3454
        %v3515 = vadd.f32 %v3324, %v3459
        %v3516 = vadd.f32 %v3325, %v3462
        %v3517 = vadd.f32 %v3326, %v3467
        %v3518 = vadd.f32 %v3327, %v3470
        %v3519 = vadd.f32 %v3328, %v3475
        %v3520 = vadd.f32 %v3329, %v3478
        %v3521 = vadd.f32 %v3330, %v3483
        %v3522 = vadd.f32 %v3331, %v3486
        %v3523 = vadd.f32 %v3332, %v3491
        %v3524 = vadd.f32 %v3333, %v3494
        %v3525 = vadd.f32 %v3334, %v3499
        %v3526 = vadd.f32 %v3335, %v3502
        %v3527 = vadd.f32 %v3336, %v3507
        %v3528 = vadd.f32 %v3337, %v3510
        %v3529 = vld [vmem:[%s7] sm:$0x1]
        %v3531 = vlaneseq
        %v3532 = vshrl.u32 %v3531, 7
        %v3533 = vsub.s32 0, %v3532
        %v3534 = vrot.slane %v3529, %v3533
        %v3536 = vmul.f32 %v3513, %v3534
        %v3537 = vmul.f32 %v3514, %v3534
        %v3538 = vmul.f32 %v3515, %v3534
        %v3539 = vmul.f32 %v3516, %v3534
        %v3540 = vmul.f32 %v3517, %v3534
        %v3541 = vmul.f32 %v3518, %v3534
        %v3542 = vmul.f32 %v3519, %v3534
        %v3543 = vmul.f32 %v3520, %v3534
        %v3544 = vmul.f32 %v3521, %v3534
        %v3545 = vmul.f32 %v3522, %v3534
        %v3546 = vmul.f32 %v3523, %v3534
        %v3547 = vmul.f32 %v3524, %v3534
        %v3548 = vmul.f32 %v3525, %v3534
        %v3549 = vmul.f32 %v3526, %v3534
        %v3550 = vmul.f32 %v3527, %v3534
        %v3551 = vmul.f32 %v3528, %v3534
        %v3552 = vld [vmem:[%s8] sm:$0x1]
        %v3554 = vlaneseq
        %v3555 = vshrl.u32 %v3554, 7
        %v3556 = vsub.s32 0, %v3555
        %v3557 = vrot.slane %v3552, %v3556
        %v3559 = vadd.f32 %v3536, %v3557
        %v3560 = vadd.f32 %v3537, %v3557
        %v3561 = vadd.f32 %v3538, %v3557
        %v3562 = vadd.f32 %v3539, %v3557
        %v3563 = vadd.f32 %v3540, %v3557
        %v3564 = vadd.f32 %v3541, %v3557
        %v3565 = vadd.f32 %v3542, %v3557
        %v3566 = vadd.f32 %v3543, %v3557
        %v3567 = vadd.f32 %v3544, %v3557
        %v3568 = vadd.f32 %v3545, %v3557
        %v3569 = vadd.f32 %v3546, %v3557
        %v3570 = vadd.f32 %v3547, %v3557
        %v3571 = vadd.f32 %v3548, %v3557
        %v3572 = vadd.f32 %v3549, %v3557
        %v3573 = vadd.f32 %v3550, %v3557
        %v3574 = vadd.f32 %v3551, %v3557
        %v3575 = vmax.f32 %v3559, 0.0
        %v3576 = vmax.f32 %v3560, 0.0
        %v3577 = vmax.f32 %v3561, 0.0
        %v3578 = vmax.f32 %v3562, 0.0
        %v3579 = vmax.f32 %v3563, 0.0
        %v3580 = vmax.f32 %v3564, 0.0
        %v3581 = vmax.f32 %v3565, 0.0
        %v3582 = vmax.f32 %v3566, 0.0
        %v3583 = vmax.f32 %v3567, 0.0
        %v3584 = vmax.f32 %v3568, 0.0
        %v3585 = vmax.f32 %v3569, 0.0
        %v3586 = vmax.f32 %v3570, 0.0
        %v3587 = vmax.f32 %v3571, 0.0
        %v3588 = vmax.f32 %v3572, 0.0
        %v3589 = vmax.f32 %v3573, 0.0
        %v3590 = vmax.f32 %v3574, 0.0
        %v3591 = vpack.c.bf16 %v3576, %v3575
        %v3592 = vpack.c.bf16 %v3578, %v3577
        %v3593 = vpack.c.bf16 %v3580, %v3579
        %v3594 = vpack.c.bf16 %v3582, %v3581
        %v3595 = vpack.c.bf16 %v3584, %v3583
        %v3596 = vpack.c.bf16 %v3586, %v3585
        %v3597 = vpack.c.bf16 %v3588, %v3587
        %v3598 = vpack.c.bf16 %v3590, %v3589
        %v3599 = vld [vmem:[#allocation12] sm:$0xf]
        %v3600 = vld [vmem:[#allocation12 + $0x4] sm:$0xf]
        %v3601 = vld [vmem:[#allocation12 + $0x8] sm:$0xf]
        %v3602 = vld [vmem:[#allocation12 + $0xc] sm:$0xf]
        %v3603 = vld [vmem:[#allocation12 + $0x10] sm:$0xf]
        %v3604 = vld [vmem:[#allocation12 + $0x14] sm:$0xf]
        %v3605 = vld [vmem:[#allocation12 + $0x18] sm:$0xf]
        %v3606 = vld [vmem:[#allocation12 + $0x1c] sm:$0xf]
        %v3607 = vld [vmem:[#allocation12 + $0x20] sm:$0xf]
        %v3608 = vld [vmem:[#allocation12 + $0x24] sm:$0xf]
        %v3609 = vld [vmem:[#allocation12 + $0x28] sm:$0xf]
        %v3610 = vld [vmem:[#allocation12 + $0x2c] sm:$0xf]
        %v3611 = vld [vmem:[#allocation12 + $0x30] sm:$0xf]
        %v3612 = vld [vmem:[#allocation12 + $0x34] sm:$0xf]
        %v3613 = vld [vmem:[#allocation12 + $0x38] sm:$0xf]
        %v3614 = vld [vmem:[#allocation12 + $0x3c] sm:$0xf]
        %v3631 = vunpack.c.l.b16 %v3599
        %v3632 = vunpack.c.l.b16 %v3600
        %v3633 = vunpack.c.l.b16 %v3601
        %v3634 = vunpack.c.l.b16 %v3602
        %v3635 = vunpack.c.l.b16 %v3603
        %v3636 = vunpack.c.l.b16 %v3604
        %v3637 = vunpack.c.l.b16 %v3605
        %v3638 = vunpack.c.l.b16 %v3606
        %v3639 = vunpack.c.l.b16 %v3607
        %v3640 = vunpack.c.l.b16 %v3608
        %v3641 = vunpack.c.l.b16 %v3609
        %v3642 = vunpack.c.l.b16 %v3610
        %v3643 = vunpack.c.l.b16 %v3611
        %v3644 = vunpack.c.l.b16 %v3612
        %v3645 = vunpack.c.l.b16 %v3613
        %v3646 = vunpack.c.l.b16 %v3614
        %v3647 = vpack.c.b16 %v3632, %v3631
        %v3648 = vpack.c.b16 %v3634, %v3633
        %v3649 = vpack.c.b16 %v3636, %v3635
        %v3650 = vpack.c.b16 %v3638, %v3637
        %v3651 = vpack.c.b16 %v3640, %v3639
        %v3652 = vpack.c.b16 %v3642, %v3641
        %v3653 = vpack.c.b16 %v3644, %v3643
        %v3654 = vpack.c.b16 %v3646, %v3645
        %3663 = vmatprep.subr.bf16.mxu0 0
        %3664 = vmatpush1.bf16.msra.mxu0 %v3647
        %3665 = vmatprep.subr.bf16.mxu0 0
        %3666 = vmatpush1.bf16.msra.mxu0 %v3648
        %3667 = vmatprep.subr.bf16.mxu0 0
        %3668 = vmatpush1.bf16.msra.mxu0 %v3649
        %3669 = vmatprep.subr.bf16.mxu0 0
        %3670 = vmatpush1.bf16.msra.mxu0 %v3650
        %3671 = vmatprep.subr.bf16.mxu0 0
        %3672 = vmatpush1.bf16.msra.mxu0 %v3651
        %3673 = vmatprep.subr.bf16.mxu0 0
        %3674 = vmatpush1.bf16.msra.mxu0 %v3652
        %3675 = vmatprep.subr.bf16.mxu0 0
        %3676 = vmatpush1.bf16.msra.mxu0 %v3653
        %3677 = vmatprep.subr.bf16.mxu0 0
        %3678 = vmatpush1.bf16.msra.mxu0 %v3654
        %3679 = vmatprep.subr.bf16.mxu0 0
        %3680 = vmatpush1.bf16.msra.mxu0 0
        %3681 = vmatprep.subr.bf16.mxu0 0
        %3682 = vmatpush1.bf16.msra.mxu0 0
        %3683 = vmatprep.subr.bf16.mxu0 0
        %3684 = vmatpush1.bf16.msra.mxu0 0
        %3685 = vmatprep.subr.bf16.mxu0 0
        %3686 = vmatpush1.bf16.msra.mxu0 0
        %3687 = vmatprep.subr.bf16.mxu0 0
        %3688 = vmatpush1.bf16.msra.mxu0 0
        %3689 = vmatprep.subr.bf16.mxu0 0
        %3690 = vmatpush1.bf16.msra.mxu0 0
        %3691 = vmatprep.subr.bf16.mxu0 0
        %3692 = vmatpush1.bf16.msra.mxu0 0
        %3693 = vmatprep.subr.bf16.mxu0 0
        %3694 = vmatpush1.bf16.msra.mxu0 0
        %3695 = vmatprep.mubr.bf16.mxu0 0
        %3696 = vmatmul.mubr.bf16.gmra.mrb[0].mxu0 %v3591
        %v3697 = vpop.f32.mrb[0].mxu0
        %v3698 = vadd.f32 0.0, %v3697
        %v3699 = vpop.f32.mrb[0].mxu0
        %v3700 = vpop.f32.mrb[0].mxu0
        %v3701 = vadd.f32 0.0, %v3700
        %v3702 = vpop.f32.mrb[0].mxu0
        %3703 = vmatprep.mubr.bf16.mxu0 0
        %3704 = vmatmul.mubr.bf16.gmra.mrb[0].mxu0 %v3592
        %v3705 = vpop.f32.mrb[0].mxu0
        %v3706 = vadd.f32 0.0, %v3705
        %v3707 = vpop.f32.mrb[0].mxu0
        %v3708 = vpop.f32.mrb[0].mxu0
        %v3709 = vadd.f32 0.0, %v3708
        %v3710 = vpop.f32.mrb[0].mxu0
        %3711 = vmatprep.mubr.bf16.mxu0 0
        %3712 = vmatmul.mubr.bf16.gmra.mrb[0].mxu0 %v3593
        %v3713 = vpop.f32.mrb[0].mxu0
        %v3714 = vadd.f32 0.0, %v3713
        %v3715 = vpop.f32.mrb[0].mxu0
        %v3716 = vpop.f32.mrb[0].mxu0
        %v3717 = vadd.f32 0.0, %v3716
        %v3718 = vpop.f32.mrb[0].mxu0
        %3719 = vmatprep.mubr.bf16.mxu0 0
        %3720 = vmatmul.mubr.bf16.gmra.mrb[0].mxu0 %v3594
        %v3721 = vpop.f32.mrb[0].mxu0
        %v3722 = vadd.f32 0.0, %v3721
        %v3723 = vpop.f32.mrb[0].mxu0
        %v3724 = vpop.f32.mrb[0].mxu0
        %v3725 = vadd.f32 0.0, %v3724
        %v3726 = vpop.f32.mrb[0].mxu0
        %3727 = vmatprep.mubr.bf16.mxu0 0
        %3728 = vmatmul.mubr.bf16.gmra.mrb[0].mxu0 %v3595
        %v3729 = vpop.f32.mrb[0].mxu0
        %v3730 = vadd.f32 0.0, %v3729
        %v3731 = vpop.f32.mrb[0].mxu0
        %v3732 = vpop.f32.mrb[0].mxu0
        %v3733 = vadd.f32 0.0, %v3732
        %v3734 = vpop.f32.mrb[0].mxu0
        %3735 = vmatprep.mubr.bf16.mxu0 0
        %3736 = vmatmul.mubr.bf16.gmra.mrb[0].mxu0 %v3596
        %v3737 = vpop.f32.mrb[0].mxu0
        %v3738 = vadd.f32 0.0, %v3737
        %v3739 = vpop.f32.mrb[0].mxu0
        %v3740 = vpop.f32.mrb[0].mxu0
        %v3741 = vadd.f32 0.0, %v3740
        %v3742 = vpop.f32.mrb[0].mxu0
        %3743 = vmatprep.mubr.bf16.mxu0 0
        %3744 = vmatmul.mubr.bf16.gmra.mrb[0].mxu0 %v3597
        %v3745 = vpop.f32.mrb[0].mxu0
        %v3746 = vadd.f32 0.0, %v3745
        %v3747 = vpop.f32.mrb[0].mxu0
        %v3748 = vpop.f32.mrb[0].mxu0
        %v3749 = vadd.f32 0.0, %v3748
        %v3750 = vpop.f32.mrb[0].mxu0
        %3751 = vmatprep.mubr.bf16.mxu0 0
        %3752 = vmatmul.mubr.bf16.gmra.mrb[0].mxu0 %v3598
        %v3753 = vpop.f32.mrb[0].mxu0
        %v3754 = vadd.f32 0.0, %v3753
        %v3755 = vpop.f32.mrb[0].mxu0
        %v3756 = vpop.f32.mrb[0].mxu0
        %v3757 = vadd.f32 0.0, %v3756
        %v3758 = vpop.f32.mrb[0].mxu0
        %3759 = vdwg.mxu0
        %v3760 = vld [vmem:[%s10] sm:$0x1]
        %v3762 = vlaneseq
        %v3763 = vshrl.u32 %v3762, 7
        %v3764 = vsub.s32 0, %v3763
        %v3765 = vrot.slane %v3760, %v3764
        %v3767 = vmul.f32 %v3698, %v3765
        %v3768 = vmul.f32 %v3701, %v3765
        %v3769 = vmul.f32 %v3706, %v3765
        %v3770 = vmul.f32 %v3709, %v3765
        %v3771 = vmul.f32 %v3714, %v3765
        %v3772 = vmul.f32 %v3717, %v3765
        %v3773 = vmul.f32 %v3722, %v3765
        %v3774 = vmul.f32 %v3725, %v3765
        %v3775 = vmul.f32 %v3730, %v3765
        %v3776 = vmul.f32 %v3733, %v3765
        %v3777 = vmul.f32 %v3738, %v3765
        %v3778 = vmul.f32 %v3741, %v3765
        %v3779 = vmul.f32 %v3746, %v3765
        %v3780 = vmul.f32 %v3749, %v3765
        %v3781 = vmul.f32 %v3754, %v3765
        %v3782 = vmul.f32 %v3757, %v3765
        %v3783 = vld [vmem:[%s11] sm:$0x1]
        %v3785 = vlaneseq
        %v3786 = vshrl.u32 %v3785, 7
        %v3787 = vsub.s32 0, %v3786
        %v3788 = vrot.slane %v3783, %v3787
        %v3790 = vadd.f32 %v3767, %v3788
        %v3791 = vadd.f32 %v3768, %v3788
        %v3792 = vadd.f32 %v3769, %v3788
        %v3793 = vadd.f32 %v3770, %v3788
        %v3794 = vadd.f32 %v3771, %v3788
        %v3795 = vadd.f32 %v3772, %v3788
        %v3796 = vadd.f32 %v3773, %v3788
        %v3797 = vadd.f32 %v3774, %v3788
        %v3798 = vadd.f32 %v3775, %v3788
        %v3799 = vadd.f32 %v3776, %v3788
        %v3800 = vadd.f32 %v3777, %v3788
        %v3801 = vadd.f32 %v3778, %v3788
        %v3802 = vadd.f32 %v3779, %v3788
        %v3803 = vadd.f32 %v3780, %v3788
        %v3804 = vadd.f32 %v3781, %v3788
        %v3805 = vadd.f32 %v3782, %v3788
        %v3806 = vunpack.c.l.bf16 %v615
        %v3807 = vunpack.c.l.bf16 %v616
        %v3808 = vunpack.c.l.bf16 %v617
        %v3809 = vunpack.c.l.bf16 %v618
        %v3810 = vunpack.c.l.bf16 %v619
        %v3811 = vunpack.c.l.bf16 %v620
        %v3812 = vunpack.c.l.bf16 %v621
        %v3813 = vunpack.c.l.bf16 %v622
        %v3814 = vunpack.c.l.bf16 %v623
        %v3815 = vunpack.c.l.bf16 %v624
        %v3816 = vunpack.c.l.bf16 %v625
        %v3817 = vunpack.c.l.bf16 %v626
        %v3818 = vunpack.c.l.bf16 %v627
        %v3819 = vunpack.c.l.bf16 %v628
        %v3820 = vunpack.c.l.bf16 %v629
        %v3821 = vunpack.c.l.bf16 %v630
        %v3822 = vadd.f32 %v3790, %v3806
        %v3823 = vadd.f32 %v3791, %v3807
        %v3824 = vadd.f32 %v3792, %v3808
        %v3825 = vadd.f32 %v3793, %v3809
        %v3826 = vadd.f32 %v3794, %v3810
        %v3827 = vadd.f32 %v3795, %v3811
        %v3828 = vadd.f32 %v3796, %v3812
        %v3829 = vadd.f32 %v3797, %v3813
        %v3830 = vadd.f32 %v3798, %v3814
        %v3831 = vadd.f32 %v3799, %v3815
        %v3832 = vadd.f32 %v3800, %v3816
        %v3833 = vadd.f32 %v3801, %v3817
        %v3834 = vadd.f32 %v3802, %v3818
        %v3835 = vadd.f32 %v3803, %v3819
        %v3836 = vadd.f32 %v3804, %v3820
        %v3837 = vadd.f32 %v3805, %v3821
        %v3838 = vmax.f32 %v3822, 0.0
        %v3839 = vmax.f32 %v3823, 0.0
        %v3840 = vmax.f32 %v3824, 0.0
        %v3841 = vmax.f32 %v3825, 0.0
        %v3842 = vmax.f32 %v3826, 0.0
        %v3843 = vmax.f32 %v3827, 0.0
        %v3844 = vmax.f32 %v3828, 0.0
        %v3845 = vmax.f32 %v3829, 0.0
        %v3846 = vmax.f32 %v3830, 0.0
        %v3847 = vmax.f32 %v3831, 0.0
        %v3848 = vmax.f32 %v3832, 0.0
        %v3849 = vmax.f32 %v3833, 0.0
        %v3850 = vmax.f32 %v3834, 0.0
        %v3851 = vmax.f32 %v3835, 0.0
        %v3852 = vmax.f32 %v3836, 0.0
        %v3853 = vmax.f32 %v3837, 0.0
        %3854 = vst [vmem:[%s603] sm:$0xff] %v3838
        %3855 = vst [vmem:[%s603 + $0x8] sm:$0xff] %v3839
        %3856 = vst [vmem:[%s603 + $0x10] sm:$0xff] %v3840
        %3857 = vst [vmem:[%s603 + $0x18] sm:$0xff] %v3841
        %3858 = vst [vmem:[%s603 + $0x20] sm:$0xff] %v3842
        %3859 = vst [vmem:[%s603 + $0x28] sm:$0xff] %v3843
        %3860 = vst [vmem:[%s603 + $0x30] sm:$0xff] %v3844
        %3861 = vst [vmem:[%s603 + $0x38] sm:$0xff] %v3845
        %3862 = vst [vmem:[%s603 + $0x40] sm:$0xff] %v3846
        %3863 = vst [vmem:[%s603 + $0x48] sm:$0xff] %v3847
        %3864 = vst [vmem:[%s603 + $0x50] sm:$0xff] %v3848
        %3865 = vst [vmem:[%s603 + $0x58] sm:$0xff] %v3849
        %3866 = vst [vmem:[%s603 + $0x60] sm:$0xff] %v3850
        %3867 = vst [vmem:[%s603 + $0x68] sm:$0xff] %v3851
        %3868 = vst [vmem:[%s603 + $0x70] sm:$0xff] %v3852
        %3869 = vst [vmem:[%s603 + $0x78] sm:$0xff] %v3853
        %s3870 = sand.u32 %s345, 1
        %s3871 = scalar_lea.sflag [#allocation5], %s3870
        %s3872 = sand.u32 %s345, 1
        %s3873 = smul.addr %s3872, 128
        %s3874 = scalar_lea.vmem [#allocation14], %s3873
        // Predicated region
        $region109: #{tpu_custom_call.1} parent=67 // pred_check
          %p3875 = pneg %p355
        $region110: #{tpu_custom_call.1} parent=67 // pred_check_branch
          %3877 = sbr.rel (%p3875) target = $region112
        $region111: #{tpu_custom_call.1} parent=67 // pred_region
          %s3878 = smul.u32 8, %s39
          %s3880 = ssub.s32 2048, 2048
          %3881 = vsyncadd %s3871, %s3880
          %s3882 = smul.addr %s3878, 2
          %s3883 = smul.addr %s38, 32
          %s3884 = sadd.s32 %s3882, %s3883
          %s3885 = smul.addr %s3884, 128
          %s3886 = scalar_lea.hbm %s12, %s3885
          %s3887 = sshll.u32 %s3874, 4
          %s3888 = int_to_ptr.vmem [resolvable:$true] %s3887
          %3893 = dma.vmem_to_hbm [thread:$0]  %s3888, 2048, %s3886, %s3871, 128, 128, 8
        $region112: #{tpu_custom_call.1} parent=67 // pred_fallthru
          _
      $region68: #{tpu_custom_call.1} parent=5 // pred_fallthru
        _
      %p3894 = scmp.le.s32.totalorder 2, %s29
      // Predicated region
      $region113: #{tpu_custom_call.1} parent=5 // pred_check
        %p3895 = pneg %p3894
      $region114: #{tpu_custom_call.1} parent=5 // pred_check_branch
        %3897 = sbr.rel (%p3895) target = $region116
      $region115: #{tpu_custom_call.1} parent=5 // pred_region
        %s3898 = ssub.s32 %s29, 2
        // Predicated region
        $region117: #{tpu_custom_call.1} parent=115 // pred_check
          %p3899 = pneg %p361
        $region118: #{tpu_custom_call.1} parent=115 // pred_check_branch
          %3901 = sbr.rel (%p3899) target = $region120
        $region119: #{tpu_custom_call.1} parent=115 // pred_region
          %s3902 = sand.u32 %s346, 1
          %s3903 = scalar_lea.sflag [#allocation5], %s3902
          %s3904 = sand.u32 %s346, 1
          %s3905 = smul.addr %s3904, 128
          %s3906 = scalar_lea.vmem [#allocation14], %s3905
          %3907 = dma.done %s3903, 2048
        $region120: #{tpu_custom_call.1} parent=115 // pred_fallthru
          _
      $region116: #{tpu_custom_call.1} parent=5 // pred_fallthru
        _
    $region6: #{tpu_custom_call.1} parent=1 // loop_footer
      %s33 = sadd.s32 1, %s29
    $region7: #{tpu_custom_call.1} parent=1 // loop_footer_branch
      %28 = sbr.rel target = $region3
    $region8: #{tpu_custom_call.1} parent=1 // loop_exit
      _
    %3908 = vsyncpa [#allocation4], 1
    %s3909 = scalar_lea.sflag [#allocation4], 1
    %3910 = vsyncpa %s3909, 1
    %3911 = vsyncpa [#allocation7], 1
    %s3912 = scalar_lea.sflag [#allocation7], 1
    %3913 = vsyncpa %s3912, 1
    %3914 = vsyncpa [#allocation10], 1
    %3915 = vsyncpa [#allocation13], 1
    %3916 = vsyncpa [#allocation5], 1
    %s3917 = scalar_lea.sflag [#allocation5], 1
    %3918 = vsyncpa %s3917, 1

</llo_original>
